<compile_context>
chip_gen: v6e
topology: v6e:2x2x1
jax: 0.10.0
libtpu: 0.0.40
codegen_flags: <defaults>
</compile_context>

<pallas_src>
import jax
import jax.numpy as jnp
from jax.experimental import pallas as pl
from jax.experimental.pallas import tpu as pltpu


# ---------------------------------------------------------------------------
# helpers
# ---------------------------------------------------------------------------

def _round_up(n, m):
    return ((n + m - 1) // m) * m


# Explicit scoped-VMEM limit: v5e's scoped default is only 16 MiB; 48 MiB still
# fits inside v7x's 64 MiB physical VMEM per TensorCore.
_VMEM_LIMIT = 48 * 1024 * 1024


def _pick_k_tile(kp):
    # kp is a multiple of 128.  Prefer 512/256 (whole 256-deep MXU passes on
    # v6e/v7x); 384 only for the 1152-sized K layers; 128 as last resort.
    for t in (512, 256, 384, 128):
        if kp % t == 0:
            return t
    return 128


def _pick_n_tile(np_):
    # lane-dense output tile; take the whole N when it fits (nt == 1 avoids
    # re-reading the A operand).
    if np_ <= 512:
        return np_
    for t in (512, 256, 128):
        if np_ % t == 0:
            return t
    return 128


# ---------------------------------------------------------------------------
# Pallas kernels
# ---------------------------------------------------------------------------

def _make_matmul_kernel(mode, tm, m_real):
    """Tiled matmul kernel with a fused epilogue.

    mode: "swish" -> y = swish(a@b + bias), bf16 out
          "stats" -> y = a@b + bias (bf16 out) + per-tile channel sum / sumsq
          "pool"  -> per-image mean over the m_real valid rows of (a@b + bias),
                     followed by sigmoid (global-average-pool head)
    NOTE: pl.program_id / pl.num_programs are only called at kernel top level
    (not inside pl.when bodies) so the interpret/CPU fallback can lower them.
    """
    if mode == "swish":
        def kernel(a_ref, b_ref, bias_ref, y_ref, acc_ref):
            k = pl.program_id(2)
            k_last = pl.num_programs(2) - 1

            @pl.when(k == 0)
            def _():
                acc_ref[...] = jnp.zeros_like(acc_ref)

            acc_ref[...] += jnp.dot(a_ref[...], b_ref[...],
                                    preferred_element_type=jnp.float32)

            @pl.when(k == k_last)
            def _():
                y = acc_ref[...] + bias_ref[...]
                y_ref[...] = (y * jax.nn.sigmoid(y)).astype(y_ref.dtype)

        return kernel

    if mode == "stats":
        def kernel(a_ref, b_ref, bias_ref, y_ref, sum_ref, sq_ref, acc_ref):
            k = pl.program_id(2)
            k_last = pl.num_programs(2) - 1
            # hoisted out of the pl.when body (see NOTE above)
            rows = (pl.program_id(0) * tm
                    + jax.lax.broadcasted_iota(jnp.int32, (tm, 1), 0))

            @pl.when(k == 0)
            def _():
                acc_ref[...] = jnp.zeros_like(acc_ref)

            acc_ref[...] += jnp.dot(a_ref[...], b_ref[...],
                                    preferred_element_type=jnp.float32)

            @pl.when(k == k_last)
            def _():
                y = acc_ref[...] + bias_ref[...]
                y_ref[...] = y.astype(y_ref.dtype)          # bf16 write
                ym = jnp.where(rows < m_real, y, 0.0)       # mask M padding
                s = jnp.sum(ym, axis=0, keepdims=True)
                ss = jnp.sum(ym * ym, axis=0, keepdims=True)
                sum_ref[...] = jnp.broadcast_to(s, sum_ref.shape)
                sq_ref[...] = jnp.broadcast_to(ss, sq_ref.shape)

        return kernel

    # mode == "pool": each M-tile is one image (tm rows, m_real of them valid)
    def kernel(a_ref, b_ref, bias_ref, o_ref, acc_ref):
        k = pl.program_id(2)
        k_last = pl.num_programs(2) - 1
        rows = jax.lax.broadcasted_iota(jnp.int32, (tm, 1), 0)

        @pl.when(k == 0)
        def _():
            acc_ref[...] = jnp.zeros_like(acc_ref)

        acc_ref[...] += jnp.dot(a_ref[...], b_ref[...],
                                preferred_element_type=jnp.float32)

        @pl.when(k == k_last)
        def _():
            y = acc_ref[...] + bias_ref[...]
            ym = jnp.where(rows < m_real, y, 0.0)
            pooled = jnp.sum(ym, axis=0, keepdims=True) * (1.0 / m_real)
            o_ref[...] = jnp.broadcast_to(jax.nn.sigmoid(pooled), o_ref.shape)

    return kernel


def _bn_swish_kernel(x_ref, scale_ref, shift_ref, o_ref):
    # fused batchnorm-affine (precomputed per-channel scale/shift) + swish
    y = x_ref[...].astype(jnp.float32) * scale_ref[...] + shift_ref[...]
    o_ref[...] = (y * jax.nn.sigmoid(y)).astype(o_ref.dtype)


# ---------------------------------------------------------------------------
# Pallas wrappers
# ---------------------------------------------------------------------------

def pallas_conv_matmul(a, bmat, biasp, *, mode):
    """Tiled MXU matmul with fused epilogue.

    a: (M, K) bf16 im2col patches, bmat: (Kp, Np) bf16 prepared weights,
    biasp: (1, Np) f32 prepared bias.  Returns y (Mp, Np) bf16 (padded along
    M); for mode == "stats" also per-M-tile channel sum / sumsq partials.
    """
    M, K = a.shape
    Kp, Np = bmat.shape

    tn = _pick_n_tile(Np)
    nt = Np // tn
    tk = _pick_k_tile(Kp)
    kt = Kp // tk
    tm = min(512, _round_up(M, 16))
    Mp = _round_up(M, tm)
    mt = Mp // tm
    # v7x megacore: avoid a 1-wide parallel extent when the M tile can split.
    if mt == 1 and nt == 1 and tm >= 256 and tm % 32 == 0:
        tm //= 2
        Mp = _round_up(M, tm)
        mt = Mp // tm

    ap = a if (Mp == M and Kp == K) else jnp.pad(a, ((0, Mp - M), (0, Kp - K)))

    kernel = _make_matmul_kernel(mode, tm, M)

    out_shapes = [jax.ShapeDtypeStruct((Mp, Np), jnp.bfloat16)]
    out_specs = [pl.BlockSpec((tm, tn), lambda i, j, k: (i, j))]
    if mode == "stats":
        out_shapes += [jax.ShapeDtypeStruct((8 * mt, Np), jnp.float32)] * 2
        out_specs += [pl.BlockSpec((8, tn), lambda i, j, k: (i, j))] * 2

    cost = pl.CostEstimate(
        flops=2 * Mp * Kp * Np,
        transcendentals=(Mp * Np if mode == "swish" else 0),
        bytes_accessed=Mp * Kp * 2 + Kp * Np * 2 + Mp * Np * 2,
    )

    res = pl.pallas_call(
        kernel,
        out_shape=tuple(out_shapes) if len(out_shapes) > 1 else out_shapes[0],
        grid_spec=pltpu.PrefetchScalarGridSpec(
            num_scalar_prefetch=0,
            grid=(mt, nt, kt),
            in_specs=[
                pl.BlockSpec((tm, tk), lambda i, j, k: (i, k)),
                pl.BlockSpec((tk, tn), lambda i, j, k: (k, j)),
                pl.BlockSpec((1, tn), lambda i, j, k: (0, j)),
            ],
            out_specs=tuple(out_specs) if len(out_specs) > 1 else out_specs[0],
            scratch_shapes=[pltpu.VMEM((tm, tn), jnp.float32)],
        ),
        compiler_params=pltpu.CompilerParams(
            dimension_semantics=("parallel", "parallel", "arbitrary"),
            vmem_limit_bytes=_VMEM_LIMIT),
        cost_estimate=cost,
    )(ap, bmat, biasp)
    return res


def pallas_pool_head(a, bmat, biasp, *, n_img, s_real, sp):
    """conv9 + per-image global average pool + sigmoid, all in the epilogue.

    a: (n_img * sp, Kp) bf16 (per-image row-padded), bmat: (Kp, Np) bf16,
    biasp: (1, Np) f32.  Returns (8 * n_img, Np) f32; row 8*i holds image i.
    """
    Kp, Np = bmat.shape
    tn = _pick_n_tile(Np)
    nt = Np // tn
    tk = _pick_k_tile(Kp)
    kt = Kp // tk

    kernel = _make_matmul_kernel("pool", sp, s_real)

    return pl.pallas_call(
        kernel,
        out_shape=jax.ShapeDtypeStruct((8 * n_img, Np), jnp.float32),
        grid_spec=pltpu.PrefetchScalarGridSpec(
            num_scalar_prefetch=0,
            grid=(n_img, nt, kt),
            in_specs=[
                pl.BlockSpec((sp, tk), lambda i, j, k: (i, k)),
                pl.BlockSpec((tk, tn), lambda i, j, k: (k, j)),
                pl.BlockSpec((1, tn), lambda i, j, k: (0, j)),
            ],
            out_specs=pl.BlockSpec((8, tn), lambda i, j, k: (i, j)),
            scratch_shapes=[pltpu.VMEM((sp, tn), jnp.float32)],
        ),
        compiler_params=pltpu.CompilerParams(
            dimension_semantics=("parallel", "parallel", "arbitrary"),
            vmem_limit_bytes=_VMEM_LIMIT),
    )(a, bmat, biasp)


def pallas_bn_swish(y, scale, shift):
    """y: (Mp, Cp) bf16, scale/shift: (Cp,) f32 -> bf16 swish(y*scale+shift)."""
    Mp, Cp = y.shape
    tm = Mp
    for t in (1024, 512, 256, 128, 64, 32, 16):   # Mp is a multiple of 16
        if Mp % t == 0:
            tm = t
            break
    return pl.pallas_call(
        _bn_swish_kernel,
        out_shape=jax.ShapeDtypeStruct((Mp, Cp), jnp.bfloat16),
        grid_spec=pltpu.PrefetchScalarGridSpec(
            num_scalar_prefetch=0,
            grid=(Mp // tm,),
            in_specs=[pl.BlockSpec((tm, Cp), lambda i: (i, 0)),
                      pl.BlockSpec((1, Cp), lambda i: (0, 0)),
                      pl.BlockSpec((1, Cp), lambda i: (0, 0))],
            out_specs=pl.BlockSpec((tm, Cp), lambda i: (i, 0)),
        ),
        compiler_params=pltpu.CompilerParams(
            dimension_semantics=("parallel",),
            vmem_limit_bytes=_VMEM_LIMIT),
    )(y, scale.reshape(1, Cp), shift.reshape(1, Cp))


# ---------------------------------------------------------------------------
# Layer glue
# ---------------------------------------------------------------------------

def im2col(x_nhwc, kh, kw, stride, pad):
    """im2col over the REAL channel count (no lane padding of Cin)."""
    # TODO(synk): fuse the kh*kw taps into the matmul K grid axis (per-tap
    # index_map / manual DMA of strided windows) to avoid this 9x-expanded
    # HBM intermediate; would also allow fusing the previous layer's
    # BN-scale/shift + swish into the A-load path of the matmul.
    N, H, W, C = x_nhwc.shape
    xpad = jnp.pad(x_nhwc, ((0, 0), (pad, pad), (pad, pad), (0, 0)))
    Ho = (H + 2 * pad - kh) // stride + 1
    Wo = (W + 2 * pad - kw) // stride + 1
    cols = []
    for i in range(kh):
        for j in range(kw):
            cols.append(xpad[:, i:i + stride * Ho:stride,
                             j:j + stride * Wo:stride, :])
    patches = jnp.concatenate(cols, axis=-1)            # (N, Ho, Wo, kh*kw*C)
    A = patches.reshape(N * Ho * Wo, kh * kw * C).astype(jnp.bfloat16)
    return A, N, Ho, Wo


def conv_bn_swish_layer(x, wmat, biasp, ksz, stride, pad, cout):
    """Conv -> BatchNorm (training-mode batch stats, gamma=1, beta=0) -> swish."""
    A, N, Ho, Wo = im2col(x, ksz, ksz, stride, pad)
    y, sums, sqs = pallas_conv_matmul(A, wmat, biasp, mode="stats")
    M = N * Ho * Wo
    Np = y.shape[1]
    # reduce the tiny per-M-tile partials accumulated inside the matmul
    ch_sum = sums.reshape(-1, 8, Np)[:, 0, :].sum(axis=0)
    ch_sq = sqs.reshape(-1, 8, Np)[:, 0, :].sum(axis=0)
    mean = ch_sum / M
    var = jnp.maximum(ch_sq / M - mean * mean, 0.0)      # biased, like PyTorch BN
    scale = jax.lax.rsqrt(var + 1e-5)                    # gamma = 1
    shift = -mean * scale                                # beta  = 0
    yb = pallas_bn_swish(y, scale, shift)                # bf16 -> bf16
    return yb[:M, :cout].reshape(N, Ho, Wo, cout)


def conv9_pool_head(x, wmat, biasp, cout):
    """1x1 conv with padding=1, then global avg_pool2d + sigmoid + view(N,-1)."""
    N, H, W, C = x.shape
    xpad = jnp.pad(x, ((0, 0), (1, 1), (1, 1), (0, 0)))  # ring outputs = bias
    Ho, Wo = H + 2, W + 2
    S = Ho * Wo
    Sp = _round_up(S, 16)
    Kp, Np = wmat.shape
    A = xpad.reshape(N, S, C)
    A = jnp.pad(A, ((0, 0), (0, Sp - S), (0, Kp - C))).astype(jnp.bfloat16)
    A = A.reshape(N * Sp, Kp)
    out = pallas_pool_head(A, wmat, biasp, n_img=N, s_real=S, sp=Sp)
    return out.reshape(N, 8, Np)[:, 0, :cout]            # (N, out_channels)


# ---------------------------------------------------------------------------
# Model definition / parameter handling
# ---------------------------------------------------------------------------

def _layer_cfg(in_channels, out_channels):
    # (name, ksize, stride, pad, cin, cout) -- matches the PyTorch __init__
    return [
        ("1", 3, 1, 1, in_channels, 64),
        ("2", 3, 2, 1, 64, 64),
        ("3", 3, 1, 1, 64, 128),
        ("4", 3, 2, 1, 128, 128),
        ("5", 3, 1, 1, 128, 256),
        ("6", 3, 2, 1, 256, 256),
        ("7", 3, 1, 1, 256, 512),
        ("8", 3, 2, 1, 512, 512),
        ("9", 1, 1, 1, 512, out_channels),
    ]


def prepare_params(params):
    """One-time weight prep (hoisted out of the per-forward path):
    reshape to (K, Cout), zero-pad to (Kp, Np), cast to bf16; pad bias."""
    prepped = {}
    for name in sorted(k[1:] for k in params if k.startswith("w")):
        w = params["w" + name]                 # (kh, kw, cin, cout), HWIO
        b = params["b" + name]
        kh, kw, cin, cout = w.shape
        K = kh * kw * cin
        Kp = _round_up(K, 128)
        Np = _round_up(cout, 128)
        wmat = w.reshape(K, cout).astype(jnp.bfloat16)
        wmat = jnp.pad(wmat, ((0, Kp - K), (0, Np - cout)))
        biasp = jnp.pad(b.astype(jnp.float32), (0, Np - cout)).reshape(1, Np)
        prepped[name] = (wmat, biasp)
    return prepped


def make_discriminator_forward(in_channels, out_channels):
    cfg = _layer_cfg(in_channels, out_channels)

    def forward(x_nchw, prepped):
        x = jnp.transpose(x_nchw, (0, 2, 3, 1)).astype(jnp.bfloat16)  # -> NHWC

        # conv1 + swish (no BN); swish fused into the matmul epilogue
        name, ksz, stride, pad, _cin, cout = cfg[0]
        wmat, biasp = prepped[name]
        A, N, Ho, Wo = im2col(x, ksz, ksz, stride, pad)
        y = pallas_conv_matmul(A, wmat, biasp, mode="swish")
        x = y[:N * Ho * Wo, :cout].reshape(N, Ho, Wo, cout)

        # conv2..conv8: conv (+ fused batch stats) -> BN -> swish
        for name, ksz, stride, pad, _cin, cout in cfg[1:8]:
            wmat, biasp = prepped[name]
            x = conv_bn_swish_layer(x, wmat, biasp, ksz, stride, pad, cout)

        # conv9 (1x1, padding=1) + global avg pool + sigmoid, fully fused head
        name, ksz, stride, pad, _cin, cout = cfg[8]
        wmat, biasp = prepped[name]
        return conv9_pool_head(x, wmat, biasp, cout)

    return forward


def init_params(key, in_channels, out_channels):
    params = {}
    for name, k, _s, _p, cin, cout in _layer_cfg(in_channels, out_channels):
        key, kw_, kb_ = jax.random.split(key, 3)
        std = (2.0 / (k * k * cin)) ** 0.5
        params["w" + name] = jax.random.normal(kw_, (k, k, cin, cout),
                                               jnp.float32) * std
        params["b" + name] = jax.random.normal(kb_, (cout,), jnp.float32) * 0.01
    return params


if __name__ == "__main__":
    key = jax.random.PRNGKey(0)
    pkey, xkey = jax.random.split(key)

    in_channels, out_channels = 4, 3
    params = init_params(pkey, in_channels, out_channels)
    prepped = prepare_params(params)          # hoisted one-time weight prep

    # NCHW input, like the PyTorch module expects.
    x = jax.random.normal(xkey, (2, in_channels, 16, 16), jnp.float32)

    fwd = jax.jit(make_discriminator_forward(in_channels, out_channels))
    out = fwd(x, prepped)
    out = jax.block_until_ready(out)

    assert out.shape == (2, out_channels), out.shape
    assert bool(jnp.all(jnp.isfinite(out)))
    assert bool(jnp.all((out > 0.0) & (out < 1.0)))   # sigmoid output range
    print("KERNEL_OK")
</pallas_src>

<mosaic_0001>
module attributes {stable_mosaic.version = 11 : i64} {
  func.func @kernel(%arg0: i32, %arg1: i32, %arg2: i32, %arg3: memref<256x128xbf16, #tpu.memory_space<vmem>>, %arg4: memref<128x128xbf16, #tpu.memory_space<vmem>>, %arg5: memref<1x128xf32, #tpu.memory_space<vmem>>, %arg6: memref<256x128xbf16, #tpu.memory_space<vmem>>, %arg7: memref<256x128xf32, #tpu.memory_space<vmem>>) attributes {dimension_semantics = [#tpu.dimension_semantics<parallel>, #tpu.dimension_semantics<parallel>, #tpu.dimension_semantics<arbitrary>], iteration_bounds = array<i64: 2, 1, 1>, scalar_prefetch = 0 : i64, scratch_operands = 1 : i64, tpu.core_type = #tpu.core_type<tc>, window_params = [{transform_indices = @transform_0, window_bounds = array<i64: 256, 128>}, {transform_indices = @transform_1, window_bounds = array<i64: 128, 128>}, {transform_indices = @transform_2, window_bounds = array<i64: 1, 128>}, {transform_indices = @transform_3, window_bounds = array<i64: 256, 128>}]} {
    %c0_i32 = arith.constant 0 : i32
    %0 = arith.cmpi eq, %arg2, %c0_i32 : i32
    %1 = arith.extui %0 : i1 to i32
    %c0_i32_0 = arith.constant 0 : i32
    %2 = arith.cmpi ne, %1, %c0_i32_0 : i32
    scf.if %2 {
      %cst_10 = arith.constant 0.000000e+00 : f32
      %12 = vector.broadcast %cst_10 : f32 to vector<256x128xf32>
      %c0_11 = arith.constant 0 : index
      %c0_12 = arith.constant 0 : index
      %13 = vector.load %arg7[%c0_11, %c0_12] : memref<256x128xf32, #tpu.memory_space<vmem>>, vector<256x128xf32>
      tpu.vector_store %arg7[%c0_11, %c0_12], %12 {strides = array<i32>} : memref<256x128xf32, #tpu.memory_space<vmem>>, vector<256x128xf32>,
    } else {
    }
    %c0 = arith.constant 0 : index
    %c0_1 = arith.constant 0 : index
    %3 = vector.load %arg7[%c0, %c0_1] : memref<256x128xf32, #tpu.memory_space<vmem>>, vector<256x128xf32>
    %c0_2 = arith.constant 0 : index
    %c0_3 = arith.constant 0 : index
    %4 = vector.load %arg3[%c0_2, %c0_3] : memref<256x128xbf16, #tpu.memory_space<vmem>>, vector<256x128xbf16>
    %c0_4 = arith.constant 0 : index
    %c0_5 = arith.constant 0 : index
    %5 = vector.load %arg4[%c0_4, %c0_5] : memref<128x128xbf16, #tpu.memory_space<vmem>>, vector<128x128xbf16>
    %cst = arith.constant dense<0.000000e+00> : vector<256x128xf32>
    %6 = tpu.matmul %4, %5, %cst {dimension_numbers = #tpu.dot_dimension_numbers<[1], [0], [0], [1], [0, 0, 1, 1], [], []>} : vector<256x128xbf16>, vector<128x128xbf16>, vector<256x128xf32> -> vector<256x128xf32>
    %7 = arith.addf %3, %6 : vector<256x128xf32>
    %c0_6 = arith.constant 0 : index
    %c0_7 = arith.constant 0 : index
    %8 = vector.load %arg7[%c0_6, %c0_7] : memref<256x128xf32, #tpu.memory_space<vmem>>, vector<256x128xf32>
    tpu.vector_store %arg7[%c0_6, %c0_7], %7 {strides = array<i32>} : memref<256x128xf32, #tpu.memory_space<vmem>>, vector<256x128xf32>,
    %c0_i32_8 = arith.constant 0 : i32
    %9 = arith.cmpi eq, %arg2, %c0_i32_8 : i32
    %10 = arith.extui %9 : i1 to i32
    %c0_i32_9 = arith.constant 0 : i32
    %11 = arith.cmpi ne, %10, %c0_i32_9 : i32
    scf.if %11 {
      %c0_10 = arith.constant 0 : index
      %c0_11 = arith.constant 0 : index
      %12 = vector.load %arg7[%c0_10, %c0_11] : memref<256x128xf32, #tpu.memory_space<vmem>>, vector<256x128xf32>
      %c0_12 = arith.constant 0 : index
      %c0_13 = arith.constant 0 : index
      %13 = vector.load %arg5[%c0_12, %c0_13] : memref<1x128xf32, #tpu.memory_space<vmem>>, vector<1x128xf32>
      %14 = vector.broadcast %13 : vector<1x128xf32> to vector<256x128xf32>
      %15 = arith.addf %12, %14 : vector<256x128xf32>
      %16 = arith.negf %15 : vector<256x128xf32>
      %17 = math.exp %16 : vector<256x128xf32>
      %cst_14 = arith.constant 1.000000e+00 : f32
      %18 = vector.broadcast %cst_14 : f32 to vector<256x128xf32>
      %19 = arith.addf %18, %17 : vector<256x128xf32>
      %20 = arith.divf %18, %19 : vector<256x128xf32>
      %21 = arith.mulf %15, %20 : vector<256x128xf32>
      %22 = arith.truncf %21 : vector<256x128xf32> to vector<256x128xbf16>
      %c0_15 = arith.constant 0 : index
      %c0_16 = arith.constant 0 : index
      %23 = vector.load %arg6[%c0_15, %c0_16] : memref<256x128xbf16, #tpu.memory_space<vmem>>, vector<256x128xbf16>
      tpu.vector_store %arg6[%c0_15, %c0_16], %22 {strides = array<i32>} : memref<256x128xbf16, #tpu.memory_space<vmem>>, vector<256x128xbf16>,
    } else {
    }
    return
  }
  func.func @transform_0(%arg0: i32, %arg1: i32, %arg2: i32) -> (i32, i32) {
    %c0_i32 = arith.constant 0 : i32
    return %arg0, %arg2 : i32, i32
  }
  func.func @transform_1(%arg0: i32, %arg1: i32, %arg2: i32) -> (i32, i32) {
    %c0_i32 = arith.constant 0 : i32
    return %arg2, %arg1 : i32, i32
  }
  func.func @transform_2(%arg0: i32, %arg1: i32, %arg2: i32) -> (i32, i32) {
    %c0_i32 = arith.constant 0 : i32
    %c0_i32_0 = arith.constant 0 : i32
    return %c0_i32, %arg1 : i32, i32
  }
  func.func @transform_3(%arg0: i32, %arg1: i32, %arg2: i32) -> (i32, i32) {
    %c0_i32 = arith.constant 0 : i32
    return %arg0, %arg1 : i32, i32
  }
}

module attributes {stable_mosaic.version = 11 : i64} {
  func.func @kernel(%arg0: i32, %arg1: i32, %arg2: i32, %arg3: memref<128x128xbf16, #tpu.memory_space<vmem>>, %arg4: memref<128x128xbf16, #tpu.memory_space<vmem>>, %arg5: memref<1x128xf32, #tpu.memory_space<vmem>>, %arg6: memref<128x128xbf16, #tpu.memory_space<vmem>>, %arg7: memref<8x128xf32, #tpu.memory_space<vmem>>, %arg8: memref<8x128xf32, #tpu.memory_space<vmem>>, %arg9: memref<128x128xf32, #tpu.memory_space<vmem>>) attributes {dimension_semantics = [#tpu.dimension_semantics<parallel>, #tpu.dimension_semantics<parallel>, #tpu.dimension_semantics<arbitrary>], iteration_bounds = array<i64: 1, 1, 5>, scalar_prefetch = 0 : i64, scratch_operands = 1 : i64, tpu.core_type = #tpu.core_type<tc>, window_params = [{transform_indices = @transform_0, window_bounds = array<i64: 128, 128>}, {transform_indices = @transform_1, window_bounds = array<i64: 128, 128>}, {transform_indices = @transform_2, window_bounds = array<i64: 1, 128>}, {transform_indices = @transform_3, window_bounds = array<i64: 128, 128>}, {transform_indices = @transform_4, window_bounds = array<i64: 8, 128>}, {transform_indices = @transform_5, window_bounds = array<i64: 8, 128>}]} {
    %c128_i32 = arith.constant 128 : i32
    %0 = arith.muli %arg0, %c128_i32 : i32
    %1 = tpu.iota {dimensions = array<i32: 0>} : vector<128x1xi32>
    %2 = vector.broadcast %0 : i32 to vector<128x1xi32>
    %3 = arith.addi %2, %1 : vector<128x1xi32>
    %c0_i32 = arith.constant 0 : i32
    %4 = arith.cmpi eq, %arg2, %c0_i32 : i32
    %5 = arith.extui %4 : i1 to i32
    %c0_i32_0 = arith.constant 0 : i32
    %6 = arith.cmpi ne, %5, %c0_i32_0 : i32
    scf.if %6 {
      %cst_9 = arith.constant 0.000000e+00 : f32
      %16 = vector.broadcast %cst_9 : f32 to vector<128x128xf32>
      %c0_10 = arith.constant 0 : index
      %c0_11 = arith.constant 0 : index
      %17 = vector.load %arg9[%c0_10, %c0_11] : memref<128x128xf32, #tpu.memory_space<vmem>>, vector<128x128xf32>
      tpu.vector_store %arg9[%c0_10, %c0_11], %16 {strides = array<i32>} : memref<128x128xf32, #tpu.memory_space<vmem>>, vector<128x128xf32>,
    } else {
    }
    %c0 = arith.constant 0 : index
    %c0_1 = arith.constant 0 : index
    %7 = vector.load %arg9[%c0, %c0_1] : memref<128x128xf32, #tpu.memory_space<vmem>>, vector<128x128xf32>
    %c0_2 = arith.constant 0 : index
    %c0_3 = arith.constant 0 : index
    %8 = vector.load %arg3[%c0_2, %c0_3] : memref<128x128xbf16, #tpu.memory_space<vmem>>, vector<128x128xbf16>
    %c0_4 = arith.constant 0 : index
    %c0_5 = arith.constant 0 : index
    %9 = vector.load %arg4[%c0_4, %c0_5] : memref<128x128xbf16, #tpu.memory_space<vmem>>, vector<128x128xbf16>
    %cst = arith.constant dense<0.000000e+00> : vector<128x128xf32>
    %10 = tpu.matmul %8, %9, %cst {dimension_numbers = #tpu.dot_dimension_numbers<[1], [0], [0], [1], [0, 0, 1, 1], [], []>} : vector<128x128xbf16>, vector<128x128xbf16>, vector<128x128xf32> -> vector<128x128xf32>
    %11 = arith.addf %7, %10 : vector<128x128xf32>
    %c0_6 = arith.constant 0 : index
    %c0_7 = arith.constant 0 : index
    %12 = vector.load %arg9[%c0_6, %c0_7] : memref<128x128xf32, #tpu.memory_space<vmem>>, vector<128x128xf32>
    tpu.vector_store %arg9[%c0_6, %c0_7], %11 {strides = array<i32>} : memref<128x128xf32, #tpu.memory_space<vmem>>, vector<128x128xf32>,
    %c4_i32 = arith.constant 4 : i32
    %13 = arith.cmpi eq, %arg2, %c4_i32 : i32
    %14 = arith.extui %13 : i1 to i32
    %c0_i32_8 = arith.constant 0 : i32
    %15 = arith.cmpi ne, %14, %c0_i32_8 : i32
    scf.if %15 {
      %c0_9 = arith.constant 0 : index
      %c0_10 = arith.constant 0 : index
      %16 = vector.load %arg9[%c0_9, %c0_10] : memref<128x128xf32, #tpu.memory_space<vmem>>, vector<128x128xf32>
      %c0_11 = arith.constant 0 : index
      %c0_12 = arith.constant 0 : index
      %17 = vector.load %arg5[%c0_11, %c0_12] : memref<1x128xf32, #tpu.memory_space<vmem>>, vector<1x128xf32>
      %18 = vector.broadcast %17 : vector<1x128xf32> to vector<128x128xf32>
      %19 = arith.addf %16, %18 : vector<128x128xf32>
      %20 = arith.truncf %19 : vector<128x128xf32> to vector<128x128xbf16>
      %c0_13 = arith.constant 0 : index
      %c0_14 = arith.constant 0 : index
      %21 = vector.load %arg6[%c0_13, %c0_14] : memref<128x128xbf16, #tpu.memory_space<vmem>>, vector<128x128xbf16>
      tpu.vector_store %arg6[%c0_13, %c0_14], %20 {strides = array<i32>} : memref<128x128xbf16, #tpu.memory_space<vmem>>, vector<128x128xbf16>,
      %c128_i32_15 = arith.constant 128 : i32
      %22 = vector.broadcast %c128_i32_15 : i32 to vector<128x1xi32>
      %23 = arith.cmpi slt, %3, %22 : vector<128x1xi32>
      %cst_16 = arith.constant 0.000000e+00 : f32
      %24 = vector.shape_cast %23 : vector<128x1xi1> to vector<128x1xi1>
      %25 = vector.broadcast %24 : vector<128x1xi1> to vector<128x128xi1>
      %26 = vector.broadcast %cst_16 : f32 to vector<128x128xf32>
      %27 = arith.select %25, %19, %26 : vector<128x128xi1>, vector<128x128xf32>
      %cst_17 = arith.constant dense<0.000000e+00> : vector<128xf32>
      %28 = vector.multi_reduction <add>, %27, %cst_17 [0] : vector<128x128xf32> to vector<128xf32>
      %29 = vector.shape_cast %28 : vector<128xf32> to vector<1x128xf32>
      %30 = arith.mulf %27, %27 : vector<128x128xf32>
      %cst_18 = arith.constant dense<0.000000e+00> : vector<128xf32>
      %31 = vector.multi_reduction <add>, %30, %cst_18 [0] : vector<128x128xf32> to vector<128xf32>
      %32 = vector.shape_cast %31 : vector<128xf32> to vector<1x128xf32>
      %33 = vector.shape_cast %29 : vector<1x128xf32> to vector<1x128xf32>
      %34 = vector.broadcast %33 : vector<1x128xf32> to vector<8x128xf32>
      %c0_19 = arith.constant 0 : index
      %c0_20 = arith.constant 0 : index
      %35 = vector.load %arg7[%c0_19, %c0_20] : memref<8x128xf32, #tpu.memory_space<vmem>>, vector<8x128xf32>
      tpu.vector_store %arg7[%c0_19, %c0_20], %34 {strides = array<i32>} : memref<8x128xf32, #tpu.memory_space<vmem>>, vector<8x128xf32>,
      %36 = vector.shape_cast %32 : vector<1x128xf32> to vector<1x128xf32>
      %37 = vector.broadcast %36 : vector<1x128xf32> to vector<8x128xf32>
      %c0_21 = arith.constant 0 : index
      %c0_22 = arith.constant 0 : index
      %38 = vector.load %arg8[%c0_21, %c0_22] : memref<8x128xf32, #tpu.memory_space<vmem>>, vector<8x128xf32>
      tpu.vector_store %arg8[%c0_21, %c0_22], %37 {strides = array<i32>} : memref<8x128xf32, #tpu.memory_space<vmem>>, vector<8x128xf32>,
    } else {
    }
    return
  }
  func.func @transform_0(%arg0: i32, %arg1: i32, %arg2: i32) -> (i32, i32) {
    %c0_i32 = arith.constant 0 : i32
    return %arg0, %arg2 : i32, i32
  }
  func.func @transform_1(%arg0: i32, %arg1: i32, %arg2: i32) -> (i32, i32) {
    %c0_i32 = arith.constant 0 : i32
    return %arg2, %arg1 : i32, i32
  }
  func.func @transform_2(%arg0: i32, %arg1: i32, %arg2: i32) -> (i32, i32) {
    %c0_i32 = arith.constant 0 : i32
    %c0_i32_0 = arith.constant 0 : i32
    return %c0_i32, %arg1 : i32, i32
  }
  func.func @transform_3(%arg0: i32, %arg1: i32, %arg2: i32) -> (i32, i32) {
    %c0_i32 = arith.constant 0 : i32
    return %arg0, %arg1 : i32, i32
  }
  func.func @transform_4(%arg0: i32, %arg1: i32, %arg2: i32) -> (i32, i32) {
    %c0_i32 = arith.constant 0 : i32
    return %arg0, %arg1 : i32, i32
  }
  func.func @transform_5(%arg0: i32, %arg1: i32, %arg2: i32) -> (i32, i32) {
    %c0_i32 = arith.constant 0 : i32
    return %arg0, %arg1 : i32, i32
  }
}

module attributes {stable_mosaic.version = 11 : i64} {
  func.func @_bn_swish_kernel(%arg0: i32, %arg1: memref<128x128xbf16, #tpu.memory_space<vmem>>, %arg2: memref<1x128xf32, #tpu.memory_space<vmem>>, %arg3: memref<1x128xf32, #tpu.memory_space<vmem>>, %arg4: memref<128x128xbf16, #tpu.memory_space<vmem>>) attributes {dimension_semantics = [#tpu.dimension_semantics<parallel>], iteration_bounds = array<i64: 1>, scalar_prefetch = 0 : i64, scratch_operands = 0 : i64, tpu.core_type = #tpu.core_type<tc>, window_params = [{transform_indices = @transform_0, window_bounds = array<i64: 128, 128>}, {pipeline_mode = #tpu.pipeline_mode<synchronous>, transform_indices = @transform_1, window_bounds = array<i64: 1, 128>}, {pipeline_mode = #tpu.pipeline_mode<synchronous>, transform_indices = @transform_2, window_bounds = array<i64: 1, 128>}, {transform_indices = @transform_3, window_bounds = array<i64: 128, 128>}]} {
    %c0 = arith.constant 0 : index
    %c0_0 = arith.constant 0 : index
    %0 = vector.load %arg1[%c0, %c0_0] : memref<128x128xbf16, #tpu.memory_space<vmem>>, vector<128x128xbf16>
    %1 = arith.extf %0 : vector<128x128xbf16> to vector<128x128xf32>
    %c0_1 = arith.constant 0 : index
    %c0_2 = arith.constant 0 : index
    %2 = vector.load %arg2[%c0_1, %c0_2] : memref<1x128xf32, #tpu.memory_space<vmem>>, vector<1x128xf32>
    %3 = vector.broadcast %2 : vector<1x128xf32> to vector<128x128xf32>
    %4 = arith.mulf %1, %3 : vector<128x128xf32>
    %c0_3 = arith.constant 0 : index
    %c0_4 = arith.constant 0 : index
    %5 = vector.load %arg3[%c0_3, %c0_4] : memref<1x128xf32, #tpu.memory_space<vmem>>, vector<1x128xf32>
    %6 = vector.broadcast %5 : vector<1x128xf32> to vector<128x128xf32>
    %7 = arith.addf %4, %6 : vector<128x128xf32>
    %8 = arith.negf %7 : vector<128x128xf32>
    %9 = math.exp %8 : vector<128x128xf32>
    %cst = arith.constant 1.000000e+00 : f32
    %10 = vector.broadcast %cst : f32 to vector<128x128xf32>
    %11 = arith.addf %10, %9 : vector<128x128xf32>
    %12 = arith.divf %10, %11 : vector<128x128xf32>
    %13 = arith.mulf %7, %12 : vector<128x128xf32>
    %14 = arith.truncf %13 : vector<128x128xf32> to vector<128x128xbf16>
    %c0_5 = arith.constant 0 : index
    %c0_6 = arith.constant 0 : index
    %15 = vector.load %arg4[%c0_5, %c0_6] : memref<128x128xbf16, #tpu.memory_space<vmem>>, vector<128x128xbf16>
    tpu.vector_store %arg4[%c0_5, %c0_6], %14 {strides = array<i32>} : memref<128x128xbf16, #tpu.memory_space<vmem>>, vector<128x128xbf16>,
    return
  }
  func.func @transform_0(%arg0: i32) -> (i32, i32) {
    %c0_i32 = arith.constant 0 : i32
    %c0_i32_0 = arith.constant 0 : i32
    return %arg0, %c0_i32 : i32, i32
  }
  func.func @transform_1(%arg0: i32) -> (i32, i32) {
    %c0_i32 = arith.constant 0 : i32
    %c0_i32_0 = arith.constant 0 : i32
    %c0_i32_1 = arith.constant 0 : i32
    return %c0_i32, %c0_i32_0 : i32, i32
  }
  func.func @transform_2(%arg0: i32) -> (i32, i32) {
    %c0_i32 = arith.constant 0 : i32
    %c0_i32_0 = arith.constant 0 : i32
    %c0_i32_1 = arith.constant 0 : i32
    return %c0_i32, %c0_i32_0 : i32, i32
  }
  func.func @transform_3(%arg0: i32) -> (i32, i32) {
    %c0_i32 = arith.constant 0 : i32
    %c0_i32_0 = arith.constant 0 : i32
    return %arg0, %c0_i32 : i32, i32
  }
}

module attributes {stable_mosaic.version = 11 : i64} {
  func.func @kernel(%arg0: i32, %arg1: i32, %arg2: i32, %arg3: memref<32x384xbf16, #tpu.memory_space<vmem>>, %arg4: memref<384x128xbf16, #tpu.memory_space<vmem>>, %arg5: memref<1x128xf32, #tpu.memory_space<vmem>>, %arg6: memref<32x128xbf16, #tpu.memory_space<vmem>>, %arg7: memref<8x128xf32, #tpu.memory_space<vmem>>, %arg8: memref<8x128xf32, #tpu.memory_space<vmem>>, %arg9: memref<32x128xf32, #tpu.memory_space<vmem>>) attributes {dimension_semantics = [#tpu.dimension_semantics<parallel>, #tpu.dimension_semantics<parallel>, #tpu.dimension_semantics<arbitrary>], iteration_bounds = array<i64: 1, 1, 3>, scalar_prefetch = 0 : i64, scratch_operands = 1 : i64, tpu.core_type = #tpu.core_type<tc>, window_params = [{transform_indices = @transform_0, window_bounds = array<i64: 32, 384>}, {transform_indices = @transform_1, window_bounds = array<i64: 384, 128>}, {transform_indices = @transform_2, window_bounds = array<i64: 1, 128>}, {transform_indices = @transform_3, window_bounds = array<i64: 32, 128>}, {transform_indices = @transform_4, window_bounds = array<i64: 8, 128>}, {transform_indices = @transform_5, window_bounds = array<i64: 8, 128>}]} {
    %c32_i32 = arith.constant 32 : i32
    %0 = arith.muli %arg0, %c32_i32 : i32
    %1 = tpu.iota {dimensions = array<i32: 0>} : vector<32x1xi32>
    %2 = vector.broadcast %0 : i32 to vector<32x1xi32>
    %3 = arith.addi %2, %1 : vector<32x1xi32>
    %c0_i32 = arith.constant 0 : i32
    %4 = arith.cmpi eq, %arg2, %c0_i32 : i32
    %5 = arith.extui %4 : i1 to i32
    %c0_i32_0 = arith.constant 0 : i32
    %6 = arith.cmpi ne, %5, %c0_i32_0 : i32
    scf.if %6 {
      %cst_9 = arith.constant 0.000000e+00 : f32
      %16 = vector.broadcast %cst_9 : f32 to vector<32x128xf32>
      %c0_10 = arith.constant 0 : index
      %c0_11 = arith.constant 0 : index
      %17 = vector.load %arg9[%c0_10, %c0_11] : memref<32x128xf32, #tpu.memory_space<vmem>>, vector<32x128xf32>
      tpu.vector_store %arg9[%c0_10, %c0_11], %16 {strides = array<i32>} : memref<32x128xf32, #tpu.memory_space<vmem>>, vector<32x128xf32>,
    } else {
    }
    %c0 = arith.constant 0 : index
    %c0_1 = arith.constant 0 : index
    %7 = vector.load %arg9[%c0, %c0_1] : memref<32x128xf32, #tpu.memory_space<vmem>>, vector<32x128xf32>
    %c0_2 = arith.constant 0 : index
    %c0_3 = arith.constant 0 : index
    %8 = vector.load %arg3[%c0_2, %c0_3] : memref<32x384xbf16, #tpu.memory_space<vmem>>, vector<32x384xbf16>
    %c0_4 = arith.constant 0 : index
    %c0_5 = arith.constant 0 : index
    %9 = vector.load %arg4[%c0_4, %c0_5] : memref<384x128xbf16, #tpu.memory_space<vmem>>, vector<384x128xbf16>
    %cst = arith.constant dense<0.000000e+00> : vector<32x128xf32>
    %10 = tpu.matmul %8, %9, %cst {dimension_numbers = #tpu.dot_dimension_numbers<[1], [0], [0], [1], [0, 0, 1, 1], [], []>} : vector<32x384xbf16>, vector<384x128xbf16>, vector<32x128xf32> -> vector<32x128xf32>
    %11 = arith.addf %7, %10 : vector<32x128xf32>
    %c0_6 = arith.constant 0 : index
    %c0_7 = arith.constant 0 : index
    %12 = vector.load %arg9[%c0_6, %c0_7] : memref<32x128xf32, #tpu.memory_space<vmem>>, vector<32x128xf32>
    tpu.vector_store %arg9[%c0_6, %c0_7], %11 {strides = array<i32>} : memref<32x128xf32, #tpu.memory_space<vmem>>, vector<32x128xf32>,
    %c2_i32 = arith.constant 2 : i32
    %13 = arith.cmpi eq, %arg2, %c2_i32 : i32
    %14 = arith.extui %13 : i1 to i32
    %c0_i32_8 = arith.constant 0 : i32
    %15 = arith.cmpi ne, %14, %c0_i32_8 : i32
    scf.if %15 {
      %c0_9 = arith.constant 0 : index
      %c0_10 = arith.constant 0 : index
      %16 = vector.load %arg9[%c0_9, %c0_10] : memref<32x128xf32, #tpu.memory_space<vmem>>, vector<32x128xf32>
      %c0_11 = arith.constant 0 : index
      %c0_12 = arith.constant 0 : index
      %17 = vector.load %arg5[%c0_11, %c0_12] : memref<1x128xf32, #tpu.memory_space<vmem>>, vector<1x128xf32>
      %18 = vector.broadcast %17 : vector<1x128xf32> to vector<32x128xf32>
      %19 = arith.addf %16, %18 : vector<32x128xf32>
      %20 = arith.truncf %19 : vector<32x128xf32> to vector<32x128xbf16>
      %c0_13 = arith.constant 0 : index
      %c0_14 = arith.constant 0 : index
      %21 = vector.load %arg6[%c0_13, %c0_14] : memref<32x128xbf16, #tpu.memory_space<vmem>>, vector<32x128xbf16>
      tpu.vector_store %arg6[%c0_13, %c0_14], %20 {strides = array<i32>} : memref<32x128xbf16, #tpu.memory_space<vmem>>, vector<32x128xbf16>,
      %c32_i32_15 = arith.constant 32 : i32
      %22 = vector.broadcast %c32_i32_15 : i32 to vector<32x1xi32>
      %23 = arith.cmpi slt, %3, %22 : vector<32x1xi32>
      %cst_16 = arith.constant 0.000000e+00 : f32
      %24 = vector.shape_cast %23 : vector<32x1xi1> to vector<32x1xi1>
      %25 = vector.broadcast %24 : vector<32x1xi1> to vector<32x128xi1>
      %26 = vector.broadcast %cst_16 : f32 to vector<32x128xf32>
      %27 = arith.select %25, %19, %26 : vector<32x128xi1>, vector<32x128xf32>
      %cst_17 = arith.constant dense<0.000000e+00> : vector<128xf32>
      %28 = vector.multi_reduction <add>, %27, %cst_17 [0] : vector<32x128xf32> to vector<128xf32>
      %29 = vector.shape_cast %28 : vector<128xf32> to vector<1x128xf32>
      %30 = arith.mulf %27, %27 : vector<32x128xf32>
      %cst_18 = arith.constant dense<0.000000e+00> : vector<128xf32>
      %31 = vector.multi_reduction <add>, %30, %cst_18 [0] : vector<32x128xf32> to vector<128xf32>
      %32 = vector.shape_cast %31 : vector<128xf32> to vector<1x128xf32>
      %33 = vector.shape_cast %29 : vector<1x128xf32> to vector<1x128xf32>
      %34 = vector.broadcast %33 : vector<1x128xf32> to vector<8x128xf32>
      %c0_19 = arith.constant 0 : index
      %c0_20 = arith.constant 0 : index
      %35 = vector.load %arg7[%c0_19, %c0_20] : memref<8x128xf32, #tpu.memory_space<vmem>>, vector<8x128xf32>
      tpu.vector_store %arg7[%c0_19, %c0_20], %34 {strides = array<i32>} : memref<8x128xf32, #tpu.memory_space<vmem>>, vector<8x128xf32>,
      %36 = vector.shape_cast %32 : vector<1x128xf32> to vector<1x128xf32>
      %37 = vector.broadcast %36 : vector<1x128xf32> to vector<8x128xf32>
      %c0_21 = arith.constant 0 : index
      %c0_22 = arith.constant 0 : index
      %38 = vector.load %arg8[%c0_21, %c0_22] : memref<8x128xf32, #tpu.memory_space<vmem>>, vector<8x128xf32>
      tpu.vector_store %arg8[%c0_21, %c0_22], %37 {strides = array<i32>} : memref<8x128xf32, #tpu.memory_space<vmem>>, vector<8x128xf32>,
    } else {
    }
    return
  }
  func.func @transform_0(%arg0: i32, %arg1: i32, %arg2: i32) -> (i32, i32) {
    %c0_i32 = arith.constant 0 : i32
    return %arg0, %arg2 : i32, i32
  }
  func.func @transform_1(%arg0: i32, %arg1: i32, %arg2: i32) -> (i32, i32) {
    %c0_i32 = arith.constant 0 : i32
    return %arg2, %arg1 : i32, i32
  }
  func.func @transform_2(%arg0: i32, %arg1: i32, %arg2: i32) -> (i32, i32) {
    %c0_i32 = arith.constant 0 : i32
    %c0_i32_0 = arith.constant 0 : i32
    return %c0_i32, %arg1 : i32, i32
  }
  func.func @transform_3(%arg0: i32, %arg1: i32, %arg2: i32) -> (i32, i32) {
    %c0_i32 = arith.constant 0 : i32
    return %arg0, %arg1 : i32, i32
  }
  func.func @transform_4(%arg0: i32, %arg1: i32, %arg2: i32) -> (i32, i32) {
    %c0_i32 = arith.constant 0 : i32
    return %arg0, %arg1 : i32, i32
  }
  func.func @transform_5(%arg0: i32, %arg1: i32, %arg2: i32) -> (i32, i32) {
    %c0_i32 = arith.constant 0 : i32
    return %arg0, %arg1 : i32, i32
  }
}

module attributes {stable_mosaic.version = 11 : i64} {
  func.func @_bn_swish_kernel(%arg0: i32, %arg1: memref<32x128xbf16, #tpu.memory_space<vmem>>, %arg2: memref<1x128xf32, #tpu.memory_space<vmem>>, %arg3: memref<1x128xf32, #tpu.memory_space<vmem>>, %arg4: memref<32x128xbf16, #tpu.memory_space<vmem>>) attributes {dimension_semantics = [#tpu.dimension_semantics<parallel>], iteration_bounds = array<i64: 1>, scalar_prefetch = 0 : i64, scratch_operands = 0 : i64, tpu.core_type = #tpu.core_type<tc>, window_params = [{transform_indices = @transform_0, window_bounds = array<i64: 32, 128>}, {pipeline_mode = #tpu.pipeline_mode<synchronous>, transform_indices = @transform_1, window_bounds = array<i64: 1, 128>}, {pipeline_mode = #tpu.pipeline_mode<synchronous>, transform_indices = @transform_2, window_bounds = array<i64: 1, 128>}, {transform_indices = @transform_3, window_bounds = array<i64: 32, 128>}]} {
    %c0 = arith.constant 0 : index
    %c0_0 = arith.constant 0 : index
    %0 = vector.load %arg1[%c0, %c0_0] : memref<32x128xbf16, #tpu.memory_space<vmem>>, vector<32x128xbf16>
    %1 = arith.extf %0 : vector<32x128xbf16> to vector<32x128xf32>
    %c0_1 = arith.constant 0 : index
    %c0_2 = arith.constant 0 : index
    %2 = vector.load %arg2[%c0_1, %c0_2] : memref<1x128xf32, #tpu.memory_space<vmem>>, vector<1x128xf32>
    %3 = vector.broadcast %2 : vector<1x128xf32> to vector<32x128xf32>
    %4 = arith.mulf %1, %3 : vector<32x128xf32>
    %c0_3 = arith.constant 0 : index
    %c0_4 = arith.constant 0 : index
    %5 = vector.load %arg3[%c0_3, %c0_4] : memref<1x128xf32, #tpu.memory_space<vmem>>, vector<1x128xf32>
    %6 = vector.broadcast %5 : vector<1x128xf32> to vector<32x128xf32>
    %7 = arith.addf %4, %6 : vector<32x128xf32>
    %8 = arith.negf %7 : vector<32x128xf32>
    %9 = math.exp %8 : vector<32x128xf32>
    %cst = arith.constant 1.000000e+00 : f32
    %10 = vector.broadcast %cst : f32 to vector<32x128xf32>
    %11 = arith.addf %10, %9 : vector<32x128xf32>
    %12 = arith.divf %10, %11 : vector<32x128xf32>
    %13 = arith.mulf %7, %12 : vector<32x128xf32>
    %14 = arith.truncf %13 : vector<32x128xf32> to vector<32x128xbf16>
    %c0_5 = arith.constant 0 : index
    %c0_6 = arith.constant 0 : index
    %15 = vector.load %arg4[%c0_5, %c0_6] : memref<32x128xbf16, #tpu.memory_space<vmem>>, vector<32x128xbf16>
    tpu.vector_store %arg4[%c0_5, %c0_6], %14 {strides = array<i32>} : memref<32x128xbf16, #tpu.memory_space<vmem>>, vector<32x128xbf16>,
    return
  }
  func.func @transform_0(%arg0: i32) -> (i32, i32) {
    %c0_i32 = arith.constant 0 : i32
    %c0_i32_0 = arith.constant 0 : i32
    return %arg0, %c0_i32 : i32, i32
  }
  func.func @transform_1(%arg0: i32) -> (i32, i32) {
    %c0_i32 = arith.constant 0 : i32
    %c0_i32_0 = arith.constant 0 : i32
    %c0_i32_1 = arith.constant 0 : i32
    return %c0_i32, %c0_i32_0 : i32, i32
  }
  func.func @transform_2(%arg0: i32) -> (i32, i32) {
    %c0_i32 = arith.constant 0 : i32
    %c0_i32_0 = arith.constant 0 : i32
    %c0_i32_1 = arith.constant 0 : i32
    return %c0_i32, %c0_i32_0 : i32, i32
  }
  func.func @transform_3(%arg0: i32) -> (i32, i32) {
    %c0_i32 = arith.constant 0 : i32
    %c0_i32_0 = arith.constant 0 : i32
    return %arg0, %c0_i32 : i32, i32
  }
}

module attributes {stable_mosaic.version = 11 : i64} {
  func.func @kernel(%arg0: i32, %arg1: i32, %arg2: i32, %arg3: memref<32x384xbf16, #tpu.memory_space<vmem>>, %arg4: memref<384x256xbf16, #tpu.memory_space<vmem>>, %arg5: memref<1x256xf32, #tpu.memory_space<vmem>>, %arg6: memref<32x256xbf16, #tpu.memory_space<vmem>>, %arg7: memref<8x256xf32, #tpu.memory_space<vmem>>, %arg8: memref<8x256xf32, #tpu.memory_space<vmem>>, %arg9: memref<32x256xf32, #tpu.memory_space<vmem>>) attributes {dimension_semantics = [#tpu.dimension_semantics<parallel>, #tpu.dimension_semantics<parallel>, #tpu.dimension_semantics<arbitrary>], iteration_bounds = array<i64: 1, 1, 3>, scalar_prefetch = 0 : i64, scratch_operands = 1 : i64, tpu.core_type = #tpu.core_type<tc>, window_params = [{transform_indices = @transform_0, window_bounds = array<i64: 32, 384>}, {transform_indices = @transform_1, window_bounds = array<i64: 384, 256>}, {transform_indices = @transform_2, window_bounds = array<i64: 1, 256>}, {transform_indices = @transform_3, window_bounds = array<i64: 32, 256>}, {transform_indices = @transform_4, window_bounds = array<i64: 8, 256>}, {transform_indices = @transform_5, window_bounds = array<i64: 8, 256>}]} {
    %c32_i32 = arith.constant 32 : i32
    %0 = arith.muli %arg0, %c32_i32 : i32
    %1 = tpu.iota {dimensions = array<i32: 0>} : vector<32x1xi32>
    %2 = vector.broadcast %0 : i32 to vector<32x1xi32>
    %3 = arith.addi %2, %1 : vector<32x1xi32>
    %c0_i32 = arith.constant 0 : i32
    %4 = arith.cmpi eq, %arg2, %c0_i32 : i32
    %5 = arith.extui %4 : i1 to i32
    %c0_i32_0 = arith.constant 0 : i32
    %6 = arith.cmpi ne, %5, %c0_i32_0 : i32
    scf.if %6 {
      %cst_9 = arith.constant 0.000000e+00 : f32
      %16 = vector.broadcast %cst_9 : f32 to vector<32x256xf32>
      %c0_10 = arith.constant 0 : index
      %c0_11 = arith.constant 0 : index
      %17 = vector.load %arg9[%c0_10, %c0_11] : memref<32x256xf32, #tpu.memory_space<vmem>>, vector<32x256xf32>
      tpu.vector_store %arg9[%c0_10, %c0_11], %16 {strides = array<i32>} : memref<32x256xf32, #tpu.memory_space<vmem>>, vector<32x256xf32>,
    } else {
    }
    %c0 = arith.constant 0 : index
    %c0_1 = arith.constant 0 : index
    %7 = vector.load %arg9[%c0, %c0_1] : memref<32x256xf32, #tpu.memory_space<vmem>>, vector<32x256xf32>
    %c0_2 = arith.constant 0 : index
    %c0_3 = arith.constant 0 : index
    %8 = vector.load %arg3[%c0_2, %c0_3] : memref<32x384xbf16, #tpu.memory_space<vmem>>, vector<32x384xbf16>
    %c0_4 = arith.constant 0 : index
    %c0_5 = arith.constant 0 : index
    %9 = vector.load %arg4[%c0_4, %c0_5] : memref<384x256xbf16, #tpu.memory_space<vmem>>, vector<384x256xbf16>
    %cst = arith.constant dense<0.000000e+00> : vector<32x256xf32>
    %10 = tpu.matmul %8, %9, %cst {dimension_numbers = #tpu.dot_dimension_numbers<[1], [0], [0], [1], [0, 0, 1, 1], [], []>} : vector<32x384xbf16>, vector<384x256xbf16>, vector<32x256xf32> -> vector<32x256xf32>
    %11 = arith.addf %7, %10 : vector<32x256xf32>
    %c0_6 = arith.constant 0 : index
    %c0_7 = arith.constant 0 : index
    %12 = vector.load %arg9[%c0_6, %c0_7] : memref<32x256xf32, #tpu.memory_space<vmem>>, vector<32x256xf32>
    tpu.vector_store %arg9[%c0_6, %c0_7], %11 {strides = array<i32>} : memref<32x256xf32, #tpu.memory_space<vmem>>, vector<32x256xf32>,
    %c2_i32 = arith.constant 2 : i32
    %13 = arith.cmpi eq, %arg2, %c2_i32 : i32
    %14 = arith.extui %13 : i1 to i32
    %c0_i32_8 = arith.constant 0 : i32
    %15 = arith.cmpi ne, %14, %c0_i32_8 : i32
    scf.if %15 {
      %c0_9 = arith.constant 0 : index
      %c0_10 = arith.constant 0 : index
      %16 = vector.load %arg9[%c0_9, %c0_10] : memref<32x256xf32, #tpu.memory_space<vmem>>, vector<32x256xf32>
      %c0_11 = arith.constant 0 : index
      %c0_12 = arith.constant 0 : index
      %17 = vector.load %arg5[%c0_11, %c0_12] : memref<1x256xf32, #tpu.memory_space<vmem>>, vector<1x256xf32>
      %18 = vector.broadcast %17 : vector<1x256xf32> to vector<32x256xf32>
      %19 = arith.addf %16, %18 : vector<32x256xf32>
      %20 = arith.truncf %19 : vector<32x256xf32> to vector<32x256xbf16>
      %c0_13 = arith.constant 0 : index
      %c0_14 = arith.constant 0 : index
      %21 = vector.load %arg6[%c0_13, %c0_14] : memref<32x256xbf16, #tpu.memory_space<vmem>>, vector<32x256xbf16>
      tpu.vector_store %arg6[%c0_13, %c0_14], %20 {strides = array<i32>} : memref<32x256xbf16, #tpu.memory_space<vmem>>, vector<32x256xbf16>,
      %c32_i32_15 = arith.constant 32 : i32
      %22 = vector.broadcast %c32_i32_15 : i32 to vector<32x1xi32>
      %23 = arith.cmpi slt, %3, %22 : vector<32x1xi32>
      %cst_16 = arith.constant 0.000000e+00 : f32
      %24 = vector.shape_cast %23 : vector<32x1xi1> to vector<32x1xi1>
      %25 = vector.broadcast %24 : vector<32x1xi1> to vector<32x256xi1>
      %26 = vector.broadcast %cst_16 : f32 to vector<32x256xf32>
      %27 = arith.select %25, %19, %26 : vector<32x256xi1>, vector<32x256xf32>
      %cst_17 = arith.constant dense<0.000000e+00> : vector<256xf32>
      %28 = vector.multi_reduction <add>, %27, %cst_17 [0] : vector<32x256xf32> to vector<256xf32>
      %29 = vector.shape_cast %28 : vector<256xf32> to vector<1x256xf32>
      %30 = arith.mulf %27, %27 : vector<32x256xf32>
      %cst_18 = arith.constant dense<0.000000e+00> : vector<256xf32>
      %31 = vector.multi_reduction <add>, %30, %cst_18 [0] : vector<32x256xf32> to vector<256xf32>
      %32 = vector.shape_cast %31 : vector<256xf32> to vector<1x256xf32>
      %33 = vector.shape_cast %29 : vector<1x256xf32> to vector<1x256xf32>
      %34 = vector.broadcast %33 : vector<1x256xf32> to vector<8x256xf32>
      %c0_19 = arith.constant 0 : index
      %c0_20 = arith.constant 0 : index
      %35 = vector.load %arg7[%c0_19, %c0_20] : memref<8x256xf32, #tpu.memory_space<vmem>>, vector<8x256xf32>
      tpu.vector_store %arg7[%c0_19, %c0_20], %34 {strides = array<i32>} : memref<8x256xf32, #tpu.memory_space<vmem>>, vector<8x256xf32>,
      %36 = vector.shape_cast %32 : vector<1x256xf32> to vector<1x256xf32>
      %37 = vector.broadcast %36 : vector<1x256xf32> to vector<8x256xf32>
      %c0_21 = arith.constant 0 : index
      %c0_22 = arith.constant 0 : index
      %38 = vector.load %arg8[%c0_21, %c0_22] : memref<8x256xf32, #tpu.memory_space<vmem>>, vector<8x256xf32>
      tpu.vector_store %arg8[%c0_21, %c0_22], %37 {strides = array<i32>} : memref<8x256xf32, #tpu.memory_space<vmem>>, vector<8x256xf32>,
    } else {
    }
    return
  }
  func.func @transform_0(%arg0: i32, %arg1: i32, %arg2: i32) -> (i32, i32) {
    %c0_i32 = arith.constant 0 : i32
    return %arg0, %arg2 : i32, i32
  }
  func.func @transform_1(%arg0: i32, %arg1: i32, %arg2: i32) -> (i32, i32) {
    %c0_i32 = arith.constant 0 : i32
    return %arg2, %arg1 : i32, i32
  }
  func.func @transform_2(%arg0: i32, %arg1: i32, %arg2: i32) -> (i32, i32) {
    %c0_i32 = arith.constant 0 : i32
    %c0_i32_0 = arith.constant 0 : i32
    return %c0_i32, %arg1 : i32, i32
  }
  func.func @transform_3(%arg0: i32, %arg1: i32, %arg2: i32) -> (i32, i32) {
    %c0_i32 = arith.constant 0 : i32
    return %arg0, %arg1 : i32, i32
  }
  func.func @transform_4(%arg0: i32, %arg1: i32, %arg2: i32) -> (i32, i32) {
    %c0_i32 = arith.constant 0 : i32
    return %arg0, %arg1 : i32, i32
  }
  func.func @transform_5(%arg0: i32, %arg1: i32, %arg2: i32) -> (i32, i32) {
    %c0_i32 = arith.constant 0 : i32
    return %arg0, %arg1 : i32, i32
  }
}

module attributes {stable_mosaic.version = 11 : i64} {
  func.func @_bn_swish_kernel(%arg0: i32, %arg1: memref<32x256xbf16, #tpu.memory_space<vmem>>, %arg2: memref<1x256xf32, #tpu.memory_space<vmem>>, %arg3: memref<1x256xf32, #tpu.memory_space<vmem>>, %arg4: memref<32x256xbf16, #tpu.memory_space<vmem>>) attributes {dimension_semantics = [#tpu.dimension_semantics<parallel>], iteration_bounds = array<i64: 1>, scalar_prefetch = 0 : i64, scratch_operands = 0 : i64, tpu.core_type = #tpu.core_type<tc>, window_params = [{transform_indices = @transform_0, window_bounds = array<i64: 32, 256>}, {pipeline_mode = #tpu.pipeline_mode<synchronous>, transform_indices = @transform_1, window_bounds = array<i64: 1, 256>}, {pipeline_mode = #tpu.pipeline_mode<synchronous>, transform_indices = @transform_2, window_bounds = array<i64: 1, 256>}, {transform_indices = @transform_3, window_bounds = array<i64: 32, 256>}]} {
    %c0 = arith.constant 0 : index
    %c0_0 = arith.constant 0 : index
    %0 = vector.load %arg1[%c0, %c0_0] : memref<32x256xbf16, #tpu.memory_space<vmem>>, vector<32x256xbf16>
    %1 = arith.extf %0 : vector<32x256xbf16> to vector<32x256xf32>
    %c0_1 = arith.constant 0 : index
    %c0_2 = arith.constant 0 : index
    %2 = vector.load %arg2[%c0_1, %c0_2] : memref<1x256xf32, #tpu.memory_space<vmem>>, vector<1x256xf32>
    %3 = vector.broadcast %2 : vector<1x256xf32> to vector<32x256xf32>
    %4 = arith.mulf %1, %3 : vector<32x256xf32>
    %c0_3 = arith.constant 0 : index
    %c0_4 = arith.constant 0 : index
    %5 = vector.load %arg3[%c0_3, %c0_4] : memref<1x256xf32, #tpu.memory_space<vmem>>, vector<1x256xf32>
    %6 = vector.broadcast %5 : vector<1x256xf32> to vector<32x256xf32>
    %7 = arith.addf %4, %6 : vector<32x256xf32>
    %8 = arith.negf %7 : vector<32x256xf32>
    %9 = math.exp %8 : vector<32x256xf32>
    %cst = arith.constant 1.000000e+00 : f32
    %10 = vector.broadcast %cst : f32 to vector<32x256xf32>
    %11 = arith.addf %10, %9 : vector<32x256xf32>
    %12 = arith.divf %10, %11 : vector<32x256xf32>
    %13 = arith.mulf %7, %12 : vector<32x256xf32>
    %14 = arith.truncf %13 : vector<32x256xf32> to vector<32x256xbf16>
    %c0_5 = arith.constant 0 : index
    %c0_6 = arith.constant 0 : index
    %15 = vector.load %arg4[%c0_5, %c0_6] : memref<32x256xbf16, #tpu.memory_space<vmem>>, vector<32x256xbf16>
    tpu.vector_store %arg4[%c0_5, %c0_6], %14 {strides = array<i32>} : memref<32x256xbf16, #tpu.memory_space<vmem>>, vector<32x256xbf16>,
    return
  }
  func.func @transform_0(%arg0: i32) -> (i32, i32) {
    %c0_i32 = arith.constant 0 : i32
    %c0_i32_0 = arith.constant 0 : i32
    return %arg0, %c0_i32 : i32, i32
  }
  func.func @transform_1(%arg0: i32) -> (i32, i32) {
    %c0_i32 = arith.constant 0 : i32
    %c0_i32_0 = arith.constant 0 : i32
    %c0_i32_1 = arith.constant 0 : i32
    return %c0_i32, %c0_i32_0 : i32, i32
  }
  func.func @transform_2(%arg0: i32) -> (i32, i32) {
    %c0_i32 = arith.constant 0 : i32
    %c0_i32_0 = arith.constant 0 : i32
    %c0_i32_1 = arith.constant 0 : i32
    return %c0_i32, %c0_i32_0 : i32, i32
  }
  func.func @transform_3(%arg0: i32) -> (i32, i32) {
    %c0_i32 = arith.constant 0 : i32
    %c0_i32_0 = arith.constant 0 : i32
    return %arg0, %c0_i32 : i32, i32
  }
}

module attributes {stable_mosaic.version = 11 : i64} {
  func.func @kernel(%arg0: i32, %arg1: i32, %arg2: i32, %arg3: memref<16x256xbf16, #tpu.memory_space<vmem>>, %arg4: memref<256x256xbf16, #tpu.memory_space<vmem>>, %arg5: memref<1x256xf32, #tpu.memory_space<vmem>>, %arg6: memref<16x256xbf16, #tpu.memory_space<vmem>>, %arg7: memref<8x256xf32, #tpu.memory_space<vmem>>, %arg8: memref<8x256xf32, #tpu.memory_space<vmem>>, %arg9: memref<16x256xf32, #tpu.memory_space<vmem>>) attributes {dimension_semantics = [#tpu.dimension_semantics<parallel>, #tpu.dimension_semantics<parallel>, #tpu.dimension_semantics<arbitrary>], iteration_bounds = array<i64: 1, 1, 9>, scalar_prefetch = 0 : i64, scratch_operands = 1 : i64, tpu.core_type = #tpu.core_type<tc>, window_params = [{transform_indices = @transform_0, window_bounds = array<i64: 16, 256>}, {transform_indices = @transform_1, window_bounds = array<i64: 256, 256>}, {transform_indices = @transform_2, window_bounds = array<i64: 1, 256>}, {transform_indices = @transform_3, window_bounds = array<i64: 16, 256>}, {transform_indices = @transform_4, window_bounds = array<i64: 8, 256>}, {transform_indices = @transform_5, window_bounds = array<i64: 8, 256>}]} {
    %c16_i32 = arith.constant 16 : i32
    %0 = arith.muli %arg0, %c16_i32 : i32
    %1 = tpu.iota {dimensions = array<i32: 0>} : vector<16x1xi32>
    %2 = vector.broadcast %0 : i32 to vector<16x1xi32>
    %3 = arith.addi %2, %1 : vector<16x1xi32>
    %c0_i32 = arith.constant 0 : i32
    %4 = arith.cmpi eq, %arg2, %c0_i32 : i32
    %5 = arith.extui %4 : i1 to i32
    %c0_i32_0 = arith.constant 0 : i32
    %6 = arith.cmpi ne, %5, %c0_i32_0 : i32
    scf.if %6 {
      %cst_9 = arith.constant 0.000000e+00 : f32
      %16 = vector.broadcast %cst_9 : f32 to vector<16x256xf32>
      %c0_10 = arith.constant 0 : index
      %c0_11 = arith.constant 0 : index
      %17 = vector.load %arg9[%c0_10, %c0_11] : memref<16x256xf32, #tpu.memory_space<vmem>>, vector<16x256xf32>
      tpu.vector_store %arg9[%c0_10, %c0_11], %16 {strides = array<i32>} : memref<16x256xf32, #tpu.memory_space<vmem>>, vector<16x256xf32>,
    } else {
    }
    %c0 = arith.constant 0 : index
    %c0_1 = arith.constant 0 : index
    %7 = vector.load %arg9[%c0, %c0_1] : memref<16x256xf32, #tpu.memory_space<vmem>>, vector<16x256xf32>
    %c0_2 = arith.constant 0 : index
    %c0_3 = arith.constant 0 : index
    %8 = vector.load %arg3[%c0_2, %c0_3] : memref<16x256xbf16, #tpu.memory_space<vmem>>, vector<16x256xbf16>
    %c0_4 = arith.constant 0 : index
    %c0_5 = arith.constant 0 : index
    %9 = vector.load %arg4[%c0_4, %c0_5] : memref<256x256xbf16, #tpu.memory_space<vmem>>, vector<256x256xbf16>
    %cst = arith.constant dense<0.000000e+00> : vector<16x256xf32>
    %10 = tpu.matmul %8, %9, %cst {dimension_numbers = #tpu.dot_dimension_numbers<[1], [0], [0], [1], [0, 0, 1, 1], [], []>} : vector<16x256xbf16>, vector<256x256xbf16>, vector<16x256xf32> -> vector<16x256xf32>
    %11 = arith.addf %7, %10 : vector<16x256xf32>
    %c0_6 = arith.constant 0 : index
    %c0_7 = arith.constant 0 : index
    %12 = vector.load %arg9[%c0_6, %c0_7] : memref<16x256xf32, #tpu.memory_space<vmem>>, vector<16x256xf32>
    tpu.vector_store %arg9[%c0_6, %c0_7], %11 {strides = array<i32>} : memref<16x256xf32, #tpu.memory_space<vmem>>, vector<16x256xf32>,
    %c8_i32 = arith.constant 8 : i32
    %13 = arith.cmpi eq, %arg2, %c8_i32 : i32
    %14 = arith.extui %13 : i1 to i32
    %c0_i32_8 = arith.constant 0 : i32
    %15 = arith.cmpi ne, %14, %c0_i32_8 : i32
    scf.if %15 {
      %c0_9 = arith.constant 0 : index
      %c0_10 = arith.constant 0 : index
      %16 = vector.load %arg9[%c0_9, %c0_10] : memref<16x256xf32, #tpu.memory_space<vmem>>, vector<16x256xf32>
      %c0_11 = arith.constant 0 : index
      %c0_12 = arith.constant 0 : index
      %17 = vector.load %arg5[%c0_11, %c0_12] : memref<1x256xf32, #tpu.memory_space<vmem>>, vector<1x256xf32>
      %18 = vector.broadcast %17 : vector<1x256xf32> to vector<16x256xf32>
      %19 = arith.addf %16, %18 : vector<16x256xf32>
      %20 = arith.truncf %19 : vector<16x256xf32> to vector<16x256xbf16>
      %c0_13 = arith.constant 0 : index
      %c0_14 = arith.constant 0 : index
      %21 = vector.load %arg6[%c0_13, %c0_14] : memref<16x256xbf16, #tpu.memory_space<vmem>>, vector<16x256xbf16>
      tpu.vector_store %arg6[%c0_13, %c0_14], %20 {strides = array<i32>} : memref<16x256xbf16, #tpu.memory_space<vmem>>, vector<16x256xbf16>,
      %c8_i32_15 = arith.constant 8 : i32
      %22 = vector.broadcast %c8_i32_15 : i32 to vector<16x1xi32>
      %23 = arith.cmpi slt, %3, %22 : vector<16x1xi32>
      %cst_16 = arith.constant 0.000000e+00 : f32
      %24 = vector.shape_cast %23 : vector<16x1xi1> to vector<16x1xi1>
      %25 = vector.broadcast %24 : vector<16x1xi1> to vector<16x256xi1>
      %26 = vector.broadcast %cst_16 : f32 to vector<16x256xf32>
      %27 = arith.select %25, %19, %26 : vector<16x256xi1>, vector<16x256xf32>
      %cst_17 = arith.constant dense<0.000000e+00> : vector<256xf32>
      %28 = vector.multi_reduction <add>, %27, %cst_17 [0] : vector<16x256xf32> to vector<256xf32>
      %29 = vector.shape_cast %28 : vector<256xf32> to vector<1x256xf32>
      %30 = arith.mulf %27, %27 : vector<16x256xf32>
      %cst_18 = arith.constant dense<0.000000e+00> : vector<256xf32>
      %31 = vector.multi_reduction <add>, %30, %cst_18 [0] : vector<16x256xf32> to vector<256xf32>
      %32 = vector.shape_cast %31 : vector<256xf32> to vector<1x256xf32>
      %33 = vector.shape_cast %29 : vector<1x256xf32> to vector<1x256xf32>
      %34 = vector.broadcast %33 : vector<1x256xf32> to vector<8x256xf32>
      %c0_19 = arith.constant 0 : index
      %c0_20 = arith.constant 0 : index
      %35 = vector.load %arg7[%c0_19, %c0_20] : memref<8x256xf32, #tpu.memory_space<vmem>>, vector<8x256xf32>
      tpu.vector_store %arg7[%c0_19, %c0_20], %34 {strides = array<i32>} : memref<8x256xf32, #tpu.memory_space<vmem>>, vector<8x256xf32>,
      %36 = vector.shape_cast %32 : vector<1x256xf32> to vector<1x256xf32>
      %37 = vector.broadcast %36 : vector<1x256xf32> to vector<8x256xf32>
      %c0_21 = arith.constant 0 : index
      %c0_22 = arith.constant 0 : index
      %38 = vector.load %arg8[%c0_21, %c0_22] : memref<8x256xf32, #tpu.memory_space<vmem>>, vector<8x256xf32>
      tpu.vector_store %arg8[%c0_21, %c0_22], %37 {strides = array<i32>} : memref<8x256xf32, #tpu.memory_space<vmem>>, vector<8x256xf32>,
    } else {
    }
    return
  }
  func.func @transform_0(%arg0: i32, %arg1: i32, %arg2: i32) -> (i32, i32) {
    %c0_i32 = arith.constant 0 : i32
    return %arg0, %arg2 : i32, i32
  }
  func.func @transform_1(%arg0: i32, %arg1: i32, %arg2: i32) -> (i32, i32) {
    %c0_i32 = arith.constant 0 : i32
    return %arg2, %arg1 : i32, i32
  }
  func.func @transform_2(%arg0: i32, %arg1: i32, %arg2: i32) -> (i32, i32) {
    %c0_i32 = arith.constant 0 : i32
    %c0_i32_0 = arith.constant 0 : i32
    return %c0_i32, %arg1 : i32, i32
  }
  func.func @transform_3(%arg0: i32, %arg1: i32, %arg2: i32) -> (i32, i32) {
    %c0_i32 = arith.constant 0 : i32
    return %arg0, %arg1 : i32, i32
  }
  func.func @transform_4(%arg0: i32, %arg1: i32, %arg2: i32) -> (i32, i32) {
    %c0_i32 = arith.constant 0 : i32
    return %arg0, %arg1 : i32, i32
  }
  func.func @transform_5(%arg0: i32, %arg1: i32, %arg2: i32) -> (i32, i32) {
    %c0_i32 = arith.constant 0 : i32
    return %arg0, %arg1 : i32, i32
  }
}

module attributes {stable_mosaic.version = 11 : i64} {
  func.func @_bn_swish_kernel(%arg0: i32, %arg1: memref<16x256xbf16, #tpu.memory_space<vmem>>, %arg2: memref<1x256xf32, #tpu.memory_space<vmem>>, %arg3: memref<1x256xf32, #tpu.memory_space<vmem>>, %arg4: memref<16x256xbf16, #tpu.memory_space<vmem>>) attributes {dimension_semantics = [#tpu.dimension_semantics<parallel>], iteration_bounds = array<i64: 1>, scalar_prefetch = 0 : i64, scratch_operands = 0 : i64, tpu.core_type = #tpu.core_type<tc>, window_params = [{transform_indices = @transform_0, window_bounds = array<i64: 16, 256>}, {pipeline_mode = #tpu.pipeline_mode<synchronous>, transform_indices = @transform_1, window_bounds = array<i64: 1, 256>}, {pipeline_mode = #tpu.pipeline_mode<synchronous>, transform_indices = @transform_2, window_bounds = array<i64: 1, 256>}, {transform_indices = @transform_3, window_bounds = array<i64: 16, 256>}]} {
    %c0 = arith.constant 0 : index
    %c0_0 = arith.constant 0 : index
    %0 = vector.load %arg1[%c0, %c0_0] : memref<16x256xbf16, #tpu.memory_space<vmem>>, vector<16x256xbf16>
    %1 = arith.extf %0 : vector<16x256xbf16> to vector<16x256xf32>
    %c0_1 = arith.constant 0 : index
    %c0_2 = arith.constant 0 : index
    %2 = vector.load %arg2[%c0_1, %c0_2] : memref<1x256xf32, #tpu.memory_space<vmem>>, vector<1x256xf32>
    %3 = vector.broadcast %2 : vector<1x256xf32> to vector<16x256xf32>
    %4 = arith.mulf %1, %3 : vector<16x256xf32>
    %c0_3 = arith.constant 0 : index
    %c0_4 = arith.constant 0 : index
    %5 = vector.load %arg3[%c0_3, %c0_4] : memref<1x256xf32, #tpu.memory_space<vmem>>, vector<1x256xf32>
    %6 = vector.broadcast %5 : vector<1x256xf32> to vector<16x256xf32>
    %7 = arith.addf %4, %6 : vector<16x256xf32>
    %8 = arith.negf %7 : vector<16x256xf32>
    %9 = math.exp %8 : vector<16x256xf32>
    %cst = arith.constant 1.000000e+00 : f32
    %10 = vector.broadcast %cst : f32 to vector<16x256xf32>
    %11 = arith.addf %10, %9 : vector<16x256xf32>
    %12 = arith.divf %10, %11 : vector<16x256xf32>
    %13 = arith.mulf %7, %12 : vector<16x256xf32>
    %14 = arith.truncf %13 : vector<16x256xf32> to vector<16x256xbf16>
    %c0_5 = arith.constant 0 : index
    %c0_6 = arith.constant 0 : index
    %15 = vector.load %arg4[%c0_5, %c0_6] : memref<16x256xbf16, #tpu.memory_space<vmem>>, vector<16x256xbf16>
    tpu.vector_store %arg4[%c0_5, %c0_6], %14 {strides = array<i32>} : memref<16x256xbf16, #tpu.memory_space<vmem>>, vector<16x256xbf16>,
    return
  }
  func.func @transform_0(%arg0: i32) -> (i32, i32) {
    %c0_i32 = arith.constant 0 : i32
    %c0_i32_0 = arith.constant 0 : i32
    return %arg0, %c0_i32 : i32, i32
  }
  func.func @transform_1(%arg0: i32) -> (i32, i32) {
    %c0_i32 = arith.constant 0 : i32
    %c0_i32_0 = arith.constant 0 : i32
    %c0_i32_1 = arith.constant 0 : i32
    return %c0_i32, %c0_i32_0 : i32, i32
  }
  func.func @transform_2(%arg0: i32) -> (i32, i32) {
    %c0_i32 = arith.constant 0 : i32
    %c0_i32_0 = arith.constant 0 : i32
    %c0_i32_1 = arith.constant 0 : i32
    return %c0_i32, %c0_i32_0 : i32, i32
  }
  func.func @transform_3(%arg0: i32) -> (i32, i32) {
    %c0_i32 = arith.constant 0 : i32
    %c0_i32_0 = arith.constant 0 : i32
    return %arg0, %c0_i32 : i32, i32
  }
}

module attributes {stable_mosaic.version = 11 : i64} {
  func.func @kernel(%arg0: i32, %arg1: i32, %arg2: i32, %arg3: memref<16x256xbf16, #tpu.memory_space<vmem>>, %arg4: memref<256x512xbf16, #tpu.memory_space<vmem>>, %arg5: memref<1x512xf32, #tpu.memory_space<vmem>>, %arg6: memref<16x512xbf16, #tpu.memory_space<vmem>>, %arg7: memref<8x512xf32, #tpu.memory_space<vmem>>, %arg8: memref<8x512xf32, #tpu.memory_space<vmem>>, %arg9: memref<16x512xf32, #tpu.memory_space<vmem>>) attributes {dimension_semantics = [#tpu.dimension_semantics<parallel>, #tpu.dimension_semantics<parallel>, #tpu.dimension_semantics<arbitrary>], iteration_bounds = array<i64: 1, 1, 9>, scalar_prefetch = 0 : i64, scratch_operands = 1 : i64, tpu.core_type = #tpu.core_type<tc>, window_params = [{transform_indices = @transform_0, window_bounds = array<i64: 16, 256>}, {transform_indices = @transform_1, window_bounds = array<i64: 256, 512>}, {transform_indices = @transform_2, window_bounds = array<i64: 1, 512>}, {transform_indices = @transform_3, window_bounds = array<i64: 16, 512>}, {transform_indices = @transform_4, window_bounds = array<i64: 8, 512>}, {transform_indices = @transform_5, window_bounds = array<i64: 8, 512>}]} {
    %c16_i32 = arith.constant 16 : i32
    %0 = arith.muli %arg0, %c16_i32 : i32
    %1 = tpu.iota {dimensions = array<i32: 0>} : vector<16x1xi32>
    %2 = vector.broadcast %0 : i32 to vector<16x1xi32>
    %3 = arith.addi %2, %1 : vector<16x1xi32>
    %c0_i32 = arith.constant 0 : i32
    %4 = arith.cmpi eq, %arg2, %c0_i32 : i32
    %5 = arith.extui %4 : i1 to i32
    %c0_i32_0 = arith.constant 0 : i32
    %6 = arith.cmpi ne, %5, %c0_i32_0 : i32
    scf.if %6 {
      %cst_9 = arith.constant 0.000000e+00 : f32
      %16 = vector.broadcast %cst_9 : f32 to vector<16x512xf32>
      %c0_10 = arith.constant 0 : index
      %c0_11 = arith.constant 0 : index
      %17 = vector.load %arg9[%c0_10, %c0_11] : memref<16x512xf32, #tpu.memory_space<vmem>>, vector<16x512xf32>
      tpu.vector_store %arg9[%c0_10, %c0_11], %16 {strides = array<i32>} : memref<16x512xf32, #tpu.memory_space<vmem>>, vector<16x512xf32>,
    } else {
    }
    %c0 = arith.constant 0 : index
    %c0_1 = arith.constant 0 : index
    %7 = vector.load %arg9[%c0, %c0_1] : memref<16x512xf32, #tpu.memory_space<vmem>>, vector<16x512xf32>
    %c0_2 = arith.constant 0 : index
    %c0_3 = arith.constant 0 : index
    %8 = vector.load %arg3[%c0_2, %c0_3] : memref<16x256xbf16, #tpu.memory_space<vmem>>, vector<16x256xbf16>
    %c0_4 = arith.constant 0 : index
    %c0_5 = arith.constant 0 : index
    %9 = vector.load %arg4[%c0_4, %c0_5] : memref<256x512xbf16, #tpu.memory_space<vmem>>, vector<256x512xbf16>
    %cst = arith.constant dense<0.000000e+00> : vector<16x512xf32>
    %10 = tpu.matmul %8, %9, %cst {dimension_numbers = #tpu.dot_dimension_numbers<[1], [0], [0], [1], [0, 0, 1, 1], [], []>} : vector<16x256xbf16>, vector<256x512xbf16>, vector<16x512xf32> -> vector<16x512xf32>
    %11 = arith.addf %7, %10 : vector<16x512xf32>
    %c0_6 = arith.constant 0 : index
    %c0_7 = arith.constant 0 : index
    %12 = vector.load %arg9[%c0_6, %c0_7] : memref<16x512xf32, #tpu.memory_space<vmem>>, vector<16x512xf32>
    tpu.vector_store %arg9[%c0_6, %c0_7], %11 {strides = array<i32>} : memref<16x512xf32, #tpu.memory_space<vmem>>, vector<16x512xf32>,
    %c8_i32 = arith.constant 8 : i32
    %13 = arith.cmpi eq, %arg2, %c8_i32 : i32
    %14 = arith.extui %13 : i1 to i32
    %c0_i32_8 = arith.constant 0 : i32
    %15 = arith.cmpi ne, %14, %c0_i32_8 : i32
    scf.if %15 {
      %c0_9 = arith.constant 0 : index
      %c0_10 = arith.constant 0 : index
      %16 = vector.load %arg9[%c0_9, %c0_10] : memref<16x512xf32, #tpu.memory_space<vmem>>, vector<16x512xf32>
      %c0_11 = arith.constant 0 : index
      %c0_12 = arith.constant 0 : index
      %17 = vector.load %arg5[%c0_11, %c0_12] : memref<1x512xf32, #tpu.memory_space<vmem>>, vector<1x512xf32>
      %18 = vector.broadcast %17 : vector<1x512xf32> to vector<16x512xf32>
      %19 = arith.addf %16, %18 : vector<16x512xf32>
      %20 = arith.truncf %19 : vector<16x512xf32> to vector<16x512xbf16>
      %c0_13 = arith.constant 0 : index
      %c0_14 = arith.constant 0 : index
      %21 = vector.load %arg6[%c0_13, %c0_14] : memref<16x512xbf16, #tpu.memory_space<vmem>>, vector<16x512xbf16>
      tpu.vector_store %arg6[%c0_13, %c0_14], %20 {strides = array<i32>} : memref<16x512xbf16, #tpu.memory_space<vmem>>, vector<16x512xbf16>,
      %c8_i32_15 = arith.constant 8 : i32
      %22 = vector.broadcast %c8_i32_15 : i32 to vector<16x1xi32>
      %23 = arith.cmpi slt, %3, %22 : vector<16x1xi32>
      %cst_16 = arith.constant 0.000000e+00 : f32
      %24 = vector.shape_cast %23 : vector<16x1xi1> to vector<16x1xi1>
      %25 = vector.broadcast %24 : vector<16x1xi1> to vector<16x512xi1>
      %26 = vector.broadcast %cst_16 : f32 to vector<16x512xf32>
      %27 = arith.select %25, %19, %26 : vector<16x512xi1>, vector<16x512xf32>
      %cst_17 = arith.constant dense<0.000000e+00> : vector<512xf32>
      %28 = vector.multi_reduction <add>, %27, %cst_17 [0] : vector<16x512xf32> to vector<512xf32>
      %29 = vector.shape_cast %28 : vector<512xf32> to vector<1x512xf32>
      %30 = arith.mulf %27, %27 : vector<16x512xf32>
      %cst_18 = arith.constant dense<0.000000e+00> : vector<512xf32>
      %31 = vector.multi_reduction <add>, %30, %cst_18 [0] : vector<16x512xf32> to vector<512xf32>
      %32 = vector.shape_cast %31 : vector<512xf32> to vector<1x512xf32>
      %33 = vector.shape_cast %29 : vector<1x512xf32> to vector<1x512xf32>
      %34 = vector.broadcast %33 : vector<1x512xf32> to vector<8x512xf32>
      %c0_19 = arith.constant 0 : index
      %c0_20 = arith.constant 0 : index
      %35 = vector.load %arg7[%c0_19, %c0_20] : memref<8x512xf32, #tpu.memory_space<vmem>>, vector<8x512xf32>
      tpu.vector_store %arg7[%c0_19, %c0_20], %34 {strides = array<i32>} : memref<8x512xf32, #tpu.memory_space<vmem>>, vector<8x512xf32>,
      %36 = vector.shape_cast %32 : vector<1x512xf32> to vector<1x512xf32>
      %37 = vector.broadcast %36 : vector<1x512xf32> to vector<8x512xf32>
      %c0_21 = arith.constant 0 : index
      %c0_22 = arith.constant 0 : index
      %38 = vector.load %arg8[%c0_21, %c0_22] : memref<8x512xf32, #tpu.memory_space<vmem>>, vector<8x512xf32>
      tpu.vector_store %arg8[%c0_21, %c0_22], %37 {strides = array<i32>} : memref<8x512xf32, #tpu.memory_space<vmem>>, vector<8x512xf32>,
    } else {
    }
    return
  }
  func.func @transform_0(%arg0: i32, %arg1: i32, %arg2: i32) -> (i32, i32) {
    %c0_i32 = arith.constant 0 : i32
    return %arg0, %arg2 : i32, i32
  }
  func.func @transform_1(%arg0: i32, %arg1: i32, %arg2: i32) -> (i32, i32) {
    %c0_i32 = arith.constant 0 : i32
    return %arg2, %arg1 : i32, i32
  }
  func.func @transform_2(%arg0: i32, %arg1: i32, %arg2: i32) -> (i32, i32) {
    %c0_i32 = arith.constant 0 : i32
    %c0_i32_0 = arith.constant 0 : i32
    return %c0_i32, %arg1 : i32, i32
  }
  func.func @transform_3(%arg0: i32, %arg1: i32, %arg2: i32) -> (i32, i32) {
    %c0_i32 = arith.constant 0 : i32
    return %arg0, %arg1 : i32, i32
  }
  func.func @transform_4(%arg0: i32, %arg1: i32, %arg2: i32) -> (i32, i32) {
    %c0_i32 = arith.constant 0 : i32
    return %arg0, %arg1 : i32, i32
  }
  func.func @transform_5(%arg0: i32, %arg1: i32, %arg2: i32) -> (i32, i32) {
    %c0_i32 = arith.constant 0 : i32
    return %arg0, %arg1 : i32, i32
  }
}

module attributes {stable_mosaic.version = 11 : i64} {
  func.func @_bn_swish_kernel(%arg0: i32, %arg1: memref<16x512xbf16, #tpu.memory_space<vmem>>, %arg2: memref<1x512xf32, #tpu.memory_space<vmem>>, %arg3: memref<1x512xf32, #tpu.memory_space<vmem>>, %arg4: memref<16x512xbf16, #tpu.memory_space<vmem>>) attributes {dimension_semantics = [#tpu.dimension_semantics<parallel>], iteration_bounds = array<i64: 1>, scalar_prefetch = 0 : i64, scratch_operands = 0 : i64, tpu.core_type = #tpu.core_type<tc>, window_params = [{transform_indices = @transform_0, window_bounds = array<i64: 16, 512>}, {pipeline_mode = #tpu.pipeline_mode<synchronous>, transform_indices = @transform_1, window_bounds = array<i64: 1, 512>}, {pipeline_mode = #tpu.pipeline_mode<synchronous>, transform_indices = @transform_2, window_bounds = array<i64: 1, 512>}, {transform_indices = @transform_3, window_bounds = array<i64: 16, 512>}]} {
    %c0 = arith.constant 0 : index
    %c0_0 = arith.constant 0 : index
    %0 = vector.load %arg1[%c0, %c0_0] : memref<16x512xbf16, #tpu.memory_space<vmem>>, vector<16x512xbf16>
    %1 = arith.extf %0 : vector<16x512xbf16> to vector<16x512xf32>
    %c0_1 = arith.constant 0 : index
    %c0_2 = arith.constant 0 : index
    %2 = vector.load %arg2[%c0_1, %c0_2] : memref<1x512xf32, #tpu.memory_space<vmem>>, vector<1x512xf32>
    %3 = vector.broadcast %2 : vector<1x512xf32> to vector<16x512xf32>
    %4 = arith.mulf %1, %3 : vector<16x512xf32>
    %c0_3 = arith.constant 0 : index
    %c0_4 = arith.constant 0 : index
    %5 = vector.load %arg3[%c0_3, %c0_4] : memref<1x512xf32, #tpu.memory_space<vmem>>, vector<1x512xf32>
    %6 = vector.broadcast %5 : vector<1x512xf32> to vector<16x512xf32>
    %7 = arith.addf %4, %6 : vector<16x512xf32>
    %8 = arith.negf %7 : vector<16x512xf32>
    %9 = math.exp %8 : vector<16x512xf32>
    %cst = arith.constant 1.000000e+00 : f32
    %10 = vector.broadcast %cst : f32 to vector<16x512xf32>
    %11 = arith.addf %10, %9 : vector<16x512xf32>
    %12 = arith.divf %10, %11 : vector<16x512xf32>
    %13 = arith.mulf %7, %12 : vector<16x512xf32>
    %14 = arith.truncf %13 : vector<16x512xf32> to vector<16x512xbf16>
    %c0_5 = arith.constant 0 : index
    %c0_6 = arith.constant 0 : index
    %15 = vector.load %arg4[%c0_5, %c0_6] : memref<16x512xbf16, #tpu.memory_space<vmem>>, vector<16x512xbf16>
    tpu.vector_store %arg4[%c0_5, %c0_6], %14 {strides = array<i32>} : memref<16x512xbf16, #tpu.memory_space<vmem>>, vector<16x512xbf16>,
    return
  }
  func.func @transform_0(%arg0: i32) -> (i32, i32) {
    %c0_i32 = arith.constant 0 : i32
    %c0_i32_0 = arith.constant 0 : i32
    return %arg0, %c0_i32 : i32, i32
  }
  func.func @transform_1(%arg0: i32) -> (i32, i32) {
    %c0_i32 = arith.constant 0 : i32
    %c0_i32_0 = arith.constant 0 : i32
    %c0_i32_1 = arith.constant 0 : i32
    return %c0_i32, %c0_i32_0 : i32, i32
  }
  func.func @transform_2(%arg0: i32) -> (i32, i32) {
    %c0_i32 = arith.constant 0 : i32
    %c0_i32_0 = arith.constant 0 : i32
    %c0_i32_1 = arith.constant 0 : i32
    return %c0_i32, %c0_i32_0 : i32, i32
  }
  func.func @transform_3(%arg0: i32) -> (i32, i32) {
    %c0_i32 = arith.constant 0 : i32
    %c0_i32_0 = arith.constant 0 : i32
    return %arg0, %c0_i32 : i32, i32
  }
}

module attributes {stable_mosaic.version = 11 : i64} {
  func.func @kernel(%arg0: i32, %arg1: i32, %arg2: i32, %arg3: memref<16x512xbf16, #tpu.memory_space<vmem>>, %arg4: memref<512x512xbf16, #tpu.memory_space<vmem>>, %arg5: memref<1x512xf32, #tpu.memory_space<vmem>>, %arg6: memref<16x512xbf16, #tpu.memory_space<vmem>>, %arg7: memref<8x512xf32, #tpu.memory_space<vmem>>, %arg8: memref<8x512xf32, #tpu.memory_space<vmem>>, %arg9: memref<16x512xf32, #tpu.memory_space<vmem>>) attributes {dimension_semantics = [#tpu.dimension_semantics<parallel>, #tpu.dimension_semantics<parallel>, #tpu.dimension_semantics<arbitrary>], iteration_bounds = array<i64: 1, 1, 9>, scalar_prefetch = 0 : i64, scratch_operands = 1 : i64, tpu.core_type = #tpu.core_type<tc>, window_params = [{transform_indices = @transform_0, window_bounds = array<i64: 16, 512>}, {transform_indices = @transform_1, window_bounds = array<i64: 512, 512>}, {transform_indices = @transform_2, window_bounds = array<i64: 1, 512>}, {transform_indices = @transform_3, window_bounds = array<i64: 16, 512>}, {transform_indices = @transform_4, window_bounds = array<i64: 8, 512>}, {transform_indices = @transform_5, window_bounds = array<i64: 8, 512>}]} {
    %c16_i32 = arith.constant 16 : i32
    %0 = arith.muli %arg0, %c16_i32 : i32
    %1 = tpu.iota {dimensions = array<i32: 0>} : vector<16x1xi32>
    %2 = vector.broadcast %0 : i32 to vector<16x1xi32>
    %3 = arith.addi %2, %1 : vector<16x1xi32>
    %c0_i32 = arith.constant 0 : i32
    %4 = arith.cmpi eq, %arg2, %c0_i32 : i32
    %5 = arith.extui %4 : i1 to i32
    %c0_i32_0 = arith.constant 0 : i32
    %6 = arith.cmpi ne, %5, %c0_i32_0 : i32
    scf.if %6 {
      %cst_9 = arith.constant 0.000000e+00 : f32
      %16 = vector.broadcast %cst_9 : f32 to vector<16x512xf32>
      %c0_10 = arith.constant 0 : index
      %c0_11 = arith.constant 0 : index
      %17 = vector.load %arg9[%c0_10, %c0_11] : memref<16x512xf32, #tpu.memory_space<vmem>>, vector<16x512xf32>
      tpu.vector_store %arg9[%c0_10, %c0_11], %16 {strides = array<i32>} : memref<16x512xf32, #tpu.memory_space<vmem>>, vector<16x512xf32>,
    } else {
    }
    %c0 = arith.constant 0 : index
    %c0_1 = arith.constant 0 : index
    %7 = vector.load %arg9[%c0, %c0_1] : memref<16x512xf32, #tpu.memory_space<vmem>>, vector<16x512xf32>
    %c0_2 = arith.constant 0 : index
    %c0_3 = arith.constant 0 : index
    %8 = vector.load %arg3[%c0_2, %c0_3] : memref<16x512xbf16, #tpu.memory_space<vmem>>, vector<16x512xbf16>
    %c0_4 = arith.constant 0 : index
    %c0_5 = arith.constant 0 : index
    %9 = vector.load %arg4[%c0_4, %c0_5] : memref<512x512xbf16, #tpu.memory_space<vmem>>, vector<512x512xbf16>
    %cst = arith.constant dense<0.000000e+00> : vector<16x512xf32>
    %10 = tpu.matmul %8, %9, %cst {dimension_numbers = #tpu.dot_dimension_numbers<[1], [0], [0], [1], [0, 0, 1, 1], [], []>} : vector<16x512xbf16>, vector<512x512xbf16>, vector<16x512xf32> -> vector<16x512xf32>
    %11 = arith.addf %7, %10 : vector<16x512xf32>
    %c0_6 = arith.constant 0 : index
    %c0_7 = arith.constant 0 : index
    %12 = vector.load %arg9[%c0_6, %c0_7] : memref<16x512xf32, #tpu.memory_space<vmem>>, vector<16x512xf32>
    tpu.vector_store %arg9[%c0_6, %c0_7], %11 {strides = array<i32>} : memref<16x512xf32, #tpu.memory_space<vmem>>, vector<16x512xf32>,
    %c8_i32 = arith.constant 8 : i32
    %13 = arith.cmpi eq, %arg2, %c8_i32 : i32
    %14 = arith.extui %13 : i1 to i32
    %c0_i32_8 = arith.constant 0 : i32
    %15 = arith.cmpi ne, %14, %c0_i32_8 : i32
    scf.if %15 {
      %c0_9 = arith.constant 0 : index
      %c0_10 = arith.constant 0 : index
      %16 = vector.load %arg9[%c0_9, %c0_10] : memref<16x512xf32, #tpu.memory_space<vmem>>, vector<16x512xf32>
      %c0_11 = arith.constant 0 : index
      %c0_12 = arith.constant 0 : index
      %17 = vector.load %arg5[%c0_11, %c0_12] : memref<1x512xf32, #tpu.memory_space<vmem>>, vector<1x512xf32>
      %18 = vector.broadcast %17 : vector<1x512xf32> to vector<16x512xf32>
      %19 = arith.addf %16, %18 : vector<16x512xf32>
      %20 = arith.truncf %19 : vector<16x512xf32> to vector<16x512xbf16>
      %c0_13 = arith.constant 0 : index
      %c0_14 = arith.constant 0 : index
      %21 = vector.load %arg6[%c0_13, %c0_14] : memref<16x512xbf16, #tpu.memory_space<vmem>>, vector<16x512xbf16>
      tpu.vector_store %arg6[%c0_13, %c0_14], %20 {strides = array<i32>} : memref<16x512xbf16, #tpu.memory_space<vmem>>, vector<16x512xbf16>,
      %c2_i32 = arith.constant 2 : i32
      %22 = vector.broadcast %c2_i32 : i32 to vector<16x1xi32>
      %23 = arith.cmpi slt, %3, %22 : vector<16x1xi32>
      %cst_15 = arith.constant 0.000000e+00 : f32
      %24 = vector.shape_cast %23 : vector<16x1xi1> to vector<16x1xi1>
      %25 = vector.broadcast %24 : vector<16x1xi1> to vector<16x512xi1>
      %26 = vector.broadcast %cst_15 : f32 to vector<16x512xf32>
      %27 = arith.select %25, %19, %26 : vector<16x512xi1>, vector<16x512xf32>
      %cst_16 = arith.constant dense<0.000000e+00> : vector<512xf32>
      %28 = vector.multi_reduction <add>, %27, %cst_16 [0] : vector<16x512xf32> to vector<512xf32>
      %29 = vector.shape_cast %28 : vector<512xf32> to vector<1x512xf32>
      %30 = arith.mulf %27, %27 : vector<16x512xf32>
      %cst_17 = arith.constant dense<0.000000e+00> : vector<512xf32>
      %31 = vector.multi_reduction <add>, %30, %cst_17 [0] : vector<16x512xf32> to vector<512xf32>
      %32 = vector.shape_cast %31 : vector<512xf32> to vector<1x512xf32>
      %33 = vector.shape_cast %29 : vector<1x512xf32> to vector<1x512xf32>
      %34 = vector.broadcast %33 : vector<1x512xf32> to vector<8x512xf32>
      %c0_18 = arith.constant 0 : index
      %c0_19 = arith.constant 0 : index
      %35 = vector.load %arg7[%c0_18, %c0_19] : memref<8x512xf32, #tpu.memory_space<vmem>>, vector<8x512xf32>
      tpu.vector_store %arg7[%c0_18, %c0_19], %34 {strides = array<i32>} : memref<8x512xf32, #tpu.memory_space<vmem>>, vector<8x512xf32>,
      %36 = vector.shape_cast %32 : vector<1x512xf32> to vector<1x512xf32>
      %37 = vector.broadcast %36 : vector<1x512xf32> to vector<8x512xf32>
      %c0_20 = arith.constant 0 : index
      %c0_21 = arith.constant 0 : index
      %38 = vector.load %arg8[%c0_20, %c0_21] : memref<8x512xf32, #tpu.memory_space<vmem>>, vector<8x512xf32>
      tpu.vector_store %arg8[%c0_20, %c0_21], %37 {strides = array<i32>} : memref<8x512xf32, #tpu.memory_space<vmem>>, vector<8x512xf32>,
    } else {
    }
    return
  }
  func.func @transform_0(%arg0: i32, %arg1: i32, %arg2: i32) -> (i32, i32) {
    %c0_i32 = arith.constant 0 : i32
    return %arg0, %arg2 : i32, i32
  }
  func.func @transform_1(%arg0: i32, %arg1: i32, %arg2: i32) -> (i32, i32) {
    %c0_i32 = arith.constant 0 : i32
    return %arg2, %arg1 : i32, i32
  }
  func.func @transform_2(%arg0: i32, %arg1: i32, %arg2: i32) -> (i32, i32) {
    %c0_i32 = arith.constant 0 : i32
    %c0_i32_0 = arith.constant 0 : i32
    return %c0_i32, %arg1 : i32, i32
  }
  func.func @transform_3(%arg0: i32, %arg1: i32, %arg2: i32) -> (i32, i32) {
    %c0_i32 = arith.constant 0 : i32
    return %arg0, %arg1 : i32, i32
  }
  func.func @transform_4(%arg0: i32, %arg1: i32, %arg2: i32) -> (i32, i32) {
    %c0_i32 = arith.constant 0 : i32
    return %arg0, %arg1 : i32, i32
  }
  func.func @transform_5(%arg0: i32, %arg1: i32, %arg2: i32) -> (i32, i32) {
    %c0_i32 = arith.constant 0 : i32
    return %arg0, %arg1 : i32, i32
  }
}

module attributes {stable_mosaic.version = 11 : i64} {
  func.func @kernel(%arg0: i32, %arg1: i32, %arg2: i32, %arg3: memref<16x512xbf16, #tpu.memory_space<vmem>>, %arg4: memref<512x128xbf16, #tpu.memory_space<vmem>>, %arg5: memref<1x128xf32, #tpu.memory_space<vmem>>, %arg6: memref<8x128xf32, #tpu.memory_space<vmem>>, %arg7: memref<16x128xf32, #tpu.memory_space<vmem>>) attributes {dimension_semantics = [#tpu.dimension_semantics<parallel>, #tpu.dimension_semantics<parallel>, #tpu.dimension_semantics<arbitrary>], iteration_bounds = array<i64: 2, 1, 1>, scalar_prefetch = 0 : i64, scratch_operands = 1 : i64, tpu.core_type = #tpu.core_type<tc>, window_params = [{transform_indices = @transform_0, window_bounds = array<i64: 16, 512>}, {transform_indices = @transform_1, window_bounds = array<i64: 512, 128>}, {transform_indices = @transform_2, window_bounds = array<i64: 1, 128>}, {transform_indices = @transform_3, window_bounds = array<i64: 8, 128>}]} {
    %0 = tpu.iota {dimensions = array<i32: 0>} : vector<16x1xi32>
    %c0_i32 = arith.constant 0 : i32
    %1 = arith.cmpi eq, %arg2, %c0_i32 : i32
    %2 = arith.extui %1 : i1 to i32
    %c0_i32_0 = arith.constant 0 : i32
    %3 = arith.cmpi ne, %2, %c0_i32_0 : i32
    scf.if %3 {
      %cst_10 = arith.constant 0.000000e+00 : f32
      %13 = vector.broadcast %cst_10 : f32 to vector<16x128xf32>
      %c0_11 = arith.constant 0 : index
      %c0_12 = arith.constant 0 : index
      %14 = vector.load %arg7[%c0_11, %c0_12] : memref<16x128xf32, #tpu.memory_space<vmem>>, vector<16x128xf32>
      tpu.vector_store %arg7[%c0_11, %c0_12], %13 {strides = array<i32>} : memref<16x128xf32, #tpu.memory_space<vmem>>, vector<16x128xf32>,
    } else {
    }
    %c0 = arith.constant 0 : index
    %c0_1 = arith.constant 0 : index
    %4 = vector.load %arg7[%c0, %c0_1] : memref<16x128xf32, #tpu.memory_space<vmem>>, vector<16x128xf32>
    %c0_2 = arith.constant 0 : index
    %c0_3 = arith.constant 0 : index
    %5 = vector.load %arg3[%c0_2, %c0_3] : memref<16x512xbf16, #tpu.memory_space<vmem>>, vector<16x512xbf16>
    %c0_4 = arith.constant 0 : index
    %c0_5 = arith.constant 0 : index
    %6 = vector.load %arg4[%c0_4, %c0_5] : memref<512x128xbf16, #tpu.memory_space<vmem>>, vector<512x128xbf16>
    %cst = arith.constant dense<0.000000e+00> : vector<16x128xf32>
    %7 = tpu.matmul %5, %6, %cst {dimension_numbers = #tpu.dot_dimension_numbers<[1], [0], [0], [1], [0, 0, 1, 1], [], []>} : vector<16x512xbf16>, vector<512x128xbf16>, vector<16x128xf32> -> vector<16x128xf32>
    %8 = arith.addf %4, %7 : vector<16x128xf32>
    %c0_6 = arith.constant 0 : index
    %c0_7 = arith.constant 0 : index
    %9 = vector.load %arg7[%c0_6, %c0_7] : memref<16x128xf32, #tpu.memory_space<vmem>>, vector<16x128xf32>
    tpu.vector_store %arg7[%c0_6, %c0_7], %8 {strides = array<i32>} : memref<16x128xf32, #tpu.memory_space<vmem>>, vector<16x128xf32>,
    %c0_i32_8 = arith.constant 0 : i32
    %10 = arith.cmpi eq, %arg2, %c0_i32_8 : i32
    %11 = arith.extui %10 : i1 to i32
    %c0_i32_9 = arith.constant 0 : i32
    %12 = arith.cmpi ne, %11, %c0_i32_9 : i32
    scf.if %12 {
      %c0_10 = arith.constant 0 : index
      %c0_11 = arith.constant 0 : index
      %13 = vector.load %arg7[%c0_10, %c0_11] : memref<16x128xf32, #tpu.memory_space<vmem>>, vector<16x128xf32>
      %c0_12 = arith.constant 0 : index
      %c0_13 = arith.constant 0 : index
      %14 = vector.load %arg5[%c0_12, %c0_13] : memref<1x128xf32, #tpu.memory_space<vmem>>, vector<1x128xf32>
      %15 = vector.broadcast %14 : vector<1x128xf32> to vector<16x128xf32>
      %16 = arith.addf %13, %15 : vector<16x128xf32>
      %c9_i32 = arith.constant 9 : i32
      %17 = vector.broadcast %c9_i32 : i32 to vector<16x1xi32>
      %18 = arith.cmpi slt, %0, %17 : vector<16x1xi32>
      %cst_14 = arith.constant 0.000000e+00 : f32
      %19 = vector.shape_cast %18 : vector<16x1xi1> to vector<16x1xi1>
      %20 = vector.broadcast %19 : vector<16x1xi1> to vector<16x128xi1>
      %21 = vector.broadcast %cst_14 : f32 to vector<16x128xf32>
      %22 = arith.select %20, %16, %21 : vector<16x128xi1>, vector<16x128xf32>
      %cst_15 = arith.constant dense<0.000000e+00> : vector<128xf32>
      %23 = vector.multi_reduction <add>, %22, %cst_15 [0] : vector<16x128xf32> to vector<128xf32>
      %24 = vector.shape_cast %23 : vector<128xf32> to vector<1x128xf32>
      %cst_16 = arith.constant 0.111111112 : f32
      %25 = vector.broadcast %cst_16 : f32 to vector<1x128xf32>
      %26 = arith.mulf %24, %25 : vector<1x128xf32>
      %27 = arith.negf %26 : vector<1x128xf32>
      %28 = math.exp %27 : vector<1x128xf32>
      %cst_17 = arith.constant 1.000000e+00 : f32
      %29 = vector.broadcast %cst_17 : f32 to vector<1x128xf32>
      %30 = arith.addf %29, %28 : vector<1x128xf32>
      %31 = arith.divf %29, %30 : vector<1x128xf32>
      %32 = vector.shape_cast %31 : vector<1x128xf32> to vector<1x128xf32>
      %33 = vector.broadcast %32 : vector<1x128xf32> to vector<8x128xf32>
      %c0_18 = arith.constant 0 : index
      %c0_19 = arith.constant 0 : index
      %34 = vector.load %arg6[%c0_18, %c0_19] : memref<8x128xf32, #tpu.memory_space<vmem>>, vector<8x128xf32>
      tpu.vector_store %arg6[%c0_18, %c0_19], %33 {strides = array<i32>} : memref<8x128xf32, #tpu.memory_space<vmem>>, vector<8x128xf32>,
    } else {
    }
    return
  }
  func.func @transform_0(%arg0: i32, %arg1: i32, %arg2: i32) -> (i32, i32) {
    %c0_i32 = arith.constant 0 : i32
    return %arg0, %arg2 : i32, i32
  }
  func.func @transform_1(%arg0: i32, %arg1: i32, %arg2: i32) -> (i32, i32) {
    %c0_i32 = arith.constant 0 : i32
    return %arg2, %arg1 : i32, i32
  }
  func.func @transform_2(%arg0: i32, %arg1: i32, %arg2: i32) -> (i32, i32) {
    %c0_i32 = arith.constant 0 : i32
    %c0_i32_0 = arith.constant 0 : i32
    return %c0_i32, %arg1 : i32, i32
  }
  func.func @transform_3(%arg0: i32, %arg1: i32, %arg2: i32) -> (i32, i32) {
    %c0_i32 = arith.constant 0 : i32
    return %arg0, %arg1 : i32, i32
  }
}

</mosaic_0001>

<llo_original>
// kernel: forward.16
$region0: #{forward.16}
  #allocation0 [shape = 'u32[]', space=smem, size = 0x4, offset = 0x4, fixed_abs, tag = 'smem constant byte address 0x4 - core index']
  #allocation1 [shape = 'u32[144,128]{1,0:T(1,128)}', space=vmem, size = 0x12000, scoped, tag = 'internal scratch']
  #allocation2 [shape = 'f32[256,128]{1,0:T(8,128)}', space=vmem, size = 0x20000, scoped, tag = 'scratch operand']
  %s0 = inlined_call_operand.vmem [shape: bf16[512,128], index: 0, kind: input, shape index: {}]
  %s1 = inlined_call_operand.vmem [shape: bf16[128,128], index: 1, kind: input, shape index: {}]
  %s2 = inlined_call_operand.vmem [shape: f32[1,128], index: 2, kind: input, shape index: {}]
  %s3 = inlined_call_operand.vmem [shape: bf16[512,128], index: 3, kind: output, shape index: {}]
  %s4 = sld [smem:[#allocation0]]
  $region53: #{forward.16} parent=0
    _
  %s6 = ssub.s32 1, %s4
  %s7 = scalar_select 0, %s6, %s4
  loop: start=0, step=1, limit=4
  $region2: #{forward.16} parent=0 // loop_pre_header
    _
  $region3: #{forward.16} parent=0 // loop_header
    %s9 = sphi 0, %s13
    %p10 = scmp.ge.s32.totalorder %s9, 4
    %s16 = sphi 0, %s35
    %s17 = sphi 0, %s31
    %s18 = sphi 0, %s27
    %s19 = sphi 0, %s16
    %s20 = sphi 0, %s17
    %s21 = sphi 0, %s18
    %s22 = sphi 0, %s19
    %s23 = sphi 0, %s20
    %s24 = sphi 0, %s21
    %s40 = sphi 0, %s42
    %s43 = sphi 0, %s40
    %s44 = sphi 0, %s43
    %s60 = sphi 0, %s44
    %s68 = sphi 0, %s70
    %s71 = sphi 0, %s68
    %s72 = sphi 0, %s71
    %s88 = sphi 0, %s72
    %s94 = sphi 0, %s96
    %s97 = sphi 0, %s94
    %s98 = sphi 0, %s97
    %s114 = sphi 0, %s98
    %s122 = sphi 0, %s124
    %s125 = sphi 0, %s122
    %s126 = sphi 0, %s125
    %s142 = sphi 0, %s126
  $region4: #{forward.16} parent=0 // loop_header_branch
    %12 = sbr.rel (%p10) target = $region8
  $region5: #{forward.16} parent=0 // loop_body
    %s14 = ssub.s32 %s9, 1
    %s15 = ssub.s32 %s9, 2
    %s25 = sadd.s32 1, %s18
    %p26 = scmp.ge.s32.totalorder %s25, 1
    %s27 = scalar_select %p26, 0, %s25
    %s28 = sadd.s32 1, %s17
    %s29 = scalar_select %p26, %s28, %s17
    %p30 = scmp.ge.s32.totalorder %s29, 1
    %s31 = scalar_select %p30, 0, %s29
    %s32 = sadd.s32 1, %s16
    %s33 = scalar_select %p30, %s32, %s16
    %p34 = scmp.ge.s32.totalorder %s33, 2
    %s35 = scalar_select %p34, 0, %s33
    %s36 = ssub.s32 %s16, %s35
    %s37 = ssub.s32 %s18, %s27
    %s38 = sor.u32 %s36, %s37
    %p39 = scmp.eq.s32.totalorder %s38, 0
    %s41 = sadd.s32 %s40, 1
    %s42 = scalar_select %p39, %s40, %s41
    %p45 = pneg %p39
    %p46 = scmp.eq.s32.totalorder %s9, 1
    %p47 = por %p45, %p46
    %p48 = scmp.ne.s32.totalorder %s40, %s43
    %p49 = scmp.eq.s32.totalorder %s9, 0
    %p50 = por %p48, %p49
    %p51 = scmp.ne.s32.totalorder %s40, %s43
    %p52 = scmp.eq.s32.totalorder %s14, 1
    %p53 = por %p51, %p52
    %p54 = scmp.ne.s32.totalorder %s43, %s44
    %p55 = scmp.eq.s32.totalorder %s14, 0
    %p56 = por %p54, %p55
    %p57 = scmp.ne.s32.totalorder %s43, %s44
    %p58 = scmp.eq.s32.totalorder %s15, 1
    %p59 = por %p57, %p58
    %p61 = scmp.ne.s32.totalorder %s44, %s60
    %p62 = scmp.eq.s32.totalorder %s15, 0
    %p63 = por %p61, %p62
    %s64 = ssub.s32 %s18, %s27
    %s65 = ssub.s32 %s17, %s31
    %s66 = sor.u32 %s64, %s65
    %p67 = scmp.eq.s32.totalorder %s66, 0
    %s69 = sadd.s32 %s68, 1
    %s70 = scalar_select %p67, %s68, %s69
    %p73 = pneg %p67
    %p74 = scmp.eq.s32.totalorder %s9, 1
    %p75 = por %p73, %p74
    %p76 = scmp.ne.s32.totalorder %s68, %s71
    %p77 = scmp.eq.s32.totalorder %s9, 0
    %p78 = por %p76, %p77
    %p79 = scmp.ne.s32.totalorder %s68, %s71
    %p80 = scmp.eq.s32.totalorder %s14, 1
    %p81 = por %p79, %p80
    %p82 = scmp.ne.s32.totalorder %s71, %s72
    %p83 = scmp.eq.s32.totalorder %s14, 0
    %p84 = por %p82, %p83
    %p85 = scmp.ne.s32.totalorder %s71, %s72
    %p86 = scmp.eq.s32.totalorder %s15, 1
    %p87 = por %p85, %p86
    %p89 = scmp.ne.s32.totalorder %s72, %s88
    %p90 = scmp.eq.s32.totalorder %s15, 0
    %p91 = por %p89, %p90
    %s92 = ssub.s32 %s17, %s31
    %p93 = scmp.eq.s32.totalorder %s92, 0
    %s95 = sadd.s32 %s94, 1
    %s96 = scalar_select %p93, %s94, %s95
    %p99 = pneg %p93
    %p100 = scmp.eq.s32.totalorder %s9, 1
    %p101 = por %p99, %p100
    %p102 = scmp.ne.s32.totalorder %s94, %s97
    %p103 = scmp.eq.s32.totalorder %s9, 0
    %p104 = por %p102, %p103
    %p105 = scmp.ne.s32.totalorder %s94, %s97
    %p106 = scmp.eq.s32.totalorder %s14, 1
    %p107 = por %p105, %p106
    %p108 = scmp.ne.s32.totalorder %s97, %s98
    %p109 = scmp.eq.s32.totalorder %s14, 0
    %p110 = por %p108, %p109
    %p111 = scmp.ne.s32.totalorder %s97, %s98
    %p112 = scmp.eq.s32.totalorder %s15, 1
    %p113 = por %p111, %p112
    %p115 = scmp.ne.s32.totalorder %s98, %s114
    %p116 = scmp.eq.s32.totalorder %s15, 0
    %p117 = por %p115, %p116
    %s118 = ssub.s32 %s16, %s35
    %s119 = ssub.s32 %s17, %s31
    %s120 = sor.u32 %s118, %s119
    %p121 = scmp.eq.s32.totalorder %s120, 0
    %s123 = sadd.s32 %s122, 1
    %s124 = scalar_select %p121, %s122, %s123
    %p127 = pneg %p121
    %p128 = scmp.eq.s32.totalorder %s9, 1
    %p129 = por %p127, %p128
    %p130 = scmp.ne.s32.totalorder %s122, %s125
    %p131 = scmp.eq.s32.totalorder %s9, 0
    %p132 = por %p130, %p131
    %p133 = scmp.ne.s32.totalorder %s122, %s125
    %p134 = scmp.eq.s32.totalorder %s14, 1
    %p135 = por %p133, %p134
    %p136 = scmp.ne.s32.totalorder %s125, %s126
    %p137 = scmp.eq.s32.totalorder %s14, 0
    %p138 = por %p136, %p137
    %p139 = scmp.ne.s32.totalorder %s125, %s126
    %p140 = scmp.eq.s32.totalorder %s15, 1
    %p141 = por %p139, %p140
    %p143 = scmp.ne.s32.totalorder %s126, %s142
    %p144 = scmp.eq.s32.totalorder %s15, 0
    %p145 = por %p143, %p144
    %p146 = scmp.le.s32.totalorder 1, %s9
    %p147 = scmp.lt.s32.totalorder %s9, 3
    %p148 = pnand %p146, %p147
    %p149 = pneg %p148
    // Predicated region
    $region9: #{forward.16} parent=5 // pred_check
      _
    $region10: #{forward.16} parent=5 // pred_check_branch
      %151 = sbr.rel (%p148) target = $region12
    $region11: #{forward.16} parent=5 // pred_region
      %s152 = ssub.s32 %s9, 1
      // Predicated region
      $region13: #{forward.16} parent=11 // pred_check
        %p153 = pneg %p84
      $region14: #{forward.16} parent=11 // pred_check_branch
        %155 = sbr.rel (%p153) target = $region16
      $region15: #{forward.16} parent=11 // pred_region
        %s156 = smul.u32 16, %s21
        %p157 = scmp.lt.s32.totalorder %s156, 15
        %s158 = scalar_select %p157, %s156, 15
        %p159 = scmp.lt.s32.totalorder %s20, 0
        %s160 = scalar_select %p159, %s20, 0
        %s161 = sadd.s32 %s160, %s158
        %s162 = smul.addr %s161, 4
        %s163 = scalar_lea.vmem %s1, %s162
        %s164 = smul.u32 16, %s21
      $region16: #{forward.16} parent=11 // pred_fallthru
        _
      // Predicated region
      $region17: #{forward.16} parent=11 // pred_check
        %p165 = pneg %p110
      $region18: #{forward.16} parent=11 // pred_check_branch
        %167 = sbr.rel (%p165) target = $region20
      $region19: #{forward.16} parent=11 // pred_region
        %p168 = scmp.lt.s32.totalorder %s20, 0
        %s169 = scalar_select %p168, %s20, 0
        %s170 = scalar_lea.vmem %s2, %s169
      $region20: #{forward.16} parent=11 // pred_fallthru
        _
    $region12: #{forward.16} parent=5 // pred_fallthru
      _
    %p171 = scmp.lt.s32.totalorder %s9, 2
    // Predicated region
    $region21: #{forward.16} parent=5 // pred_check
      %p172 = pneg %p171
    $region22: #{forward.16} parent=5 // pred_check_branch
      %174 = sbr.rel (%p172) target = $region24
    $region23: #{forward.16} parent=5 // pred_region
      // Predicated region
      $region25: #{forward.16} parent=23 // pred_check
        %p175 = pneg %p50
      $region26: #{forward.16} parent=23 // pred_check_branch
        %177 = sbr.rel (%p175) target = $region28
      $region27: #{forward.16} parent=23 // pred_region
        %s178 = smul.u32 32, %s16
        %p179 = scmp.lt.s32.totalorder %s178, 63
        %s180 = scalar_select %p179, %s178, 63
        %p181 = scmp.lt.s32.totalorder %s18, 0
        %s182 = scalar_select %p181, %s18, 0
        %s183 = sadd.s32 %s182, %s180
        %s184 = smul.addr %s183, 4
        %s185 = scalar_lea.vmem %s0, %s184
        %s186 = smul.u32 32, %s16
      $region28: #{forward.16} parent=23 // pred_fallthru
        _
    $region24: #{forward.16} parent=5 // pred_fallthru
      _
    %p187 = scmp.le.s32.totalorder 1, %s9
    %p188 = scmp.lt.s32.totalorder %s9, 3
    %p189 = pnand %p187, %p188
    %p190 = pneg %p189
    // Predicated region
    $region29: #{forward.16} parent=5 // pred_check
      _
    $region30: #{forward.16} parent=5 // pred_check_branch
      %192 = sbr.rel (%p189) target = $region32
    $region31: #{forward.16} parent=5 // pred_region
      %s193 = ssub.s32 %s9, 1
      %s194 = smul.u32 32, %s19
      %p195 = scmp.lt.s32.totalorder %s194, 63
      %s196 = scalar_select %p195, %s194, 63
      %p197 = scmp.lt.s32.totalorder %s21, 0
      %s198 = scalar_select %p197, %s21, 0
      %s199 = sadd.s32 %s198, %s196
      %s200 = smul.addr %s199, 4
      %s201 = scalar_lea.vmem %s0, %s200
      %p202 = pneg %p56
      %p203 = pneg %p53
      %s204 = smul.u32 16, %s21
      %p205 = scmp.lt.s32.totalorder %s204, 15
      %s206 = scalar_select %p205, %s204, 15
      %p207 = scmp.lt.s32.totalorder %s20, 0
      %s208 = scalar_select %p207, %s20, 0
      %s209 = sadd.s32 %s208, %s206
      %s210 = smul.addr %s209, 4
      %s211 = scalar_lea.vmem %s1, %s210
      %p212 = pneg %p84
      %p213 = pneg %p81
      %p214 = scmp.lt.s32.totalorder %s20, 0
      %s215 = scalar_select %p214, %s20, 0
      %s216 = scalar_lea.vmem %s2, %s215
      %p217 = pneg %p110
      %p218 = pneg %p107
      %p219 = pneg %p138
      %p220 = pneg %p135
      %s221 = smul.u32 32, %s19
      %p222 = scmp.lt.s32.totalorder %s221, 63
      %s223 = scalar_select %p222, %s221, 63
      %p224 = scmp.lt.s32.totalorder %s20, 0
      %s225 = scalar_select %p224, %s20, 0
      %s226 = sadd.s32 %s225, %s223
      %s227 = smul.addr %s226, 4
      %s228 = scalar_lea.vmem %s3, %s227
      %s229 = smul.u32 32, %s19
      %p230 = scmp.lt.s32.totalorder %s229, 63
      %s231 = scalar_select %p230, %s229, 63
      %p232 = scmp.lt.s32.totalorder %s21, 0
      %s233 = scalar_select %p232, %s21, 0
      %s234 = sadd.s32 %s233, %s231
      %s235 = smul.addr %s234, 4
      %s236 = scalar_lea.vmem %s0, %s235
      %s237 = smul.u32 32, %s19
      %s238 = smul.u32 16, %s21
      %p239 = scmp.lt.s32.totalorder %s238, 15
      %s240 = scalar_select %p239, %s238, 15
      %p241 = scmp.lt.s32.totalorder %s20, 0
      %s242 = scalar_select %p241, %s20, 0
      %s243 = sadd.s32 %s242, %s240
      %s244 = smul.addr %s243, 4
      %s245 = scalar_lea.vmem %s1, %s244
      %s246 = smul.u32 16, %s21
      %p247 = scmp.lt.s32.totalorder %s20, 0
      %s248 = scalar_select %p247, %s20, 0
      %s249 = scalar_lea.vmem %s2, %s248
      %s250 = smul.u32 32, %s19
      %p251 = scmp.lt.s32.totalorder %s250, 63
      %s252 = scalar_select %p251, %s250, 63
      %p253 = scmp.lt.s32.totalorder %s20, 0
      %s254 = scalar_select %p253, %s20, 0
      %s255 = sadd.s32 %s254, %s252
      %s256 = smul.addr %s255, 4
      %s257 = scalar_lea.vmem %s3, %s256
      %s258 = smul.u32 32, %s19
      %p260 = scmp.eq.s32.totalorder %s21, 0
      // Predicated region
      $region33: #{forward.16} parent=31 // pred_check
        %p261 = pneg %p260
      $region34: #{forward.16} parent=31 // pred_check_branch
        %263 = sbr.rel (%p261) target = $region36
      $region35: #{forward.16} parent=31 // pred_region
        %264 = vst [vmem:[#allocation2] sm:$0xff] 0.0
        %265 = vst [vmem:[#allocation2 + $0x8] sm:$0xff] 0.0
        %266 = vst [vmem:[#allocation2 + $0x10] sm:$0xff] 0.0
        %267 = vst [vmem:[#allocation2 + $0x18] sm:$0xff] 0.0
        %268 = vst [vmem:[#allocation2 + $0x20] sm:$0xff] 0.0
        %269 = vst [vmem:[#allocation2 + $0x28] sm:$0xff] 0.0
        %270 = vst [vmem:[#allocation2 + $0x30] sm:$0xff] 0.0
        %271 = vst [vmem:[#allocation2 + $0x38] sm:$0xff] 0.0
        %272 = vst [vmem:[#allocation2 + $0x40] sm:$0xff] 0.0
        %273 = vst [vmem:[#allocation2 + $0x48] sm:$0xff] 0.0
        %274 = vst [vmem:[#allocation2 + $0x50] sm:$0xff] 0.0
        %275 = vst [vmem:[#allocation2 + $0x58] sm:$0xff] 0.0
        %276 = vst [vmem:[#allocation2 + $0x60] sm:$0xff] 0.0
        %277 = vst [vmem:[#allocation2 + $0x68] sm:$0xff] 0.0
        %278 = vst [vmem:[#allocation2 + $0x70] sm:$0xff] 0.0
        %279 = vst [vmem:[#allocation2 + $0x78] sm:$0xff] 0.0
        %280 = vst [vmem:[#allocation2 + $0x80] sm:$0xff] 0.0
        %281 = vst [vmem:[#allocation2 + $0x88] sm:$0xff] 0.0
        %282 = vst [vmem:[#allocation2 + $0x90] sm:$0xff] 0.0
        %283 = vst [vmem:[#allocation2 + $0x98] sm:$0xff] 0.0
        %284 = vst [vmem:[#allocation2 + $0xa0] sm:$0xff] 0.0
        %285 = vst [vmem:[#allocation2 + $0xa8] sm:$0xff] 0.0
        %286 = vst [vmem:[#allocation2 + $0xb0] sm:$0xff] 0.0
        %287 = vst [vmem:[#allocation2 + $0xb8] sm:$0xff] 0.0
        %288 = vst [vmem:[#allocation2 + $0xc0] sm:$0xff] 0.0
        %289 = vst [vmem:[#allocation2 + $0xc8] sm:$0xff] 0.0
        %290 = vst [vmem:[#allocation2 + $0xd0] sm:$0xff] 0.0
        %291 = vst [vmem:[#allocation2 + $0xd8] sm:$0xff] 0.0
        %292 = vst [vmem:[#allocation2 + $0xe0] sm:$0xff] 0.0
        %293 = vst [vmem:[#allocation2 + $0xe8] sm:$0xff] 0.0
        %294 = vst [vmem:[#allocation2 + $0xf0] sm:$0xff] 0.0
        %295 = vst [vmem:[#allocation2 + $0xf8] sm:$0xff] 0.0
      $region36: #{forward.16} parent=31 // pred_fallthru
        _
      %v296 = vld [vmem:[#allocation2] sm:$0xff]
      %v297 = vld [vmem:[#allocation2 + $0x8] sm:$0xff]
      %v298 = vld [vmem:[#allocation2 + $0x10] sm:$0xff]
      %v299 = vld [vmem:[#allocation2 + $0x18] sm:$0xff]
      %v300 = vld [vmem:[#allocation2 + $0x20] sm:$0xff]
      %v301 = vld [vmem:[#allocation2 + $0x28] sm:$0xff]
      %v302 = vld [vmem:[#allocation2 + $0x30] sm:$0xff]
      %v303 = vld [vmem:[#allocation2 + $0x38] sm:$0xff]
      %v304 = vld [vmem:[#allocation2 + $0x40] sm:$0xff]
      %v305 = vld [vmem:[#allocation2 + $0x48] sm:$0xff]
      %v306 = vld [vmem:[#allocation2 + $0x50] sm:$0xff]
      %v307 = vld [vmem:[#allocation2 + $0x58] sm:$0xff]
      %v308 = vld [vmem:[#allocation2 + $0x60] sm:$0xff]
      %v309 = vld [vmem:[#allocation2 + $0x68] sm:$0xff]
      %v310 = vld [vmem:[#allocation2 + $0x70] sm:$0xff]
      %v311 = vld [vmem:[#allocation2 + $0x78] sm:$0xff]
      %v312 = vld [vmem:[#allocation2 + $0x80] sm:$0xff]
      %v313 = vld [vmem:[#allocation2 + $0x88] sm:$0xff]
      %v314 = vld [vmem:[#allocation2 + $0x90] sm:$0xff]
      %v315 = vld [vmem:[#allocation2 + $0x98] sm:$0xff]
      %v316 = vld [vmem:[#allocation2 + $0xa0] sm:$0xff]
      %v317 = vld [vmem:[#allocation2 + $0xa8] sm:$0xff]
      %v318 = vld [vmem:[#allocation2 + $0xb0] sm:$0xff]
      %v319 = vld [vmem:[#allocation2 + $0xb8] sm:$0xff]
      %v320 = vld [vmem:[#allocation2 + $0xc0] sm:$0xff]
      %v321 = vld [vmem:[#allocation2 + $0xc8] sm:$0xff]
      %v322 = vld [vmem:[#allocation2 + $0xd0] sm:$0xff]
      %v323 = vld [vmem:[#allocation2 + $0xd8] sm:$0xff]
      %v324 = vld [vmem:[#allocation2 + $0xe0] sm:$0xff]
      %v325 = vld [vmem:[#allocation2 + $0xe8] sm:$0xff]
      %v326 = vld [vmem:[#allocation2 + $0xf0] sm:$0xff]
      %v327 = vld [vmem:[#allocation2 + $0xf8] sm:$0xff]
      %v328 = vld [vmem:[%s236] sm:$0xf]
      %v329 = vld [vmem:[%s236 + $0x4] sm:$0xf]
      %v330 = vld [vmem:[%s236 + $0x8] sm:$0xf]
      %v331 = vld [vmem:[%s236 + $0xc] sm:$0xf]
      %v332 = vld [vmem:[%s236 + $0x10] sm:$0xf]
      %v333 = vld [vmem:[%s236 + $0x14] sm:$0xf]
      %v334 = vld [vmem:[%s236 + $0x18] sm:$0xf]
      %v335 = vld [vmem:[%s236 + $0x1c] sm:$0xf]
      %v336 = vld [vmem:[%s236 + $0x20] sm:$0xf]
      %v337 = vld [vmem:[%s236 + $0x24] sm:$0xf]
      %v338 = vld [vmem:[%s236 + $0x28] sm:$0xf]
      %v339 = vld [vmem:[%s236 + $0x2c] sm:$0xf]
      %v340 = vld [vmem:[%s236 + $0x30] sm:$0xf]
      %v341 = vld [vmem:[%s236 + $0x34] sm:$0xf]
      %v342 = vld [vmem:[%s236 + $0x38] sm:$0xf]
      %v343 = vld [vmem:[%s236 + $0x3c] sm:$0xf]
      %v344 = vld [vmem:[%s236 + $0x40] sm:$0xf]
      %v345 = vld [vmem:[%s236 + $0x44] sm:$0xf]
      %v346 = vld [vmem:[%s236 + $0x48] sm:$0xf]
      %v347 = vld [vmem:[%s236 + $0x4c] sm:$0xf]
      %v348 = vld [vmem:[%s236 + $0x50] sm:$0xf]
      %v349 = vld [vmem:[%s236 + $0x54] sm:$0xf]
      %v350 = vld [vmem:[%s236 + $0x58] sm:$0xf]
      %v351 = vld [vmem:[%s236 + $0x5c] sm:$0xf]
      %v352 = vld [vmem:[%s236 + $0x60] sm:$0xf]
      %v353 = vld [vmem:[%s236 + $0x64] sm:$0xf]
      %v354 = vld [vmem:[%s236 + $0x68] sm:$0xf]
      %v355 = vld [vmem:[%s236 + $0x6c] sm:$0xf]
      %v356 = vld [vmem:[%s236 + $0x70] sm:$0xf]
      %v357 = vld [vmem:[%s236 + $0x74] sm:$0xf]
      %v358 = vld [vmem:[%s236 + $0x78] sm:$0xf]
      %v359 = vld [vmem:[%s236 + $0x7c] sm:$0xf]
      %v360 = vld [vmem:[%s245] sm:$0xf]
      %v361 = vld [vmem:[%s245 + $0x4] sm:$0xf]
      %v362 = vld [vmem:[%s245 + $0x8] sm:$0xf]
      %v363 = vld [vmem:[%s245 + $0xc] sm:$0xf]
      %v364 = vld [vmem:[%s245 + $0x10] sm:$0xf]
      %v365 = vld [vmem:[%s245 + $0x14] sm:$0xf]
      %v366 = vld [vmem:[%s245 + $0x18] sm:$0xf]
      %v367 = vld [vmem:[%s245 + $0x1c] sm:$0xf]
      %v368 = vld [vmem:[%s245 + $0x20] sm:$0xf]
      %v369 = vld [vmem:[%s245 + $0x24] sm:$0xf]
      %v370 = vld [vmem:[%s245 + $0x28] sm:$0xf]
      %v371 = vld [vmem:[%s245 + $0x2c] sm:$0xf]
      %v372 = vld [vmem:[%s245 + $0x30] sm:$0xf]
      %v373 = vld [vmem:[%s245 + $0x34] sm:$0xf]
      %v374 = vld [vmem:[%s245 + $0x38] sm:$0xf]
      %v375 = vld [vmem:[%s245 + $0x3c] sm:$0xf]
      %v408 = vunpack.c.l.b16 %v328
      %v409 = vunpack.c.l.b16 %v329
      %v410 = vunpack.c.l.b16 %v330
      %v411 = vunpack.c.l.b16 %v331
      %v412 = vunpack.c.l.b16 %v332
      %v413 = vunpack.c.l.b16 %v333
      %v414 = vunpack.c.l.b16 %v334
      %v415 = vunpack.c.l.b16 %v335
      %v416 = vunpack.c.l.b16 %v336
      %v417 = vunpack.c.l.b16 %v337
      %v418 = vunpack.c.l.b16 %v338
      %v419 = vunpack.c.l.b16 %v339
      %v420 = vunpack.c.l.b16 %v340
      %v421 = vunpack.c.l.b16 %v341
      %v422 = vunpack.c.l.b16 %v342
      %v423 = vunpack.c.l.b16 %v343
      %v424 = vunpack.c.l.b16 %v344
      %v425 = vunpack.c.l.b16 %v345
      %v426 = vunpack.c.l.b16 %v346
      %v427 = vunpack.c.l.b16 %v347
      %v428 = vunpack.c.l.b16 %v348
      %v429 = vunpack.c.l.b16 %v349
      %v430 = vunpack.c.l.b16 %v350
      %v431 = vunpack.c.l.b16 %v351
      %v432 = vunpack.c.l.b16 %v352
      %v433 = vunpack.c.l.b16 %v353
      %v434 = vunpack.c.l.b16 %v354
      %v435 = vunpack.c.l.b16 %v355
      %v436 = vunpack.c.l.b16 %v356
      %v437 = vunpack.c.l.b16 %v357
      %v438 = vunpack.c.l.b16 %v358
      %v439 = vunpack.c.l.b16 %v359
      %v440 = vpack.c.b16 %v409, %v408
      %v441 = vpack.c.b16 %v411, %v410
      %v442 = vpack.c.b16 %v413, %v412
      %v443 = vpack.c.b16 %v415, %v414
      %v444 = vpack.c.b16 %v417, %v416
      %v445 = vpack.c.b16 %v419, %v418
      %v446 = vpack.c.b16 %v421, %v420
      %v447 = vpack.c.b16 %v423, %v422
      %v448 = vpack.c.b16 %v425, %v424
      %v449 = vpack.c.b16 %v427, %v426
      %v450 = vpack.c.b16 %v429, %v428
      %v451 = vpack.c.b16 %v431, %v430
      %v452 = vpack.c.b16 %v433, %v432
      %v453 = vpack.c.b16 %v435, %v434
      %v454 = vpack.c.b16 %v437, %v436
      %v455 = vpack.c.b16 %v439, %v438
      %v488 = vunpack.c.l.b16 %v360
      %v489 = vunpack.c.l.b16 %v361
      %v490 = vunpack.c.l.b16 %v362
      %v491 = vunpack.c.l.b16 %v363
      %v492 = vunpack.c.l.b16 %v364
      %v493 = vunpack.c.l.b16 %v365
      %v494 = vunpack.c.l.b16 %v366
      %v495 = vunpack.c.l.b16 %v367
      %v496 = vunpack.c.l.b16 %v368
      %v497 = vunpack.c.l.b16 %v369
      %v498 = vunpack.c.l.b16 %v370
      %v499 = vunpack.c.l.b16 %v371
      %v500 = vunpack.c.l.b16 %v372
      %v501 = vunpack.c.l.b16 %v373
      %v502 = vunpack.c.l.b16 %v374
      %v503 = vunpack.c.l.b16 %v375
      %v504 = vpack.c.b16 %v489, %v488
      %v505 = vpack.c.b16 %v491, %v490
      %v506 = vpack.c.b16 %v493, %v492
      %v507 = vpack.c.b16 %v495, %v494
      %v508 = vpack.c.b16 %v497, %v496
      %v509 = vpack.c.b16 %v499, %v498
      %v510 = vpack.c.b16 %v501, %v500
      %v511 = vpack.c.b16 %v503, %v502
      %520 = vmatprep.subr.bf16.mxu0 0
      %521 = vmatpush1.bf16.msra.mxu0 %v511
      %522 = vmatprep.subr.bf16.mxu0 0
      %523 = vmatpush1.bf16.msra.mxu0 %v510
      %524 = vmatprep.subr.bf16.mxu0 0
      %525 = vmatpush1.bf16.msra.mxu0 %v509
      %526 = vmatprep.subr.bf16.mxu0 0
      %527 = vmatpush1.bf16.msra.mxu0 %v508
      %528 = vmatprep.subr.bf16.mxu0 0
      %529 = vmatpush1.bf16.msra.mxu0 %v507
      %530 = vmatprep.subr.bf16.mxu0 0
      %531 = vmatpush1.bf16.msra.mxu0 %v506
      %532 = vmatprep.subr.bf16.mxu0 0
      %533 = vmatpush1.bf16.msra.mxu0 %v505
      %534 = vmatprep.subr.bf16.mxu0 0
      %535 = vmatpush1.bf16.msra.mxu0 %v504
      %536 = vmatprep.subr.bf16.mxu0 0
      %537 = vmatpush2.bf16.msra.mxu0 0
      %538 = vmatprep.subr.bf16.mxu0 0
      %539 = vmatpush2.bf16.msra.mxu0 0
      %540 = vmatprep.subr.bf16.mxu0 0
      %541 = vmatpush2.bf16.msra.mxu0 0
      %542 = vmatprep.subr.bf16.mxu0 0
      %543 = vmatpush2.bf16.msra.mxu0 0
      %544 = vmatprep.subr.bf16.mxu0 0
      %545 = vmatpush2.bf16.msra.mxu0 0
      %546 = vmatprep.subr.bf16.mxu0 0
      %547 = vmatpush2.bf16.msra.mxu0 0
      %548 = vmatprep.subr.bf16.mxu0 0
      %549 = vmatpush2.bf16.msra.mxu0 0
      %550 = vmatprep.subr.bf16.mxu0 0
      %551 = vmatpush2.bf16.msra.mxu0 0
      %552 = vmatprep.mubr.bf16.mxu0 0
      %553 = vmatmul.mubr.bf16.gmra.mxu0 %v440
      %v554 = vpop.f32.mrf.mxu0
      %v555 = vadd.f32 0.0, %v554
      %v556 = vpop.f32.mrf.mxu0
      %v557 = vpop.f32.mrf.mxu0
      %v558 = vadd.f32 0.0, %v557
      %v559 = vpop.f32.mrf.mxu0
      %560 = vmatprep.mubr.bf16.mxu0 0
      %561 = vmatmul.mubr.bf16.gmra.mxu0 %v441
      %v562 = vpop.f32.mrf.mxu0
      %v563 = vadd.f32 0.0, %v562
      %v564 = vpop.f32.mrf.mxu0
      %v565 = vpop.f32.mrf.mxu0
      %v566 = vadd.f32 0.0, %v565
      %v567 = vpop.f32.mrf.mxu0
      %568 = vmatprep.mubr.bf16.mxu0 0
      %569 = vmatmul.mubr.bf16.gmra.mxu0 %v442
      %v570 = vpop.f32.mrf.mxu0
      %v571 = vadd.f32 0.0, %v570
      %v572 = vpop.f32.mrf.mxu0
      %v573 = vpop.f32.mrf.mxu0
      %v574 = vadd.f32 0.0, %v573
      %v575 = vpop.f32.mrf.mxu0
      %576 = vmatprep.mubr.bf16.mxu0 0
      %577 = vmatmul.mubr.bf16.gmra.mxu0 %v443
      %v578 = vpop.f32.mrf.mxu0
      %v579 = vadd.f32 0.0, %v578
      %v580 = vpop.f32.mrf.mxu0
      %v581 = vpop.f32.mrf.mxu0
      %v582 = vadd.f32 0.0, %v581
      %v583 = vpop.f32.mrf.mxu0
      %584 = vmatprep.mubr.bf16.mxu0 0
      %585 = vmatmul.mubr.bf16.gmra.mxu0 %v444
      %v586 = vpop.f32.mrf.mxu0
      %v587 = vadd.f32 0.0, %v586
      %v588 = vpop.f32.mrf.mxu0
      %v589 = vpop.f32.mrf.mxu0
      %v590 = vadd.f32 0.0, %v589
      %v591 = vpop.f32.mrf.mxu0
      %592 = vmatprep.mubr.bf16.mxu0 0
      %593 = vmatmul.mubr.bf16.gmra.mxu0 %v445
      %v594 = vpop.f32.mrf.mxu0
      %v595 = vadd.f32 0.0, %v594
      %v596 = vpop.f32.mrf.mxu0
      %v597 = vpop.f32.mrf.mxu0
      %v598 = vadd.f32 0.0, %v597
      %v599 = vpop.f32.mrf.mxu0
      %600 = vmatprep.mubr.bf16.mxu0 0
      %601 = vmatmul.mubr.bf16.gmra.mxu0 %v446
      %v602 = vpop.f32.mrf.mxu0
      %v603 = vadd.f32 0.0, %v602
      %v604 = vpop.f32.mrf.mxu0
      %v605 = vpop.f32.mrf.mxu0
      %v606 = vadd.f32 0.0, %v605
      %v607 = vpop.f32.mrf.mxu0
      %608 = vmatprep.mubr.bf16.mxu0 0
      %609 = vmatmul.mubr.bf16.gmra.mxu0 %v447
      %v610 = vpop.f32.mrf.mxu0
      %v611 = vadd.f32 0.0, %v610
      %v612 = vpop.f32.mrf.mxu0
      %v613 = vpop.f32.mrf.mxu0
      %v614 = vadd.f32 0.0, %v613
      %v615 = vpop.f32.mrf.mxu0
      %616 = vmatprep.mubr.bf16.mxu0 0
      %617 = vmatmul.mubr.bf16.gmra.mxu0 %v448
      %v618 = vpop.f32.mrf.mxu0
      %v619 = vadd.f32 0.0, %v618
      %v620 = vpop.f32.mrf.mxu0
      %v621 = vpop.f32.mrf.mxu0
      %v622 = vadd.f32 0.0, %v621
      %v623 = vpop.f32.mrf.mxu0
      %624 = vmatprep.mubr.bf16.mxu0 0
      %625 = vmatmul.mubr.bf16.gmra.mxu0 %v449
      %v626 = vpop.f32.mrf.mxu0
      %v627 = vadd.f32 0.0, %v626
      %v628 = vpop.f32.mrf.mxu0
      %v629 = vpop.f32.mrf.mxu0
      %v630 = vadd.f32 0.0, %v629
      %v631 = vpop.f32.mrf.mxu0
      %632 = vmatprep.mubr.bf16.mxu0 0
      %633 = vmatmul.mubr.bf16.gmra.mxu0 %v450
      %v634 = vpop.f32.mrf.mxu0
      %v635 = vadd.f32 0.0, %v634
      %v636 = vpop.f32.mrf.mxu0
      %v637 = vpop.f32.mrf.mxu0
      %v638 = vadd.f32 0.0, %v637
      %v639 = vpop.f32.mrf.mxu0
      %640 = vmatprep.mubr.bf16.mxu0 0
      %641 = vmatmul.mubr.bf16.gmra.mxu0 %v451
      %v642 = vpop.f32.mrf.mxu0
      %v643 = vadd.f32 0.0, %v642
      %v644 = vpop.f32.mrf.mxu0
      %v645 = vpop.f32.mrf.mxu0
      %v646 = vadd.f32 0.0, %v645
      %v647 = vpop.f32.mrf.mxu0
      %648 = vmatprep.mubr.bf16.mxu0 0
      %649 = vmatmul.mubr.bf16.gmra.mxu0 %v452
      %v650 = vpop.f32.mrf.mxu0
      %v651 = vadd.f32 0.0, %v650
      %v652 = vpop.f32.mrf.mxu0
      %v653 = vpop.f32.mrf.mxu0
      %v654 = vadd.f32 0.0, %v653
      %v655 = vpop.f32.mrf.mxu0
      %656 = vmatprep.mubr.bf16.mxu0 0
      %657 = vmatmul.mubr.bf16.gmra.mxu0 %v453
      %v658 = vpop.f32.mrf.mxu0
      %v659 = vadd.f32 0.0, %v658
      %v660 = vpop.f32.mrf.mxu0
      %v661 = vpop.f32.mrf.mxu0
      %v662 = vadd.f32 0.0, %v661
      %v663 = vpop.f32.mrf.mxu0
      %664 = vmatprep.mubr.bf16.mxu0 0
      %665 = vmatmul.mubr.bf16.gmra.mxu0 %v454
      %v666 = vpop.f32.mrf.mxu0
      %v667 = vadd.f32 0.0, %v666
      %v668 = vpop.f32.mrf.mxu0
      %v669 = vpop.f32.mrf.mxu0
      %v670 = vadd.f32 0.0, %v669
      %v671 = vpop.f32.mrf.mxu0
      %672 = vmatprep.mubr.bf16.mxu0 0
      %673 = vmatmul.mubr.bf16.gmra.mxu0 %v455
      %v674 = vpop.f32.mrf.mxu0
      %v675 = vadd.f32 0.0, %v674
      %v676 = vpop.f32.mrf.mxu0
      %v677 = vpop.f32.mrf.mxu0
      %v678 = vadd.f32 0.0, %v677
      %v679 = vpop.f32.mrf.mxu0
      %680 = vdwg.mxu0
      %v681 = vadd.f32 %v296, %v555
      %v682 = vadd.f32 %v297, %v558
      %v683 = vadd.f32 %v298, %v563
      %v684 = vadd.f32 %v299, %v566
      %v685 = vadd.f32 %v300, %v571
      %v686 = vadd.f32 %v301, %v574
      %v687 = vadd.f32 %v302, %v579
      %v688 = vadd.f32 %v303, %v582
      %v689 = vadd.f32 %v304, %v587
      %v690 = vadd.f32 %v305, %v590
      %v691 = vadd.f32 %v306, %v595
      %v692 = vadd.f32 %v307, %v598
      %v693 = vadd.f32 %v308, %v603
      %v694 = vadd.f32 %v309, %v606
      %v695 = vadd.f32 %v310, %v611
      %v696 = vadd.f32 %v311, %v614
      %v697 = vadd.f32 %v312, %v619
      %v698 = vadd.f32 %v313, %v622
      %v699 = vadd.f32 %v314, %v627
      %v700 = vadd.f32 %v315, %v630
      %v701 = vadd.f32 %v316, %v635
      %v702 = vadd.f32 %v317, %v638
      %v703 = vadd.f32 %v318, %v643
      %v704 = vadd.f32 %v319, %v646
      %v705 = vadd.f32 %v320, %v651
      %v706 = vadd.f32 %v321, %v654
      %v707 = vadd.f32 %v322, %v659
      %v708 = vadd.f32 %v323, %v662
      %v709 = vadd.f32 %v324, %v667
      %v710 = vadd.f32 %v325, %v670
      %v711 = vadd.f32 %v326, %v675
      %v712 = vadd.f32 %v327, %v678
      %713 = vst [vmem:[#allocation2] sm:$0xff] %v681
      %714 = vst [vmem:[#allocation2 + $0x8] sm:$0xff] %v682
      %715 = vst [vmem:[#allocation2 + $0x10] sm:$0xff] %v683
      %716 = vst [vmem:[#allocation2 + $0x18] sm:$0xff] %v684
      %717 = vst [vmem:[#allocation2 + $0x20] sm:$0xff] %v685
      %718 = vst [vmem:[#allocation2 + $0x28] sm:$0xff] %v686
      %719 = vst [vmem:[#allocation2 + $0x30] sm:$0xff] %v687
      %720 = vst [vmem:[#allocation2 + $0x38] sm:$0xff] %v688
      %721 = vst [vmem:[#allocation2 + $0x40] sm:$0xff] %v689
      %722 = vst [vmem:[#allocation2 + $0x48] sm:$0xff] %v690
      %723 = vst [vmem:[#allocation2 + $0x50] sm:$0xff] %v691
      %724 = vst [vmem:[#allocation2 + $0x58] sm:$0xff] %v692
      %725 = vst [vmem:[#allocation2 + $0x60] sm:$0xff] %v693
      %726 = vst [vmem:[#allocation2 + $0x68] sm:$0xff] %v694
      %727 = vst [vmem:[#allocation2 + $0x70] sm:$0xff] %v695
      %728 = vst [vmem:[#allocation2 + $0x78] sm:$0xff] %v696
      %729 = vst [vmem:[#allocation2 + $0x80] sm:$0xff] %v697
      %730 = vst [vmem:[#allocation2 + $0x88] sm:$0xff] %v698
      %731 = vst [vmem:[#allocation2 + $0x90] sm:$0xff] %v699
      %732 = vst [vmem:[#allocation2 + $0x98] sm:$0xff] %v700
      %733 = vst [vmem:[#allocation2 + $0xa0] sm:$0xff] %v701
      %734 = vst [vmem:[#allocation2 + $0xa8] sm:$0xff] %v702
      %735 = vst [vmem:[#allocation2 + $0xb0] sm:$0xff] %v703
      %736 = vst [vmem:[#allocation2 + $0xb8] sm:$0xff] %v704
      %737 = vst [vmem:[#allocation2 + $0xc0] sm:$0xff] %v705
      %738 = vst [vmem:[#allocation2 + $0xc8] sm:$0xff] %v706
      %739 = vst [vmem:[#allocation2 + $0xd0] sm:$0xff] %v707
      %740 = vst [vmem:[#allocation2 + $0xd8] sm:$0xff] %v708
      %741 = vst [vmem:[#allocation2 + $0xe0] sm:$0xff] %v709
      %742 = vst [vmem:[#allocation2 + $0xe8] sm:$0xff] %v710
      %743 = vst [vmem:[#allocation2 + $0xf0] sm:$0xff] %v711
      %744 = vst [vmem:[#allocation2 + $0xf8] sm:$0xff] %v712
      // Predicated region
      $region37: #{forward.16} parent=31 // pred_check
        %p745 = pneg %p260
      $region38: #{forward.16} parent=31 // pred_check_branch
        %747 = sbr.rel (%p745) target = $region40
      $region39: #{forward.16} parent=31 // pred_region
        %v748 = vld [vmem:[#allocation2] sm:$0xff]
        %v749 = vld [vmem:[#allocation2 + $0x8] sm:$0xff]
        %v750 = vld [vmem:[#allocation2 + $0x10] sm:$0xff]
        %v751 = vld [vmem:[#allocation2 + $0x18] sm:$0xff]
        %v752 = vld [vmem:[#allocation2 + $0x20] sm:$0xff]
        %v753 = vld [vmem:[#allocation2 + $0x28] sm:$0xff]
        %v754 = vld [vmem:[#allocation2 + $0x30] sm:$0xff]
        %v755 = vld [vmem:[#allocation2 + $0x38] sm:$0xff]
        %v756 = vld [vmem:[#allocation2 + $0x40] sm:$0xff]
        %v757 = vld [vmem:[#allocation2 + $0x48] sm:$0xff]
        %v758 = vld [vmem:[#allocation2 + $0x50] sm:$0xff]
        %v759 = vld [vmem:[#allocation2 + $0x58] sm:$0xff]
        %v760 = vld [vmem:[#allocation2 + $0x60] sm:$0xff]
        %v761 = vld [vmem:[#allocation2 + $0x68] sm:$0xff]
        %v762 = vld [vmem:[#allocation2 + $0x70] sm:$0xff]
        %v763 = vld [vmem:[#allocation2 + $0x78] sm:$0xff]
        %v764 = vld [vmem:[#allocation2 + $0x80] sm:$0xff]
        %v765 = vld [vmem:[#allocation2 + $0x88] sm:$0xff]
        %v766 = vld [vmem:[#allocation2 + $0x90] sm:$0xff]
        %v767 = vld [vmem:[#allocation2 + $0x98] sm:$0xff]
        %v768 = vld [vmem:[#allocation2 + $0xa0] sm:$0xff]
        %v769 = vld [vmem:[#allocation2 + $0xa8] sm:$0xff]
        %v770 = vld [vmem:[#allocation2 + $0xb0] sm:$0xff]
        %v771 = vld [vmem:[#allocation2 + $0xb8] sm:$0xff]
        %v772 = vld [vmem:[#allocation2 + $0xc0] sm:$0xff]
        %v773 = vld [vmem:[#allocation2 + $0xc8] sm:$0xff]
        %v774 = vld [vmem:[#allocation2 + $0xd0] sm:$0xff]
        %v775 = vld [vmem:[#allocation2 + $0xd8] sm:$0xff]
        %v776 = vld [vmem:[#allocation2 + $0xe0] sm:$0xff]
        %v777 = vld [vmem:[#allocation2 + $0xe8] sm:$0xff]
        %v778 = vld [vmem:[#allocation2 + $0xf0] sm:$0xff]
        %v779 = vld [vmem:[#allocation2 + $0xf8] sm:$0xff]
        %v780 = vld [vmem:[%s249] sm:$0x1]
        %v782 = vlaneseq
        %v783 = vshrl.u32 %v782, 7
        %v784 = vsub.s32 0, %v783
        %v785 = vrot.slane %v780, %v784
        %v787 = vadd.f32 %v748, %v785
        %v788 = vadd.f32 %v749, %v785
        %v789 = vadd.f32 %v750, %v785
        %v790 = vadd.f32 %v751, %v785
        %v791 = vadd.f32 %v752, %v785
        %v792 = vadd.f32 %v753, %v785
        %v793 = vadd.f32 %v754, %v785
        %v794 = vadd.f32 %v755, %v785
        %v795 = vadd.f32 %v756, %v785
        %v796 = vadd.f32 %v757, %v785
        %v797 = vadd.f32 %v758, %v785
        %v798 = vadd.f32 %v759, %v785
        %v799 = vadd.f32 %v760, %v785
        %v800 = vadd.f32 %v761, %v785
        %v801 = vadd.f32 %v762, %v785
        %v802 = vadd.f32 %v763, %v785
        %v803 = vadd.f32 %v764, %v785
        %v804 = vadd.f32 %v765, %v785
        %v805 = vadd.f32 %v766, %v785
        %v806 = vadd.f32 %v767, %v785
        %v807 = vadd.f32 %v768, %v785
        %v808 = vadd.f32 %v769, %v785
        %v809 = vadd.f32 %v770, %v785
        %v810 = vadd.f32 %v771, %v785
        %v811 = vadd.f32 %v772, %v785
        %v812 = vadd.f32 %v773, %v785
        %v813 = vadd.f32 %v774, %v785
        %v814 = vadd.f32 %v775, %v785
        %v815 = vadd.f32 %v776, %v785
        %v816 = vadd.f32 %v777, %v785
        %v817 = vadd.f32 %v778, %v785
        %v818 = vadd.f32 %v779, %v785
        %v819 = vxor.u32 %v787, 2147483648
        %v820 = vxor.u32 %v788, 2147483648
        %v821 = vxor.u32 %v789, 2147483648
        %v822 = vxor.u32 %v790, 2147483648
        %v823 = vxor.u32 %v791, 2147483648
        %v824 = vxor.u32 %v792, 2147483648
        %v825 = vxor.u32 %v793, 2147483648
        %v826 = vxor.u32 %v794, 2147483648
        %v827 = vxor.u32 %v795, 2147483648
        %v828 = vxor.u32 %v796, 2147483648
        %v829 = vxor.u32 %v797, 2147483648
        %v830 = vxor.u32 %v798, 2147483648
        %v831 = vxor.u32 %v799, 2147483648
        %v832 = vxor.u32 %v800, 2147483648
        %v833 = vxor.u32 %v801, 2147483648
        %v834 = vxor.u32 %v802, 2147483648
        %v835 = vxor.u32 %v803, 2147483648
        %v836 = vxor.u32 %v804, 2147483648
        %v837 = vxor.u32 %v805, 2147483648
        %v838 = vxor.u32 %v806, 2147483648
        %v839 = vxor.u32 %v807, 2147483648
        %v840 = vxor.u32 %v808, 2147483648
        %v841 = vxor.u32 %v809, 2147483648
        %v842 = vxor.u32 %v810, 2147483648
        %v843 = vxor.u32 %v811, 2147483648
        %v844 = vxor.u32 %v812, 2147483648
        %v845 = vxor.u32 %v813, 2147483648
        %v846 = vxor.u32 %v814, 2147483648
        %v847 = vxor.u32 %v815, 2147483648
        %v848 = vxor.u32 %v816, 2147483648
        %v849 = vxor.u32 %v817, 2147483648
        %v850 = vxor.u32 %v818, 2147483648
        %v851 = vmul.f32 %v819, 1.442695
        %v852 = vpow.pop %v851
        %v853 = vmul.f32 %v820, 1.442695
        %v854 = vpow.pop %v853
        %v855 = vmul.f32 %v821, 1.442695
        %v856 = vpow.pop %v855
        %v857 = vmul.f32 %v822, 1.442695
        %v858 = vpow.pop %v857
        %v859 = vmul.f32 %v823, 1.442695
        %v860 = vpow.pop %v859
        %v861 = vmul.f32 %v824, 1.442695
        %v862 = vpow.pop %v861
        %v863 = vmul.f32 %v825, 1.442695
        %v864 = vpow.pop %v863
        %v865 = vmul.f32 %v826, 1.442695
        %v866 = vpow.pop %v865
        %v867 = vmul.f32 %v827, 1.442695
        %v868 = vpow.pop %v867
        %v869 = vmul.f32 %v828, 1.442695
        %v870 = vpow.pop %v869
        %v871 = vmul.f32 %v829, 1.442695
        %v872 = vpow.pop %v871
        %v873 = vmul.f32 %v830, 1.442695
        %v874 = vpow.pop %v873
        %v875 = vmul.f32 %v831, 1.442695
        %v876 = vpow.pop %v875
        %v877 = vmul.f32 %v832, 1.442695
        %v878 = vpow.pop %v877
        %v879 = vmul.f32 %v833, 1.442695
        %v880 = vpow.pop %v879
        %v881 = vmul.f32 %v834, 1.442695
        %v882 = vpow.pop %v881
        %v883 = vmul.f32 %v835, 1.442695
        %v884 = vpow.pop %v883
        %v885 = vmul.f32 %v836, 1.442695
        %v886 = vpow.pop %v885
        %v887 = vmul.f32 %v837, 1.442695
        %v888 = vpow.pop %v887
        %v889 = vmul.f32 %v838, 1.442695
        %v890 = vpow.pop %v889
        %v891 = vmul.f32 %v839, 1.442695
        %v892 = vpow.pop %v891
        %v893 = vmul.f32 %v840, 1.442695
        %v894 = vpow.pop %v893
        %v895 = vmul.f32 %v841, 1.442695
        %v896 = vpow.pop %v895
        %v897 = vmul.f32 %v842, 1.442695
        %v898 = vpow.pop %v897
        %v899 = vmul.f32 %v843, 1.442695
        %v900 = vpow.pop %v899
        %v901 = vmul.f32 %v844, 1.442695
        %v902 = vpow.pop %v901
        %v903 = vmul.f32 %v845, 1.442695
        %v904 = vpow.pop %v903
        %v905 = vmul.f32 %v846, 1.442695
        %v906 = vpow.pop %v905
        %v907 = vmul.f32 %v847, 1.442695
        %v908 = vpow.pop %v907
        %v909 = vmul.f32 %v848, 1.442695
        %v910 = vpow.pop %v909
        %v911 = vmul.f32 %v849, 1.442695
        %v912 = vpow.pop %v911
        %v913 = vmul.f32 %v850, 1.442695
        %v914 = vpow.pop %v913
        %v915 = vadd.f32 %v852, 1.0
        %v916 = vadd.f32 %v854, 1.0
        %v917 = vadd.f32 %v856, 1.0
        %v918 = vadd.f32 %v858, 1.0
        %v919 = vadd.f32 %v860, 1.0
        %v920 = vadd.f32 %v862, 1.0
        %v921 = vadd.f32 %v864, 1.0
        %v922 = vadd.f32 %v866, 1.0
        %v923 = vadd.f32 %v868, 1.0
        %v924 = vadd.f32 %v870, 1.0
        %v925 = vadd.f32 %v872, 1.0
        %v926 = vadd.f32 %v874, 1.0
        %v927 = vadd.f32 %v876, 1.0
        %v928 = vadd.f32 %v878, 1.0
        %v929 = vadd.f32 %v880, 1.0
        %v930 = vadd.f32 %v882, 1.0
        %v931 = vadd.f32 %v884, 1.0
        %v932 = vadd.f32 %v886, 1.0
        %v933 = vadd.f32 %v888, 1.0
        %v934 = vadd.f32 %v890, 1.0
        %v935 = vadd.f32 %v892, 1.0
        %v936 = vadd.f32 %v894, 1.0
        %v937 = vadd.f32 %v896, 1.0
        %v938 = vadd.f32 %v898, 1.0
        %v939 = vadd.f32 %v900, 1.0
        %v940 = vadd.f32 %v902, 1.0
        %v941 = vadd.f32 %v904, 1.0
        %v942 = vadd.f32 %v906, 1.0
        %v943 = vadd.f32 %v908, 1.0
        %v944 = vadd.f32 %v910, 1.0
        %v945 = vadd.f32 %v912, 1.0
        %v946 = vadd.f32 %v914, 1.0
        %v947 = vrcp.pop %v915
        %v948 = vmul.f32 1.0, %v947
        %v949 = vrcp.pop %v916
        %v950 = vmul.f32 1.0, %v949
        %v951 = vrcp.pop %v917
        %v952 = vmul.f32 1.0, %v951
        %v953 = vrcp.pop %v918
        %v954 = vmul.f32 1.0, %v953
        %v955 = vrcp.pop %v919
        %v956 = vmul.f32 1.0, %v955
        %v957 = vrcp.pop %v920
        %v958 = vmul.f32 1.0, %v957
        %v959 = vrcp.pop %v921
        %v960 = vmul.f32 1.0, %v959
        %v961 = vrcp.pop %v922
        %v962 = vmul.f32 1.0, %v961
        %v963 = vrcp.pop %v923
        %v964 = vmul.f32 1.0, %v963
        %v965 = vrcp.pop %v924
        %v966 = vmul.f32 1.0, %v965
        %v967 = vrcp.pop %v925
        %v968 = vmul.f32 1.0, %v967
        %v969 = vrcp.pop %v926
        %v970 = vmul.f32 1.0, %v969
        %v971 = vrcp.pop %v927
        %v972 = vmul.f32 1.0, %v971
        %v973 = vrcp.pop %v928
        %v974 = vmul.f32 1.0, %v973
        %v975 = vrcp.pop %v929
        %v976 = vmul.f32 1.0, %v975
        %v977 = vrcp.pop %v930
        %v978 = vmul.f32 1.0, %v977
        %v979 = vrcp.pop %v931
        %v980 = vmul.f32 1.0, %v979
        %v981 = vrcp.pop %v932
        %v982 = vmul.f32 1.0, %v981
        %v983 = vrcp.pop %v933
        %v984 = vmul.f32 1.0, %v983
        %v985 = vrcp.pop %v934
        %v986 = vmul.f32 1.0, %v985
        %v987 = vrcp.pop %v935
        %v988 = vmul.f32 1.0, %v987
        %v989 = vrcp.pop %v936
        %v990 = vmul.f32 1.0, %v989
        %v991 = vrcp.pop %v937
        %v992 = vmul.f32 1.0, %v991
        %v993 = vrcp.pop %v938
        %v994 = vmul.f32 1.0, %v993
        %v995 = vrcp.pop %v939
        %v996 = vmul.f32 1.0, %v995
        %v997 = vrcp.pop %v940
        %v998 = vmul.f32 1.0, %v997
        %v999 = vrcp.pop %v941
        %v1000 = vmul.f32 1.0, %v999
        %v1001 = vrcp.pop %v942
        %v1002 = vmul.f32 1.0, %v1001
        %v1003 = vrcp.pop %v943
        %v1004 = vmul.f32 1.0, %v1003
        %v1005 = vrcp.pop %v944
        %v1006 = vmul.f32 1.0, %v1005
        %v1007 = vrcp.pop %v945
        %v1008 = vmul.f32 1.0, %v1007
        %v1009 = vrcp.pop %v946
        %v1010 = vmul.f32 1.0, %v1009
        %v1011 = vmul.f32 %v787, %v948
        %v1012 = vmul.f32 %v788, %v950
        %v1013 = vmul.f32 %v789, %v952
        %v1014 = vmul.f32 %v790, %v954
        %v1015 = vmul.f32 %v791, %v956
        %v1016 = vmul.f32 %v792, %v958
        %v1017 = vmul.f32 %v793, %v960
        %v1018 = vmul.f32 %v794, %v962
        %v1019 = vmul.f32 %v795, %v964
        %v1020 = vmul.f32 %v796, %v966
        %v1021 = vmul.f32 %v797, %v968
        %v1022 = vmul.f32 %v798, %v970
        %v1023 = vmul.f32 %v799, %v972
        %v1024 = vmul.f32 %v800, %v974
        %v1025 = vmul.f32 %v801, %v976
        %v1026 = vmul.f32 %v802, %v978
        %v1027 = vmul.f32 %v803, %v980
        %v1028 = vmul.f32 %v804, %v982
        %v1029 = vmul.f32 %v805, %v984
        %v1030 = vmul.f32 %v806, %v986
        %v1031 = vmul.f32 %v807, %v988
        %v1032 = vmul.f32 %v808, %v990
        %v1033 = vmul.f32 %v809, %v992
        %v1034 = vmul.f32 %v810, %v994
        %v1035 = vmul.f32 %v811, %v996
        %v1036 = vmul.f32 %v812, %v998
        %v1037 = vmul.f32 %v813, %v1000
        %v1038 = vmul.f32 %v814, %v1002
        %v1039 = vmul.f32 %v815, %v1004
        %v1040 = vmul.f32 %v816, %v1006
        %v1041 = vmul.f32 %v817, %v1008
        %v1042 = vmul.f32 %v818, %v1010
        %v1043 = vpack.c.bf16 %v1012, %v1011
        %v1044 = vpack.c.bf16 %v1014, %v1013
        %v1045 = vpack.c.bf16 %v1016, %v1015
        %v1046 = vpack.c.bf16 %v1018, %v1017
        %v1047 = vpack.c.bf16 %v1020, %v1019
        %v1048 = vpack.c.bf16 %v1022, %v1021
        %v1049 = vpack.c.bf16 %v1024, %v1023
        %v1050 = vpack.c.bf16 %v1026, %v1025
        %v1051 = vpack.c.bf16 %v1028, %v1027
        %v1052 = vpack.c.bf16 %v1030, %v1029
        %v1053 = vpack.c.bf16 %v1032, %v1031
        %v1054 = vpack.c.bf16 %v1034, %v1033
        %v1055 = vpack.c.bf16 %v1036, %v1035
        %v1056 = vpack.c.bf16 %v1038, %v1037
        %v1057 = vpack.c.bf16 %v1040, %v1039
        %v1058 = vpack.c.bf16 %v1042, %v1041
        %v1075 = vunpack.c.l.b16 %v1043
        %v1076 = vunpack.c.h.b16 %v1043
        %v1077 = vunpack.c.l.b16 %v1044
        %v1078 = vunpack.c.h.b16 %v1044
        %v1079 = vunpack.c.l.b16 %v1045
        %v1080 = vunpack.c.h.b16 %v1045
        %v1081 = vunpack.c.l.b16 %v1046
        %v1082 = vunpack.c.h.b16 %v1046
        %v1083 = vunpack.c.l.b16 %v1047
        %v1084 = vunpack.c.h.b16 %v1047
        %v1085 = vunpack.c.l.b16 %v1048
        %v1086 = vunpack.c.h.b16 %v1048
        %v1087 = vunpack.c.l.b16 %v1049
        %v1088 = vunpack.c.h.b16 %v1049
        %v1089 = vunpack.c.l.b16 %v1050
        %v1090 = vunpack.c.h.b16 %v1050
        %v1091 = vunpack.c.l.b16 %v1051
        %v1092 = vunpack.c.h.b16 %v1051
        %v1093 = vunpack.c.l.b16 %v1052
        %v1094 = vunpack.c.h.b16 %v1052
        %v1095 = vunpack.c.l.b16 %v1053
        %v1096 = vunpack.c.h.b16 %v1053
        %v1097 = vunpack.c.l.b16 %v1054
        %v1098 = vunpack.c.h.b16 %v1054
        %v1099 = vunpack.c.l.b16 %v1055
        %v1100 = vunpack.c.h.b16 %v1055
        %v1101 = vunpack.c.l.b16 %v1056
        %v1102 = vunpack.c.h.b16 %v1056
        %v1103 = vunpack.c.l.b16 %v1057
        %v1104 = vunpack.c.h.b16 %v1057
        %v1105 = vunpack.c.l.b16 %v1058
        %v1106 = vunpack.c.h.b16 %v1058
        %v1107 = vpack.c.b16 %v1075, %v1075
        %v1108 = vpack.c.b16 %v1076, %v1076
        %v1109 = vpack.c.b16 %v1077, %v1077
        %v1110 = vpack.c.b16 %v1078, %v1078
        %v1111 = vpack.c.b16 %v1079, %v1079
        %v1112 = vpack.c.b16 %v1080, %v1080
        %v1113 = vpack.c.b16 %v1081, %v1081
        %v1114 = vpack.c.b16 %v1082, %v1082
        %v1115 = vpack.c.b16 %v1083, %v1083
        %v1116 = vpack.c.b16 %v1084, %v1084
        %v1117 = vpack.c.b16 %v1085, %v1085
        %v1118 = vpack.c.b16 %v1086, %v1086
        %v1119 = vpack.c.b16 %v1087, %v1087
        %v1120 = vpack.c.b16 %v1088, %v1088
        %v1121 = vpack.c.b16 %v1089, %v1089
        %v1122 = vpack.c.b16 %v1090, %v1090
        %v1123 = vpack.c.b16 %v1091, %v1091
        %v1124 = vpack.c.b16 %v1092, %v1092
        %v1125 = vpack.c.b16 %v1093, %v1093
        %v1126 = vpack.c.b16 %v1094, %v1094
        %v1127 = vpack.c.b16 %v1095, %v1095
        %v1128 = vpack.c.b16 %v1096, %v1096
        %v1129 = vpack.c.b16 %v1097, %v1097
        %v1130 = vpack.c.b16 %v1098, %v1098
        %v1131 = vpack.c.b16 %v1099, %v1099
        %v1132 = vpack.c.b16 %v1100, %v1100
        %v1133 = vpack.c.b16 %v1101, %v1101
        %v1134 = vpack.c.b16 %v1102, %v1102
        %v1135 = vpack.c.b16 %v1103, %v1103
        %v1136 = vpack.c.b16 %v1104, %v1104
        %v1137 = vpack.c.b16 %v1105, %v1105
        %v1138 = vpack.c.b16 %v1106, %v1106
        %1171 = vst [vmem:[%s257] sm:$0xf] %v1107
        %1172 = vst [vmem:[%s257 + $0x4] sm:$0xf] %v1108
        %1173 = vst [vmem:[%s257 + $0x8] sm:$0xf] %v1109
        %1174 = vst [vmem:[%s257 + $0xc] sm:$0xf] %v1110
        %1175 = vst [vmem:[%s257 + $0x10] sm:$0xf] %v1111
        %1176 = vst [vmem:[%s257 + $0x14] sm:$0xf] %v1112
        %1177 = vst [vmem:[%s257 + $0x18] sm:$0xf] %v1113
        %1178 = vst [vmem:[%s257 + $0x1c] sm:$0xf] %v1114
        %1179 = vst [vmem:[%s257 + $0x20] sm:$0xf] %v1115
        %1180 = vst [vmem:[%s257 + $0x24] sm:$0xf] %v1116
        %1181 = vst [vmem:[%s257 + $0x28] sm:$0xf] %v1117
        %1182 = vst [vmem:[%s257 + $0x2c] sm:$0xf] %v1118
        %1183 = vst [vmem:[%s257 + $0x30] sm:$0xf] %v1119
        %1184 = vst [vmem:[%s257 + $0x34] sm:$0xf] %v1120
        %1185 = vst [vmem:[%s257 + $0x38] sm:$0xf] %v1121
        %1186 = vst [vmem:[%s257 + $0x3c] sm:$0xf] %v1122
        %1187 = vst [vmem:[%s257 + $0x40] sm:$0xf] %v1123
        %1188 = vst [vmem:[%s257 + $0x44] sm:$0xf] %v1124
        %1189 = vst [vmem:[%s257 + $0x48] sm:$0xf] %v1125
        %1190 = vst [vmem:[%s257 + $0x4c] sm:$0xf] %v1126
        %1191 = vst [vmem:[%s257 + $0x50] sm:$0xf] %v1127
        %1192 = vst [vmem:[%s257 + $0x54] sm:$0xf] %v1128
        %1193 = vst [vmem:[%s257 + $0x58] sm:$0xf] %v1129
        %1194 = vst [vmem:[%s257 + $0x5c] sm:$0xf] %v1130
        %1195 = vst [vmem:[%s257 + $0x60] sm:$0xf] %v1131
        %1196 = vst [vmem:[%s257 + $0x64] sm:$0xf] %v1132
        %1197 = vst [vmem:[%s257 + $0x68] sm:$0xf] %v1133
        %1198 = vst [vmem:[%s257 + $0x6c] sm:$0xf] %v1134
        %1199 = vst [vmem:[%s257 + $0x70] sm:$0xf] %v1135
        %1200 = vst [vmem:[%s257 + $0x74] sm:$0xf] %v1136
        %1201 = vst [vmem:[%s257 + $0x78] sm:$0xf] %v1137
        %1202 = vst [vmem:[%s257 + $0x7c] sm:$0xf] %v1138
      $region40: #{forward.16} parent=31 // pred_fallthru
        _
      %s1203 = smul.u32 32, %s19
      %p1204 = scmp.lt.s32.totalorder %s1203, 63
      %s1205 = scalar_select %p1204, %s1203, 63
      %p1206 = scmp.lt.s32.totalorder %s20, 0
      %s1207 = scalar_select %p1206, %s20, 0
      %s1208 = sadd.s32 %s1207, %s1205
      %s1209 = smul.addr %s1208, 4
      %s1210 = scalar_lea.vmem %s3, %s1209
      // Predicated region
      $region41: #{forward.16} parent=31 // pred_check
        %p1211 = pneg %p135
      $region42: #{forward.16} parent=31 // pred_check_branch
        %1213 = sbr.rel (%p1211) target = $region44
      $region43: #{forward.16} parent=31 // pred_region
        %s1214 = smul.u32 32, %s19
      $region44: #{forward.16} parent=31 // pred_fallthru
        _
    $region32: #{forward.16} parent=5 // pred_fallthru
      _
    %p1215 = scmp.le.s32.totalorder 2, %s9
    // Predicated region
    $region45: #{forward.16} parent=5 // pred_check
      %p1216 = pneg %p1215
    $region46: #{forward.16} parent=5 // pred_check_branch
      %1218 = sbr.rel (%p1216) target = $region48
    $region47: #{forward.16} parent=5 // pred_region
      %s1219 = ssub.s32 %s9, 2
      // Predicated region
      $region49: #{forward.16} parent=47 // pred_check
        %p1220 = pneg %p141
      $region50: #{forward.16} parent=47 // pred_check_branch
        %1222 = sbr.rel (%p1220) target = $region52
      $region51: #{forward.16} parent=47 // pred_region
        %s1223 = smul.u32 32, %s22
        %p1224 = scmp.lt.s32.totalorder %s1223, 63
        %s1225 = scalar_select %p1224, %s1223, 63
        %p1226 = scmp.lt.s32.totalorder %s23, 0
        %s1227 = scalar_select %p1226, %s23, 0
        %s1228 = sadd.s32 %s1227, %s1225
        %s1229 = smul.addr %s1228, 4
        %s1230 = scalar_lea.vmem %s3, %s1229
      $region52: #{forward.16} parent=47 // pred_fallthru
        _
    $region48: #{forward.16} parent=5 // pred_fallthru
      _
  $region6: #{forward.16} parent=0 // loop_footer
    %s13 = sadd.s32 1, %s9
  $region7: #{forward.16} parent=0 // loop_footer_branch
    %8 = sbr.rel target = $region3
  $region8: #{forward.16} parent=0 // loop_exit
    _

// kernel: forward.17
$region0: #{forward.17}
  #allocation0 [shape = 'u32[]', space=smem, size = 0x4, offset = 0x4, fixed_abs, tag = 'smem constant byte address 0x4 - core index']
  #allocation1 [shape = 'u32[144,128]{1,0:T(1,128)}', space=vmem, size = 0x12000, scoped, tag = 'internal scratch']
  #allocation2 [shape = 'f32[128,128]{1,0:T(8,128)}', space=vmem, size = 0x10000, scoped, tag = 'scratch operand']
  %s0 = inlined_call_operand.vmem [shape: bf16[128,640], index: 0, kind: input, shape index: {}]
  %s1 = inlined_call_operand.vmem [shape: bf16[640,128], index: 1, kind: input, shape index: {}]
  %s2 = inlined_call_operand.vmem [shape: f32[1,128], index: 2, kind: input, shape index: {}]
  %s3 = inlined_call_operand.vmem [shape: bf16[128,128], index: 3, kind: output, shape index: {0}]
  %s4 = inlined_call_operand.vmem [shape: f32[8,128], index: 4, kind: output, shape index: {1}]
  %s5 = inlined_call_operand.vmem [shape: f32[8,128], index: 5, kind: output, shape index: {2}]
  %6 = xla_tuple %s3, %s4, %s5
  %s7 = sld [smem:[#allocation0]]
  $region110: #{forward.17} parent=0
    _
  %s9 = ssub.s32 1, %s7
  %s10 = scalar_select 0, %s9, %s7
  $region1: #{forward.17} parent=0
    #allocation3 [shape = 'u8[65536]{0}', space=vmem, size = 0x10000, scoped, tag = 'input window, operand 0']
    loop: start=0, step=1, limit=7
    $region2: #{forward.17} parent=1 // loop_pre_header
      _
    $region3: #{forward.17} parent=1 // loop_header
      %s12 = sphi 0, %s16
      %p13 = scmp.ge.s32.totalorder %s12, 7
      %s19 = sphi 0, %s38
      %s20 = sphi 0, %s34
      %s21 = sphi 0, %s30
      %s22 = sphi 0, %s19
      %s23 = sphi 0, %s20
      %s24 = sphi 0, %s21
      %s25 = sphi 0, %s22
      %s26 = sphi 0, %s23
      %s27 = sphi 0, %s24
      %s43 = sphi 0, %s45
      %s46 = sphi 0, %s43
      %s47 = sphi 0, %s46
      %s63 = sphi 0, %s47
      %s71 = sphi 0, %s73
      %s74 = sphi 0, %s71
      %s75 = sphi 0, %s74
      %s91 = sphi 0, %s75
      %s97 = sphi 0, %s99
      %s100 = sphi 0, %s97
      %s101 = sphi 0, %s100
      %s117 = sphi 0, %s101
      %s125 = sphi 0, %s127
      %s128 = sphi 0, %s125
      %s129 = sphi 0, %s128
      %s145 = sphi 0, %s129
      %s153 = sphi 0, %s155
      %s156 = sphi 0, %s153
      %s157 = sphi 0, %s156
      %s173 = sphi 0, %s157
      %s181 = sphi 0, %s183
      %s184 = sphi 0, %s181
      %s185 = sphi 0, %s184
      %s201 = sphi 0, %s185
    $region4: #{forward.17} parent=1 // loop_header_branch
      %15 = sbr.rel (%p13) target = $region8
    $region5: #{forward.17} parent=1 // loop_body
      %s17 = ssub.s32 %s12, 1
      %s18 = ssub.s32 %s12, 2
      %s28 = sadd.s32 1, %s21
      %p29 = scmp.ge.s32.totalorder %s28, 5
      %s30 = scalar_select %p29, 0, %s28
      %s31 = sadd.s32 1, %s20
      %s32 = scalar_select %p29, %s31, %s20
      %p33 = scmp.ge.s32.totalorder %s32, 1
      %s34 = scalar_select %p33, 0, %s32
      %s35 = sadd.s32 1, %s19
      %s36 = scalar_select %p33, %s35, %s19
      %p37 = scmp.ge.s32.totalorder %s36, 1
      %s38 = scalar_select %p37, 0, %s36
      %s39 = ssub.s32 %s19, %s38
      %s40 = ssub.s32 %s21, %s30
      %s41 = sor.u32 %s39, %s40
      %p42 = scmp.eq.s32.totalorder %s41, 0
      %s44 = sadd.s32 %s43, 1
      %s45 = scalar_select %p42, %s43, %s44
      %p48 = pneg %p42
      %p49 = scmp.eq.s32.totalorder %s12, 4
      %p50 = por %p48, %p49
      %p51 = scmp.ne.s32.totalorder %s43, %s46
      %p52 = scmp.eq.s32.totalorder %s12, 0
      %p53 = por %p51, %p52
      %p54 = scmp.ne.s32.totalorder %s43, %s46
      %p55 = scmp.eq.s32.totalorder %s17, 4
      %p56 = por %p54, %p55
      %p57 = scmp.ne.s32.totalorder %s46, %s47
      %p58 = scmp.eq.s32.totalorder %s17, 0
      %p59 = por %p57, %p58
      %p60 = scmp.ne.s32.totalorder %s46, %s47
      %p61 = scmp.eq.s32.totalorder %s18, 4
      %p62 = por %p60, %p61
      %p64 = scmp.ne.s32.totalorder %s47, %s63
      %p65 = scmp.eq.s32.totalorder %s18, 0
      %p66 = por %p64, %p65
      %s67 = ssub.s32 %s21, %s30
      %s68 = ssub.s32 %s20, %s34
      %s69 = sor.u32 %s67, %s68
      %p70 = scmp.eq.s32.totalorder %s69, 0
      %s72 = sadd.s32 %s71, 1
      %s73 = scalar_select %p70, %s71, %s72
      %p76 = pneg %p70
      %p77 = scmp.eq.s32.totalorder %s12, 4
      %p78 = por %p76, %p77
      %p79 = scmp.ne.s32.totalorder %s71, %s74
      %p80 = scmp.eq.s32.totalorder %s12, 0
      %p81 = por %p79, %p80
      %p82 = scmp.ne.s32.totalorder %s71, %s74
      %p83 = scmp.eq.s32.totalorder %s17, 4
      %p84 = por %p82, %p83
      %p85 = scmp.ne.s32.totalorder %s74, %s75
      %p86 = scmp.eq.s32.totalorder %s17, 0
      %p87 = por %p85, %p86
      %p88 = scmp.ne.s32.totalorder %s74, %s75
      %p89 = scmp.eq.s32.totalorder %s18, 4
      %p90 = por %p88, %p89
      %p92 = scmp.ne.s32.totalorder %s75, %s91
      %p93 = scmp.eq.s32.totalorder %s18, 0
      %p94 = por %p92, %p93
      %s95 = ssub.s32 %s20, %s34
      %p96 = scmp.eq.s32.totalorder %s95, 0
      %s98 = sadd.s32 %s97, 1
      %s99 = scalar_select %p96, %s97, %s98
      %p102 = pneg %p96
      %p103 = scmp.eq.s32.totalorder %s12, 4
      %p104 = por %p102, %p103
      %p105 = scmp.ne.s32.totalorder %s97, %s100
      %p106 = scmp.eq.s32.totalorder %s12, 0
      %p107 = por %p105, %p106
      %p108 = scmp.ne.s32.totalorder %s97, %s100
      %p109 = scmp.eq.s32.totalorder %s17, 4
      %p110 = por %p108, %p109
      %p111 = scmp.ne.s32.totalorder %s100, %s101
      %p112 = scmp.eq.s32.totalorder %s17, 0
      %p113 = por %p111, %p112
      %p114 = scmp.ne.s32.totalorder %s100, %s101
      %p115 = scmp.eq.s32.totalorder %s18, 4
      %p116 = por %p114, %p115
      %p118 = scmp.ne.s32.totalorder %s101, %s117
      %p119 = scmp.eq.s32.totalorder %s18, 0
      %p120 = por %p118, %p119
      %s121 = ssub.s32 %s19, %s38
      %s122 = ssub.s32 %s20, %s34
      %s123 = sor.u32 %s121, %s122
      %p124 = scmp.eq.s32.totalorder %s123, 0
      %s126 = sadd.s32 %s125, 1
      %s127 = scalar_select %p124, %s125, %s126
      %p130 = pneg %p124
      %p131 = scmp.eq.s32.totalorder %s12, 4
      %p132 = por %p130, %p131
      %p133 = scmp.ne.s32.totalorder %s125, %s128
      %p134 = scmp.eq.s32.totalorder %s12, 0
      %p135 = por %p133, %p134
      %p136 = scmp.ne.s32.totalorder %s125, %s128
      %p137 = scmp.eq.s32.totalorder %s17, 4
      %p138 = por %p136, %p137
      %p139 = scmp.ne.s32.totalorder %s128, %s129
      %p140 = scmp.eq.s32.totalorder %s17, 0
      %p141 = por %p139, %p140
      %p142 = scmp.ne.s32.totalorder %s128, %s129
      %p143 = scmp.eq.s32.totalorder %s18, 4
      %p144 = por %p142, %p143
      %p146 = scmp.ne.s32.totalorder %s129, %s145
      %p147 = scmp.eq.s32.totalorder %s18, 0
      %p148 = por %p146, %p147
      %s149 = ssub.s32 %s19, %s38
      %s150 = ssub.s32 %s20, %s34
      %s151 = sor.u32 %s149, %s150
      %p152 = scmp.eq.s32.totalorder %s151, 0
      %s154 = sadd.s32 %s153, 1
      %s155 = scalar_select %p152, %s153, %s154
      %p158 = pneg %p152
      %p159 = scmp.eq.s32.totalorder %s12, 4
      %p160 = por %p158, %p159
      %p161 = scmp.ne.s32.totalorder %s153, %s156
      %p162 = scmp.eq.s32.totalorder %s12, 0
      %p163 = por %p161, %p162
      %p164 = scmp.ne.s32.totalorder %s153, %s156
      %p165 = scmp.eq.s32.totalorder %s17, 4
      %p166 = por %p164, %p165
      %p167 = scmp.ne.s32.totalorder %s156, %s157
      %p168 = scmp.eq.s32.totalorder %s17, 0
      %p169 = por %p167, %p168
      %p170 = scmp.ne.s32.totalorder %s156, %s157
      %p171 = scmp.eq.s32.totalorder %s18, 4
      %p172 = por %p170, %p171
      %p174 = scmp.ne.s32.totalorder %s157, %s173
      %p175 = scmp.eq.s32.totalorder %s18, 0
      %p176 = por %p174, %p175
      %s177 = ssub.s32 %s19, %s38
      %s178 = ssub.s32 %s20, %s34
      %s179 = sor.u32 %s177, %s178
      %p180 = scmp.eq.s32.totalorder %s179, 0
      %s182 = sadd.s32 %s181, 1
      %s183 = scalar_select %p180, %s181, %s182
      %p186 = pneg %p180
      %p187 = scmp.eq.s32.totalorder %s12, 4
      %p188 = por %p186, %p187
      %p189 = scmp.ne.s32.totalorder %s181, %s184
      %p190 = scmp.eq.s32.totalorder %s12, 0
      %p191 = por %p189, %p190
      %p192 = scmp.ne.s32.totalorder %s181, %s184
      %p193 = scmp.eq.s32.totalorder %s17, 4
      %p194 = por %p192, %p193
      %p195 = scmp.ne.s32.totalorder %s184, %s185
      %p196 = scmp.eq.s32.totalorder %s17, 0
      %p197 = por %p195, %p196
      %p198 = scmp.ne.s32.totalorder %s184, %s185
      %p199 = scmp.eq.s32.totalorder %s18, 4
      %p200 = por %p198, %p199
      %p202 = scmp.ne.s32.totalorder %s185, %s201
      %p203 = scmp.eq.s32.totalorder %s18, 0
      %p204 = por %p202, %p203
      %p205 = scmp.le.s32.totalorder 1, %s12
      %p206 = scmp.lt.s32.totalorder %s12, 6
      %p207 = pnand %p205, %p206
      %p208 = pneg %p207
      // Predicated region
      $region9: #{forward.17} parent=5 // pred_check
        _
      $region10: #{forward.17} parent=5 // pred_check_branch
        %210 = sbr.rel (%p207) target = $region12
      $region11: #{forward.17} parent=5 // pred_region
        %s211 = ssub.s32 %s12, 1
        // Predicated region
        $region13: #{forward.17} parent=11 // pred_check
          %p212 = pneg %p113
        $region14: #{forward.17} parent=11 // pred_check_branch
          %214 = sbr.rel (%p212) target = $region16
        $region15: #{forward.17} parent=11 // pred_region
          %p215 = scmp.lt.s32.totalorder %s23, 0
          %s216 = scalar_select %p215, %s23, 0
          %s217 = scalar_lea.vmem %s2, %s216
        $region16: #{forward.17} parent=11 // pred_fallthru
          _
      $region12: #{forward.17} parent=5 // pred_fallthru
        _
      %p218 = scmp.lt.s32.totalorder %s12, 5
      // Predicated region
      $region17: #{forward.17} parent=5 // pred_check
        %p219 = pneg %p218
      $region18: #{forward.17} parent=5 // pred_check_branch
        %221 = sbr.rel (%p219) target = $region20
      $region19: #{forward.17} parent=5 // pred_region
        // Predicated region
        $region21: #{forward.17} parent=19 // pred_check
          %p222 = pneg %p53
        $region22: #{forward.17} parent=19 // pred_check_branch
          %224 = sbr.rel (%p222) target = $region24
        $region23: #{forward.17} parent=19 // pred_region
          %s225 = sand.u32 %s43, 1
          %s226 = sand.u32 %s43, 1
          %s227 = smul.addr %s226, 64
          %s228 = scalar_lea.vmem [#allocation3], %s227
          %s229 = smul.u32 16, %s19
          %s230 = smul.addr %s229, 5
          %s231 = sadd.s32 %s21, %s230
          %s232 = smul.addr %s231, 4
          %s233 = scalar_lea.vmem %s0, %s232
          // Predicated region
          $region25: #{forward.17} parent=23 // pred_check
            _
          $region26: #{forward.17} parent=23 // pred_check_branch
            %235 = sbr.rel (0) target = $region28
          $region27: #{forward.17} parent=23 // pred_region
            // Predicated region
            $region29: #{forward.17} parent=27 // pred_check
              _
            $region30: #{forward.17} parent=27 // pred_check_branch
              %237 = sbr.rel target = $region32
            $region31: #{forward.17} parent=27 // pred_region
              // Predicated region
              $region44: #{forward.17} parent=31 // pred_check
                _
              $region45: #{forward.17} parent=31 // pred_check_branch
                %283 = sbr.rel (0) target = $region47
              $region46: #{forward.17} parent=31 // pred_region
                loop: start=0, step=1, limit=1
                $region48: #{forward.17} parent=46 // loop_pre_header
                  _
                $region49: #{forward.17} parent=46 // loop_header
                  %s285 = sphi 0, %s289
                  %p286 = scmp.ge.s32.totalorder %s285, 1
                  %s290 = sphi %s233, %s233
                  %s291 = sphi %s228, %s228
                $region50: #{forward.17} parent=46 // loop_header_branch
                  %288 = sbr.rel (%p286) target = $region54
                $region51: #{forward.17} parent=46 // loop_body
                  _
                $region52: #{forward.17} parent=46 // loop_footer
                  %s289 = sadd.s32 1, %s285
                $region53: #{forward.17} parent=46 // loop_footer_branch
                  %284 = sbr.rel target = $region49
                $region54: #{forward.17} parent=46 // loop_exit
                  _
                %s293 = ssub.s32 16, 1
                loop: start=0, step=1, limit=1
                $region55: #{forward.17} parent=46 // loop_pre_header
                  _
                $region56: #{forward.17} parent=46 // loop_header
                  %s295 = sphi 0, %s299
                  %p296 = scmp.ge.s32.totalorder %s295, 1
                  %s300 = sphi %s233, %s233
                  %s301 = sphi %s228, %s228
                $region57: #{forward.17} parent=46 // loop_header_branch
                  %298 = sbr.rel (%p296) target = $region61
                $region58: #{forward.17} parent=46 // loop_body
                  %v302 = vld [vmem:[%s300] sm:%s293]
                  %303 = vst [vmem:[%s301] sm:%s293] %v302
                  %v304 = vld [vmem:[%s300 + $0x14] sm:%s293]
                  %305 = vst [vmem:[%s301 + $0x4] sm:%s293] %v304
                  %v306 = vld [vmem:[%s300 + $0x28] sm:%s293]
                  %307 = vst [vmem:[%s301 + $0x8] sm:%s293] %v306
                  %v308 = vld [vmem:[%s300 + $0x3c] sm:%s293]
                  %309 = vst [vmem:[%s301 + $0xc] sm:%s293] %v308
                  %v310 = vld [vmem:[%s300 + $0x50] sm:%s293]
                  %311 = vst [vmem:[%s301 + $0x10] sm:%s293] %v310
                  %v312 = vld [vmem:[%s300 + $0x64] sm:%s293]
                  %313 = vst [vmem:[%s301 + $0x14] sm:%s293] %v312
                  %v314 = vld [vmem:[%s300 + $0x78] sm:%s293]
                  %315 = vst [vmem:[%s301 + $0x18] sm:%s293] %v314
                  %v316 = vld [vmem:[%s300 + $0x8c] sm:%s293]
                  %317 = vst [vmem:[%s301 + $0x1c] sm:%s293] %v316
                  %v318 = vld [vmem:[%s300 + $0xa0] sm:%s293]
                  %319 = vst [vmem:[%s301 + $0x20] sm:%s293] %v318
                  %v320 = vld [vmem:[%s300 + $0xb4] sm:%s293]
                  %321 = vst [vmem:[%s301 + $0x24] sm:%s293] %v320
                  %v322 = vld [vmem:[%s300 + $0xc8] sm:%s293]
                  %323 = vst [vmem:[%s301 + $0x28] sm:%s293] %v322
                  %v324 = vld [vmem:[%s300 + $0xdc] sm:%s293]
                  %325 = vst [vmem:[%s301 + $0x2c] sm:%s293] %v324
                  %v326 = vld [vmem:[%s300 + $0xf0] sm:%s293]
                  %327 = vst [vmem:[%s301 + $0x30] sm:%s293] %v326
                  %v328 = vld [vmem:[%s300 + $0x104] sm:%s293]
                  %329 = vst [vmem:[%s301 + $0x34] sm:%s293] %v328
                  %v330 = vld [vmem:[%s300 + $0x118] sm:%s293]
                  %331 = vst [vmem:[%s301 + $0x38] sm:%s293] %v330
                  %v332 = vld [vmem:[%s300 + $0x12c] sm:%s293]
                  %333 = vst [vmem:[%s301 + $0x3c] sm:%s293] %v332
                $region59: #{forward.17} parent=46 // loop_footer
                  %s299 = sadd.s32 1, %s295
                $region60: #{forward.17} parent=46 // loop_footer_branch
                  %294 = sbr.rel target = $region56
                $region61: #{forward.17} parent=46 // loop_exit
                  _
              $region47: #{forward.17} parent=31 // pred_fallthru
                _
            $region32: #{forward.17} parent=27 // pred_fallthru
              _
            // Predicated region
            $region33: #{forward.17} parent=27 // pred_check
              _
            $region34: #{forward.17} parent=27 // pred_check_branch
              %239 = sbr.rel (0) target = $region36
            $region35: #{forward.17} parent=27 // pred_region
              %s241 = ssub.s32 16, 1
              loop: start=0, step=1, limit=1
              $region37: #{forward.17} parent=35 // loop_pre_header
                _
              $region38: #{forward.17} parent=35 // loop_header
                %s243 = sphi 0, %s247
                %p244 = scmp.ge.s32.totalorder %s243, 1
                %s248 = sphi %s233, %s233
                %s249 = sphi %s228, %s228
              $region39: #{forward.17} parent=35 // loop_header_branch
                %246 = sbr.rel (%p244) target = $region43
              $region40: #{forward.17} parent=35 // loop_body
                %v250 = vld [vmem:[%s248] sm:%s241]
                %251 = vst [vmem:[%s249] sm:%s241] %v250
                %v252 = vld [vmem:[%s248 + $0x14] sm:%s241]
                %253 = vst [vmem:[%s249 + $0x4] sm:%s241] %v252
                %v254 = vld [vmem:[%s248 + $0x28] sm:%s241]
                %255 = vst [vmem:[%s249 + $0x8] sm:%s241] %v254
                %v256 = vld [vmem:[%s248 + $0x3c] sm:%s241]
                %257 = vst [vmem:[%s249 + $0xc] sm:%s241] %v256
                %v258 = vld [vmem:[%s248 + $0x50] sm:%s241]
                %259 = vst [vmem:[%s249 + $0x10] sm:%s241] %v258
                %v260 = vld [vmem:[%s248 + $0x64] sm:%s241]
                %261 = vst [vmem:[%s249 + $0x14] sm:%s241] %v260
                %v262 = vld [vmem:[%s248 + $0x78] sm:%s241]
                %263 = vst [vmem:[%s249 + $0x18] sm:%s241] %v262
                %v264 = vld [vmem:[%s248 + $0x8c] sm:%s241]
                %265 = vst [vmem:[%s249 + $0x1c] sm:%s241] %v264
                %v266 = vld [vmem:[%s248 + $0xa0] sm:%s241]
                %267 = vst [vmem:[%s249 + $0x20] sm:%s241] %v266
                %v268 = vld [vmem:[%s248 + $0xb4] sm:%s241]
                %269 = vst [vmem:[%s249 + $0x24] sm:%s241] %v268
                %v270 = vld [vmem:[%s248 + $0xc8] sm:%s241]
                %271 = vst [vmem:[%s249 + $0x28] sm:%s241] %v270
                %v272 = vld [vmem:[%s248 + $0xdc] sm:%s241]
                %273 = vst [vmem:[%s249 + $0x2c] sm:%s241] %v272
                %v274 = vld [vmem:[%s248 + $0xf0] sm:%s241]
                %275 = vst [vmem:[%s249 + $0x30] sm:%s241] %v274
                %v276 = vld [vmem:[%s248 + $0x104] sm:%s241]
                %277 = vst [vmem:[%s249 + $0x34] sm:%s241] %v276
                %v278 = vld [vmem:[%s248 + $0x118] sm:%s241]
                %279 = vst [vmem:[%s249 + $0x38] sm:%s241] %v278
                %v280 = vld [vmem:[%s248 + $0x12c] sm:%s241]
                %281 = vst [vmem:[%s249 + $0x3c] sm:%s241] %v280
              $region41: #{forward.17} parent=35 // loop_footer
                %s247 = sadd.s32 1, %s243
              $region42: #{forward.17} parent=35 // loop_footer_branch
                %242 = sbr.rel target = $region38
              $region43: #{forward.17} parent=35 // loop_exit
                _
            $region36: #{forward.17} parent=27 // pred_fallthru
              _
          $region28: #{forward.17} parent=23 // pred_fallthru
            _
          %334 = vnop
        $region24: #{forward.17} parent=19 // pred_fallthru
          _
        // Predicated region
        $region62: #{forward.17} parent=19 // pred_check
          %p335 = pneg %p81
        $region63: #{forward.17} parent=19 // pred_check_branch
          %337 = sbr.rel (%p335) target = $region65
        $region64: #{forward.17} parent=19 // pred_region
          %s338 = smul.u32 16, %s21
          %p339 = scmp.lt.s32.totalorder %s338, 79
          %s340 = scalar_select %p339, %s338, 79
          %p341 = scmp.lt.s32.totalorder %s20, 0
          %s342 = scalar_select %p341, %s20, 0
          %s343 = sadd.s32 %s342, %s340
          %s344 = smul.addr %s343, 4
          %s345 = scalar_lea.vmem %s1, %s344
          %s346 = smul.u32 16, %s21
        $region65: #{forward.17} parent=19 // pred_fallthru
          _
      $region20: #{forward.17} parent=5 // pred_fallthru
        _
      %p347 = scmp.le.s32.totalorder 1, %s12
      %p348 = scmp.lt.s32.totalorder %s12, 6
      %p349 = pnand %p347, %p348
      %p350 = pneg %p349
      // Predicated region
      $region66: #{forward.17} parent=5 // pred_check
        _
      $region67: #{forward.17} parent=5 // pred_check_branch
        %352 = sbr.rel (%p349) target = $region69
      $region68: #{forward.17} parent=5 // pred_region
        %s353 = ssub.s32 %s12, 1
        %s354 = sand.u32 %s46, 1
        %s355 = sand.u32 %s46, 1
        %s356 = smul.addr %s355, 64
        %s357 = scalar_lea.vmem [#allocation3], %s356
        // Predicated region
        $region70: #{forward.17} parent=68 // pred_check
          %p358 = pneg %p59
        $region71: #{forward.17} parent=68 // pred_check_branch
          %360 = sbr.rel (%p358) target = $region73
        $region72: #{forward.17} parent=68 // pred_region
          _
        $region73: #{forward.17} parent=68 // pred_fallthru
          _
        %s361 = sand.u32 %s46, 1
        %s362 = sand.u32 %s46, 1
        %s363 = smul.addr %s362, 64
        %s364 = scalar_lea.vmem [#allocation3], %s363
        %p365 = pneg %p59
        %p366 = pneg %p56
        %s367 = smul.u32 16, %s24
        %p368 = scmp.lt.s32.totalorder %s367, 79
        %s369 = scalar_select %p368, %s367, 79
        %p370 = scmp.lt.s32.totalorder %s23, 0
        %s371 = scalar_select %p370, %s23, 0
        %s372 = sadd.s32 %s371, %s369
        %s373 = smul.addr %s372, 4
        %s374 = scalar_lea.vmem %s1, %s373
        %p375 = pneg %p87
        %p376 = pneg %p84
        %p377 = scmp.lt.s32.totalorder %s23, 0
        %s378 = scalar_select %p377, %s23, 0
        %s379 = scalar_lea.vmem %s2, %s378
        %p380 = pneg %p113
        %p381 = pneg %p110
        %p382 = pneg %p141
        %p383 = pneg %p138
        %s384 = smul.u32 16, %s22
        %p385 = scmp.lt.s32.totalorder %s384, 15
        %s386 = scalar_select %p385, %s384, 15
        %p387 = scmp.lt.s32.totalorder %s23, 0
        %s388 = scalar_select %p387, %s23, 0
        %s389 = sadd.s32 %s388, %s386
        %s390 = smul.addr %s389, 4
        %s391 = scalar_lea.vmem %s3, %s390
        %p392 = pneg %p169
        %p393 = pneg %p166
        %p394 = scmp.lt.s32.totalorder %s22, 0
        %s395 = scalar_select %p394, %s22, 0
        %p396 = scmp.lt.s32.totalorder %s23, 0
        %s397 = scalar_select %p396, %s23, 0
        %s398 = sadd.s32 %s397, %s395
        %s399 = smul.addr %s398, 8
        %s400 = scalar_lea.vmem %s4, %s399
        %p401 = pneg %p197
        %p402 = pneg %p194
        %p403 = scmp.lt.s32.totalorder %s22, 0
        %s404 = scalar_select %p403, %s22, 0
        %p405 = scmp.lt.s32.totalorder %s23, 0
        %s406 = scalar_select %p405, %s23, 0
        %s407 = sadd.s32 %s406, %s404
        %s408 = smul.addr %s407, 8
        %s409 = scalar_lea.vmem %s5, %s408
        %s410 = smul.u32 16, %s22
        %s411 = smul.u32 16, %s24
        %p412 = scmp.lt.s32.totalorder %s411, 79
        %s413 = scalar_select %p412, %s411, 79
        %p414 = scmp.lt.s32.totalorder %s23, 0
        %s415 = scalar_select %p414, %s23, 0
        %s416 = sadd.s32 %s415, %s413
        %s417 = smul.addr %s416, 4
        %s418 = scalar_lea.vmem %s1, %s417
        %s419 = smul.u32 16, %s24
        %p420 = scmp.lt.s32.totalorder %s23, 0
        %s421 = scalar_select %p420, %s23, 0
        %s422 = scalar_lea.vmem %s2, %s421
        %s423 = smul.u32 16, %s22
        %p424 = scmp.lt.s32.totalorder %s423, 15
        %s425 = scalar_select %p424, %s423, 15
        %p426 = scmp.lt.s32.totalorder %s23, 0
        %s427 = scalar_select %p426, %s23, 0
        %s428 = sadd.s32 %s427, %s425
        %s429 = smul.addr %s428, 4
        %s430 = scalar_lea.vmem %s3, %s429
        %s431 = smul.u32 16, %s22
        %p432 = scmp.lt.s32.totalorder %s22, 0
        %s433 = scalar_select %p432, %s22, 0
        %p434 = scmp.lt.s32.totalorder %s23, 0
        %s435 = scalar_select %p434, %s23, 0
        %s436 = sadd.s32 %s435, %s433
        %s437 = smul.addr %s436, 8
        %s438 = scalar_lea.vmem %s4, %s437
        %p439 = scmp.lt.s32.totalorder %s22, 0
        %s440 = scalar_select %p439, %s22, 0
        %p441 = scmp.lt.s32.totalorder %s23, 0
        %s442 = scalar_select %p441, %s23, 0
        %s443 = sadd.s32 %s442, %s440
        %s444 = smul.addr %s443, 8
        %s445 = scalar_lea.vmem %s5, %s444
        %s447 = smul.u32 %s22, 128
        %v448 = vlaneseq
        %v449 = vshrl.u32 %v448, 7
        %v450 = vadd.s32 %v449, 8
        %v451 = vadd.s32 %v449, 16
        %v452 = vadd.s32 %v449, 24
        %v453 = vadd.s32 %v449, 32
        %v454 = vadd.s32 %v449, 40
        %v455 = vadd.s32 %v449, 48
        %v456 = vadd.s32 %v449, 56
        %v457 = vadd.s32 %v449, 64
        %v458 = vadd.s32 %v449, 72
        %v459 = vadd.s32 %v449, 80
        %v460 = vadd.s32 %v449, 88
        %v461 = vadd.s32 %v449, 96
        %v462 = vadd.s32 %v449, 104
        %v463 = vadd.s32 %v449, 112
        %v464 = vadd.s32 %v449, 120
        %v465 = vstv %s447
        %v466 = vadd.s32 %v465, %v449
        %v467 = vadd.s32 %v465, %v450
        %v468 = vadd.s32 %v465, %v451
        %v469 = vadd.s32 %v465, %v452
        %v470 = vadd.s32 %v465, %v453
        %v471 = vadd.s32 %v465, %v454
        %v472 = vadd.s32 %v465, %v455
        %v473 = vadd.s32 %v465, %v456
        %v474 = vadd.s32 %v465, %v457
        %v475 = vadd.s32 %v465, %v458
        %v476 = vadd.s32 %v465, %v459
        %v477 = vadd.s32 %v465, %v460
        %v478 = vadd.s32 %v465, %v461
        %v479 = vadd.s32 %v465, %v462
        %v480 = vadd.s32 %v465, %v463
        %v481 = vadd.s32 %v465, %v464
        %p482 = scmp.eq.s32.totalorder %s24, 0
        // Predicated region
        $region74: #{forward.17} parent=68 // pred_check
          %p483 = pneg %p482
        $region75: #{forward.17} parent=68 // pred_check_branch
          %485 = sbr.rel (%p483) target = $region77
        $region76: #{forward.17} parent=68 // pred_region
          %486 = vst [vmem:[#allocation2] sm:$0xff] 0.0
          %487 = vst [vmem:[#allocation2 + $0x8] sm:$0xff] 0.0
          %488 = vst [vmem:[#allocation2 + $0x10] sm:$0xff] 0.0
          %489 = vst [vmem:[#allocation2 + $0x18] sm:$0xff] 0.0
          %490 = vst [vmem:[#allocation2 + $0x20] sm:$0xff] 0.0
          %491 = vst [vmem:[#allocation2 + $0x28] sm:$0xff] 0.0
          %492 = vst [vmem:[#allocation2 + $0x30] sm:$0xff] 0.0
          %493 = vst [vmem:[#allocation2 + $0x38] sm:$0xff] 0.0
          %494 = vst [vmem:[#allocation2 + $0x40] sm:$0xff] 0.0
          %495 = vst [vmem:[#allocation2 + $0x48] sm:$0xff] 0.0
          %496 = vst [vmem:[#allocation2 + $0x50] sm:$0xff] 0.0
          %497 = vst [vmem:[#allocation2 + $0x58] sm:$0xff] 0.0
          %498 = vst [vmem:[#allocation2 + $0x60] sm:$0xff] 0.0
          %499 = vst [vmem:[#allocation2 + $0x68] sm:$0xff] 0.0
          %500 = vst [vmem:[#allocation2 + $0x70] sm:$0xff] 0.0
          %501 = vst [vmem:[#allocation2 + $0x78] sm:$0xff] 0.0
        $region77: #{forward.17} parent=68 // pred_fallthru
          _
        %v502 = vld [vmem:[#allocation2] sm:$0xff]
        %v503 = vld [vmem:[#allocation2 + $0x8] sm:$0xff]
        %v504 = vld [vmem:[#allocation2 + $0x10] sm:$0xff]
        %v505 = vld [vmem:[#allocation2 + $0x18] sm:$0xff]
        %v506 = vld [vmem:[#allocation2 + $0x20] sm:$0xff]
        %v507 = vld [vmem:[#allocation2 + $0x28] sm:$0xff]
        %v508 = vld [vmem:[#allocation2 + $0x30] sm:$0xff]
        %v509 = vld [vmem:[#allocation2 + $0x38] sm:$0xff]
        %v510 = vld [vmem:[#allocation2 + $0x40] sm:$0xff]
        %v511 = vld [vmem:[#allocation2 + $0x48] sm:$0xff]
        %v512 = vld [vmem:[#allocation2 + $0x50] sm:$0xff]
        %v513 = vld [vmem:[#allocation2 + $0x58] sm:$0xff]
        %v514 = vld [vmem:[#allocation2 + $0x60] sm:$0xff]
        %v515 = vld [vmem:[#allocation2 + $0x68] sm:$0xff]
        %v516 = vld [vmem:[#allocation2 + $0x70] sm:$0xff]
        %v517 = vld [vmem:[#allocation2 + $0x78] sm:$0xff]
        %v518 = vld [vmem:[%s357] sm:$0xf]
        %v519 = vld [vmem:[%s357 + $0x4] sm:$0xf]
        %v520 = vld [vmem:[%s357 + $0x8] sm:$0xf]
        %v521 = vld [vmem:[%s357 + $0xc] sm:$0xf]
        %v522 = vld [vmem:[%s357 + $0x10] sm:$0xf]
        %v523 = vld [vmem:[%s357 + $0x14] sm:$0xf]
        %v524 = vld [vmem:[%s357 + $0x18] sm:$0xf]
        %v525 = vld [vmem:[%s357 + $0x1c] sm:$0xf]
        %v526 = vld [vmem:[%s357 + $0x20] sm:$0xf]
        %v527 = vld [vmem:[%s357 + $0x24] sm:$0xf]
        %v528 = vld [vmem:[%s357 + $0x28] sm:$0xf]
        %v529 = vld [vmem:[%s357 + $0x2c] sm:$0xf]
        %v530 = vld [vmem:[%s357 + $0x30] sm:$0xf]
        %v531 = vld [vmem:[%s357 + $0x34] sm:$0xf]
        %v532 = vld [vmem:[%s357 + $0x38] sm:$0xf]
        %v533 = vld [vmem:[%s357 + $0x3c] sm:$0xf]
        %v534 = vld [vmem:[%s418] sm:$0xf]
        %v535 = vld [vmem:[%s418 + $0x4] sm:$0xf]
        %v536 = vld [vmem:[%s418 + $0x8] sm:$0xf]
        %v537 = vld [vmem:[%s418 + $0xc] sm:$0xf]
        %v538 = vld [vmem:[%s418 + $0x10] sm:$0xf]
        %v539 = vld [vmem:[%s418 + $0x14] sm:$0xf]
        %v540 = vld [vmem:[%s418 + $0x18] sm:$0xf]
        %v541 = vld [vmem:[%s418 + $0x1c] sm:$0xf]
        %v542 = vld [vmem:[%s418 + $0x20] sm:$0xf]
        %v543 = vld [vmem:[%s418 + $0x24] sm:$0xf]
        %v544 = vld [vmem:[%s418 + $0x28] sm:$0xf]
        %v545 = vld [vmem:[%s418 + $0x2c] sm:$0xf]
        %v546 = vld [vmem:[%s418 + $0x30] sm:$0xf]
        %v547 = vld [vmem:[%s418 + $0x34] sm:$0xf]
        %v548 = vld [vmem:[%s418 + $0x38] sm:$0xf]
        %v549 = vld [vmem:[%s418 + $0x3c] sm:$0xf]
        %v566 = vunpack.c.l.b16 %v518
        %v567 = vunpack.c.l.b16 %v519
        %v568 = vunpack.c.l.b16 %v520
        %v569 = vunpack.c.l.b16 %v521
        %v570 = vunpack.c.l.b16 %v522
        %v571 = vunpack.c.l.b16 %v523
        %v572 = vunpack.c.l.b16 %v524
        %v573 = vunpack.c.l.b16 %v525
        %v574 = vunpack.c.l.b16 %v526
        %v575 = vunpack.c.l.b16 %v527
        %v576 = vunpack.c.l.b16 %v528
        %v577 = vunpack.c.l.b16 %v529
        %v578 = vunpack.c.l.b16 %v530
        %v579 = vunpack.c.l.b16 %v531
        %v580 = vunpack.c.l.b16 %v532
        %v581 = vunpack.c.l.b16 %v533
        %v582 = vpack.c.b16 %v567, %v566
        %v583 = vpack.c.b16 %v569, %v568
        %v584 = vpack.c.b16 %v571, %v570
        %v585 = vpack.c.b16 %v573, %v572
        %v586 = vpack.c.b16 %v575, %v574
        %v587 = vpack.c.b16 %v577, %v576
        %v588 = vpack.c.b16 %v579, %v578
        %v589 = vpack.c.b16 %v581, %v580
        %v614 = vunpack.c.l.b16 %v534
        %v615 = vunpack.c.l.b16 %v535
        %v616 = vunpack.c.l.b16 %v536
        %v617 = vunpack.c.l.b16 %v537
        %v618 = vunpack.c.l.b16 %v538
        %v619 = vunpack.c.l.b16 %v539
        %v620 = vunpack.c.l.b16 %v540
        %v621 = vunpack.c.l.b16 %v541
        %v622 = vunpack.c.l.b16 %v542
        %v623 = vunpack.c.l.b16 %v543
        %v624 = vunpack.c.l.b16 %v544
        %v625 = vunpack.c.l.b16 %v545
        %v626 = vunpack.c.l.b16 %v546
        %v627 = vunpack.c.l.b16 %v547
        %v628 = vunpack.c.l.b16 %v548
        %v629 = vunpack.c.l.b16 %v549
        %v630 = vpack.c.b16 %v615, %v614
        %v631 = vpack.c.b16 %v617, %v616
        %v632 = vpack.c.b16 %v619, %v618
        %v633 = vpack.c.b16 %v621, %v620
        %v634 = vpack.c.b16 %v623, %v622
        %v635 = vpack.c.b16 %v625, %v624
        %v636 = vpack.c.b16 %v627, %v626
        %v637 = vpack.c.b16 %v629, %v628
        %646 = vmatprep.subr.bf16.mxu0 0
        %647 = vmatpush1.bf16.msra.mxu0 %v637
        %648 = vmatprep.subr.bf16.mxu0 0
        %649 = vmatpush1.bf16.msra.mxu0 %v636
        %650 = vmatprep.subr.bf16.mxu0 0
        %651 = vmatpush1.bf16.msra.mxu0 %v635
        %652 = vmatprep.subr.bf16.mxu0 0
        %653 = vmatpush1.bf16.msra.mxu0 %v634
        %654 = vmatprep.subr.bf16.mxu0 0
        %655 = vmatpush1.bf16.msra.mxu0 %v633
        %656 = vmatprep.subr.bf16.mxu0 0
        %657 = vmatpush1.bf16.msra.mxu0 %v632
        %658 = vmatprep.subr.bf16.mxu0 0
        %659 = vmatpush1.bf16.msra.mxu0 %v631
        %660 = vmatprep.subr.bf16.mxu0 0
        %661 = vmatpush1.bf16.msra.mxu0 %v630
        %662 = vmatprep.subr.bf16.mxu0 0
        %663 = vmatpush2.bf16.msra.mxu0 0
        %664 = vmatprep.subr.bf16.mxu0 0
        %665 = vmatpush2.bf16.msra.mxu0 0
        %666 = vmatprep.subr.bf16.mxu0 0
        %667 = vmatpush2.bf16.msra.mxu0 0
        %668 = vmatprep.subr.bf16.mxu0 0
        %669 = vmatpush2.bf16.msra.mxu0 0
        %670 = vmatprep.subr.bf16.mxu0 0
        %671 = vmatpush2.bf16.msra.mxu0 0
        %672 = vmatprep.subr.bf16.mxu0 0
        %673 = vmatpush2.bf16.msra.mxu0 0
        %674 = vmatprep.subr.bf16.mxu0 0
        %675 = vmatpush2.bf16.msra.mxu0 0
        %676 = vmatprep.subr.bf16.mxu0 0
        %677 = vmatpush2.bf16.msra.mxu0 0
        %678 = vmatprep.mubr.bf16.mxu0 0
        %679 = vmatmul.mubr.bf16.gmra.mxu0 %v582
        %v680 = vpop.f32.mrf.mxu0
        %v681 = vadd.f32 0.0, %v680
        %v682 = vpop.f32.mrf.mxu0
        %v683 = vpop.f32.mrf.mxu0
        %v684 = vadd.f32 0.0, %v683
        %v685 = vpop.f32.mrf.mxu0
        %686 = vmatprep.mubr.bf16.mxu0 0
        %687 = vmatmul.mubr.bf16.gmra.mxu0 %v583
        %v688 = vpop.f32.mrf.mxu0
        %v689 = vadd.f32 0.0, %v688
        %v690 = vpop.f32.mrf.mxu0
        %v691 = vpop.f32.mrf.mxu0
        %v692 = vadd.f32 0.0, %v691
        %v693 = vpop.f32.mrf.mxu0
        %694 = vmatprep.mubr.bf16.mxu0 0
        %695 = vmatmul.mubr.bf16.gmra.mxu0 %v584
        %v696 = vpop.f32.mrf.mxu0
        %v697 = vadd.f32 0.0, %v696
        %v698 = vpop.f32.mrf.mxu0
        %v699 = vpop.f32.mrf.mxu0
        %v700 = vadd.f32 0.0, %v699
        %v701 = vpop.f32.mrf.mxu0
        %702 = vmatprep.mubr.bf16.mxu0 0
        %703 = vmatmul.mubr.bf16.gmra.mxu0 %v585
        %v704 = vpop.f32.mrf.mxu0
        %v705 = vadd.f32 0.0, %v704
        %v706 = vpop.f32.mrf.mxu0
        %v707 = vpop.f32.mrf.mxu0
        %v708 = vadd.f32 0.0, %v707
        %v709 = vpop.f32.mrf.mxu0
        %710 = vmatprep.mubr.bf16.mxu0 0
        %711 = vmatmul.mubr.bf16.gmra.mxu0 %v586
        %v712 = vpop.f32.mrf.mxu0
        %v713 = vadd.f32 0.0, %v712
        %v714 = vpop.f32.mrf.mxu0
        %v715 = vpop.f32.mrf.mxu0
        %v716 = vadd.f32 0.0, %v715
        %v717 = vpop.f32.mrf.mxu0
        %718 = vmatprep.mubr.bf16.mxu0 0
        %719 = vmatmul.mubr.bf16.gmra.mxu0 %v587
        %v720 = vpop.f32.mrf.mxu0
        %v721 = vadd.f32 0.0, %v720
        %v722 = vpop.f32.mrf.mxu0
        %v723 = vpop.f32.mrf.mxu0
        %v724 = vadd.f32 0.0, %v723
        %v725 = vpop.f32.mrf.mxu0
        %726 = vmatprep.mubr.bf16.mxu0 0
        %727 = vmatmul.mubr.bf16.gmra.mxu0 %v588
        %v728 = vpop.f32.mrf.mxu0
        %v729 = vadd.f32 0.0, %v728
        %v730 = vpop.f32.mrf.mxu0
        %v731 = vpop.f32.mrf.mxu0
        %v732 = vadd.f32 0.0, %v731
        %v733 = vpop.f32.mrf.mxu0
        %734 = vmatprep.mubr.bf16.mxu0 0
        %735 = vmatmul.mubr.bf16.gmra.mxu0 %v589
        %v736 = vpop.f32.mrf.mxu0
        %v737 = vadd.f32 0.0, %v736
        %v738 = vpop.f32.mrf.mxu0
        %v739 = vpop.f32.mrf.mxu0
        %v740 = vadd.f32 0.0, %v739
        %v741 = vpop.f32.mrf.mxu0
        %742 = vdwg.mxu0
        %v743 = vadd.f32 %v502, %v681
        %v744 = vadd.f32 %v503, %v684
        %v745 = vadd.f32 %v504, %v689
        %v746 = vadd.f32 %v505, %v692
        %v747 = vadd.f32 %v506, %v697
        %v748 = vadd.f32 %v507, %v700
        %v749 = vadd.f32 %v508, %v705
        %v750 = vadd.f32 %v509, %v708
        %v751 = vadd.f32 %v510, %v713
        %v752 = vadd.f32 %v511, %v716
        %v753 = vadd.f32 %v512, %v721
        %v754 = vadd.f32 %v513, %v724
        %v755 = vadd.f32 %v514, %v729
        %v756 = vadd.f32 %v515, %v732
        %v757 = vadd.f32 %v516, %v737
        %v758 = vadd.f32 %v517, %v740
        %759 = vst [vmem:[#allocation2] sm:$0xff] %v743
        %760 = vst [vmem:[#allocation2 + $0x8] sm:$0xff] %v744
        %761 = vst [vmem:[#allocation2 + $0x10] sm:$0xff] %v745
        %762 = vst [vmem:[#allocation2 + $0x18] sm:$0xff] %v746
        %763 = vst [vmem:[#allocation2 + $0x20] sm:$0xff] %v747
        %764 = vst [vmem:[#allocation2 + $0x28] sm:$0xff] %v748
        %765 = vst [vmem:[#allocation2 + $0x30] sm:$0xff] %v749
        %766 = vst [vmem:[#allocation2 + $0x38] sm:$0xff] %v750
        %767 = vst [vmem:[#allocation2 + $0x40] sm:$0xff] %v751
        %768 = vst [vmem:[#allocation2 + $0x48] sm:$0xff] %v752
        %769 = vst [vmem:[#allocation2 + $0x50] sm:$0xff] %v753
        %770 = vst [vmem:[#allocation2 + $0x58] sm:$0xff] %v754
        %771 = vst [vmem:[#allocation2 + $0x60] sm:$0xff] %v755
        %772 = vst [vmem:[#allocation2 + $0x68] sm:$0xff] %v756
        %773 = vst [vmem:[#allocation2 + $0x70] sm:$0xff] %v757
        %774 = vst [vmem:[#allocation2 + $0x78] sm:$0xff] %v758
        %p775 = scmp.eq.s32.totalorder %s24, 4
        // Predicated region
        $region78: #{forward.17} parent=68 // pred_check
          %p776 = pneg %p775
        $region79: #{forward.17} parent=68 // pred_check_branch
          %778 = sbr.rel (%p776) target = $region81
        $region80: #{forward.17} parent=68 // pred_region
          %v779 = vld [vmem:[#allocation2] sm:$0xff]
          %v780 = vld [vmem:[#allocation2 + $0x8] sm:$0xff]
          %v781 = vld [vmem:[#allocation2 + $0x10] sm:$0xff]
          %v782 = vld [vmem:[#allocation2 + $0x18] sm:$0xff]
          %v783 = vld [vmem:[#allocation2 + $0x20] sm:$0xff]
          %v784 = vld [vmem:[#allocation2 + $0x28] sm:$0xff]
          %v785 = vld [vmem:[#allocation2 + $0x30] sm:$0xff]
          %v786 = vld [vmem:[#allocation2 + $0x38] sm:$0xff]
          %v787 = vld [vmem:[#allocation2 + $0x40] sm:$0xff]
          %v788 = vld [vmem:[#allocation2 + $0x48] sm:$0xff]
          %v789 = vld [vmem:[#allocation2 + $0x50] sm:$0xff]
          %v790 = vld [vmem:[#allocation2 + $0x58] sm:$0xff]
          %v791 = vld [vmem:[#allocation2 + $0x60] sm:$0xff]
          %v792 = vld [vmem:[#allocation2 + $0x68] sm:$0xff]
          %v793 = vld [vmem:[#allocation2 + $0x70] sm:$0xff]
          %v794 = vld [vmem:[#allocation2 + $0x78] sm:$0xff]
          %v795 = vld [vmem:[%s422] sm:$0x1]
          %v797 = vlaneseq
          %v798 = vshrl.u32 %v797, 7
          %v799 = vsub.s32 0, %v798
          %v800 = vrot.slane %v795, %v799
          %v802 = vadd.f32 %v779, %v800
          %v803 = vadd.f32 %v780, %v800
          %v804 = vadd.f32 %v781, %v800
          %v805 = vadd.f32 %v782, %v800
          %v806 = vadd.f32 %v783, %v800
          %v807 = vadd.f32 %v784, %v800
          %v808 = vadd.f32 %v785, %v800
          %v809 = vadd.f32 %v786, %v800
          %v810 = vadd.f32 %v787, %v800
          %v811 = vadd.f32 %v788, %v800
          %v812 = vadd.f32 %v789, %v800
          %v813 = vadd.f32 %v790, %v800
          %v814 = vadd.f32 %v791, %v800
          %v815 = vadd.f32 %v792, %v800
          %v816 = vadd.f32 %v793, %v800
          %v817 = vadd.f32 %v794, %v800
          %v818 = vpack.c.bf16 %v803, %v802
          %v819 = vpack.c.bf16 %v805, %v804
          %v820 = vpack.c.bf16 %v807, %v806
          %v821 = vpack.c.bf16 %v809, %v808
          %v822 = vpack.c.bf16 %v811, %v810
          %v823 = vpack.c.bf16 %v813, %v812
          %v824 = vpack.c.bf16 %v815, %v814
          %v825 = vpack.c.bf16 %v817, %v816
          %v834 = vunpack.c.l.b16 %v818
          %v835 = vunpack.c.h.b16 %v818
          %v836 = vunpack.c.l.b16 %v819
          %v837 = vunpack.c.h.b16 %v819
          %v838 = vunpack.c.l.b16 %v820
          %v839 = vunpack.c.h.b16 %v820
          %v840 = vunpack.c.l.b16 %v821
          %v841 = vunpack.c.h.b16 %v821
          %v842 = vunpack.c.l.b16 %v822
          %v843 = vunpack.c.h.b16 %v822
          %v844 = vunpack.c.l.b16 %v823
          %v845 = vunpack.c.h.b16 %v823
          %v846 = vunpack.c.l.b16 %v824
          %v847 = vunpack.c.h.b16 %v824
          %v848 = vunpack.c.l.b16 %v825
          %v849 = vunpack.c.h.b16 %v825
          %v850 = vpack.c.b16 %v834, %v834
          %v851 = vpack.c.b16 %v835, %v835
          %v852 = vpack.c.b16 %v836, %v836
          %v853 = vpack.c.b16 %v837, %v837
          %v854 = vpack.c.b16 %v838, %v838
          %v855 = vpack.c.b16 %v839, %v839
          %v856 = vpack.c.b16 %v840, %v840
          %v857 = vpack.c.b16 %v841, %v841
          %v858 = vpack.c.b16 %v842, %v842
          %v859 = vpack.c.b16 %v843, %v843
          %v860 = vpack.c.b16 %v844, %v844
          %v861 = vpack.c.b16 %v845, %v845
          %v862 = vpack.c.b16 %v846, %v846
          %v863 = vpack.c.b16 %v847, %v847
          %v864 = vpack.c.b16 %v848, %v848
          %v865 = vpack.c.b16 %v849, %v849
          %882 = vst [vmem:[%s430] sm:$0xf] %v850
          %883 = vst [vmem:[%s430 + $0x4] sm:$0xf] %v851
          %884 = vst [vmem:[%s430 + $0x8] sm:$0xf] %v852
          %885 = vst [vmem:[%s430 + $0xc] sm:$0xf] %v853
          %886 = vst [vmem:[%s430 + $0x10] sm:$0xf] %v854
          %887 = vst [vmem:[%s430 + $0x14] sm:$0xf] %v855
          %888 = vst [vmem:[%s430 + $0x18] sm:$0xf] %v856
          %889 = vst [vmem:[%s430 + $0x1c] sm:$0xf] %v857
          %890 = vst [vmem:[%s430 + $0x20] sm:$0xf] %v858
          %891 = vst [vmem:[%s430 + $0x24] sm:$0xf] %v859
          %892 = vst [vmem:[%s430 + $0x28] sm:$0xf] %v860
          %893 = vst [vmem:[%s430 + $0x2c] sm:$0xf] %v861
          %894 = vst [vmem:[%s430 + $0x30] sm:$0xf] %v862
          %895 = vst [vmem:[%s430 + $0x34] sm:$0xf] %v863
          %896 = vst [vmem:[%s430 + $0x38] sm:$0xf] %v864
          %897 = vst [vmem:[%s430 + $0x3c] sm:$0xf] %v865
          %vm898 = vcmp.lt.s32.totalorder %v466, 128
          %vm899 = vcmp.lt.s32.totalorder %v467, 128
          %vm900 = vcmp.lt.s32.totalorder %v468, 128
          %vm901 = vcmp.lt.s32.totalorder %v469, 128
          %vm902 = vcmp.lt.s32.totalorder %v470, 128
          %vm903 = vcmp.lt.s32.totalorder %v471, 128
          %vm904 = vcmp.lt.s32.totalorder %v472, 128
          %vm905 = vcmp.lt.s32.totalorder %v473, 128
          %vm906 = vcmp.lt.s32.totalorder %v474, 128
          %vm907 = vcmp.lt.s32.totalorder %v475, 128
          %vm908 = vcmp.lt.s32.totalorder %v476, 128
          %vm909 = vcmp.lt.s32.totalorder %v477, 128
          %vm910 = vcmp.lt.s32.totalorder %v478, 128
          %vm911 = vcmp.lt.s32.totalorder %v479, 128
          %vm912 = vcmp.lt.s32.totalorder %v480, 128
          %vm913 = vcmp.lt.s32.totalorder %v481, 128
          %v914 = vsel %vm898, 1, 0
          %v915 = vsel %vm899, 1, 0
          %v916 = vsel %vm900, 1, 0
          %v917 = vsel %vm901, 1, 0
          %v918 = vsel %vm902, 1, 0
          %v919 = vsel %vm903, 1, 0
          %v920 = vsel %vm904, 1, 0
          %v921 = vsel %vm905, 1, 0
          %v922 = vsel %vm906, 1, 0
          %v923 = vsel %vm907, 1, 0
          %v924 = vsel %vm908, 1, 0
          %v925 = vsel %vm909, 1, 0
          %v926 = vsel %vm910, 1, 0
          %v927 = vsel %vm911, 1, 0
          %v928 = vsel %vm912, 1, 0
          %v929 = vsel %vm913, 1, 0
          %vm930 = vcmp.eq.s32.totalorder %v914, 1
          %vm931 = vcmp.eq.s32.totalorder %v915, 1
          %vm932 = vcmp.eq.s32.totalorder %v916, 1
          %vm933 = vcmp.eq.s32.totalorder %v917, 1
          %vm934 = vcmp.eq.s32.totalorder %v918, 1
          %vm935 = vcmp.eq.s32.totalorder %v919, 1
          %vm936 = vcmp.eq.s32.totalorder %v920, 1
          %vm937 = vcmp.eq.s32.totalorder %v921, 1
          %vm938 = vcmp.eq.s32.totalorder %v922, 1
          %vm939 = vcmp.eq.s32.totalorder %v923, 1
          %vm940 = vcmp.eq.s32.totalorder %v924, 1
          %vm941 = vcmp.eq.s32.totalorder %v925, 1
          %vm942 = vcmp.eq.s32.totalorder %v926, 1
          %vm943 = vcmp.eq.s32.totalorder %v927, 1
          %vm944 = vcmp.eq.s32.totalorder %v928, 1
          %vm945 = vcmp.eq.s32.totalorder %v929, 1
          %v946 = vsel %vm930, %v802, 0.0
          %v947 = vsel %vm931, %v803, 0.0
          %v948 = vsel %vm932, %v804, 0.0
          %v949 = vsel %vm933, %v805, 0.0
          %v950 = vsel %vm934, %v806, 0.0
          %v951 = vsel %vm935, %v807, 0.0
          %v952 = vsel %vm936, %v808, 0.0
          %v953 = vsel %vm937, %v809, 0.0
          %v954 = vsel %vm938, %v810, 0.0
          %v955 = vsel %vm939, %v811, 0.0
          %v956 = vsel %vm940, %v812, 0.0
          %v957 = vsel %vm941, %v813, 0.0
          %v958 = vsel %vm942, %v814, 0.0
          %v959 = vsel %vm943, %v815, 0.0
          %v960 = vsel %vm944, %v816, 0.0
          %v961 = vsel %vm945, %v817, 0.0
          %v962 = vadd.f32 %v946, %v947
          %v963 = vadd.f32 %v962, %v948
          %v964 = vadd.f32 %v963, %v949
          %v965 = vadd.f32 %v964, %v950
          %v966 = vadd.f32 %v965, %v951
          %v967 = vadd.f32 %v966, %v952
          %v968 = vadd.f32 %v967, %v953
          %v969 = vadd.f32 %v968, %v954
          %v970 = vadd.f32 %v969, %v955
          %v971 = vadd.f32 %v970, %v956
          %v972 = vadd.f32 %v971, %v957
          %v973 = vadd.f32 %v972, %v958
          %v974 = vadd.f32 %v973, %v959
          %v975 = vadd.f32 %v974, %v960
          %v976 = vadd.f32 %v975, %v961
          %v977 = vrot.slane %v976, 4
          %v978 = vadd.f32 %v976, %v977
          %v979 = vrot.slane %v978, 2
          %v980 = vadd.f32 %v978, %v979
          %v981 = vrot.slane %v980, 1
          %v982 = vadd.f32 %v980, %v981
          %v983 = vmul.f32 %v946, %v946
          %v984 = vmul.f32 %v947, %v947
          %v985 = vmul.f32 %v948, %v948
          %v986 = vmul.f32 %v949, %v949
          %v987 = vmul.f32 %v950, %v950
          %v988 = vmul.f32 %v951, %v951
          %v989 = vmul.f32 %v952, %v952
          %v990 = vmul.f32 %v953, %v953
          %v991 = vmul.f32 %v954, %v954
          %v992 = vmul.f32 %v955, %v955
          %v993 = vmul.f32 %v956, %v956
          %v994 = vmul.f32 %v957, %v957
          %v995 = vmul.f32 %v958, %v958
          %v996 = vmul.f32 %v959, %v959
          %v997 = vmul.f32 %v960, %v960
          %v998 = vmul.f32 %v961, %v961
          %v999 = vadd.f32 %v983, %v984
          %v1000 = vadd.f32 %v999, %v985
          %v1001 = vadd.f32 %v1000, %v986
          %v1002 = vadd.f32 %v1001, %v987
          %v1003 = vadd.f32 %v1002, %v988
          %v1004 = vadd.f32 %v1003, %v989
          %v1005 = vadd.f32 %v1004, %v990
          %v1006 = vadd.f32 %v1005, %v991
          %v1007 = vadd.f32 %v1006, %v992
          %v1008 = vadd.f32 %v1007, %v993
          %v1009 = vadd.f32 %v1008, %v994
          %v1010 = vadd.f32 %v1009, %v995
          %v1011 = vadd.f32 %v1010, %v996
          %v1012 = vadd.f32 %v1011, %v997
          %v1013 = vadd.f32 %v1012, %v998
          %v1014 = vrot.slane %v1013, 4
          %v1015 = vadd.f32 %v1013, %v1014
          %v1016 = vrot.slane %v1015, 2
          %v1017 = vadd.f32 %v1015, %v1016
          %v1018 = vrot.slane %v1017, 1
          %v1019 = vadd.f32 %v1017, %v1018
          %1020 = vst [vmem:[%s438] sm:$0xff] %v982
          %1021 = vst [vmem:[%s445] sm:$0xff] %v1019
        $region81: #{forward.17} parent=68 // pred_fallthru
          _
        %s1022 = smul.u32 16, %s22
        %p1023 = scmp.lt.s32.totalorder %s1022, 15
        %s1024 = scalar_select %p1023, %s1022, 15
        %p1025 = scmp.lt.s32.totalorder %s23, 0
        %s1026 = scalar_select %p1025, %s23, 0
        %s1027 = sadd.s32 %s1026, %s1024
        %s1028 = smul.addr %s1027, 4
        %s1029 = scalar_lea.vmem %s3, %s1028
        %p1030 = scmp.lt.s32.totalorder %s22, 0
        %s1031 = scalar_select %p1030, %s22, 0
        %p1032 = scmp.lt.s32.totalorder %s23, 0
        %s1033 = scalar_select %p1032, %s23, 0
        %s1034 = sadd.s32 %s1033, %s1031
        %s1035 = smul.addr %s1034, 8
        %s1036 = scalar_lea.vmem %s4, %s1035
        %p1037 = scmp.lt.s32.totalorder %s22, 0
        %s1038 = scalar_select %p1037, %s22, 0
        %p1039 = scmp.lt.s32.totalorder %s23, 0
        %s1040 = scalar_select %p1039, %s23, 0
        %s1041 = sadd.s32 %s1040, %s1038
        %s1042 = smul.addr %s1041, 8
        %s1043 = scalar_lea.vmem %s5, %s1042
        // Predicated region
        $region82: #{forward.17} parent=68 // pred_check
          %p1044 = pneg %p138
        $region83: #{forward.17} parent=68 // pred_check_branch
          %1046 = sbr.rel (%p1044) target = $region85
        $region84: #{forward.17} parent=68 // pred_region
          %s1047 = smul.u32 16, %s22
        $region85: #{forward.17} parent=68 // pred_fallthru
          _
        // Predicated region
        $region86: #{forward.17} parent=68 // pred_check
          %p1048 = pneg %p166
        $region87: #{forward.17} parent=68 // pred_check_branch
          %1050 = sbr.rel (%p1048) target = $region89
        $region88: #{forward.17} parent=68 // pred_region
          _
        $region89: #{forward.17} parent=68 // pred_fallthru
          _
        // Predicated region
        $region90: #{forward.17} parent=68 // pred_check
          %p1051 = pneg %p194
        $region91: #{forward.17} parent=68 // pred_check_branch
          %1053 = sbr.rel (%p1051) target = $region93
        $region92: #{forward.17} parent=68 // pred_region
          _
        $region93: #{forward.17} parent=68 // pred_fallthru
          _
        // Predicated region
        $region94: #{forward.17} parent=68 // pred_check
          %p1054 = pneg %p138
        $region95: #{forward.17} parent=68 // pred_check_branch
          %1056 = sbr.rel (%p1054) target = $region97
        $region96: #{forward.17} parent=68 // pred_region
          %s1057 = smul.u32 16, %s22
          %p1058 = scmp.lt.s32.totalorder %s1057, 15
          %s1059 = scalar_select %p1058, %s1057, 15
          %p1060 = scmp.lt.s32.totalorder %s23, 0
          %s1061 = scalar_select %p1060, %s23, 0
          %s1062 = sadd.s32 %s1061, %s1059
          %s1063 = smul.addr %s1062, 4
          %s1064 = scalar_lea.vmem %s3, %s1063
        $region97: #{forward.17} parent=68 // pred_fallthru
          _
        // Predicated region
        $region98: #{forward.17} parent=68 // pred_check
          %p1065 = pneg %p166
        $region99: #{forward.17} parent=68 // pred_check_branch
          %1067 = sbr.rel (%p1065) target = $region101
        $region100: #{forward.17} parent=68 // pred_region
          %p1068 = scmp.lt.s32.totalorder %s22, 0
          %s1069 = scalar_select %p1068, %s22, 0
          %p1070 = scmp.lt.s32.totalorder %s23, 0
          %s1071 = scalar_select %p1070, %s23, 0
          %s1072 = sadd.s32 %s1071, %s1069
          %s1073 = smul.addr %s1072, 8
          %s1074 = scalar_lea.vmem %s4, %s1073
        $region101: #{forward.17} parent=68 // pred_fallthru
          _
        // Predicated region
        $region102: #{forward.17} parent=68 // pred_check
          %p1075 = pneg %p194
        $region103: #{forward.17} parent=68 // pred_check_branch
          %1077 = sbr.rel (%p1075) target = $region105
        $region104: #{forward.17} parent=68 // pred_region
          %p1078 = scmp.lt.s32.totalorder %s22, 0
          %s1079 = scalar_select %p1078, %s22, 0
          %p1080 = scmp.lt.s32.totalorder %s23, 0
          %s1081 = scalar_select %p1080, %s23, 0
          %s1082 = sadd.s32 %s1081, %s1079
          %s1083 = smul.addr %s1082, 8
          %s1084 = scalar_lea.vmem %s5, %s1083
        $region105: #{forward.17} parent=68 // pred_fallthru
          _
      $region69: #{forward.17} parent=5 // pred_fallthru
        _
      %p1085 = scmp.le.s32.totalorder 2, %s12
      // Predicated region
      $region106: #{forward.17} parent=5 // pred_check
        %p1086 = pneg %p1085
      $region107: #{forward.17} parent=5 // pred_check_branch
        %1088 = sbr.rel (%p1086) target = $region109
      $region108: #{forward.17} parent=5 // pred_region
        %s1089 = ssub.s32 %s12, 2
      $region109: #{forward.17} parent=5 // pred_fallthru
        _
    $region6: #{forward.17} parent=1 // loop_footer
      %s16 = sadd.s32 1, %s12
    $region7: #{forward.17} parent=1 // loop_footer_branch
      %11 = sbr.rel target = $region3
    $region8: #{forward.17} parent=1 // loop_exit
      _

// kernel: forward.18
$region0: #{forward.18}
  #allocation0 [shape = 'u32[]', space=smem, size = 0x4, offset = 0x4, fixed_abs, tag = 'smem constant byte address 0x4 - core index']
  #allocation1 [shape = 'u32[144,128]{1,0:T(1,128)}', space=vmem, size = 0x12000, scoped, tag = 'internal scratch']
  %s0 = inlined_call_operand.vmem [shape: bf16[128,128], index: 0, kind: input, shape index: {}]
  %s1 = inlined_call_operand.vmem [shape: f32[1,128], index: 1, kind: input, shape index: {}]
  %s2 = inlined_call_operand.vmem [shape: f32[1,128], index: 2, kind: input, shape index: {}]
  %s3 = inlined_call_operand.vmem [shape: bf16[128,128], index: 3, kind: output, shape index: {}]
  %s4 = sld [smem:[#allocation0]]
  $region22: #{forward.18} parent=0
    _
  %s6 = ssub.s32 1, %s4
  %s7 = scalar_select 0, %s6, %s4
  // Predicated region
  $region2: #{forward.18} parent=0 // pred_check
    _
  $region3: #{forward.18} parent=0 // pred_check_branch
    %9 = sbr.rel (0) target = $region5
  $region4: #{forward.18} parent=0 // pred_region
    _
  $region5: #{forward.18} parent=0 // pred_fallthru
    _
  // Predicated region
  $region6: #{forward.18} parent=0 // pred_check
    _
  $region7: #{forward.18} parent=0 // pred_check_branch
    %11 = sbr.rel (0) target = $region9
  $region8: #{forward.18} parent=0 // pred_region
    _
  $region9: #{forward.18} parent=0 // pred_fallthru
    _
  // Predicated region
  $region10: #{forward.18} parent=0 // pred_check
    _
  $region11: #{forward.18} parent=0 // pred_check_branch
    %13 = sbr.rel (0) target = $region13
  $region12: #{forward.18} parent=0 // pred_region
    _
  $region13: #{forward.18} parent=0 // pred_fallthru
    _
  %v14 = vld [vmem:[%s0] sm:$0xf]
  %v15 = vld [vmem:[%s0 + $0x4] sm:$0xf]
  %v16 = vld [vmem:[%s0 + $0x8] sm:$0xf]
  %v17 = vld [vmem:[%s0 + $0xc] sm:$0xf]
  %v18 = vld [vmem:[%s0 + $0x10] sm:$0xf]
  %v19 = vld [vmem:[%s0 + $0x14] sm:$0xf]
  %v20 = vld [vmem:[%s0 + $0x18] sm:$0xf]
  %v21 = vld [vmem:[%s0 + $0x1c] sm:$0xf]
  %v22 = vld [vmem:[%s0 + $0x20] sm:$0xf]
  %v23 = vld [vmem:[%s0 + $0x24] sm:$0xf]
  %v24 = vld [vmem:[%s0 + $0x28] sm:$0xf]
  %v25 = vld [vmem:[%s0 + $0x2c] sm:$0xf]
  %v26 = vld [vmem:[%s0 + $0x30] sm:$0xf]
  %v27 = vld [vmem:[%s0 + $0x34] sm:$0xf]
  %v28 = vld [vmem:[%s0 + $0x38] sm:$0xf]
  %v29 = vld [vmem:[%s0 + $0x3c] sm:$0xf]
  %v30 = vunpack.c.l.bf16 %v14
  %v31 = vunpack.c.l.bf16 %v15
  %v32 = vunpack.c.l.bf16 %v16
  %v33 = vunpack.c.l.bf16 %v17
  %v34 = vunpack.c.l.bf16 %v18
  %v35 = vunpack.c.l.bf16 %v19
  %v36 = vunpack.c.l.bf16 %v20
  %v37 = vunpack.c.l.bf16 %v21
  %v38 = vunpack.c.l.bf16 %v22
  %v39 = vunpack.c.l.bf16 %v23
  %v40 = vunpack.c.l.bf16 %v24
  %v41 = vunpack.c.l.bf16 %v25
  %v42 = vunpack.c.l.bf16 %v26
  %v43 = vunpack.c.l.bf16 %v27
  %v44 = vunpack.c.l.bf16 %v28
  %v45 = vunpack.c.l.bf16 %v29
  %v46 = vld [vmem:[%s1] sm:$0x1]
  %v48 = vlaneseq
  %v49 = vshrl.u32 %v48, 7
  %v50 = vsub.s32 0, %v49
  %v51 = vrot.slane %v46, %v50
  %v53 = vmul.f32 %v30, %v51
  %v54 = vmul.f32 %v31, %v51
  %v55 = vmul.f32 %v32, %v51
  %v56 = vmul.f32 %v33, %v51
  %v57 = vmul.f32 %v34, %v51
  %v58 = vmul.f32 %v35, %v51
  %v59 = vmul.f32 %v36, %v51
  %v60 = vmul.f32 %v37, %v51
  %v61 = vmul.f32 %v38, %v51
  %v62 = vmul.f32 %v39, %v51
  %v63 = vmul.f32 %v40, %v51
  %v64 = vmul.f32 %v41, %v51
  %v65 = vmul.f32 %v42, %v51
  %v66 = vmul.f32 %v43, %v51
  %v67 = vmul.f32 %v44, %v51
  %v68 = vmul.f32 %v45, %v51
  %v69 = vld [vmem:[%s2] sm:$0x1]
  %v71 = vlaneseq
  %v72 = vshrl.u32 %v71, 7
  %v73 = vsub.s32 0, %v72
  %v74 = vrot.slane %v69, %v73
  %v76 = vadd.f32 %v53, %v74
  %v77 = vadd.f32 %v54, %v74
  %v78 = vadd.f32 %v55, %v74
  %v79 = vadd.f32 %v56, %v74
  %v80 = vadd.f32 %v57, %v74
  %v81 = vadd.f32 %v58, %v74
  %v82 = vadd.f32 %v59, %v74
  %v83 = vadd.f32 %v60, %v74
  %v84 = vadd.f32 %v61, %v74
  %v85 = vadd.f32 %v62, %v74
  %v86 = vadd.f32 %v63, %v74
  %v87 = vadd.f32 %v64, %v74
  %v88 = vadd.f32 %v65, %v74
  %v89 = vadd.f32 %v66, %v74
  %v90 = vadd.f32 %v67, %v74
  %v91 = vadd.f32 %v68, %v74
  %v92 = vxor.u32 %v76, 2147483648
  %v93 = vxor.u32 %v77, 2147483648
  %v94 = vxor.u32 %v78, 2147483648
  %v95 = vxor.u32 %v79, 2147483648
  %v96 = vxor.u32 %v80, 2147483648
  %v97 = vxor.u32 %v81, 2147483648
  %v98 = vxor.u32 %v82, 2147483648
  %v99 = vxor.u32 %v83, 2147483648
  %v100 = vxor.u32 %v84, 2147483648
  %v101 = vxor.u32 %v85, 2147483648
  %v102 = vxor.u32 %v86, 2147483648
  %v103 = vxor.u32 %v87, 2147483648
  %v104 = vxor.u32 %v88, 2147483648
  %v105 = vxor.u32 %v89, 2147483648
  %v106 = vxor.u32 %v90, 2147483648
  %v107 = vxor.u32 %v91, 2147483648
  %v108 = vmul.f32 %v92, 1.442695
  %v109 = vpow.pop %v108
  %v110 = vmul.f32 %v93, 1.442695
  %v111 = vpow.pop %v110
  %v112 = vmul.f32 %v94, 1.442695
  %v113 = vpow.pop %v112
  %v114 = vmul.f32 %v95, 1.442695
  %v115 = vpow.pop %v114
  %v116 = vmul.f32 %v96, 1.442695
  %v117 = vpow.pop %v116
  %v118 = vmul.f32 %v97, 1.442695
  %v119 = vpow.pop %v118
  %v120 = vmul.f32 %v98, 1.442695
  %v121 = vpow.pop %v120
  %v122 = vmul.f32 %v99, 1.442695
  %v123 = vpow.pop %v122
  %v124 = vmul.f32 %v100, 1.442695
  %v125 = vpow.pop %v124
  %v126 = vmul.f32 %v101, 1.442695
  %v127 = vpow.pop %v126
  %v128 = vmul.f32 %v102, 1.442695
  %v129 = vpow.pop %v128
  %v130 = vmul.f32 %v103, 1.442695
  %v131 = vpow.pop %v130
  %v132 = vmul.f32 %v104, 1.442695
  %v133 = vpow.pop %v132
  %v134 = vmul.f32 %v105, 1.442695
  %v135 = vpow.pop %v134
  %v136 = vmul.f32 %v106, 1.442695
  %v137 = vpow.pop %v136
  %v138 = vmul.f32 %v107, 1.442695
  %v139 = vpow.pop %v138
  %v140 = vadd.f32 %v109, 1.0
  %v141 = vadd.f32 %v111, 1.0
  %v142 = vadd.f32 %v113, 1.0
  %v143 = vadd.f32 %v115, 1.0
  %v144 = vadd.f32 %v117, 1.0
  %v145 = vadd.f32 %v119, 1.0
  %v146 = vadd.f32 %v121, 1.0
  %v147 = vadd.f32 %v123, 1.0
  %v148 = vadd.f32 %v125, 1.0
  %v149 = vadd.f32 %v127, 1.0
  %v150 = vadd.f32 %v129, 1.0
  %v151 = vadd.f32 %v131, 1.0
  %v152 = vadd.f32 %v133, 1.0
  %v153 = vadd.f32 %v135, 1.0
  %v154 = vadd.f32 %v137, 1.0
  %v155 = vadd.f32 %v139, 1.0
  %v156 = vrcp.pop %v140
  %v157 = vmul.f32 1.0, %v156
  %v158 = vrcp.pop %v141
  %v159 = vmul.f32 1.0, %v158
  %v160 = vrcp.pop %v142
  %v161 = vmul.f32 1.0, %v160
  %v162 = vrcp.pop %v143
  %v163 = vmul.f32 1.0, %v162
  %v164 = vrcp.pop %v144
  %v165 = vmul.f32 1.0, %v164
  %v166 = vrcp.pop %v145
  %v167 = vmul.f32 1.0, %v166
  %v168 = vrcp.pop %v146
  %v169 = vmul.f32 1.0, %v168
  %v170 = vrcp.pop %v147
  %v171 = vmul.f32 1.0, %v170
  %v172 = vrcp.pop %v148
  %v173 = vmul.f32 1.0, %v172
  %v174 = vrcp.pop %v149
  %v175 = vmul.f32 1.0, %v174
  %v176 = vrcp.pop %v150
  %v177 = vmul.f32 1.0, %v176
  %v178 = vrcp.pop %v151
  %v179 = vmul.f32 1.0, %v178
  %v180 = vrcp.pop %v152
  %v181 = vmul.f32 1.0, %v180
  %v182 = vrcp.pop %v153
  %v183 = vmul.f32 1.0, %v182
  %v184 = vrcp.pop %v154
  %v185 = vmul.f32 1.0, %v184
  %v186 = vrcp.pop %v155
  %v187 = vmul.f32 1.0, %v186
  %v188 = vmul.f32 %v76, %v157
  %v189 = vmul.f32 %v77, %v159
  %v190 = vmul.f32 %v78, %v161
  %v191 = vmul.f32 %v79, %v163
  %v192 = vmul.f32 %v80, %v165
  %v193 = vmul.f32 %v81, %v167
  %v194 = vmul.f32 %v82, %v169
  %v195 = vmul.f32 %v83, %v171
  %v196 = vmul.f32 %v84, %v173
  %v197 = vmul.f32 %v85, %v175
  %v198 = vmul.f32 %v86, %v177
  %v199 = vmul.f32 %v87, %v179
  %v200 = vmul.f32 %v88, %v181
  %v201 = vmul.f32 %v89, %v183
  %v202 = vmul.f32 %v90, %v185
  %v203 = vmul.f32 %v91, %v187
  %v204 = vpack.c.bf16 %v189, %v188
  %v205 = vpack.c.bf16 %v191, %v190
  %v206 = vpack.c.bf16 %v193, %v192
  %v207 = vpack.c.bf16 %v195, %v194
  %v208 = vpack.c.bf16 %v197, %v196
  %v209 = vpack.c.bf16 %v199, %v198
  %v210 = vpack.c.bf16 %v201, %v200
  %v211 = vpack.c.bf16 %v203, %v202
  %v220 = vunpack.c.l.b16 %v204
  %v221 = vunpack.c.h.b16 %v204
  %v222 = vunpack.c.l.b16 %v205
  %v223 = vunpack.c.h.b16 %v205
  %v224 = vunpack.c.l.b16 %v206
  %v225 = vunpack.c.h.b16 %v206
  %v226 = vunpack.c.l.b16 %v207
  %v227 = vunpack.c.h.b16 %v207
  %v228 = vunpack.c.l.b16 %v208
  %v229 = vunpack.c.h.b16 %v208
  %v230 = vunpack.c.l.b16 %v209
  %v231 = vunpack.c.h.b16 %v209
  %v232 = vunpack.c.l.b16 %v210
  %v233 = vunpack.c.h.b16 %v210
  %v234 = vunpack.c.l.b16 %v211
  %v235 = vunpack.c.h.b16 %v211
  %v236 = vpack.c.b16 %v220, %v220
  %v237 = vpack.c.b16 %v221, %v221
  %v238 = vpack.c.b16 %v222, %v222
  %v239 = vpack.c.b16 %v223, %v223
  %v240 = vpack.c.b16 %v224, %v224
  %v241 = vpack.c.b16 %v225, %v225
  %v242 = vpack.c.b16 %v226, %v226
  %v243 = vpack.c.b16 %v227, %v227
  %v244 = vpack.c.b16 %v228, %v228
  %v245 = vpack.c.b16 %v229, %v229
  %v246 = vpack.c.b16 %v230, %v230
  %v247 = vpack.c.b16 %v231, %v231
  %v248 = vpack.c.b16 %v232, %v232
  %v249 = vpack.c.b16 %v233, %v233
  %v250 = vpack.c.b16 %v234, %v234
  %v251 = vpack.c.b16 %v235, %v235
  %268 = vst [vmem:[%s3] sm:$0xf] %v236
  %269 = vst [vmem:[%s3 + $0x4] sm:$0xf] %v237
  %270 = vst [vmem:[%s3 + $0x8] sm:$0xf] %v238
  %271 = vst [vmem:[%s3 + $0xc] sm:$0xf] %v239
  %272 = vst [vmem:[%s3 + $0x10] sm:$0xf] %v240
  %273 = vst [vmem:[%s3 + $0x14] sm:$0xf] %v241
  %274 = vst [vmem:[%s3 + $0x18] sm:$0xf] %v242
  %275 = vst [vmem:[%s3 + $0x1c] sm:$0xf] %v243
  %276 = vst [vmem:[%s3 + $0x20] sm:$0xf] %v244
  %277 = vst [vmem:[%s3 + $0x24] sm:$0xf] %v245
  %278 = vst [vmem:[%s3 + $0x28] sm:$0xf] %v246
  %279 = vst [vmem:[%s3 + $0x2c] sm:$0xf] %v247
  %280 = vst [vmem:[%s3 + $0x30] sm:$0xf] %v248
  %281 = vst [vmem:[%s3 + $0x34] sm:$0xf] %v249
  %282 = vst [vmem:[%s3 + $0x38] sm:$0xf] %v250
  %283 = vst [vmem:[%s3 + $0x3c] sm:$0xf] %v251
  // Predicated region
  $region14: #{forward.18} parent=0 // pred_check
    _
  $region15: #{forward.18} parent=0 // pred_check_branch
    %285 = sbr.rel (0) target = $region17
  $region16: #{forward.18} parent=0 // pred_region
    _
  $region17: #{forward.18} parent=0 // pred_fallthru
    _
  // Predicated region
  $region18: #{forward.18} parent=0 // pred_check
    _
  $region19: #{forward.18} parent=0 // pred_check_branch
    %287 = sbr.rel (0) target = $region21
  $region20: #{forward.18} parent=0 // pred_region
    _
  $region21: #{forward.18} parent=0 // pred_fallthru
    _

// kernel: forward.22
$region0: #{forward.22}
  #allocation0 [shape = 'u32[]', space=smem, size = 0x4, offset = 0x4, fixed_abs, tag = 'smem constant byte address 0x4 - core index']
  #allocation1 [shape = 'u32[144,128]{1,0:T(1,128)}', space=vmem, size = 0x12000, scoped, tag = 'internal scratch']
  %s0 = inlined_call_operand.vmem [shape: bf16[32,128], index: 0, kind: input, shape index: {}]
  %s1 = inlined_call_operand.vmem [shape: f32[1,128], index: 1, kind: input, shape index: {}]
  %s2 = inlined_call_operand.vmem [shape: f32[1,128], index: 2, kind: input, shape index: {}]
  %s3 = inlined_call_operand.vmem [shape: bf16[32,128], index: 3, kind: output, shape index: {}]
  %s4 = sld [smem:[#allocation0]]
  $region22: #{forward.22} parent=0
    _
  %s6 = ssub.s32 1, %s4
  %s7 = scalar_select 0, %s6, %s4
  // Predicated region
  $region2: #{forward.22} parent=0 // pred_check
    _
  $region3: #{forward.22} parent=0 // pred_check_branch
    %9 = sbr.rel (0) target = $region5
  $region4: #{forward.22} parent=0 // pred_region
    _
  $region5: #{forward.22} parent=0 // pred_fallthru
    _
  // Predicated region
  $region6: #{forward.22} parent=0 // pred_check
    _
  $region7: #{forward.22} parent=0 // pred_check_branch
    %11 = sbr.rel (0) target = $region9
  $region8: #{forward.22} parent=0 // pred_region
    _
  $region9: #{forward.22} parent=0 // pred_fallthru
    _
  // Predicated region
  $region10: #{forward.22} parent=0 // pred_check
    _
  $region11: #{forward.22} parent=0 // pred_check_branch
    %13 = sbr.rel (0) target = $region13
  $region12: #{forward.22} parent=0 // pred_region
    _
  $region13: #{forward.22} parent=0 // pred_fallthru
    _
  %v14 = vld [vmem:[%s0] sm:$0xf]
  %v15 = vld [vmem:[%s0 + $0x4] sm:$0xf]
  %v16 = vld [vmem:[%s0 + $0x8] sm:$0xf]
  %v17 = vld [vmem:[%s0 + $0xc] sm:$0xf]
  %v18 = vunpack.c.l.bf16 %v14
  %v19 = vunpack.c.l.bf16 %v15
  %v20 = vunpack.c.l.bf16 %v16
  %v21 = vunpack.c.l.bf16 %v17
  %v22 = vld [vmem:[%s1] sm:$0x1]
  %v24 = vlaneseq
  %v25 = vshrl.u32 %v24, 7
  %v26 = vsub.s32 0, %v25
  %v27 = vrot.slane %v22, %v26
  %v29 = vmul.f32 %v18, %v27
  %v30 = vmul.f32 %v19, %v27
  %v31 = vmul.f32 %v20, %v27
  %v32 = vmul.f32 %v21, %v27
  %v33 = vld [vmem:[%s2] sm:$0x1]
  %v35 = vlaneseq
  %v36 = vshrl.u32 %v35, 7
  %v37 = vsub.s32 0, %v36
  %v38 = vrot.slane %v33, %v37
  %v40 = vadd.f32 %v29, %v38
  %v41 = vadd.f32 %v30, %v38
  %v42 = vadd.f32 %v31, %v38
  %v43 = vadd.f32 %v32, %v38
  %v44 = vxor.u32 %v40, 2147483648
  %v45 = vxor.u32 %v41, 2147483648
  %v46 = vxor.u32 %v42, 2147483648
  %v47 = vxor.u32 %v43, 2147483648
  %v48 = vmul.f32 %v44, 1.442695
  %v49 = vpow.pop %v48
  %v50 = vmul.f32 %v45, 1.442695
  %v51 = vpow.pop %v50
  %v52 = vmul.f32 %v46, 1.442695
  %v53 = vpow.pop %v52
  %v54 = vmul.f32 %v47, 1.442695
  %v55 = vpow.pop %v54
  %v56 = vadd.f32 %v49, 1.0
  %v57 = vadd.f32 %v51, 1.0
  %v58 = vadd.f32 %v53, 1.0
  %v59 = vadd.f32 %v55, 1.0
  %v60 = vrcp.pop %v56
  %v61 = vmul.f32 1.0, %v60
  %v62 = vrcp.pop %v57
  %v63 = vmul.f32 1.0, %v62
  %v64 = vrcp.pop %v58
  %v65 = vmul.f32 1.0, %v64
  %v66 = vrcp.pop %v59
  %v67 = vmul.f32 1.0, %v66
  %v68 = vmul.f32 %v40, %v61
  %v69 = vmul.f32 %v41, %v63
  %v70 = vmul.f32 %v42, %v65
  %v71 = vmul.f32 %v43, %v67
  %v72 = vpack.c.bf16 %v69, %v68
  %v73 = vpack.c.bf16 %v71, %v70
  %v76 = vunpack.c.l.b16 %v72
  %v77 = vunpack.c.h.b16 %v72
  %v78 = vunpack.c.l.b16 %v73
  %v79 = vunpack.c.h.b16 %v73
  %v80 = vpack.c.b16 %v76, %v76
  %v81 = vpack.c.b16 %v77, %v77
  %v82 = vpack.c.b16 %v78, %v78
  %v83 = vpack.c.b16 %v79, %v79
  %88 = vst [vmem:[%s3] sm:$0xf] %v80
  %89 = vst [vmem:[%s3 + $0x4] sm:$0xf] %v81
  %90 = vst [vmem:[%s3 + $0x8] sm:$0xf] %v82
  %91 = vst [vmem:[%s3 + $0xc] sm:$0xf] %v83
  // Predicated region
  $region14: #{forward.22} parent=0 // pred_check
    _
  $region15: #{forward.22} parent=0 // pred_check_branch
    %93 = sbr.rel (0) target = $region17
  $region16: #{forward.22} parent=0 // pred_region
    _
  $region17: #{forward.22} parent=0 // pred_fallthru
    _
  // Predicated region
  $region18: #{forward.22} parent=0 // pred_check
    _
  $region19: #{forward.22} parent=0 // pred_check_branch
    %95 = sbr.rel (0) target = $region21
  $region20: #{forward.22} parent=0 // pred_region
    _
  $region21: #{forward.22} parent=0 // pred_fallthru
    _

// kernel: forward.21
$region0: #{forward.21}
  #allocation0 [shape = 'u32[]', space=smem, size = 0x4, offset = 0x4, fixed_abs, tag = 'smem constant byte address 0x4 - core index']
  #allocation1 [shape = 'u32[144,128]{1,0:T(1,128)}', space=vmem, size = 0x12000, scoped, tag = 'internal scratch']
  #allocation2 [shape = 'f32[32,128]{1,0:T(8,128)}', space=vmem, size = 0x4000, scoped, tag = 'scratch operand']
  %s0 = inlined_call_operand.vmem [shape: bf16[32,1152], index: 0, kind: input, shape index: {}]
  %s1 = inlined_call_operand.vmem [shape: bf16[1152,128], index: 1, kind: input, shape index: {}]
  %s2 = inlined_call_operand.vmem [shape: f32[1,128], index: 2, kind: input, shape index: {}]
  %s3 = inlined_call_operand.vmem [shape: bf16[32,128], index: 3, kind: output, shape index: {0}]
  %s4 = inlined_call_operand.vmem [shape: f32[8,128], index: 4, kind: output, shape index: {1}]
  %s5 = inlined_call_operand.vmem [shape: f32[8,128], index: 5, kind: output, shape index: {2}]
  %6 = xla_tuple %s3, %s4, %s5
  %s7 = sld [smem:[#allocation0]]
  $region95: #{forward.21} parent=0
    _
  %s9 = ssub.s32 1, %s7
  %s10 = scalar_select 0, %s9, %s7
  $region1: #{forward.21} parent=0
    #allocation3 [shape = 'u8[49152]{0}', space=vmem, size = 0xc000, scoped, tag = 'input window, operand 0']
    loop: start=0, step=1, limit=5
    $region2: #{forward.21} parent=1 // loop_pre_header
      _
    $region3: #{forward.21} parent=1 // loop_header
      %s12 = sphi 0, %s16
      %p13 = scmp.ge.s32.totalorder %s12, 5
      %s19 = sphi 0, %s38
      %s20 = sphi 0, %s34
      %s21 = sphi 0, %s30
      %s22 = sphi 0, %s19
      %s23 = sphi 0, %s20
      %s24 = sphi 0, %s21
      %s25 = sphi 0, %s22
      %s26 = sphi 0, %s23
      %s27 = sphi 0, %s24
      %s43 = sphi 0, %s45
      %s46 = sphi 0, %s43
      %s47 = sphi 0, %s46
      %s63 = sphi 0, %s47
      %s71 = sphi 0, %s73
      %s74 = sphi 0, %s71
      %s75 = sphi 0, %s74
      %s91 = sphi 0, %s75
      %s97 = sphi 0, %s99
      %s100 = sphi 0, %s97
      %s101 = sphi 0, %s100
      %s117 = sphi 0, %s101
      %s125 = sphi 0, %s127
      %s128 = sphi 0, %s125
      %s129 = sphi 0, %s128
      %s145 = sphi 0, %s129
      %s153 = sphi 0, %s155
      %s156 = sphi 0, %s153
      %s157 = sphi 0, %s156
      %s173 = sphi 0, %s157
      %s181 = sphi 0, %s183
      %s184 = sphi 0, %s181
      %s185 = sphi 0, %s184
      %s201 = sphi 0, %s185
    $region4: #{forward.21} parent=1 // loop_header_branch
      %15 = sbr.rel (%p13) target = $region8
    $region5: #{forward.21} parent=1 // loop_body
      %s17 = ssub.s32 %s12, 1
      %s18 = ssub.s32 %s12, 2
      %s28 = sadd.s32 1, %s21
      %p29 = scmp.ge.s32.totalorder %s28, 3
      %s30 = scalar_select %p29, 0, %s28
      %s31 = sadd.s32 1, %s20
      %s32 = scalar_select %p29, %s31, %s20
      %p33 = scmp.ge.s32.totalorder %s32, 1
      %s34 = scalar_select %p33, 0, %s32
      %s35 = sadd.s32 1, %s19
      %s36 = scalar_select %p33, %s35, %s19
      %p37 = scmp.ge.s32.totalorder %s36, 1
      %s38 = scalar_select %p37, 0, %s36
      %s39 = ssub.s32 %s19, %s38
      %s40 = ssub.s32 %s21, %s30
      %s41 = sor.u32 %s39, %s40
      %p42 = scmp.eq.s32.totalorder %s41, 0
      %s44 = sadd.s32 %s43, 1
      %s45 = scalar_select %p42, %s43, %s44
      %p48 = pneg %p42
      %p49 = scmp.eq.s32.totalorder %s12, 2
      %p50 = por %p48, %p49
      %p51 = scmp.ne.s32.totalorder %s43, %s46
      %p52 = scmp.eq.s32.totalorder %s12, 0
      %p53 = por %p51, %p52
      %p54 = scmp.ne.s32.totalorder %s43, %s46
      %p55 = scmp.eq.s32.totalorder %s17, 2
      %p56 = por %p54, %p55
      %p57 = scmp.ne.s32.totalorder %s46, %s47
      %p58 = scmp.eq.s32.totalorder %s17, 0
      %p59 = por %p57, %p58
      %p60 = scmp.ne.s32.totalorder %s46, %s47
      %p61 = scmp.eq.s32.totalorder %s18, 2
      %p62 = por %p60, %p61
      %p64 = scmp.ne.s32.totalorder %s47, %s63
      %p65 = scmp.eq.s32.totalorder %s18, 0
      %p66 = por %p64, %p65
      %s67 = ssub.s32 %s21, %s30
      %s68 = ssub.s32 %s20, %s34
      %s69 = sor.u32 %s67, %s68
      %p70 = scmp.eq.s32.totalorder %s69, 0
      %s72 = sadd.s32 %s71, 1
      %s73 = scalar_select %p70, %s71, %s72
      %p76 = pneg %p70
      %p77 = scmp.eq.s32.totalorder %s12, 2
      %p78 = por %p76, %p77
      %p79 = scmp.ne.s32.totalorder %s71, %s74
      %p80 = scmp.eq.s32.totalorder %s12, 0
      %p81 = por %p79, %p80
      %p82 = scmp.ne.s32.totalorder %s71, %s74
      %p83 = scmp.eq.s32.totalorder %s17, 2
      %p84 = por %p82, %p83
      %p85 = scmp.ne.s32.totalorder %s74, %s75
      %p86 = scmp.eq.s32.totalorder %s17, 0
      %p87 = por %p85, %p86
      %p88 = scmp.ne.s32.totalorder %s74, %s75
      %p89 = scmp.eq.s32.totalorder %s18, 2
      %p90 = por %p88, %p89
      %p92 = scmp.ne.s32.totalorder %s75, %s91
      %p93 = scmp.eq.s32.totalorder %s18, 0
      %p94 = por %p92, %p93
      %s95 = ssub.s32 %s20, %s34
      %p96 = scmp.eq.s32.totalorder %s95, 0
      %s98 = sadd.s32 %s97, 1
      %s99 = scalar_select %p96, %s97, %s98
      %p102 = pneg %p96
      %p103 = scmp.eq.s32.totalorder %s12, 2
      %p104 = por %p102, %p103
      %p105 = scmp.ne.s32.totalorder %s97, %s100
      %p106 = scmp.eq.s32.totalorder %s12, 0
      %p107 = por %p105, %p106
      %p108 = scmp.ne.s32.totalorder %s97, %s100
      %p109 = scmp.eq.s32.totalorder %s17, 2
      %p110 = por %p108, %p109
      %p111 = scmp.ne.s32.totalorder %s100, %s101
      %p112 = scmp.eq.s32.totalorder %s17, 0
      %p113 = por %p111, %p112
      %p114 = scmp.ne.s32.totalorder %s100, %s101
      %p115 = scmp.eq.s32.totalorder %s18, 2
      %p116 = por %p114, %p115
      %p118 = scmp.ne.s32.totalorder %s101, %s117
      %p119 = scmp.eq.s32.totalorder %s18, 0
      %p120 = por %p118, %p119
      %s121 = ssub.s32 %s19, %s38
      %s122 = ssub.s32 %s20, %s34
      %s123 = sor.u32 %s121, %s122
      %p124 = scmp.eq.s32.totalorder %s123, 0
      %s126 = sadd.s32 %s125, 1
      %s127 = scalar_select %p124, %s125, %s126
      %p130 = pneg %p124
      %p131 = scmp.eq.s32.totalorder %s12, 2
      %p132 = por %p130, %p131
      %p133 = scmp.ne.s32.totalorder %s125, %s128
      %p134 = scmp.eq.s32.totalorder %s12, 0
      %p135 = por %p133, %p134
      %p136 = scmp.ne.s32.totalorder %s125, %s128
      %p137 = scmp.eq.s32.totalorder %s17, 2
      %p138 = por %p136, %p137
      %p139 = scmp.ne.s32.totalorder %s128, %s129
      %p140 = scmp.eq.s32.totalorder %s17, 0
      %p141 = por %p139, %p140
      %p142 = scmp.ne.s32.totalorder %s128, %s129
      %p143 = scmp.eq.s32.totalorder %s18, 2
      %p144 = por %p142, %p143
      %p146 = scmp.ne.s32.totalorder %s129, %s145
      %p147 = scmp.eq.s32.totalorder %s18, 0
      %p148 = por %p146, %p147
      %s149 = ssub.s32 %s19, %s38
      %s150 = ssub.s32 %s20, %s34
      %s151 = sor.u32 %s149, %s150
      %p152 = scmp.eq.s32.totalorder %s151, 0
      %s154 = sadd.s32 %s153, 1
      %s155 = scalar_select %p152, %s153, %s154
      %p158 = pneg %p152
      %p159 = scmp.eq.s32.totalorder %s12, 2
      %p160 = por %p158, %p159
      %p161 = scmp.ne.s32.totalorder %s153, %s156
      %p162 = scmp.eq.s32.totalorder %s12, 0
      %p163 = por %p161, %p162
      %p164 = scmp.ne.s32.totalorder %s153, %s156
      %p165 = scmp.eq.s32.totalorder %s17, 2
      %p166 = por %p164, %p165
      %p167 = scmp.ne.s32.totalorder %s156, %s157
      %p168 = scmp.eq.s32.totalorder %s17, 0
      %p169 = por %p167, %p168
      %p170 = scmp.ne.s32.totalorder %s156, %s157
      %p171 = scmp.eq.s32.totalorder %s18, 2
      %p172 = por %p170, %p171
      %p174 = scmp.ne.s32.totalorder %s157, %s173
      %p175 = scmp.eq.s32.totalorder %s18, 0
      %p176 = por %p174, %p175
      %s177 = ssub.s32 %s19, %s38
      %s178 = ssub.s32 %s20, %s34
      %s179 = sor.u32 %s177, %s178
      %p180 = scmp.eq.s32.totalorder %s179, 0
      %s182 = sadd.s32 %s181, 1
      %s183 = scalar_select %p180, %s181, %s182
      %p186 = pneg %p180
      %p187 = scmp.eq.s32.totalorder %s12, 2
      %p188 = por %p186, %p187
      %p189 = scmp.ne.s32.totalorder %s181, %s184
      %p190 = scmp.eq.s32.totalorder %s12, 0
      %p191 = por %p189, %p190
      %p192 = scmp.ne.s32.totalorder %s181, %s184
      %p193 = scmp.eq.s32.totalorder %s17, 2
      %p194 = por %p192, %p193
      %p195 = scmp.ne.s32.totalorder %s184, %s185
      %p196 = scmp.eq.s32.totalorder %s17, 0
      %p197 = por %p195, %p196
      %p198 = scmp.ne.s32.totalorder %s184, %s185
      %p199 = scmp.eq.s32.totalorder %s18, 2
      %p200 = por %p198, %p199
      %p202 = scmp.ne.s32.totalorder %s185, %s201
      %p203 = scmp.eq.s32.totalorder %s18, 0
      %p204 = por %p202, %p203
      %p205 = scmp.le.s32.totalorder 1, %s12
      %p206 = scmp.lt.s32.totalorder %s12, 4
      %p207 = pnand %p205, %p206
      %p208 = pneg %p207
      // Predicated region
      $region9: #{forward.21} parent=5 // pred_check
        _
      $region10: #{forward.21} parent=5 // pred_check_branch
        %210 = sbr.rel (%p207) target = $region12
      $region11: #{forward.21} parent=5 // pred_region
        %s211 = ssub.s32 %s12, 1
        // Predicated region
        $region13: #{forward.21} parent=11 // pred_check
          %p212 = pneg %p113
        $region14: #{forward.21} parent=11 // pred_check_branch
          %214 = sbr.rel (%p212) target = $region16
        $region15: #{forward.21} parent=11 // pred_region
          %p215 = scmp.lt.s32.totalorder %s23, 0
          %s216 = scalar_select %p215, %s23, 0
          %s217 = scalar_lea.vmem %s2, %s216
        $region16: #{forward.21} parent=11 // pred_fallthru
          _
      $region12: #{forward.21} parent=5 // pred_fallthru
        _
      %p218 = scmp.lt.s32.totalorder %s12, 3
      // Predicated region
      $region17: #{forward.21} parent=5 // pred_check
        %p219 = pneg %p218
      $region18: #{forward.21} parent=5 // pred_check_branch
        %221 = sbr.rel (%p219) target = $region20
      $region19: #{forward.21} parent=5 // pred_region
        // Predicated region
        $region21: #{forward.21} parent=19 // pred_check
          %p222 = pneg %p53
        $region22: #{forward.21} parent=19 // pred_check_branch
          %224 = sbr.rel (%p222) target = $region24
        $region23: #{forward.21} parent=19 // pred_region
          %s225 = sand.u32 %s43, 1
          %s226 = sand.u32 %s43, 1
          %s227 = smul.addr %s226, 48
          %s228 = scalar_lea.vmem [#allocation3], %s227
          %s229 = smul.u32 4, %s19
          %s230 = smul.u32 3, %s21
          %s231 = smul.addr %s229, 9
          %s232 = sadd.s32 %s230, %s231
          %s233 = smul.addr %s232, 4
          %s234 = scalar_lea.vmem %s0, %s233
          // Predicated region
          $region25: #{forward.21} parent=23 // pred_check
            _
          $region26: #{forward.21} parent=23 // pred_check_branch
            %236 = sbr.rel (0) target = $region28
          $region27: #{forward.21} parent=23 // pred_region
            // Predicated region
            $region29: #{forward.21} parent=27 // pred_check
              _
            $region30: #{forward.21} parent=27 // pred_check_branch
              %238 = sbr.rel (0) target = $region32
            $region31: #{forward.21} parent=27 // pred_region
              %s239 = scalar_lea.vmem %s234, 8
              %s240 = scalar_lea.vmem %s228, 8 [#allocation3]
              loop: start=0, step=1, limit=1
              $region33: #{forward.21} parent=31 // loop_pre_header
                _
              $region34: #{forward.21} parent=31 // loop_header
                %s242 = sphi 0, %s246
                %p243 = scmp.ge.s32.totalorder %s242, 1
                %s247 = sphi %s234, %s234
                %s248 = sphi %s228, %s228
              $region35: #{forward.21} parent=31 // loop_header_branch
                %245 = sbr.rel (%p243) target = $region39
              $region36: #{forward.21} parent=31 // loop_body
                %v249 = vld [vmem:[%s247] sm:$0xff]
                %250 = vst [vmem:[%s248] sm:$0xff] %v249
                %v251 = vld [vmem:[%s247 + $0x24] sm:$0xff]
                %252 = vst [vmem:[%s248 + $0xc] sm:$0xff] %v251
                %v253 = vld [vmem:[%s247 + $0x48] sm:$0xff]
                %254 = vst [vmem:[%s248 + $0x18] sm:$0xff] %v253
                %v255 = vld [vmem:[%s247 + $0x6c] sm:$0xff]
                %256 = vst [vmem:[%s248 + $0x24] sm:$0xff] %v255
              $region37: #{forward.21} parent=31 // loop_footer
                %s246 = sadd.s32 1, %s242
              $region38: #{forward.21} parent=31 // loop_footer_branch
                %241 = sbr.rel target = $region34
              $region39: #{forward.21} parent=31 // loop_exit
                _
              %s258 = ssub.s32 16, 1
              loop: start=0, step=1, limit=1
              $region40: #{forward.21} parent=31 // loop_pre_header
                _
              $region41: #{forward.21} parent=31 // loop_header
                %s260 = sphi 0, %s264
                %p261 = scmp.ge.s32.totalorder %s260, 1
                %s265 = sphi %s239, %s239
                %s266 = sphi %s240, %s240
              $region42: #{forward.21} parent=31 // loop_header_branch
                %263 = sbr.rel (%p261) target = $region46
              $region43: #{forward.21} parent=31 // loop_body
                %v267 = vld [vmem:[%s265] sm:%s258]
                %268 = vst [vmem:[%s266] sm:%s258] %v267
                %v269 = vld [vmem:[%s265 + $0x24] sm:%s258]
                %270 = vst [vmem:[%s266 + $0xc] sm:%s258] %v269
                %v271 = vld [vmem:[%s265 + $0x48] sm:%s258]
                %272 = vst [vmem:[%s266 + $0x18] sm:%s258] %v271
                %v273 = vld [vmem:[%s265 + $0x6c] sm:%s258]
                %274 = vst [vmem:[%s266 + $0x24] sm:%s258] %v273
              $region44: #{forward.21} parent=31 // loop_footer
                %s264 = sadd.s32 1, %s260
              $region45: #{forward.21} parent=31 // loop_footer_branch
                %259 = sbr.rel target = $region41
              $region46: #{forward.21} parent=31 // loop_exit
                _
            $region32: #{forward.21} parent=27 // pred_fallthru
              _
          $region28: #{forward.21} parent=23 // pred_fallthru
            _
          %275 = vnop
        $region24: #{forward.21} parent=19 // pred_fallthru
          _
        // Predicated region
        $region47: #{forward.21} parent=19 // pred_check
          %p276 = pneg %p81
        $region48: #{forward.21} parent=19 // pred_check_branch
          %278 = sbr.rel (%p276) target = $region50
        $region49: #{forward.21} parent=19 // pred_region
          %s279 = smul.u32 48, %s21
          %p280 = scmp.lt.s32.totalorder %s279, 143
          %s281 = scalar_select %p280, %s279, 143
          %p282 = scmp.lt.s32.totalorder %s20, 0
          %s283 = scalar_select %p282, %s20, 0
          %s284 = sadd.s32 %s283, %s281
          %s285 = smul.addr %s284, 4
          %s286 = scalar_lea.vmem %s1, %s285
          %s287 = smul.u32 48, %s21
        $region50: #{forward.21} parent=19 // pred_fallthru
          _
      $region20: #{forward.21} parent=5 // pred_fallthru
        _
      %p288 = scmp.le.s32.totalorder 1, %s12
      %p289 = scmp.lt.s32.totalorder %s12, 4
      %p290 = pnand %p288, %p289
      %p291 = pneg %p290
      // Predicated region
      $region51: #{forward.21} parent=5 // pred_check
        _
      $region52: #{forward.21} parent=5 // pred_check_branch
        %293 = sbr.rel (%p290) target = $region54
      $region53: #{forward.21} parent=5 // pred_region
        %s294 = ssub.s32 %s12, 1
        %s295 = sand.u32 %s46, 1
        %s296 = sand.u32 %s46, 1
        %s297 = smul.addr %s296, 48
        %s298 = scalar_lea.vmem [#allocation3], %s297
        // Predicated region
        $region55: #{forward.21} parent=53 // pred_check
          %p299 = pneg %p59
        $region56: #{forward.21} parent=53 // pred_check_branch
          %301 = sbr.rel (%p299) target = $region58
        $region57: #{forward.21} parent=53 // pred_region
          _
        $region58: #{forward.21} parent=53 // pred_fallthru
          _
        %s302 = sand.u32 %s46, 1
        %s303 = sand.u32 %s46, 1
        %s304 = smul.addr %s303, 48
        %s305 = scalar_lea.vmem [#allocation3], %s304
        %p306 = pneg %p59
        %p307 = pneg %p56
        %s308 = smul.u32 48, %s24
        %p309 = scmp.lt.s32.totalorder %s308, 143
        %s310 = scalar_select %p309, %s308, 143
        %p311 = scmp.lt.s32.totalorder %s23, 0
        %s312 = scalar_select %p311, %s23, 0
        %s313 = sadd.s32 %s312, %s310
        %s314 = smul.addr %s313, 4
        %s315 = scalar_lea.vmem %s1, %s314
        %p316 = pneg %p87
        %p317 = pneg %p84
        %p318 = scmp.lt.s32.totalorder %s23, 0
        %s319 = scalar_select %p318, %s23, 0
        %s320 = scalar_lea.vmem %s2, %s319
        %p321 = pneg %p113
        %p322 = pneg %p110
        %p323 = pneg %p141
        %p324 = pneg %p138
        %s325 = smul.u32 4, %s22
        %p326 = scmp.lt.s32.totalorder %s325, 3
        %s327 = scalar_select %p326, %s325, 3
        %p328 = scmp.lt.s32.totalorder %s23, 0
        %s329 = scalar_select %p328, %s23, 0
        %s330 = sadd.s32 %s329, %s327
        %s331 = smul.addr %s330, 4
        %s332 = scalar_lea.vmem %s3, %s331
        %p333 = pneg %p169
        %p334 = pneg %p166
        %p335 = scmp.lt.s32.totalorder %s22, 0
        %s336 = scalar_select %p335, %s22, 0
        %p337 = scmp.lt.s32.totalorder %s23, 0
        %s338 = scalar_select %p337, %s23, 0
        %s339 = sadd.s32 %s338, %s336
        %s340 = smul.addr %s339, 8
        %s341 = scalar_lea.vmem %s4, %s340
        %p342 = pneg %p197
        %p343 = pneg %p194
        %p344 = scmp.lt.s32.totalorder %s22, 0
        %s345 = scalar_select %p344, %s22, 0
        %p346 = scmp.lt.s32.totalorder %s23, 0
        %s347 = scalar_select %p346, %s23, 0
        %s348 = sadd.s32 %s347, %s345
        %s349 = smul.addr %s348, 8
        %s350 = scalar_lea.vmem %s5, %s349
        %s351 = smul.u32 4, %s22
        %s352 = smul.u32 3, %s24
        %s353 = smul.u32 48, %s24
        %p354 = scmp.lt.s32.totalorder %s353, 143
        %s355 = scalar_select %p354, %s353, 143
        %p356 = scmp.lt.s32.totalorder %s23, 0
        %s357 = scalar_select %p356, %s23, 0
        %s358 = sadd.s32 %s357, %s355
        %s359 = smul.addr %s358, 4
        %s360 = scalar_lea.vmem %s1, %s359
        %s361 = smul.u32 48, %s24
        %p362 = scmp.lt.s32.totalorder %s23, 0
        %s363 = scalar_select %p362, %s23, 0
        %s364 = scalar_lea.vmem %s2, %s363
        %s365 = smul.u32 4, %s22
        %p366 = scmp.lt.s32.totalorder %s365, 3
        %s367 = scalar_select %p366, %s365, 3
        %p368 = scmp.lt.s32.totalorder %s23, 0
        %s369 = scalar_select %p368, %s23, 0
        %s370 = sadd.s32 %s369, %s367
        %s371 = smul.addr %s370, 4
        %s372 = scalar_lea.vmem %s3, %s371
        %s373 = smul.u32 4, %s22
        %p374 = scmp.lt.s32.totalorder %s22, 0
        %s375 = scalar_select %p374, %s22, 0
        %p376 = scmp.lt.s32.totalorder %s23, 0
        %s377 = scalar_select %p376, %s23, 0
        %s378 = sadd.s32 %s377, %s375
        %s379 = smul.addr %s378, 8
        %s380 = scalar_lea.vmem %s4, %s379
        %p381 = scmp.lt.s32.totalorder %s22, 0
        %s382 = scalar_select %p381, %s22, 0
        %p383 = scmp.lt.s32.totalorder %s23, 0
        %s384 = scalar_select %p383, %s23, 0
        %s385 = sadd.s32 %s384, %s382
        %s386 = smul.addr %s385, 8
        %s387 = scalar_lea.vmem %s5, %s386
        %s389 = smul.u32 %s22, 32
        %v390 = vlaneseq
        %v391 = vshrl.u32 %v390, 7
        %v392 = vadd.s32 %v391, 8
        %v393 = vadd.s32 %v391, 16
        %v394 = vadd.s32 %v391, 24
        %v395 = vstv %s389
        %v396 = vadd.s32 %v395, %v391
        %v397 = vadd.s32 %v395, %v392
        %v398 = vadd.s32 %v395, %v393
        %v399 = vadd.s32 %v395, %v394
        %p400 = scmp.eq.s32.totalorder %s24, 0
        // Predicated region
        $region59: #{forward.21} parent=53 // pred_check
          %p401 = pneg %p400
        $region60: #{forward.21} parent=53 // pred_check_branch
          %403 = sbr.rel (%p401) target = $region62
        $region61: #{forward.21} parent=53 // pred_region
          %404 = vst [vmem:[#allocation2] sm:$0xff] 0.0
          %405 = vst [vmem:[#allocation2 + $0x8] sm:$0xff] 0.0
          %406 = vst [vmem:[#allocation2 + $0x10] sm:$0xff] 0.0
          %407 = vst [vmem:[#allocation2 + $0x18] sm:$0xff] 0.0
        $region62: #{forward.21} parent=53 // pred_fallthru
          _
        %v408 = vld [vmem:[#allocation2] sm:$0xff]
        %v409 = vld [vmem:[#allocation2 + $0x8] sm:$0xff]
        %v410 = vld [vmem:[#allocation2 + $0x10] sm:$0xff]
        %v411 = vld [vmem:[#allocation2 + $0x18] sm:$0xff]
        %v412 = vld [vmem:[%s298] sm:$0xff]
        %v413 = vld [vmem:[%s298 + $0x8] sm:$0xf]
        %v414 = vld [vmem:[%s298 + $0xc] sm:$0xff]
        %v415 = vld [vmem:[%s298 + $0x14] sm:$0xf]
        %v416 = vld [vmem:[%s298 + $0x18] sm:$0xff]
        %v417 = vld [vmem:[%s298 + $0x20] sm:$0xf]
        %v418 = vld [vmem:[%s298 + $0x24] sm:$0xff]
        %v419 = vld [vmem:[%s298 + $0x2c] sm:$0xf]
        %v420 = vld [vmem:[%s360] sm:$0xf]
        %v421 = vld [vmem:[%s360 + $0x4] sm:$0xf]
        %v422 = vld [vmem:[%s360 + $0x8] sm:$0xf]
        %v423 = vld [vmem:[%s360 + $0xc] sm:$0xf]
        %v424 = vld [vmem:[%s360 + $0x10] sm:$0xf]
        %v425 = vld [vmem:[%s360 + $0x14] sm:$0xf]
        %v426 = vld [vmem:[%s360 + $0x18] sm:$0xf]
        %v427 = vld [vmem:[%s360 + $0x1c] sm:$0xf]
        %v428 = vld [vmem:[%s360 + $0x20] sm:$0xf]
        %v429 = vld [vmem:[%s360 + $0x24] sm:$0xf]
        %v430 = vld [vmem:[%s360 + $0x28] sm:$0xf]
        %v431 = vld [vmem:[%s360 + $0x2c] sm:$0xf]
        %v432 = vld [vmem:[%s360 + $0x30] sm:$0xf]
        %v433 = vld [vmem:[%s360 + $0x34] sm:$0xf]
        %v434 = vld [vmem:[%s360 + $0x38] sm:$0xf]
        %v435 = vld [vmem:[%s360 + $0x3c] sm:$0xf]
        %v436 = vld [vmem:[%s360 + $0x40] sm:$0xf]
        %v437 = vld [vmem:[%s360 + $0x44] sm:$0xf]
        %v438 = vld [vmem:[%s360 + $0x48] sm:$0xf]
        %v439 = vld [vmem:[%s360 + $0x4c] sm:$0xf]
        %v440 = vld [vmem:[%s360 + $0x50] sm:$0xf]
        %v441 = vld [vmem:[%s360 + $0x54] sm:$0xf]
        %v442 = vld [vmem:[%s360 + $0x58] sm:$0xf]
        %v443 = vld [vmem:[%s360 + $0x5c] sm:$0xf]
        %v444 = vld [vmem:[%s360 + $0x60] sm:$0xf]
        %v445 = vld [vmem:[%s360 + $0x64] sm:$0xf]
        %v446 = vld [vmem:[%s360 + $0x68] sm:$0xf]
        %v447 = vld [vmem:[%s360 + $0x6c] sm:$0xf]
        %v448 = vld [vmem:[%s360 + $0x70] sm:$0xf]
        %v449 = vld [vmem:[%s360 + $0x74] sm:$0xf]
        %v450 = vld [vmem:[%s360 + $0x78] sm:$0xf]
        %v451 = vld [vmem:[%s360 + $0x7c] sm:$0xf]
        %v452 = vld [vmem:[%s360 + $0x80] sm:$0xf]
        %v453 = vld [vmem:[%s360 + $0x84] sm:$0xf]
        %v454 = vld [vmem:[%s360 + $0x88] sm:$0xf]
        %v455 = vld [vmem:[%s360 + $0x8c] sm:$0xf]
        %v456 = vld [vmem:[%s360 + $0x90] sm:$0xf]
        %v457 = vld [vmem:[%s360 + $0x94] sm:$0xf]
        %v458 = vld [vmem:[%s360 + $0x98] sm:$0xf]
        %v459 = vld [vmem:[%s360 + $0x9c] sm:$0xf]
        %v460 = vld [vmem:[%s360 + $0xa0] sm:$0xf]
        %v461 = vld [vmem:[%s360 + $0xa4] sm:$0xf]
        %v462 = vld [vmem:[%s360 + $0xa8] sm:$0xf]
        %v463 = vld [vmem:[%s360 + $0xac] sm:$0xf]
        %v464 = vld [vmem:[%s360 + $0xb0] sm:$0xf]
        %v465 = vld [vmem:[%s360 + $0xb4] sm:$0xf]
        %v466 = vld [vmem:[%s360 + $0xb8] sm:$0xf]
        %v467 = vld [vmem:[%s360 + $0xbc] sm:$0xf]
        %v476 = vunpack.c.l.b16 %v412
        %v477 = vunpack.c.h.b16 %v412
        %v478 = vunpack.c.l.b16 %v413
        %v479 = vunpack.c.l.b16 %v414
        %v480 = vunpack.c.h.b16 %v414
        %v481 = vunpack.c.l.b16 %v415
        %v482 = vunpack.c.l.b16 %v416
        %v483 = vunpack.c.h.b16 %v416
        %v484 = vunpack.c.l.b16 %v417
        %v485 = vunpack.c.l.b16 %v418
        %v486 = vunpack.c.h.b16 %v418
        %v487 = vunpack.c.l.b16 %v419
        %v488 = vpack.c.b16 %v479, %v476
        %v489 = vpack.c.b16 %v480, %v477
        %v490 = vpack.c.b16 %v481, %v478
        %v491 = vpack.c.b16 %v485, %v482
        %v492 = vpack.c.b16 %v486, %v483
        %v493 = vpack.c.b16 %v487, %v484
        %v548 = vunpack.c.l.b16 %v420
        %v549 = vunpack.c.l.b16 %v421
        %v550 = vunpack.c.l.b16 %v422
        %v551 = vunpack.c.l.b16 %v423
        %v552 = vunpack.c.l.b16 %v424
        %v553 = vunpack.c.l.b16 %v425
        %v554 = vunpack.c.l.b16 %v426
        %v555 = vunpack.c.l.b16 %v427
        %v556 = vunpack.c.l.b16 %v428
        %v557 = vunpack.c.l.b16 %v429
        %v558 = vunpack.c.l.b16 %v430
        %v559 = vunpack.c.l.b16 %v431
        %v560 = vunpack.c.l.b16 %v432
        %v561 = vunpack.c.l.b16 %v433
        %v562 = vunpack.c.l.b16 %v434
        %v563 = vunpack.c.l.b16 %v435
        %v564 = vunpack.c.l.b16 %v436
        %v565 = vunpack.c.l.b16 %v437
        %v566 = vunpack.c.l.b16 %v438
        %v567 = vunpack.c.l.b16 %v439
        %v568 = vunpack.c.l.b16 %v440
        %v569 = vunpack.c.l.b16 %v441
        %v570 = vunpack.c.l.b16 %v442
        %v571 = vunpack.c.l.b16 %v443
        %v572 = vunpack.c.l.b16 %v444
        %v573 = vunpack.c.l.b16 %v445
        %v574 = vunpack.c.l.b16 %v446
        %v575 = vunpack.c.l.b16 %v447
        %v576 = vunpack.c.l.b16 %v448
        %v577 = vunpack.c.l.b16 %v449
        %v578 = vunpack.c.l.b16 %v450
        %v579 = vunpack.c.l.b16 %v451
        %v580 = vunpack.c.l.b16 %v452
        %v581 = vunpack.c.l.b16 %v453
        %v582 = vunpack.c.l.b16 %v454
        %v583 = vunpack.c.l.b16 %v455
        %v584 = vunpack.c.l.b16 %v456
        %v585 = vunpack.c.l.b16 %v457
        %v586 = vunpack.c.l.b16 %v458
        %v587 = vunpack.c.l.b16 %v459
        %v588 = vunpack.c.l.b16 %v460
        %v589 = vunpack.c.l.b16 %v461
        %v590 = vunpack.c.l.b16 %v462
        %v591 = vunpack.c.l.b16 %v463
        %v592 = vunpack.c.l.b16 %v464
        %v593 = vunpack.c.l.b16 %v465
        %v594 = vunpack.c.l.b16 %v466
        %v595 = vunpack.c.l.b16 %v467
        %v596 = vpack.c.b16 %v549, %v548
        %v597 = vpack.c.b16 %v551, %v550
        %v598 = vpack.c.b16 %v553, %v552
        %v599 = vpack.c.b16 %v555, %v554
        %v600 = vpack.c.b16 %v557, %v556
        %v601 = vpack.c.b16 %v559, %v558
        %v602 = vpack.c.b16 %v561, %v560
        %v603 = vpack.c.b16 %v563, %v562
        %v604 = vpack.c.b16 %v565, %v564
        %v605 = vpack.c.b16 %v567, %v566
        %v606 = vpack.c.b16 %v569, %v568
        %v607 = vpack.c.b16 %v571, %v570
        %v608 = vpack.c.b16 %v573, %v572
        %v609 = vpack.c.b16 %v575, %v574
        %v610 = vpack.c.b16 %v577, %v576
        %v611 = vpack.c.b16 %v579, %v578
        %v612 = vpack.c.b16 %v581, %v580
        %v613 = vpack.c.b16 %v583, %v582
        %v614 = vpack.c.b16 %v585, %v584
        %v615 = vpack.c.b16 %v587, %v586
        %v616 = vpack.c.b16 %v589, %v588
        %v617 = vpack.c.b16 %v591, %v590
        %v618 = vpack.c.b16 %v593, %v592
        %v619 = vpack.c.b16 %v595, %v594
        %644 = vmatprep.subr.bf16.mxu0 0
        %645 = vmatpush1.bf16.msra.mxu0 %v603
        %646 = vmatprep.subr.bf16.mxu0 0
        %647 = vmatpush1.bf16.msra.mxu0 %v602
        %648 = vmatprep.subr.bf16.mxu0 0
        %649 = vmatpush1.bf16.msra.mxu0 %v601
        %650 = vmatprep.subr.bf16.mxu0 0
        %651 = vmatpush1.bf16.msra.mxu0 %v600
        %652 = vmatprep.subr.bf16.mxu0 0
        %653 = vmatpush1.bf16.msra.mxu0 %v599
        %654 = vmatprep.subr.bf16.mxu0 0
        %655 = vmatpush1.bf16.msra.mxu0 %v598
        %656 = vmatprep.subr.bf16.mxu0 0
        %657 = vmatpush1.bf16.msra.mxu0 %v597
        %658 = vmatprep.subr.bf16.mxu0 0
        %659 = vmatpush1.bf16.msra.mxu0 %v596
        %660 = vmatprep.subr.bf16.mxu0 0
        %661 = vmatpush2.bf16.msra.mxu0 %v611
        %662 = vmatprep.subr.bf16.mxu0 0
        %663 = vmatpush2.bf16.msra.mxu0 %v610
        %664 = vmatprep.subr.bf16.mxu0 0
        %665 = vmatpush2.bf16.msra.mxu0 %v609
        %666 = vmatprep.subr.bf16.mxu0 0
        %667 = vmatpush2.bf16.msra.mxu0 %v608
        %668 = vmatprep.subr.bf16.mxu0 0
        %669 = vmatpush2.bf16.msra.mxu0 %v607
        %670 = vmatprep.subr.bf16.mxu0 0
        %671 = vmatpush2.bf16.msra.mxu0 %v606
        %672 = vmatprep.subr.bf16.mxu0 0
        %673 = vmatpush2.bf16.msra.mxu0 %v605
        %674 = vmatprep.subr.bf16.mxu0 0
        %675 = vmatpush2.bf16.msra.mxu0 %v604
        %676 = vmatprep.mubr.bf16.mxu0 %v489
        %677 = vmatmul.mubr.bf16.gmra.mxu0 %v488
        %v678 = vpop.f32.mrf.mxu0
        %v679 = vadd.f32 0.0, %v678
        %v680 = vpop.f32.mrf.mxu0
        %v681 = vpop.f32.mrf.mxu0
        %v682 = vadd.f32 0.0, %v681
        %v683 = vpop.f32.mrf.mxu0
        %684 = vmatprep.mubr.bf16.mxu0 %v492
        %685 = vmatmul.mubr.bf16.gmra.mxu0 %v491
        %v686 = vpop.f32.mrf.mxu0
        %v687 = vadd.f32 0.0, %v686
        %v688 = vpop.f32.mrf.mxu0
        %v689 = vpop.f32.mrf.mxu0
        %v690 = vadd.f32 0.0, %v689
        %v691 = vpop.f32.mrf.mxu0
        %692 = vdwg.mxu0
        %693 = vmatprep.subr.bf16.mxu0 0
        %694 = vmatpush1.bf16.msra.mxu0 %v619
        %695 = vmatprep.subr.bf16.mxu0 0
        %696 = vmatpush1.bf16.msra.mxu0 %v618
        %697 = vmatprep.subr.bf16.mxu0 0
        %698 = vmatpush1.bf16.msra.mxu0 %v617
        %699 = vmatprep.subr.bf16.mxu0 0
        %700 = vmatpush1.bf16.msra.mxu0 %v616
        %701 = vmatprep.subr.bf16.mxu0 0
        %702 = vmatpush1.bf16.msra.mxu0 %v615
        %703 = vmatprep.subr.bf16.mxu0 0
        %704 = vmatpush1.bf16.msra.mxu0 %v614
        %705 = vmatprep.subr.bf16.mxu0 0
        %706 = vmatpush1.bf16.msra.mxu0 %v613
        %707 = vmatprep.subr.bf16.mxu0 0
        %708 = vmatpush1.bf16.msra.mxu0 %v612
        %709 = vmatprep.subr.bf16.mxu0 0
        %710 = vmatpush2.bf16.msra.mxu0 0
        %711 = vmatprep.subr.bf16.mxu0 0
        %712 = vmatpush2.bf16.msra.mxu0 0
        %713 = vmatprep.subr.bf16.mxu0 0
        %714 = vmatpush2.bf16.msra.mxu0 0
        %715 = vmatprep.subr.bf16.mxu0 0
        %716 = vmatpush2.bf16.msra.mxu0 0
        %717 = vmatprep.subr.bf16.mxu0 0
        %718 = vmatpush2.bf16.msra.mxu0 0
        %719 = vmatprep.subr.bf16.mxu0 0
        %720 = vmatpush2.bf16.msra.mxu0 0
        %721 = vmatprep.subr.bf16.mxu0 0
        %722 = vmatpush2.bf16.msra.mxu0 0
        %723 = vmatprep.subr.bf16.mxu0 0
        %724 = vmatpush2.bf16.msra.mxu0 0
        %725 = vmatprep.mubr.bf16.mxu0 0
        %726 = vmatmul.mubr.bf16.gmra.mxu0 %v490
        %v727 = vpop.f32.mrf.mxu0
        %v728 = vadd.f32 %v679, %v727
        %v729 = vpop.f32.mrf.mxu0
        %v730 = vpop.f32.mrf.mxu0
        %v731 = vadd.f32 %v682, %v730
        %v732 = vpop.f32.mrf.mxu0
        %733 = vmatprep.mubr.bf16.mxu0 0
        %734 = vmatmul.mubr.bf16.gmra.mxu0 %v493
        %v735 = vpop.f32.mrf.mxu0
        %v736 = vadd.f32 %v687, %v735
        %v737 = vpop.f32.mrf.mxu0
        %v738 = vpop.f32.mrf.mxu0
        %v739 = vadd.f32 %v690, %v738
        %v740 = vpop.f32.mrf.mxu0
        %741 = vdwg.mxu0
        %v742 = vadd.f32 %v408, %v728
        %v743 = vadd.f32 %v409, %v731
        %v744 = vadd.f32 %v410, %v736
        %v745 = vadd.f32 %v411, %v739
        %746 = vst [vmem:[#allocation2] sm:$0xff] %v742
        %747 = vst [vmem:[#allocation2 + $0x8] sm:$0xff] %v743
        %748 = vst [vmem:[#allocation2 + $0x10] sm:$0xff] %v744
        %749 = vst [vmem:[#allocation2 + $0x18] sm:$0xff] %v745
        %p750 = scmp.eq.s32.totalorder %s24, 2
        // Predicated region
        $region63: #{forward.21} parent=53 // pred_check
          %p751 = pneg %p750
        $region64: #{forward.21} parent=53 // pred_check_branch
          %753 = sbr.rel (%p751) target = $region66
        $region65: #{forward.21} parent=53 // pred_region
          %v754 = vld [vmem:[#allocation2] sm:$0xff]
          %v755 = vld [vmem:[#allocation2 + $0x8] sm:$0xff]
          %v756 = vld [vmem:[#allocation2 + $0x10] sm:$0xff]
          %v757 = vld [vmem:[#allocation2 + $0x18] sm:$0xff]
          %v758 = vld [vmem:[%s364] sm:$0x1]
          %v760 = vlaneseq
          %v761 = vshrl.u32 %v760, 7
          %v762 = vsub.s32 0, %v761
          %v763 = vrot.slane %v758, %v762
          %v765 = vadd.f32 %v754, %v763
          %v766 = vadd.f32 %v755, %v763
          %v767 = vadd.f32 %v756, %v763
          %v768 = vadd.f32 %v757, %v763
          %v769 = vpack.c.bf16 %v766, %v765
          %v770 = vpack.c.bf16 %v768, %v767
          %v773 = vunpack.c.l.b16 %v769
          %v774 = vunpack.c.h.b16 %v769
          %v775 = vunpack.c.l.b16 %v770
          %v776 = vunpack.c.h.b16 %v770
          %v777 = vpack.c.b16 %v773, %v773
          %v778 = vpack.c.b16 %v774, %v774
          %v779 = vpack.c.b16 %v775, %v775
          %v780 = vpack.c.b16 %v776, %v776
          %785 = vst [vmem:[%s372] sm:$0xf] %v777
          %786 = vst [vmem:[%s372 + $0x4] sm:$0xf] %v778
          %787 = vst [vmem:[%s372 + $0x8] sm:$0xf] %v779
          %788 = vst [vmem:[%s372 + $0xc] sm:$0xf] %v780
          %vm789 = vcmp.lt.s32.totalorder %v396, 32
          %vm790 = vcmp.lt.s32.totalorder %v397, 32
          %vm791 = vcmp.lt.s32.totalorder %v398, 32
          %vm792 = vcmp.lt.s32.totalorder %v399, 32
          %v793 = vsel %vm789, 1, 0
          %v794 = vsel %vm790, 1, 0
          %v795 = vsel %vm791, 1, 0
          %v796 = vsel %vm792, 1, 0
          %vm797 = vcmp.eq.s32.totalorder %v793, 1
          %vm798 = vcmp.eq.s32.totalorder %v794, 1
          %vm799 = vcmp.eq.s32.totalorder %v795, 1
          %vm800 = vcmp.eq.s32.totalorder %v796, 1
          %v801 = vsel %vm797, %v765, 0.0
          %v802 = vsel %vm798, %v766, 0.0
          %v803 = vsel %vm799, %v767, 0.0
          %v804 = vsel %vm800, %v768, 0.0
          %v805 = vadd.f32 %v801, %v802
          %v806 = vadd.f32 %v805, %v803
          %v807 = vadd.f32 %v806, %v804
          %v808 = vrot.slane %v807, 4
          %v809 = vadd.f32 %v807, %v808
          %v810 = vrot.slane %v809, 2
          %v811 = vadd.f32 %v809, %v810
          %v812 = vrot.slane %v811, 1
          %v813 = vadd.f32 %v811, %v812
          %v814 = vmul.f32 %v801, %v801
          %v815 = vmul.f32 %v802, %v802
          %v816 = vmul.f32 %v803, %v803
          %v817 = vmul.f32 %v804, %v804
          %v818 = vadd.f32 %v814, %v815
          %v819 = vadd.f32 %v818, %v816
          %v820 = vadd.f32 %v819, %v817
          %v821 = vrot.slane %v820, 4
          %v822 = vadd.f32 %v820, %v821
          %v823 = vrot.slane %v822, 2
          %v824 = vadd.f32 %v822, %v823
          %v825 = vrot.slane %v824, 1
          %v826 = vadd.f32 %v824, %v825
          %827 = vst [vmem:[%s380] sm:$0xff] %v813
          %828 = vst [vmem:[%s387] sm:$0xff] %v826
        $region66: #{forward.21} parent=53 // pred_fallthru
          _
        %s829 = smul.u32 4, %s22
        %p830 = scmp.lt.s32.totalorder %s829, 3
        %s831 = scalar_select %p830, %s829, 3
        %p832 = scmp.lt.s32.totalorder %s23, 0
        %s833 = scalar_select %p832, %s23, 0
        %s834 = sadd.s32 %s833, %s831
        %s835 = smul.addr %s834, 4
        %s836 = scalar_lea.vmem %s3, %s835
        %p837 = scmp.lt.s32.totalorder %s22, 0
        %s838 = scalar_select %p837, %s22, 0
        %p839 = scmp.lt.s32.totalorder %s23, 0
        %s840 = scalar_select %p839, %s23, 0
        %s841 = sadd.s32 %s840, %s838
        %s842 = smul.addr %s841, 8
        %s843 = scalar_lea.vmem %s4, %s842
        %p844 = scmp.lt.s32.totalorder %s22, 0
        %s845 = scalar_select %p844, %s22, 0
        %p846 = scmp.lt.s32.totalorder %s23, 0
        %s847 = scalar_select %p846, %s23, 0
        %s848 = sadd.s32 %s847, %s845
        %s849 = smul.addr %s848, 8
        %s850 = scalar_lea.vmem %s5, %s849
        // Predicated region
        $region67: #{forward.21} parent=53 // pred_check
          %p851 = pneg %p138
        $region68: #{forward.21} parent=53 // pred_check_branch
          %853 = sbr.rel (%p851) target = $region70
        $region69: #{forward.21} parent=53 // pred_region
          %s854 = smul.u32 4, %s22
        $region70: #{forward.21} parent=53 // pred_fallthru
          _
        // Predicated region
        $region71: #{forward.21} parent=53 // pred_check
          %p855 = pneg %p166
        $region72: #{forward.21} parent=53 // pred_check_branch
          %857 = sbr.rel (%p855) target = $region74
        $region73: #{forward.21} parent=53 // pred_region
          _
        $region74: #{forward.21} parent=53 // pred_fallthru
          _
        // Predicated region
        $region75: #{forward.21} parent=53 // pred_check
          %p858 = pneg %p194
        $region76: #{forward.21} parent=53 // pred_check_branch
          %860 = sbr.rel (%p858) target = $region78
        $region77: #{forward.21} parent=53 // pred_region
          _
        $region78: #{forward.21} parent=53 // pred_fallthru
          _
        // Predicated region
        $region79: #{forward.21} parent=53 // pred_check
          %p861 = pneg %p138
        $region80: #{forward.21} parent=53 // pred_check_branch
          %863 = sbr.rel (%p861) target = $region82
        $region81: #{forward.21} parent=53 // pred_region
          %s864 = smul.u32 4, %s22
          %p865 = scmp.lt.s32.totalorder %s864, 3
          %s866 = scalar_select %p865, %s864, 3
          %p867 = scmp.lt.s32.totalorder %s23, 0
          %s868 = scalar_select %p867, %s23, 0
          %s869 = sadd.s32 %s868, %s866
          %s870 = smul.addr %s869, 4
          %s871 = scalar_lea.vmem %s3, %s870
        $region82: #{forward.21} parent=53 // pred_fallthru
          _
        // Predicated region
        $region83: #{forward.21} parent=53 // pred_check
          %p872 = pneg %p166
        $region84: #{forward.21} parent=53 // pred_check_branch
          %874 = sbr.rel (%p872) target = $region86
        $region85: #{forward.21} parent=53 // pred_region
          %p875 = scmp.lt.s32.totalorder %s22, 0
          %s876 = scalar_select %p875, %s22, 0
          %p877 = scmp.lt.s32.totalorder %s23, 0
          %s878 = scalar_select %p877, %s23, 0
          %s879 = sadd.s32 %s878, %s876
          %s880 = smul.addr %s879, 8
          %s881 = scalar_lea.vmem %s4, %s880
        $region86: #{forward.21} parent=53 // pred_fallthru
          _
        // Predicated region
        $region87: #{forward.21} parent=53 // pred_check
          %p882 = pneg %p194
        $region88: #{forward.21} parent=53 // pred_check_branch
          %884 = sbr.rel (%p882) target = $region90
        $region89: #{forward.21} parent=53 // pred_region
          %p885 = scmp.lt.s32.totalorder %s22, 0
          %s886 = scalar_select %p885, %s22, 0
          %p887 = scmp.lt.s32.totalorder %s23, 0
          %s888 = scalar_select %p887, %s23, 0
          %s889 = sadd.s32 %s888, %s886
          %s890 = smul.addr %s889, 8
          %s891 = scalar_lea.vmem %s5, %s890
        $region90: #{forward.21} parent=53 // pred_fallthru
          _
      $region54: #{forward.21} parent=5 // pred_fallthru
        _
      %p892 = scmp.le.s32.totalorder 2, %s12
      // Predicated region
      $region91: #{forward.21} parent=5 // pred_check
        %p893 = pneg %p892
      $region92: #{forward.21} parent=5 // pred_check_branch
        %895 = sbr.rel (%p893) target = $region94
      $region93: #{forward.21} parent=5 // pred_region
        %s896 = ssub.s32 %s12, 2
      $region94: #{forward.21} parent=5 // pred_fallthru
        _
    $region6: #{forward.21} parent=1 // loop_footer
      %s16 = sadd.s32 1, %s12
    $region7: #{forward.21} parent=1 // loop_footer_branch
      %11 = sbr.rel target = $region3
    $region8: #{forward.21} parent=1 // loop_exit
      _

// kernel: forward.24
$region0: #{forward.24}
  #allocation0 [shape = 'u32[]', space=smem, size = 0x4, offset = 0x4, fixed_abs, tag = 'smem constant byte address 0x4 - core index']
  #allocation1 [shape = 'u32[144,128]{1,0:T(1,128)}', space=vmem, size = 0x12000, scoped, tag = 'internal scratch']
  %s0 = inlined_call_operand.vmem [shape: bf16[32,256], index: 0, kind: input, shape index: {}]
  %s1 = inlined_call_operand.vmem [shape: f32[1,256], index: 1, kind: input, shape index: {}]
  %s2 = inlined_call_operand.vmem [shape: f32[1,256], index: 2, kind: input, shape index: {}]
  %s3 = inlined_call_operand.vmem [shape: bf16[32,256], index: 3, kind: output, shape index: {}]
  %s4 = sld [smem:[#allocation0]]
  $region22: #{forward.24} parent=0
    _
  %s6 = ssub.s32 1, %s4
  %s7 = scalar_select 0, %s6, %s4
  // Predicated region
  $region2: #{forward.24} parent=0 // pred_check
    _
  $region3: #{forward.24} parent=0 // pred_check_branch
    %9 = sbr.rel (0) target = $region5
  $region4: #{forward.24} parent=0 // pred_region
    _
  $region5: #{forward.24} parent=0 // pred_fallthru
    _
  // Predicated region
  $region6: #{forward.24} parent=0 // pred_check
    _
  $region7: #{forward.24} parent=0 // pred_check_branch
    %11 = sbr.rel (0) target = $region9
  $region8: #{forward.24} parent=0 // pred_region
    _
  $region9: #{forward.24} parent=0 // pred_fallthru
    _
  // Predicated region
  $region10: #{forward.24} parent=0 // pred_check
    _
  $region11: #{forward.24} parent=0 // pred_check_branch
    %13 = sbr.rel (0) target = $region13
  $region12: #{forward.24} parent=0 // pred_region
    _
  $region13: #{forward.24} parent=0 // pred_fallthru
    _
  %v14 = vld [vmem:[%s0] sm:$0xff]
  %v15 = vld [vmem:[%s0 + $0x8] sm:$0xff]
  %v16 = vld [vmem:[%s0 + $0x10] sm:$0xff]
  %v17 = vld [vmem:[%s0 + $0x18] sm:$0xff]
  %v18 = vunpack.c.l.bf16 %v14
  %v19 = vunpack.c.h.bf16 %v14
  %v20 = vunpack.c.l.bf16 %v15
  %v21 = vunpack.c.h.bf16 %v15
  %v22 = vunpack.c.l.bf16 %v16
  %v23 = vunpack.c.h.bf16 %v16
  %v24 = vunpack.c.l.bf16 %v17
  %v25 = vunpack.c.h.bf16 %v17
  %v26 = vld [vmem:[%s1] sm:$0x3]
  %v28 = vlaneseq
  %v29 = vshrl.u32 %v28, 7
  %v30 = vsub.s32 0, %v29
  %v31 = vrot.slane %v26, %v30
  %v32 = vlaneseq
  %v33 = vshrl.u32 %v32, 7
  %v34 = vsub.s32 1, %v33
  %v35 = vrot.slane %v26, %v34
  %v38 = vmul.f32 %v18, %v31
  %v39 = vmul.f32 %v19, %v35
  %v40 = vmul.f32 %v20, %v31
  %v41 = vmul.f32 %v21, %v35
  %v42 = vmul.f32 %v22, %v31
  %v43 = vmul.f32 %v23, %v35
  %v44 = vmul.f32 %v24, %v31
  %v45 = vmul.f32 %v25, %v35
  %v46 = vld [vmem:[%s2] sm:$0x3]
  %v48 = vlaneseq
  %v49 = vshrl.u32 %v48, 7
  %v50 = vsub.s32 0, %v49
  %v51 = vrot.slane %v46, %v50
  %v52 = vlaneseq
  %v53 = vshrl.u32 %v52, 7
  %v54 = vsub.s32 1, %v53
  %v55 = vrot.slane %v46, %v54
  %v58 = vadd.f32 %v38, %v51
  %v59 = vadd.f32 %v39, %v55
  %v60 = vadd.f32 %v40, %v51
  %v61 = vadd.f32 %v41, %v55
  %v62 = vadd.f32 %v42, %v51
  %v63 = vadd.f32 %v43, %v55
  %v64 = vadd.f32 %v44, %v51
  %v65 = vadd.f32 %v45, %v55
  %v66 = vxor.u32 %v58, 2147483648
  %v67 = vxor.u32 %v59, 2147483648
  %v68 = vxor.u32 %v60, 2147483648
  %v69 = vxor.u32 %v61, 2147483648
  %v70 = vxor.u32 %v62, 2147483648
  %v71 = vxor.u32 %v63, 2147483648
  %v72 = vxor.u32 %v64, 2147483648
  %v73 = vxor.u32 %v65, 2147483648
  %v74 = vmul.f32 %v66, 1.442695
  %v75 = vpow.pop %v74
  %v76 = vmul.f32 %v67, 1.442695
  %v77 = vpow.pop %v76
  %v78 = vmul.f32 %v68, 1.442695
  %v79 = vpow.pop %v78
  %v80 = vmul.f32 %v69, 1.442695
  %v81 = vpow.pop %v80
  %v82 = vmul.f32 %v70, 1.442695
  %v83 = vpow.pop %v82
  %v84 = vmul.f32 %v71, 1.442695
  %v85 = vpow.pop %v84
  %v86 = vmul.f32 %v72, 1.442695
  %v87 = vpow.pop %v86
  %v88 = vmul.f32 %v73, 1.442695
  %v89 = vpow.pop %v88
  %v90 = vadd.f32 %v75, 1.0
  %v91 = vadd.f32 %v77, 1.0
  %v92 = vadd.f32 %v79, 1.0
  %v93 = vadd.f32 %v81, 1.0
  %v94 = vadd.f32 %v83, 1.0
  %v95 = vadd.f32 %v85, 1.0
  %v96 = vadd.f32 %v87, 1.0
  %v97 = vadd.f32 %v89, 1.0
  %v98 = vrcp.pop %v90
  %v99 = vmul.f32 1.0, %v98
  %v100 = vrcp.pop %v91
  %v101 = vmul.f32 1.0, %v100
  %v102 = vrcp.pop %v92
  %v103 = vmul.f32 1.0, %v102
  %v104 = vrcp.pop %v93
  %v105 = vmul.f32 1.0, %v104
  %v106 = vrcp.pop %v94
  %v107 = vmul.f32 1.0, %v106
  %v108 = vrcp.pop %v95
  %v109 = vmul.f32 1.0, %v108
  %v110 = vrcp.pop %v96
  %v111 = vmul.f32 1.0, %v110
  %v112 = vrcp.pop %v97
  %v113 = vmul.f32 1.0, %v112
  %v114 = vmul.f32 %v58, %v99
  %v115 = vmul.f32 %v59, %v101
  %v116 = vmul.f32 %v60, %v103
  %v117 = vmul.f32 %v61, %v105
  %v118 = vmul.f32 %v62, %v107
  %v119 = vmul.f32 %v63, %v109
  %v120 = vmul.f32 %v64, %v111
  %v121 = vmul.f32 %v65, %v113
  %v122 = vpack.c.bf16 %v116, %v114
  %v123 = vpack.c.bf16 %v117, %v115
  %v124 = vpack.c.bf16 %v120, %v118
  %v125 = vpack.c.bf16 %v121, %v119
  %v130 = vunpack.c.l.b16 %v122
  %v131 = vunpack.c.l.b16 %v123
  %v132 = vunpack.c.h.b16 %v122
  %v133 = vunpack.c.h.b16 %v123
  %v134 = vunpack.c.l.b16 %v124
  %v135 = vunpack.c.l.b16 %v125
  %v136 = vunpack.c.h.b16 %v124
  %v137 = vunpack.c.h.b16 %v125
  %v138 = vpack.c.b16 %v131, %v130
  %v139 = vpack.c.b16 %v133, %v132
  %v140 = vpack.c.b16 %v135, %v134
  %v141 = vpack.c.b16 %v137, %v136
  %146 = vst [vmem:[%s3] sm:$0xff] %v138
  %147 = vst [vmem:[%s3 + $0x8] sm:$0xff] %v139
  %148 = vst [vmem:[%s3 + $0x10] sm:$0xff] %v140
  %149 = vst [vmem:[%s3 + $0x18] sm:$0xff] %v141
  // Predicated region
  $region14: #{forward.24} parent=0 // pred_check
    _
  $region15: #{forward.24} parent=0 // pred_check_branch
    %151 = sbr.rel (0) target = $region17
  $region16: #{forward.24} parent=0 // pred_region
    _
  $region17: #{forward.24} parent=0 // pred_fallthru
    _
  // Predicated region
  $region18: #{forward.24} parent=0 // pred_check
    _
  $region19: #{forward.24} parent=0 // pred_check_branch
    %153 = sbr.rel (0) target = $region21
  $region20: #{forward.24} parent=0 // pred_region
    _
  $region21: #{forward.24} parent=0 // pred_fallthru
    _

// kernel: forward.23
$region0: #{forward.23}
  #allocation0 [shape = 'u32[]', space=smem, size = 0x4, offset = 0x4, fixed_abs, tag = 'smem constant byte address 0x4 - core index']
  #allocation1 [shape = 'u32[144,128]{1,0:T(1,128)}', space=vmem, size = 0x12000, scoped, tag = 'internal scratch']
  #allocation2 [shape = 'f32[32,256]{1,0:T(8,128)}', space=vmem, size = 0x8000, scoped, tag = 'scratch operand']
  %s0 = inlined_call_operand.vmem [shape: bf16[32,1152], index: 0, kind: input, shape index: {}]
  %s1 = inlined_call_operand.vmem [shape: bf16[1152,256], index: 1, kind: input, shape index: {}]
  %s2 = inlined_call_operand.vmem [shape: f32[1,256], index: 2, kind: input, shape index: {}]
  %s3 = inlined_call_operand.vmem [shape: bf16[32,256], index: 3, kind: output, shape index: {0}]
  %s4 = inlined_call_operand.vmem [shape: f32[8,256], index: 4, kind: output, shape index: {1}]
  %s5 = inlined_call_operand.vmem [shape: f32[8,256], index: 5, kind: output, shape index: {2}]
  %6 = xla_tuple %s3, %s4, %s5
  %s7 = sld [smem:[#allocation0]]
  $region95: #{forward.23} parent=0
    _
  %s9 = ssub.s32 1, %s7
  %s10 = scalar_select 0, %s9, %s7
  $region1: #{forward.23} parent=0
    #allocation3 [shape = 'u8[49152]{0}', space=vmem, size = 0xc000, scoped, tag = 'input window, operand 0']
    loop: start=0, step=1, limit=5
    $region2: #{forward.23} parent=1 // loop_pre_header
      _
    $region3: #{forward.23} parent=1 // loop_header
      %s12 = sphi 0, %s16
      %p13 = scmp.ge.s32.totalorder %s12, 5
      %s19 = sphi 0, %s38
      %s20 = sphi 0, %s34
      %s21 = sphi 0, %s30
      %s22 = sphi 0, %s19
      %s23 = sphi 0, %s20
      %s24 = sphi 0, %s21
      %s25 = sphi 0, %s22
      %s26 = sphi 0, %s23
      %s27 = sphi 0, %s24
      %s43 = sphi 0, %s45
      %s46 = sphi 0, %s43
      %s47 = sphi 0, %s46
      %s63 = sphi 0, %s47
      %s71 = sphi 0, %s73
      %s74 = sphi 0, %s71
      %s75 = sphi 0, %s74
      %s91 = sphi 0, %s75
      %s97 = sphi 0, %s99
      %s100 = sphi 0, %s97
      %s101 = sphi 0, %s100
      %s117 = sphi 0, %s101
      %s125 = sphi 0, %s127
      %s128 = sphi 0, %s125
      %s129 = sphi 0, %s128
      %s145 = sphi 0, %s129
      %s153 = sphi 0, %s155
      %s156 = sphi 0, %s153
      %s157 = sphi 0, %s156
      %s173 = sphi 0, %s157
      %s181 = sphi 0, %s183
      %s184 = sphi 0, %s181
      %s185 = sphi 0, %s184
      %s201 = sphi 0, %s185
    $region4: #{forward.23} parent=1 // loop_header_branch
      %15 = sbr.rel (%p13) target = $region8
    $region5: #{forward.23} parent=1 // loop_body
      %s17 = ssub.s32 %s12, 1
      %s18 = ssub.s32 %s12, 2
      %s28 = sadd.s32 1, %s21
      %p29 = scmp.ge.s32.totalorder %s28, 3
      %s30 = scalar_select %p29, 0, %s28
      %s31 = sadd.s32 1, %s20
      %s32 = scalar_select %p29, %s31, %s20
      %p33 = scmp.ge.s32.totalorder %s32, 1
      %s34 = scalar_select %p33, 0, %s32
      %s35 = sadd.s32 1, %s19
      %s36 = scalar_select %p33, %s35, %s19
      %p37 = scmp.ge.s32.totalorder %s36, 1
      %s38 = scalar_select %p37, 0, %s36
      %s39 = ssub.s32 %s19, %s38
      %s40 = ssub.s32 %s21, %s30
      %s41 = sor.u32 %s39, %s40
      %p42 = scmp.eq.s32.totalorder %s41, 0
      %s44 = sadd.s32 %s43, 1
      %s45 = scalar_select %p42, %s43, %s44
      %p48 = pneg %p42
      %p49 = scmp.eq.s32.totalorder %s12, 2
      %p50 = por %p48, %p49
      %p51 = scmp.ne.s32.totalorder %s43, %s46
      %p52 = scmp.eq.s32.totalorder %s12, 0
      %p53 = por %p51, %p52
      %p54 = scmp.ne.s32.totalorder %s43, %s46
      %p55 = scmp.eq.s32.totalorder %s17, 2
      %p56 = por %p54, %p55
      %p57 = scmp.ne.s32.totalorder %s46, %s47
      %p58 = scmp.eq.s32.totalorder %s17, 0
      %p59 = por %p57, %p58
      %p60 = scmp.ne.s32.totalorder %s46, %s47
      %p61 = scmp.eq.s32.totalorder %s18, 2
      %p62 = por %p60, %p61
      %p64 = scmp.ne.s32.totalorder %s47, %s63
      %p65 = scmp.eq.s32.totalorder %s18, 0
      %p66 = por %p64, %p65
      %s67 = ssub.s32 %s21, %s30
      %s68 = ssub.s32 %s20, %s34
      %s69 = sor.u32 %s67, %s68
      %p70 = scmp.eq.s32.totalorder %s69, 0
      %s72 = sadd.s32 %s71, 1
      %s73 = scalar_select %p70, %s71, %s72
      %p76 = pneg %p70
      %p77 = scmp.eq.s32.totalorder %s12, 2
      %p78 = por %p76, %p77
      %p79 = scmp.ne.s32.totalorder %s71, %s74
      %p80 = scmp.eq.s32.totalorder %s12, 0
      %p81 = por %p79, %p80
      %p82 = scmp.ne.s32.totalorder %s71, %s74
      %p83 = scmp.eq.s32.totalorder %s17, 2
      %p84 = por %p82, %p83
      %p85 = scmp.ne.s32.totalorder %s74, %s75
      %p86 = scmp.eq.s32.totalorder %s17, 0
      %p87 = por %p85, %p86
      %p88 = scmp.ne.s32.totalorder %s74, %s75
      %p89 = scmp.eq.s32.totalorder %s18, 2
      %p90 = por %p88, %p89
      %p92 = scmp.ne.s32.totalorder %s75, %s91
      %p93 = scmp.eq.s32.totalorder %s18, 0
      %p94 = por %p92, %p93
      %s95 = ssub.s32 %s20, %s34
      %p96 = scmp.eq.s32.totalorder %s95, 0
      %s98 = sadd.s32 %s97, 1
      %s99 = scalar_select %p96, %s97, %s98
      %p102 = pneg %p96
      %p103 = scmp.eq.s32.totalorder %s12, 2
      %p104 = por %p102, %p103
      %p105 = scmp.ne.s32.totalorder %s97, %s100
      %p106 = scmp.eq.s32.totalorder %s12, 0
      %p107 = por %p105, %p106
      %p108 = scmp.ne.s32.totalorder %s97, %s100
      %p109 = scmp.eq.s32.totalorder %s17, 2
      %p110 = por %p108, %p109
      %p111 = scmp.ne.s32.totalorder %s100, %s101
      %p112 = scmp.eq.s32.totalorder %s17, 0
      %p113 = por %p111, %p112
      %p114 = scmp.ne.s32.totalorder %s100, %s101
      %p115 = scmp.eq.s32.totalorder %s18, 2
      %p116 = por %p114, %p115
      %p118 = scmp.ne.s32.totalorder %s101, %s117
      %p119 = scmp.eq.s32.totalorder %s18, 0
      %p120 = por %p118, %p119
      %s121 = ssub.s32 %s19, %s38
      %s122 = ssub.s32 %s20, %s34
      %s123 = sor.u32 %s121, %s122
      %p124 = scmp.eq.s32.totalorder %s123, 0
      %s126 = sadd.s32 %s125, 1
      %s127 = scalar_select %p124, %s125, %s126
      %p130 = pneg %p124
      %p131 = scmp.eq.s32.totalorder %s12, 2
      %p132 = por %p130, %p131
      %p133 = scmp.ne.s32.totalorder %s125, %s128
      %p134 = scmp.eq.s32.totalorder %s12, 0
      %p135 = por %p133, %p134
      %p136 = scmp.ne.s32.totalorder %s125, %s128
      %p137 = scmp.eq.s32.totalorder %s17, 2
      %p138 = por %p136, %p137
      %p139 = scmp.ne.s32.totalorder %s128, %s129
      %p140 = scmp.eq.s32.totalorder %s17, 0
      %p141 = por %p139, %p140
      %p142 = scmp.ne.s32.totalorder %s128, %s129
      %p143 = scmp.eq.s32.totalorder %s18, 2
      %p144 = por %p142, %p143
      %p146 = scmp.ne.s32.totalorder %s129, %s145
      %p147 = scmp.eq.s32.totalorder %s18, 0
      %p148 = por %p146, %p147
      %s149 = ssub.s32 %s19, %s38
      %s150 = ssub.s32 %s20, %s34
      %s151 = sor.u32 %s149, %s150
      %p152 = scmp.eq.s32.totalorder %s151, 0
      %s154 = sadd.s32 %s153, 1
      %s155 = scalar_select %p152, %s153, %s154
      %p158 = pneg %p152
      %p159 = scmp.eq.s32.totalorder %s12, 2
      %p160 = por %p158, %p159
      %p161 = scmp.ne.s32.totalorder %s153, %s156
      %p162 = scmp.eq.s32.totalorder %s12, 0
      %p163 = por %p161, %p162
      %p164 = scmp.ne.s32.totalorder %s153, %s156
      %p165 = scmp.eq.s32.totalorder %s17, 2
      %p166 = por %p164, %p165
      %p167 = scmp.ne.s32.totalorder %s156, %s157
      %p168 = scmp.eq.s32.totalorder %s17, 0
      %p169 = por %p167, %p168
      %p170 = scmp.ne.s32.totalorder %s156, %s157
      %p171 = scmp.eq.s32.totalorder %s18, 2
      %p172 = por %p170, %p171
      %p174 = scmp.ne.s32.totalorder %s157, %s173
      %p175 = scmp.eq.s32.totalorder %s18, 0
      %p176 = por %p174, %p175
      %s177 = ssub.s32 %s19, %s38
      %s178 = ssub.s32 %s20, %s34
      %s179 = sor.u32 %s177, %s178
      %p180 = scmp.eq.s32.totalorder %s179, 0
      %s182 = sadd.s32 %s181, 1
      %s183 = scalar_select %p180, %s181, %s182
      %p186 = pneg %p180
      %p187 = scmp.eq.s32.totalorder %s12, 2
      %p188 = por %p186, %p187
      %p189 = scmp.ne.s32.totalorder %s181, %s184
      %p190 = scmp.eq.s32.totalorder %s12, 0
      %p191 = por %p189, %p190
      %p192 = scmp.ne.s32.totalorder %s181, %s184
      %p193 = scmp.eq.s32.totalorder %s17, 2
      %p194 = por %p192, %p193
      %p195 = scmp.ne.s32.totalorder %s184, %s185
      %p196 = scmp.eq.s32.totalorder %s17, 0
      %p197 = por %p195, %p196
      %p198 = scmp.ne.s32.totalorder %s184, %s185
      %p199 = scmp.eq.s32.totalorder %s18, 2
      %p200 = por %p198, %p199
      %p202 = scmp.ne.s32.totalorder %s185, %s201
      %p203 = scmp.eq.s32.totalorder %s18, 0
      %p204 = por %p202, %p203
      %p205 = scmp.le.s32.totalorder 1, %s12
      %p206 = scmp.lt.s32.totalorder %s12, 4
      %p207 = pnand %p205, %p206
      %p208 = pneg %p207
      // Predicated region
      $region9: #{forward.23} parent=5 // pred_check
        _
      $region10: #{forward.23} parent=5 // pred_check_branch
        %210 = sbr.rel (%p207) target = $region12
      $region11: #{forward.23} parent=5 // pred_region
        %s211 = ssub.s32 %s12, 1
        // Predicated region
        $region13: #{forward.23} parent=11 // pred_check
          %p212 = pneg %p113
        $region14: #{forward.23} parent=11 // pred_check_branch
          %214 = sbr.rel (%p212) target = $region16
        $region15: #{forward.23} parent=11 // pred_region
          %s215 = smul.u32 2, %s23
          %p216 = scmp.lt.s32.totalorder %s215, 1
          %s217 = scalar_select %p216, %s215, 1
          %s218 = scalar_lea.vmem %s2, %s217
          %s219 = smul.u32 2, %s23
        $region16: #{forward.23} parent=11 // pred_fallthru
          _
      $region12: #{forward.23} parent=5 // pred_fallthru
        _
      %p220 = scmp.lt.s32.totalorder %s12, 3
      // Predicated region
      $region17: #{forward.23} parent=5 // pred_check
        %p221 = pneg %p220
      $region18: #{forward.23} parent=5 // pred_check_branch
        %223 = sbr.rel (%p221) target = $region20
      $region19: #{forward.23} parent=5 // pred_region
        // Predicated region
        $region21: #{forward.23} parent=19 // pred_check
          %p224 = pneg %p53
        $region22: #{forward.23} parent=19 // pred_check_branch
          %226 = sbr.rel (%p224) target = $region24
        $region23: #{forward.23} parent=19 // pred_region
          %s227 = sand.u32 %s43, 1
          %s228 = sand.u32 %s43, 1
          %s229 = smul.addr %s228, 48
          %s230 = scalar_lea.vmem [#allocation3], %s229
          %s231 = smul.u32 4, %s19
          %s232 = smul.u32 3, %s21
          %s233 = smul.addr %s231, 9
          %s234 = sadd.s32 %s232, %s233
          %s235 = smul.addr %s234, 4
          %s236 = scalar_lea.vmem %s0, %s235
          // Predicated region
          $region25: #{forward.23} parent=23 // pred_check
            _
          $region26: #{forward.23} parent=23 // pred_check_branch
            %238 = sbr.rel (0) target = $region28
          $region27: #{forward.23} parent=23 // pred_region
            // Predicated region
            $region29: #{forward.23} parent=27 // pred_check
              _
            $region30: #{forward.23} parent=27 // pred_check_branch
              %240 = sbr.rel (0) target = $region32
            $region31: #{forward.23} parent=27 // pred_region
              %s241 = scalar_lea.vmem %s236, 8
              %s242 = scalar_lea.vmem %s230, 8 [#allocation3]
              loop: start=0, step=1, limit=1
              $region33: #{forward.23} parent=31 // loop_pre_header
                _
              $region34: #{forward.23} parent=31 // loop_header
                %s244 = sphi 0, %s248
                %p245 = scmp.ge.s32.totalorder %s244, 1
                %s249 = sphi %s236, %s236
                %s250 = sphi %s230, %s230
              $region35: #{forward.23} parent=31 // loop_header_branch
                %247 = sbr.rel (%p245) target = $region39
              $region36: #{forward.23} parent=31 // loop_body
                %v251 = vld [vmem:[%s249] sm:$0xff]
                %252 = vst [vmem:[%s250] sm:$0xff] %v251
                %v253 = vld [vmem:[%s249 + $0x24] sm:$0xff]
                %254 = vst [vmem:[%s250 + $0xc] sm:$0xff] %v253
                %v255 = vld [vmem:[%s249 + $0x48] sm:$0xff]
                %256 = vst [vmem:[%s250 + $0x18] sm:$0xff] %v255
                %v257 = vld [vmem:[%s249 + $0x6c] sm:$0xff]
                %258 = vst [vmem:[%s250 + $0x24] sm:$0xff] %v257
              $region37: #{forward.23} parent=31 // loop_footer
                %s248 = sadd.s32 1, %s244
              $region38: #{forward.23} parent=31 // loop_footer_branch
                %243 = sbr.rel target = $region34
              $region39: #{forward.23} parent=31 // loop_exit
                _
              %s260 = ssub.s32 16, 1
              loop: start=0, step=1, limit=1
              $region40: #{forward.23} parent=31 // loop_pre_header
                _
              $region41: #{forward.23} parent=31 // loop_header
                %s262 = sphi 0, %s266
                %p263 = scmp.ge.s32.totalorder %s262, 1
                %s267 = sphi %s241, %s241
                %s268 = sphi %s242, %s242
              $region42: #{forward.23} parent=31 // loop_header_branch
                %265 = sbr.rel (%p263) target = $region46
              $region43: #{forward.23} parent=31 // loop_body
                %v269 = vld [vmem:[%s267] sm:%s260]
                %270 = vst [vmem:[%s268] sm:%s260] %v269
                %v271 = vld [vmem:[%s267 + $0x24] sm:%s260]
                %272 = vst [vmem:[%s268 + $0xc] sm:%s260] %v271
                %v273 = vld [vmem:[%s267 + $0x48] sm:%s260]
                %274 = vst [vmem:[%s268 + $0x18] sm:%s260] %v273
                %v275 = vld [vmem:[%s267 + $0x6c] sm:%s260]
                %276 = vst [vmem:[%s268 + $0x24] sm:%s260] %v275
              $region44: #{forward.23} parent=31 // loop_footer
                %s266 = sadd.s32 1, %s262
              $region45: #{forward.23} parent=31 // loop_footer_branch
                %261 = sbr.rel target = $region41
              $region46: #{forward.23} parent=31 // loop_exit
                _
            $region32: #{forward.23} parent=27 // pred_fallthru
              _
          $region28: #{forward.23} parent=23 // pred_fallthru
            _
          %277 = vnop
        $region24: #{forward.23} parent=19 // pred_fallthru
          _
        // Predicated region
        $region47: #{forward.23} parent=19 // pred_check
          %p278 = pneg %p81
        $region48: #{forward.23} parent=19 // pred_check_branch
          %280 = sbr.rel (%p278) target = $region50
        $region49: #{forward.23} parent=19 // pred_region
          %s281 = smul.u32 48, %s21
          %s282 = smul.u32 2, %s20
          %p283 = scmp.lt.s32.totalorder %s281, 143
          %s284 = scalar_select %p283, %s281, 143
          %p285 = scmp.lt.s32.totalorder %s282, 1
          %s286 = scalar_select %p285, %s282, 1
          %s287 = smul.addr %s284, 2
          %s288 = sadd.s32 %s286, %s287
          %s289 = smul.addr %s288, 4
          %s290 = scalar_lea.vmem %s1, %s289
          %s291 = smul.u32 48, %s21
          %s292 = smul.u32 2, %s20
        $region50: #{forward.23} parent=19 // pred_fallthru
          _
      $region20: #{forward.23} parent=5 // pred_fallthru
        _
      %p293 = scmp.le.s32.totalorder 1, %s12
      %p294 = scmp.lt.s32.totalorder %s12, 4
      %p295 = pnand %p293, %p294
      %p296 = pneg %p295
      // Predicated region
      $region51: #{forward.23} parent=5 // pred_check
        _
      $region52: #{forward.23} parent=5 // pred_check_branch
        %298 = sbr.rel (%p295) target = $region54
      $region53: #{forward.23} parent=5 // pred_region
        %s299 = ssub.s32 %s12, 1
        %s300 = sand.u32 %s46, 1
        %s301 = sand.u32 %s46, 1
        %s302 = smul.addr %s301, 48
        %s303 = scalar_lea.vmem [#allocation3], %s302
        // Predicated region
        $region55: #{forward.23} parent=53 // pred_check
          %p304 = pneg %p59
        $region56: #{forward.23} parent=53 // pred_check_branch
          %306 = sbr.rel (%p304) target = $region58
        $region57: #{forward.23} parent=53 // pred_region
          _
        $region58: #{forward.23} parent=53 // pred_fallthru
          _
        %s307 = sand.u32 %s46, 1
        %s308 = sand.u32 %s46, 1
        %s309 = smul.addr %s308, 48
        %s310 = scalar_lea.vmem [#allocation3], %s309
        %p311 = pneg %p59
        %p312 = pneg %p56
        %s313 = smul.u32 48, %s24
        %s314 = smul.u32 2, %s23
        %p315 = scmp.lt.s32.totalorder %s313, 143
        %s316 = scalar_select %p315, %s313, 143
        %p317 = scmp.lt.s32.totalorder %s314, 1
        %s318 = scalar_select %p317, %s314, 1
        %s319 = smul.addr %s316, 2
        %s320 = sadd.s32 %s318, %s319
        %s321 = smul.addr %s320, 4
        %s322 = scalar_lea.vmem %s1, %s321
        %p323 = pneg %p87
        %p324 = pneg %p84
        %s325 = smul.u32 2, %s23
        %p326 = scmp.lt.s32.totalorder %s325, 1
        %s327 = scalar_select %p326, %s325, 1
        %s328 = scalar_lea.vmem %s2, %s327
        %p329 = pneg %p113
        %p330 = pneg %p110
        %p331 = pneg %p141
        %p332 = pneg %p138
        %s333 = smul.u32 4, %s22
        %s334 = smul.u32 2, %s23
        %p335 = scmp.lt.s32.totalorder %s333, 3
        %s336 = scalar_select %p335, %s333, 3
        %p337 = scmp.lt.s32.totalorder %s334, 1
        %s338 = scalar_select %p337, %s334, 1
        %s339 = smul.addr %s336, 2
        %s340 = sadd.s32 %s338, %s339
        %s341 = smul.addr %s340, 4
        %s342 = scalar_lea.vmem %s3, %s341
        %p343 = pneg %p169
        %p344 = pneg %p166
        %s345 = smul.u32 2, %s23
        %p346 = scmp.lt.s32.totalorder %s22, 0
        %s347 = scalar_select %p346, %s22, 0
        %p348 = scmp.lt.s32.totalorder %s345, 1
        %s349 = scalar_select %p348, %s345, 1
        %s350 = smul.addr %s347, 2
        %s351 = sadd.s32 %s349, %s350
        %s352 = smul.addr %s351, 8
        %s353 = scalar_lea.vmem %s4, %s352
        %p354 = pneg %p197
        %p355 = pneg %p194
        %s356 = smul.u32 2, %s23
        %p357 = scmp.lt.s32.totalorder %s22, 0
        %s358 = scalar_select %p357, %s22, 0
        %p359 = scmp.lt.s32.totalorder %s356, 1
        %s360 = scalar_select %p359, %s356, 1
        %s361 = smul.addr %s358, 2
        %s362 = sadd.s32 %s360, %s361
        %s363 = smul.addr %s362, 8
        %s364 = scalar_lea.vmem %s5, %s363
        %s365 = smul.u32 4, %s22
        %s366 = smul.u32 3, %s24
        %s367 = smul.u32 48, %s24
        %s368 = smul.u32 2, %s23
        %p369 = scmp.lt.s32.totalorder %s367, 143
        %s370 = scalar_select %p369, %s367, 143
        %p371 = scmp.lt.s32.totalorder %s368, 1
        %s372 = scalar_select %p371, %s368, 1
        %s373 = smul.addr %s370, 2
        %s374 = sadd.s32 %s372, %s373
        %s375 = smul.addr %s374, 4
        %s376 = scalar_lea.vmem %s1, %s375
        %s377 = smul.u32 48, %s24
        %s378 = smul.u32 2, %s23
        %s379 = smul.u32 2, %s23
        %p380 = scmp.lt.s32.totalorder %s379, 1
        %s381 = scalar_select %p380, %s379, 1
        %s382 = scalar_lea.vmem %s2, %s381
        %s383 = smul.u32 2, %s23
        %s384 = smul.u32 4, %s22
        %s385 = smul.u32 2, %s23
        %p386 = scmp.lt.s32.totalorder %s384, 3
        %s387 = scalar_select %p386, %s384, 3
        %p388 = scmp.lt.s32.totalorder %s385, 1
        %s389 = scalar_select %p388, %s385, 1
        %s390 = smul.addr %s387, 2
        %s391 = sadd.s32 %s389, %s390
        %s392 = smul.addr %s391, 4
        %s393 = scalar_lea.vmem %s3, %s392
        %s394 = smul.u32 4, %s22
        %s395 = smul.u32 2, %s23
        %s396 = smul.u32 2, %s23
        %p397 = scmp.lt.s32.totalorder %s22, 0
        %s398 = scalar_select %p397, %s22, 0
        %p399 = scmp.lt.s32.totalorder %s396, 1
        %s400 = scalar_select %p399, %s396, 1
        %s401 = smul.addr %s398, 2
        %s402 = sadd.s32 %s400, %s401
        %s403 = smul.addr %s402, 8
        %s404 = scalar_lea.vmem %s4, %s403
        %s405 = smul.u32 2, %s23
        %s406 = smul.u32 2, %s23
        %p407 = scmp.lt.s32.totalorder %s22, 0
        %s408 = scalar_select %p407, %s22, 0
        %p409 = scmp.lt.s32.totalorder %s406, 1
        %s410 = scalar_select %p409, %s406, 1
        %s411 = smul.addr %s408, 2
        %s412 = sadd.s32 %s410, %s411
        %s413 = smul.addr %s412, 8
        %s414 = scalar_lea.vmem %s5, %s413
        %s415 = smul.u32 2, %s23
        %s417 = smul.u32 %s22, 32
        %v418 = vlaneseq
        %v419 = vshrl.u32 %v418, 7
        %v420 = vadd.s32 %v419, 8
        %v421 = vadd.s32 %v419, 16
        %v422 = vadd.s32 %v419, 24
        %v423 = vstv %s417
        %v424 = vadd.s32 %v423, %v419
        %v425 = vadd.s32 %v423, %v420
        %v426 = vadd.s32 %v423, %v421
        %v427 = vadd.s32 %v423, %v422
        %p428 = scmp.eq.s32.totalorder %s24, 0
        // Predicated region
        $region59: #{forward.23} parent=53 // pred_check
          %p429 = pneg %p428
        $region60: #{forward.23} parent=53 // pred_check_branch
          %431 = sbr.rel (%p429) target = $region62
        $region61: #{forward.23} parent=53 // pred_region
          %432 = vst [vmem:[#allocation2] sm:$0xff] 0.0
          %433 = vst [vmem:[#allocation2 + $0x8] sm:$0xff] 0.0
          %434 = vst [vmem:[#allocation2 + $0x10] sm:$0xff] 0.0
          %435 = vst [vmem:[#allocation2 + $0x18] sm:$0xff] 0.0
          %436 = vst [vmem:[#allocation2 + $0x20] sm:$0xff] 0.0
          %437 = vst [vmem:[#allocation2 + $0x28] sm:$0xff] 0.0
          %438 = vst [vmem:[#allocation2 + $0x30] sm:$0xff] 0.0
          %439 = vst [vmem:[#allocation2 + $0x38] sm:$0xff] 0.0
        $region62: #{forward.23} parent=53 // pred_fallthru
          _
        %v440 = vld [vmem:[#allocation2] sm:$0xff]
        %v441 = vld [vmem:[#allocation2 + $0x8] sm:$0xff]
        %v442 = vld [vmem:[#allocation2 + $0x10] sm:$0xff]
        %v443 = vld [vmem:[#allocation2 + $0x18] sm:$0xff]
        %v444 = vld [vmem:[#allocation2 + $0x20] sm:$0xff]
        %v445 = vld [vmem:[#allocation2 + $0x28] sm:$0xff]
        %v446 = vld [vmem:[#allocation2 + $0x30] sm:$0xff]
        %v447 = vld [vmem:[#allocation2 + $0x38] sm:$0xff]
        %v448 = vld [vmem:[%s303] sm:$0xff]
        %v449 = vld [vmem:[%s303 + $0x8] sm:$0xf]
        %v450 = vld [vmem:[%s303 + $0xc] sm:$0xff]
        %v451 = vld [vmem:[%s303 + $0x14] sm:$0xf]
        %v452 = vld [vmem:[%s303 + $0x18] sm:$0xff]
        %v453 = vld [vmem:[%s303 + $0x20] sm:$0xf]
        %v454 = vld [vmem:[%s303 + $0x24] sm:$0xff]
        %v455 = vld [vmem:[%s303 + $0x2c] sm:$0xf]
        %v456 = vld [vmem:[%s376] sm:$0xff]
        %v457 = vld [vmem:[%s376 + $0x8] sm:$0xff]
        %v458 = vld [vmem:[%s376 + $0x10] sm:$0xff]
        %v459 = vld [vmem:[%s376 + $0x18] sm:$0xff]
        %v460 = vld [vmem:[%s376 + $0x20] sm:$0xff]
        %v461 = vld [vmem:[%s376 + $0x28] sm:$0xff]
        %v462 = vld [vmem:[%s376 + $0x30] sm:$0xff]
        %v463 = vld [vmem:[%s376 + $0x38] sm:$0xff]
        %v464 = vld [vmem:[%s376 + $0x40] sm:$0xff]
        %v465 = vld [vmem:[%s376 + $0x48] sm:$0xff]
        %v466 = vld [vmem:[%s376 + $0x50] sm:$0xff]
        %v467 = vld [vmem:[%s376 + $0x58] sm:$0xff]
        %v468 = vld [vmem:[%s376 + $0x60] sm:$0xff]
        %v469 = vld [vmem:[%s376 + $0x68] sm:$0xff]
        %v470 = vld [vmem:[%s376 + $0x70] sm:$0xff]
        %v471 = vld [vmem:[%s376 + $0x78] sm:$0xff]
        %v472 = vld [vmem:[%s376 + $0x80] sm:$0xff]
        %v473 = vld [vmem:[%s376 + $0x88] sm:$0xff]
        %v474 = vld [vmem:[%s376 + $0x90] sm:$0xff]
        %v475 = vld [vmem:[%s376 + $0x98] sm:$0xff]
        %v476 = vld [vmem:[%s376 + $0xa0] sm:$0xff]
        %v477 = vld [vmem:[%s376 + $0xa8] sm:$0xff]
        %v478 = vld [vmem:[%s376 + $0xb0] sm:$0xff]
        %v479 = vld [vmem:[%s376 + $0xb8] sm:$0xff]
        %v480 = vld [vmem:[%s376 + $0xc0] sm:$0xff]
        %v481 = vld [vmem:[%s376 + $0xc8] sm:$0xff]
        %v482 = vld [vmem:[%s376 + $0xd0] sm:$0xff]
        %v483 = vld [vmem:[%s376 + $0xd8] sm:$0xff]
        %v484 = vld [vmem:[%s376 + $0xe0] sm:$0xff]
        %v485 = vld [vmem:[%s376 + $0xe8] sm:$0xff]
        %v486 = vld [vmem:[%s376 + $0xf0] sm:$0xff]
        %v487 = vld [vmem:[%s376 + $0xf8] sm:$0xff]
        %v488 = vld [vmem:[%s376 + $0x100] sm:$0xff]
        %v489 = vld [vmem:[%s376 + $0x108] sm:$0xff]
        %v490 = vld [vmem:[%s376 + $0x110] sm:$0xff]
        %v491 = vld [vmem:[%s376 + $0x118] sm:$0xff]
        %v492 = vld [vmem:[%s376 + $0x120] sm:$0xff]
        %v493 = vld [vmem:[%s376 + $0x128] sm:$0xff]
        %v494 = vld [vmem:[%s376 + $0x130] sm:$0xff]
        %v495 = vld [vmem:[%s376 + $0x138] sm:$0xff]
        %v496 = vld [vmem:[%s376 + $0x140] sm:$0xff]
        %v497 = vld [vmem:[%s376 + $0x148] sm:$0xff]
        %v498 = vld [vmem:[%s376 + $0x150] sm:$0xff]
        %v499 = vld [vmem:[%s376 + $0x158] sm:$0xff]
        %v500 = vld [vmem:[%s376 + $0x160] sm:$0xff]
        %v501 = vld [vmem:[%s376 + $0x168] sm:$0xff]
        %v502 = vld [vmem:[%s376 + $0x170] sm:$0xff]
        %v503 = vld [vmem:[%s376 + $0x178] sm:$0xff]
        %v512 = vunpack.c.l.b16 %v448
        %v513 = vunpack.c.h.b16 %v448
        %v514 = vunpack.c.l.b16 %v449
        %v515 = vunpack.c.l.b16 %v450
        %v516 = vunpack.c.h.b16 %v450
        %v517 = vunpack.c.l.b16 %v451
        %v518 = vunpack.c.l.b16 %v452
        %v519 = vunpack.c.h.b16 %v452
        %v520 = vunpack.c.l.b16 %v453
        %v521 = vunpack.c.l.b16 %v454
        %v522 = vunpack.c.h.b16 %v454
        %v523 = vunpack.c.l.b16 %v455
        %v524 = vpack.c.b16 %v515, %v512
        %v525 = vpack.c.b16 %v516, %v513
        %v526 = vpack.c.b16 %v517, %v514
        %v527 = vpack.c.b16 %v521, %v518
        %v528 = vpack.c.b16 %v522, %v519
        %v529 = vpack.c.b16 %v523, %v520
        %v584 = vunpack.c.l.b16 %v456
        %v585 = vunpack.c.h.b16 %v456
        %v586 = vunpack.c.l.b16 %v457
        %v587 = vunpack.c.h.b16 %v457
        %v588 = vunpack.c.l.b16 %v458
        %v589 = vunpack.c.h.b16 %v458
        %v590 = vunpack.c.l.b16 %v459
        %v591 = vunpack.c.h.b16 %v459
        %v592 = vunpack.c.l.b16 %v460
        %v593 = vunpack.c.h.b16 %v460
        %v594 = vunpack.c.l.b16 %v461
        %v595 = vunpack.c.h.b16 %v461
        %v596 = vunpack.c.l.b16 %v462
        %v597 = vunpack.c.h.b16 %v462
        %v598 = vunpack.c.l.b16 %v463
        %v599 = vunpack.c.h.b16 %v463
        %v600 = vunpack.c.l.b16 %v464
        %v601 = vunpack.c.h.b16 %v464
        %v602 = vunpack.c.l.b16 %v465
        %v603 = vunpack.c.h.b16 %v465
        %v604 = vunpack.c.l.b16 %v466
        %v605 = vunpack.c.h.b16 %v466
        %v606 = vunpack.c.l.b16 %v467
        %v607 = vunpack.c.h.b16 %v467
        %v608 = vunpack.c.l.b16 %v468
        %v609 = vunpack.c.h.b16 %v468
        %v610 = vunpack.c.l.b16 %v469
        %v611 = vunpack.c.h.b16 %v469
        %v612 = vunpack.c.l.b16 %v470
        %v613 = vunpack.c.h.b16 %v470
        %v614 = vunpack.c.l.b16 %v471
        %v615 = vunpack.c.h.b16 %v471
        %v616 = vunpack.c.l.b16 %v472
        %v617 = vunpack.c.h.b16 %v472
        %v618 = vunpack.c.l.b16 %v473
        %v619 = vunpack.c.h.b16 %v473
        %v620 = vunpack.c.l.b16 %v474
        %v621 = vunpack.c.h.b16 %v474
        %v622 = vunpack.c.l.b16 %v475
        %v623 = vunpack.c.h.b16 %v475
        %v624 = vunpack.c.l.b16 %v476
        %v625 = vunpack.c.h.b16 %v476
        %v626 = vunpack.c.l.b16 %v477
        %v627 = vunpack.c.h.b16 %v477
        %v628 = vunpack.c.l.b16 %v478
        %v629 = vunpack.c.h.b16 %v478
        %v630 = vunpack.c.l.b16 %v479
        %v631 = vunpack.c.h.b16 %v479
        %v632 = vunpack.c.l.b16 %v480
        %v633 = vunpack.c.h.b16 %v480
        %v634 = vunpack.c.l.b16 %v481
        %v635 = vunpack.c.h.b16 %v481
        %v636 = vunpack.c.l.b16 %v482
        %v637 = vunpack.c.h.b16 %v482
        %v638 = vunpack.c.l.b16 %v483
        %v639 = vunpack.c.h.b16 %v483
        %v640 = vunpack.c.l.b16 %v484
        %v641 = vunpack.c.h.b16 %v484
        %v642 = vunpack.c.l.b16 %v485
        %v643 = vunpack.c.h.b16 %v485
        %v644 = vunpack.c.l.b16 %v486
        %v645 = vunpack.c.h.b16 %v486
        %v646 = vunpack.c.l.b16 %v487
        %v647 = vunpack.c.h.b16 %v487
        %v648 = vunpack.c.l.b16 %v488
        %v649 = vunpack.c.h.b16 %v488
        %v650 = vunpack.c.l.b16 %v489
        %v651 = vunpack.c.h.b16 %v489
        %v652 = vunpack.c.l.b16 %v490
        %v653 = vunpack.c.h.b16 %v490
        %v654 = vunpack.c.l.b16 %v491
        %v655 = vunpack.c.h.b16 %v491
        %v656 = vunpack.c.l.b16 %v492
        %v657 = vunpack.c.h.b16 %v492
        %v658 = vunpack.c.l.b16 %v493
        %v659 = vunpack.c.h.b16 %v493
        %v660 = vunpack.c.l.b16 %v494
        %v661 = vunpack.c.h.b16 %v494
        %v662 = vunpack.c.l.b16 %v495
        %v663 = vunpack.c.h.b16 %v495
        %v664 = vunpack.c.l.b16 %v496
        %v665 = vunpack.c.h.b16 %v496
        %v666 = vunpack.c.l.b16 %v497
        %v667 = vunpack.c.h.b16 %v497
        %v668 = vunpack.c.l.b16 %v498
        %v669 = vunpack.c.h.b16 %v498
        %v670 = vunpack.c.l.b16 %v499
        %v671 = vunpack.c.h.b16 %v499
        %v672 = vunpack.c.l.b16 %v500
        %v673 = vunpack.c.h.b16 %v500
        %v674 = vunpack.c.l.b16 %v501
        %v675 = vunpack.c.h.b16 %v501
        %v676 = vunpack.c.l.b16 %v502
        %v677 = vunpack.c.h.b16 %v502
        %v678 = vunpack.c.l.b16 %v503
        %v679 = vunpack.c.h.b16 %v503
        %v680 = vpack.c.b16 %v586, %v584
        %v681 = vpack.c.b16 %v587, %v585
        %v682 = vpack.c.b16 %v590, %v588
        %v683 = vpack.c.b16 %v591, %v589
        %v684 = vpack.c.b16 %v594, %v592
        %v685 = vpack.c.b16 %v595, %v593
        %v686 = vpack.c.b16 %v598, %v596
        %v687 = vpack.c.b16 %v599, %v597
        %v688 = vpack.c.b16 %v602, %v600
        %v689 = vpack.c.b16 %v603, %v601
        %v690 = vpack.c.b16 %v606, %v604
        %v691 = vpack.c.b16 %v607, %v605
        %v692 = vpack.c.b16 %v610, %v608
        %v693 = vpack.c.b16 %v611, %v609
        %v694 = vpack.c.b16 %v614, %v612
        %v695 = vpack.c.b16 %v615, %v613
        %v696 = vpack.c.b16 %v618, %v616
        %v697 = vpack.c.b16 %v619, %v617
        %v698 = vpack.c.b16 %v622, %v620
        %v699 = vpack.c.b16 %v623, %v621
        %v700 = vpack.c.b16 %v626, %v624
        %v701 = vpack.c.b16 %v627, %v625
        %v702 = vpack.c.b16 %v630, %v628
        %v703 = vpack.c.b16 %v631, %v629
        %v704 = vpack.c.b16 %v634, %v632
        %v705 = vpack.c.b16 %v635, %v633
        %v706 = vpack.c.b16 %v638, %v636
        %v707 = vpack.c.b16 %v639, %v637
        %v708 = vpack.c.b16 %v642, %v640
        %v709 = vpack.c.b16 %v643, %v641
        %v710 = vpack.c.b16 %v646, %v644
        %v711 = vpack.c.b16 %v647, %v645
        %v712 = vpack.c.b16 %v650, %v648
        %v713 = vpack.c.b16 %v651, %v649
        %v714 = vpack.c.b16 %v654, %v652
        %v715 = vpack.c.b16 %v655, %v653
        %v716 = vpack.c.b16 %v658, %v656
        %v717 = vpack.c.b16 %v659, %v657
        %v718 = vpack.c.b16 %v662, %v660
        %v719 = vpack.c.b16 %v663, %v661
        %v720 = vpack.c.b16 %v666, %v664
        %v721 = vpack.c.b16 %v667, %v665
        %v722 = vpack.c.b16 %v670, %v668
        %v723 = vpack.c.b16 %v671, %v669
        %v724 = vpack.c.b16 %v674, %v672
        %v725 = vpack.c.b16 %v675, %v673
        %v726 = vpack.c.b16 %v678, %v676
        %v727 = vpack.c.b16 %v679, %v677
        %776 = vmatprep.subr.bf16.mxu0 %v695
        %777 = vmatpush1.bf16.msra.mxu0 %v694
        %778 = vmatprep.subr.bf16.mxu0 %v693
        %779 = vmatpush1.bf16.msra.mxu0 %v692
        %780 = vmatprep.subr.bf16.mxu0 %v691
        %781 = vmatpush1.bf16.msra.mxu0 %v690
        %782 = vmatprep.subr.bf16.mxu0 %v689
        %783 = vmatpush1.bf16.msra.mxu0 %v688
        %784 = vmatprep.subr.bf16.mxu0 %v687
        %785 = vmatpush1.bf16.msra.mxu0 %v686
        %786 = vmatprep.subr.bf16.mxu0 %v685
        %787 = vmatpush1.bf16.msra.mxu0 %v684
        %788 = vmatprep.subr.bf16.mxu0 %v683
        %789 = vmatpush1.bf16.msra.mxu0 %v682
        %790 = vmatprep.subr.bf16.mxu0 %v681
        %791 = vmatpush1.bf16.msra.mxu0 %v680
        %792 = vmatprep.subr.bf16.mxu0 %v711
        %793 = vmatpush2.bf16.msra.mxu0 %v710
        %794 = vmatprep.subr.bf16.mxu0 %v709
        %795 = vmatpush2.bf16.msra.mxu0 %v708
        %796 = vmatprep.subr.bf16.mxu0 %v707
        %797 = vmatpush2.bf16.msra.mxu0 %v706
        %798 = vmatprep.subr.bf16.mxu0 %v705
        %799 = vmatpush2.bf16.msra.mxu0 %v704
        %800 = vmatprep.subr.bf16.mxu0 %v703
        %801 = vmatpush2.bf16.msra.mxu0 %v702
        %802 = vmatprep.subr.bf16.mxu0 %v701
        %803 = vmatpush2.bf16.msra.mxu0 %v700
        %804 = vmatprep.subr.bf16.mxu0 %v699
        %805 = vmatpush2.bf16.msra.mxu0 %v698
        %806 = vmatprep.subr.bf16.mxu0 %v697
        %807 = vmatpush2.bf16.msra.mxu0 %v696
        %808 = vmatprep.mubr.bf16.mxu0 %v525
        %809 = vmatmul.mubr.bf16.gmra.mxu0 %v524
        %v810 = vpop.f32.mrf.mxu0
        %v811 = vadd.f32 0.0, %v810
        %v812 = vpop.f32.mrf.mxu0
        %v813 = vadd.f32 0.0, %v812
        %v814 = vpop.f32.mrf.mxu0
        %v815 = vadd.f32 0.0, %v814
        %v816 = vpop.f32.mrf.mxu0
        %v817 = vadd.f32 0.0, %v816
        %818 = vmatprep.mubr.bf16.mxu0 %v528
        %819 = vmatmul.mubr.bf16.gmra.mxu0 %v527
        %v820 = vpop.f32.mrf.mxu0
        %v821 = vadd.f32 0.0, %v820
        %v822 = vpop.f32.mrf.mxu0
        %v823 = vadd.f32 0.0, %v822
        %v824 = vpop.f32.mrf.mxu0
        %v825 = vadd.f32 0.0, %v824
        %v826 = vpop.f32.mrf.mxu0
        %v827 = vadd.f32 0.0, %v826
        %828 = vdwg.mxu0
        %829 = vmatprep.subr.bf16.mxu0 %v727
        %830 = vmatpush1.bf16.msra.mxu0 %v726
        %831 = vmatprep.subr.bf16.mxu0 %v725
        %832 = vmatpush1.bf16.msra.mxu0 %v724
        %833 = vmatprep.subr.bf16.mxu0 %v723
        %834 = vmatpush1.bf16.msra.mxu0 %v722
        %835 = vmatprep.subr.bf16.mxu0 %v721
        %836 = vmatpush1.bf16.msra.mxu0 %v720
        %837 = vmatprep.subr.bf16.mxu0 %v719
        %838 = vmatpush1.bf16.msra.mxu0 %v718
        %839 = vmatprep.subr.bf16.mxu0 %v717
        %840 = vmatpush1.bf16.msra.mxu0 %v716
        %841 = vmatprep.subr.bf16.mxu0 %v715
        %842 = vmatpush1.bf16.msra.mxu0 %v714
        %843 = vmatprep.subr.bf16.mxu0 %v713
        %844 = vmatpush1.bf16.msra.mxu0 %v712
        %845 = vmatprep.subr.bf16.mxu0 0
        %846 = vmatpush2.bf16.msra.mxu0 0
        %847 = vmatprep.subr.bf16.mxu0 0
        %848 = vmatpush2.bf16.msra.mxu0 0
        %849 = vmatprep.subr.bf16.mxu0 0
        %850 = vmatpush2.bf16.msra.mxu0 0
        %851 = vmatprep.subr.bf16.mxu0 0
        %852 = vmatpush2.bf16.msra.mxu0 0
        %853 = vmatprep.subr.bf16.mxu0 0
        %854 = vmatpush2.bf16.msra.mxu0 0
        %855 = vmatprep.subr.bf16.mxu0 0
        %856 = vmatpush2.bf16.msra.mxu0 0
        %857 = vmatprep.subr.bf16.mxu0 0
        %858 = vmatpush2.bf16.msra.mxu0 0
        %859 = vmatprep.subr.bf16.mxu0 0
        %860 = vmatpush2.bf16.msra.mxu0 0
        %861 = vmatprep.mubr.bf16.mxu0 0
        %862 = vmatmul.mubr.bf16.gmra.mxu0 %v526
        %v863 = vpop.f32.mrf.mxu0
        %v864 = vadd.f32 %v811, %v863
        %v865 = vpop.f32.mrf.mxu0
        %v866 = vadd.f32 %v813, %v865
        %v867 = vpop.f32.mrf.mxu0
        %v868 = vadd.f32 %v815, %v867
        %v869 = vpop.f32.mrf.mxu0
        %v870 = vadd.f32 %v817, %v869
        %871 = vmatprep.mubr.bf16.mxu0 0
        %872 = vmatmul.mubr.bf16.gmra.mxu0 %v529
        %v873 = vpop.f32.mrf.mxu0
        %v874 = vadd.f32 %v821, %v873
        %v875 = vpop.f32.mrf.mxu0
        %v876 = vadd.f32 %v823, %v875
        %v877 = vpop.f32.mrf.mxu0
        %v878 = vadd.f32 %v825, %v877
        %v879 = vpop.f32.mrf.mxu0
        %v880 = vadd.f32 %v827, %v879
        %881 = vdwg.mxu0
        %v882 = vadd.f32 %v440, %v864
        %v883 = vadd.f32 %v441, %v866
        %v884 = vadd.f32 %v442, %v868
        %v885 = vadd.f32 %v443, %v870
        %v886 = vadd.f32 %v444, %v874
        %v887 = vadd.f32 %v445, %v876
        %v888 = vadd.f32 %v446, %v878
        %v889 = vadd.f32 %v447, %v880
        %890 = vst [vmem:[#allocation2] sm:$0xff] %v882
        %891 = vst [vmem:[#allocation2 + $0x8] sm:$0xff] %v883
        %892 = vst [vmem:[#allocation2 + $0x10] sm:$0xff] %v884
        %893 = vst [vmem:[#allocation2 + $0x18] sm:$0xff] %v885
        %894 = vst [vmem:[#allocation2 + $0x20] sm:$0xff] %v886
        %895 = vst [vmem:[#allocation2 + $0x28] sm:$0xff] %v887
        %896 = vst [vmem:[#allocation2 + $0x30] sm:$0xff] %v888
        %897 = vst [vmem:[#allocation2 + $0x38] sm:$0xff] %v889
        %p898 = scmp.eq.s32.totalorder %s24, 2
        // Predicated region
        $region63: #{forward.23} parent=53 // pred_check
          %p899 = pneg %p898
        $region64: #{forward.23} parent=53 // pred_check_branch
          %901 = sbr.rel (%p899) target = $region66
        $region65: #{forward.23} parent=53 // pred_region
          %v902 = vld [vmem:[#allocation2] sm:$0xff]
          %v903 = vld [vmem:[#allocation2 + $0x8] sm:$0xff]
          %v904 = vld [vmem:[#allocation2 + $0x10] sm:$0xff]
          %v905 = vld [vmem:[#allocation2 + $0x18] sm:$0xff]
          %v906 = vld [vmem:[#allocation2 + $0x20] sm:$0xff]
          %v907 = vld [vmem:[#allocation2 + $0x28] sm:$0xff]
          %v908 = vld [vmem:[#allocation2 + $0x30] sm:$0xff]
          %v909 = vld [vmem:[#allocation2 + $0x38] sm:$0xff]
          %v910 = vld [vmem:[%s382] sm:$0x3]
          %v912 = vlaneseq
          %v913 = vshrl.u32 %v912, 7
          %v914 = vsub.s32 0, %v913
          %v915 = vrot.slane %v910, %v914
          %v916 = vlaneseq
          %v917 = vshrl.u32 %v916, 7
          %v918 = vsub.s32 1, %v917
          %v919 = vrot.slane %v910, %v918
          %v922 = vadd.f32 %v902, %v915
          %v923 = vadd.f32 %v903, %v919
          %v924 = vadd.f32 %v904, %v915
          %v925 = vadd.f32 %v905, %v919
          %v926 = vadd.f32 %v906, %v915
          %v927 = vadd.f32 %v907, %v919
          %v928 = vadd.f32 %v908, %v915
          %v929 = vadd.f32 %v909, %v919
          %v930 = vpack.c.bf16 %v924, %v922
          %v931 = vpack.c.bf16 %v925, %v923
          %v932 = vpack.c.bf16 %v928, %v926
          %v933 = vpack.c.bf16 %v929, %v927
          %v938 = vunpack.c.l.b16 %v930
          %v939 = vunpack.c.l.b16 %v931
          %v940 = vunpack.c.h.b16 %v930
          %v941 = vunpack.c.h.b16 %v931
          %v942 = vunpack.c.l.b16 %v932
          %v943 = vunpack.c.l.b16 %v933
          %v944 = vunpack.c.h.b16 %v932
          %v945 = vunpack.c.h.b16 %v933
          %v946 = vpack.c.b16 %v939, %v938
          %v947 = vpack.c.b16 %v941, %v940
          %v948 = vpack.c.b16 %v943, %v942
          %v949 = vpack.c.b16 %v945, %v944
          %954 = vst [vmem:[%s393] sm:$0xff] %v946
          %955 = vst [vmem:[%s393 + $0x8] sm:$0xff] %v947
          %956 = vst [vmem:[%s393 + $0x10] sm:$0xff] %v948
          %957 = vst [vmem:[%s393 + $0x18] sm:$0xff] %v949
          %vm958 = vcmp.lt.s32.totalorder %v424, 32
          %vm959 = vcmp.lt.s32.totalorder %v425, 32
          %vm960 = vcmp.lt.s32.totalorder %v426, 32
          %vm961 = vcmp.lt.s32.totalorder %v427, 32
          %v962 = vsel %vm958, 1, 0
          %v963 = vsel %vm959, 1, 0
          %v964 = vsel %vm960, 1, 0
          %v965 = vsel %vm961, 1, 0
          %vm966 = vcmp.eq.s32.totalorder %v962, 1
          %vm967 = vcmp.eq.s32.totalorder %v963, 1
          %vm968 = vcmp.eq.s32.totalorder %v964, 1
          %vm969 = vcmp.eq.s32.totalorder %v965, 1
          %v970 = vsel %vm966, %v922, 0.0
          %v971 = vsel %vm966, %v923, 0.0
          %v972 = vsel %vm967, %v924, 0.0
          %v973 = vsel %vm967, %v925, 0.0
          %v974 = vsel %vm968, %v926, 0.0
          %v975 = vsel %vm968, %v927, 0.0
          %v976 = vsel %vm969, %v928, 0.0
          %v977 = vsel %vm969, %v929, 0.0
          %v978 = vadd.f32 %v970, %v972
          %v979 = vadd.f32 %v978, %v974
          %v980 = vadd.f32 %v979, %v976
          %v981 = vrot.slane %v980, 4
          %v982 = vadd.f32 %v980, %v981
          %v983 = vrot.slane %v982, 2
          %v984 = vadd.f32 %v982, %v983
          %v985 = vrot.slane %v984, 1
          %v986 = vadd.f32 %v984, %v985
          %v987 = vadd.f32 %v971, %v973
          %v988 = vadd.f32 %v987, %v975
          %v989 = vadd.f32 %v988, %v977
          %v990 = vrot.slane %v989, 4
          %v991 = vadd.f32 %v989, %v990
          %v992 = vrot.slane %v991, 2
          %v993 = vadd.f32 %v991, %v992
          %v994 = vrot.slane %v993, 1
          %v995 = vadd.f32 %v993, %v994
          %v996 = vmul.f32 %v970, %v970
          %v997 = vmul.f32 %v971, %v971
          %v998 = vmul.f32 %v972, %v972
          %v999 = vmul.f32 %v973, %v973
          %v1000 = vmul.f32 %v974, %v974
          %v1001 = vmul.f32 %v975, %v975
          %v1002 = vmul.f32 %v976, %v976
          %v1003 = vmul.f32 %v977, %v977
          %v1004 = vadd.f32 %v996, %v998
          %v1005 = vadd.f32 %v1004, %v1000
          %v1006 = vadd.f32 %v1005, %v1002
          %v1007 = vrot.slane %v1006, 4
          %v1008 = vadd.f32 %v1006, %v1007
          %v1009 = vrot.slane %v1008, 2
          %v1010 = vadd.f32 %v1008, %v1009
          %v1011 = vrot.slane %v1010, 1
          %v1012 = vadd.f32 %v1010, %v1011
          %v1013 = vadd.f32 %v997, %v999
          %v1014 = vadd.f32 %v1013, %v1001
          %v1015 = vadd.f32 %v1014, %v1003
          %v1016 = vrot.slane %v1015, 4
          %v1017 = vadd.f32 %v1015, %v1016
          %v1018 = vrot.slane %v1017, 2
          %v1019 = vadd.f32 %v1017, %v1018
          %v1020 = vrot.slane %v1019, 1
          %v1021 = vadd.f32 %v1019, %v1020
          %1022 = vst [vmem:[%s404] sm:$0xff] %v986
          %1023 = vst [vmem:[%s404 + $0x8] sm:$0xff] %v995
          %1024 = vst [vmem:[%s414] sm:$0xff] %v1012
          %1025 = vst [vmem:[%s414 + $0x8] sm:$0xff] %v1021
        $region66: #{forward.23} parent=53 // pred_fallthru
          _
        %s1026 = smul.u32 4, %s22
        %s1027 = smul.u32 2, %s23
        %p1028 = scmp.lt.s32.totalorder %s1026, 3
        %s1029 = scalar_select %p1028, %s1026, 3
        %p1030 = scmp.lt.s32.totalorder %s1027, 1
        %s1031 = scalar_select %p1030, %s1027, 1
        %s1032 = smul.addr %s1029, 2
        %s1033 = sadd.s32 %s1031, %s1032
        %s1034 = smul.addr %s1033, 4
        %s1035 = scalar_lea.vmem %s3, %s1034
        %s1036 = smul.u32 2, %s23
        %p1037 = scmp.lt.s32.totalorder %s22, 0
        %s1038 = scalar_select %p1037, %s22, 0
        %p1039 = scmp.lt.s32.totalorder %s1036, 1
        %s1040 = scalar_select %p1039, %s1036, 1
        %s1041 = smul.addr %s1038, 2
        %s1042 = sadd.s32 %s1040, %s1041
        %s1043 = smul.addr %s1042, 8
        %s1044 = scalar_lea.vmem %s4, %s1043
        %s1045 = smul.u32 2, %s23
        %p1046 = scmp.lt.s32.totalorder %s22, 0
        %s1047 = scalar_select %p1046, %s22, 0
        %p1048 = scmp.lt.s32.totalorder %s1045, 1
        %s1049 = scalar_select %p1048, %s1045, 1
        %s1050 = smul.addr %s1047, 2
        %s1051 = sadd.s32 %s1049, %s1050
        %s1052 = smul.addr %s1051, 8
        %s1053 = scalar_lea.vmem %s5, %s1052
        // Predicated region
        $region67: #{forward.23} parent=53 // pred_check
          %p1054 = pneg %p138
        $region68: #{forward.23} parent=53 // pred_check_branch
          %1056 = sbr.rel (%p1054) target = $region70
        $region69: #{forward.23} parent=53 // pred_region
          %s1057 = smul.u32 4, %s22
          %s1058 = smul.u32 2, %s23
        $region70: #{forward.23} parent=53 // pred_fallthru
          _
        // Predicated region
        $region71: #{forward.23} parent=53 // pred_check
          %p1059 = pneg %p166
        $region72: #{forward.23} parent=53 // pred_check_branch
          %1061 = sbr.rel (%p1059) target = $region74
        $region73: #{forward.23} parent=53 // pred_region
          %s1062 = smul.u32 2, %s23
        $region74: #{forward.23} parent=53 // pred_fallthru
          _
        // Predicated region
        $region75: #{forward.23} parent=53 // pred_check
          %p1063 = pneg %p194
        $region76: #{forward.23} parent=53 // pred_check_branch
          %1065 = sbr.rel (%p1063) target = $region78
        $region77: #{forward.23} parent=53 // pred_region
          %s1066 = smul.u32 2, %s23
        $region78: #{forward.23} parent=53 // pred_fallthru
          _
        // Predicated region
        $region79: #{forward.23} parent=53 // pred_check
          %p1067 = pneg %p138
        $region80: #{forward.23} parent=53 // pred_check_branch
          %1069 = sbr.rel (%p1067) target = $region82
        $region81: #{forward.23} parent=53 // pred_region
          %s1070 = smul.u32 4, %s22
          %s1071 = smul.u32 2, %s23
          %p1072 = scmp.lt.s32.totalorder %s1070, 3
          %s1073 = scalar_select %p1072, %s1070, 3
          %p1074 = scmp.lt.s32.totalorder %s1071, 1
          %s1075 = scalar_select %p1074, %s1071, 1
          %s1076 = smul.addr %s1073, 2
          %s1077 = sadd.s32 %s1075, %s1076
          %s1078 = smul.addr %s1077, 4
          %s1079 = scalar_lea.vmem %s3, %s1078
        $region82: #{forward.23} parent=53 // pred_fallthru
          _
        // Predicated region
        $region83: #{forward.23} parent=53 // pred_check
          %p1080 = pneg %p166
        $region84: #{forward.23} parent=53 // pred_check_branch
          %1082 = sbr.rel (%p1080) target = $region86
        $region85: #{forward.23} parent=53 // pred_region
          %s1083 = smul.u32 2, %s23
          %p1084 = scmp.lt.s32.totalorder %s22, 0
          %s1085 = scalar_select %p1084, %s22, 0
          %p1086 = scmp.lt.s32.totalorder %s1083, 1
          %s1087 = scalar_select %p1086, %s1083, 1
          %s1088 = smul.addr %s1085, 2
          %s1089 = sadd.s32 %s1087, %s1088
          %s1090 = smul.addr %s1089, 8
          %s1091 = scalar_lea.vmem %s4, %s1090
        $region86: #{forward.23} parent=53 // pred_fallthru
          _
        // Predicated region
        $region87: #{forward.23} parent=53 // pred_check
          %p1092 = pneg %p194
        $region88: #{forward.23} parent=53 // pred_check_branch
          %1094 = sbr.rel (%p1092) target = $region90
        $region89: #{forward.23} parent=53 // pred_region
          %s1095 = smul.u32 2, %s23
          %p1096 = scmp.lt.s32.totalorder %s22, 0
          %s1097 = scalar_select %p1096, %s22, 0
          %p1098 = scmp.lt.s32.totalorder %s1095, 1
          %s1099 = scalar_select %p1098, %s1095, 1
          %s1100 = smul.addr %s1097, 2
          %s1101 = sadd.s32 %s1099, %s1100
          %s1102 = smul.addr %s1101, 8
          %s1103 = scalar_lea.vmem %s5, %s1102
        $region90: #{forward.23} parent=53 // pred_fallthru
          _
      $region54: #{forward.23} parent=5 // pred_fallthru
        _
      %p1104 = scmp.le.s32.totalorder 2, %s12
      // Predicated region
      $region91: #{forward.23} parent=5 // pred_check
        %p1105 = pneg %p1104
      $region92: #{forward.23} parent=5 // pred_check_branch
        %1107 = sbr.rel (%p1105) target = $region94
      $region93: #{forward.23} parent=5 // pred_region
        %s1108 = ssub.s32 %s12, 2
      $region94: #{forward.23} parent=5 // pred_fallthru
        _
    $region6: #{forward.23} parent=1 // loop_footer
      %s16 = sadd.s32 1, %s12
    $region7: #{forward.23} parent=1 // loop_footer_branch
      %11 = sbr.rel target = $region3
    $region8: #{forward.23} parent=1 // loop_exit
      _

// kernel: forward.26
$region0: #{forward.26}
  #allocation0 [shape = 'u32[]', space=smem, size = 0x4, offset = 0x4, fixed_abs, tag = 'smem constant byte address 0x4 - core index']
  #allocation1 [shape = 'u32[144,128]{1,0:T(1,128)}', space=vmem, size = 0x12000, scoped, tag = 'internal scratch']
  %s0 = inlined_call_operand.vmem [shape: bf16[16,256], index: 0, kind: input, shape index: {}]
  %s1 = inlined_call_operand.vmem [shape: f32[1,256], index: 1, kind: input, shape index: {}]
  %s2 = inlined_call_operand.vmem [shape: f32[1,256], index: 2, kind: input, shape index: {}]
  %s3 = inlined_call_operand.vmem [shape: bf16[16,256], index: 3, kind: output, shape index: {}]
  %s4 = sld [smem:[#allocation0]]
  $region22: #{forward.26} parent=0
    _
  %s6 = ssub.s32 1, %s4
  %s7 = scalar_select 0, %s6, %s4
  // Predicated region
  $region2: #{forward.26} parent=0 // pred_check
    _
  $region3: #{forward.26} parent=0 // pred_check_branch
    %9 = sbr.rel (0) target = $region5
  $region4: #{forward.26} parent=0 // pred_region
    _
  $region5: #{forward.26} parent=0 // pred_fallthru
    _
  // Predicated region
  $region6: #{forward.26} parent=0 // pred_check
    _
  $region7: #{forward.26} parent=0 // pred_check_branch
    %11 = sbr.rel (0) target = $region9
  $region8: #{forward.26} parent=0 // pred_region
    _
  $region9: #{forward.26} parent=0 // pred_fallthru
    _
  // Predicated region
  $region10: #{forward.26} parent=0 // pred_check
    _
  $region11: #{forward.26} parent=0 // pred_check_branch
    %13 = sbr.rel (0) target = $region13
  $region12: #{forward.26} parent=0 // pred_region
    _
  $region13: #{forward.26} parent=0 // pred_fallthru
    _
  %v14 = vld [vmem:[%s0] sm:$0xff]
  %v15 = vld [vmem:[%s0 + $0x8] sm:$0xff]
  %v16 = vunpack.c.l.bf16 %v14
  %v17 = vunpack.c.h.bf16 %v14
  %v18 = vunpack.c.l.bf16 %v15
  %v19 = vunpack.c.h.bf16 %v15
  %v20 = vld [vmem:[%s1] sm:$0x3]
  %v22 = vlaneseq
  %v23 = vshrl.u32 %v22, 7
  %v24 = vsub.s32 0, %v23
  %v25 = vrot.slane %v20, %v24
  %v26 = vlaneseq
  %v27 = vshrl.u32 %v26, 7
  %v28 = vsub.s32 1, %v27
  %v29 = vrot.slane %v20, %v28
  %v32 = vmul.f32 %v16, %v25
  %v33 = vmul.f32 %v17, %v29
  %v34 = vmul.f32 %v18, %v25
  %v35 = vmul.f32 %v19, %v29
  %v36 = vld [vmem:[%s2] sm:$0x3]
  %v38 = vlaneseq
  %v39 = vshrl.u32 %v38, 7
  %v40 = vsub.s32 0, %v39
  %v41 = vrot.slane %v36, %v40
  %v42 = vlaneseq
  %v43 = vshrl.u32 %v42, 7
  %v44 = vsub.s32 1, %v43
  %v45 = vrot.slane %v36, %v44
  %v48 = vadd.f32 %v32, %v41
  %v49 = vadd.f32 %v33, %v45
  %v50 = vadd.f32 %v34, %v41
  %v51 = vadd.f32 %v35, %v45
  %v52 = vxor.u32 %v48, 2147483648
  %v53 = vxor.u32 %v49, 2147483648
  %v54 = vxor.u32 %v50, 2147483648
  %v55 = vxor.u32 %v51, 2147483648
  %v56 = vmul.f32 %v52, 1.442695
  %v57 = vpow.pop %v56
  %v58 = vmul.f32 %v53, 1.442695
  %v59 = vpow.pop %v58
  %v60 = vmul.f32 %v54, 1.442695
  %v61 = vpow.pop %v60
  %v62 = vmul.f32 %v55, 1.442695
  %v63 = vpow.pop %v62
  %v64 = vadd.f32 %v57, 1.0
  %v65 = vadd.f32 %v59, 1.0
  %v66 = vadd.f32 %v61, 1.0
  %v67 = vadd.f32 %v63, 1.0
  %v68 = vrcp.pop %v64
  %v69 = vmul.f32 1.0, %v68
  %v70 = vrcp.pop %v65
  %v71 = vmul.f32 1.0, %v70
  %v72 = vrcp.pop %v66
  %v73 = vmul.f32 1.0, %v72
  %v74 = vrcp.pop %v67
  %v75 = vmul.f32 1.0, %v74
  %v76 = vmul.f32 %v48, %v69
  %v77 = vmul.f32 %v49, %v71
  %v78 = vmul.f32 %v50, %v73
  %v79 = vmul.f32 %v51, %v75
  %v80 = vpack.c.bf16 %v78, %v76
  %v81 = vpack.c.bf16 %v79, %v77
  %v84 = vunpack.c.l.b16 %v80
  %v85 = vunpack.c.l.b16 %v81
  %v86 = vunpack.c.h.b16 %v80
  %v87 = vunpack.c.h.b16 %v81
  %v88 = vpack.c.b16 %v85, %v84
  %v89 = vpack.c.b16 %v87, %v86
  %92 = vst [vmem:[%s3] sm:$0xff] %v88
  %93 = vst [vmem:[%s3 + $0x8] sm:$0xff] %v89
  // Predicated region
  $region14: #{forward.26} parent=0 // pred_check
    _
  $region15: #{forward.26} parent=0 // pred_check_branch
    %95 = sbr.rel (0) target = $region17
  $region16: #{forward.26} parent=0 // pred_region
    _
  $region17: #{forward.26} parent=0 // pred_fallthru
    _
  // Predicated region
  $region18: #{forward.26} parent=0 // pred_check
    _
  $region19: #{forward.26} parent=0 // pred_check_branch
    %97 = sbr.rel (0) target = $region21
  $region20: #{forward.26} parent=0 // pred_region
    _
  $region21: #{forward.26} parent=0 // pred_fallthru
    _

// kernel: forward.25
$region0: #{forward.25}
  #allocation0 [shape = 'u32[]', space=smem, size = 0x4, offset = 0x4, fixed_abs, tag = 'smem constant byte address 0x4 - core index']
  #allocation1 [shape = 'u32[144,128]{1,0:T(1,128)}', space=vmem, size = 0x12000, scoped, tag = 'internal scratch']
  #allocation2 [shape = 'f32[16,256]{1,0:T(8,128)}', space=vmem, size = 0x4000, scoped, tag = 'scratch operand']
  %s0 = inlined_call_operand.vmem [shape: bf16[16,2304], index: 0, kind: input, shape index: {}]
  %s1 = inlined_call_operand.vmem [shape: bf16[2304,256], index: 1, kind: input, shape index: {}]
  %s2 = inlined_call_operand.vmem [shape: f32[1,256], index: 2, kind: input, shape index: {}]
  %s3 = inlined_call_operand.vmem [shape: bf16[16,256], index: 3, kind: output, shape index: {0}]
  %s4 = inlined_call_operand.vmem [shape: f32[8,256], index: 4, kind: output, shape index: {1}]
  %s5 = inlined_call_operand.vmem [shape: f32[8,256], index: 5, kind: output, shape index: {2}]
  %6 = xla_tuple %s3, %s4, %s5
  %s7 = sld [smem:[#allocation0]]
  $region107: #{forward.25} parent=0
    _
  %s9 = ssub.s32 1, %s7
  %s10 = scalar_select 0, %s9, %s7
  $region1: #{forward.25} parent=0
    #allocation3 [shape = 'u8[16384]{0}', space=vmem, size = 0x4000, scoped, tag = 'input window, operand 0']
    loop: start=0, step=1, limit=11
    $region2: #{forward.25} parent=1 // loop_pre_header
      _
    $region3: #{forward.25} parent=1 // loop_header
      %s12 = sphi 0, %s16
      %p13 = scmp.ge.s32.totalorder %s12, 11
      %s19 = sphi 0, %s38
      %s20 = sphi 0, %s34
      %s21 = sphi 0, %s30
      %s22 = sphi 0, %s19
      %s23 = sphi 0, %s20
      %s24 = sphi 0, %s21
      %s25 = sphi 0, %s22
      %s26 = sphi 0, %s23
      %s27 = sphi 0, %s24
      %s43 = sphi 0, %s45
      %s46 = sphi 0, %s43
      %s47 = sphi 0, %s46
      %s63 = sphi 0, %s47
      %s71 = sphi 0, %s73
      %s74 = sphi 0, %s71
      %s75 = sphi 0, %s74
      %s91 = sphi 0, %s75
      %s97 = sphi 0, %s99
      %s100 = sphi 0, %s97
      %s101 = sphi 0, %s100
      %s117 = sphi 0, %s101
      %s125 = sphi 0, %s127
      %s128 = sphi 0, %s125
      %s129 = sphi 0, %s128
      %s145 = sphi 0, %s129
      %s153 = sphi 0, %s155
      %s156 = sphi 0, %s153
      %s157 = sphi 0, %s156
      %s173 = sphi 0, %s157
      %s181 = sphi 0, %s183
      %s184 = sphi 0, %s181
      %s185 = sphi 0, %s184
      %s201 = sphi 0, %s185
    $region4: #{forward.25} parent=1 // loop_header_branch
      %15 = sbr.rel (%p13) target = $region8
    $region5: #{forward.25} parent=1 // loop_body
      %s17 = ssub.s32 %s12, 1
      %s18 = ssub.s32 %s12, 2
      %s28 = sadd.s32 1, %s21
      %p29 = scmp.ge.s32.totalorder %s28, 9
      %s30 = scalar_select %p29, 0, %s28
      %s31 = sadd.s32 1, %s20
      %s32 = scalar_select %p29, %s31, %s20
      %p33 = scmp.ge.s32.totalorder %s32, 1
      %s34 = scalar_select %p33, 0, %s32
      %s35 = sadd.s32 1, %s19
      %s36 = scalar_select %p33, %s35, %s19
      %p37 = scmp.ge.s32.totalorder %s36, 1
      %s38 = scalar_select %p37, 0, %s36
      %s39 = ssub.s32 %s19, %s38
      %s40 = ssub.s32 %s21, %s30
      %s41 = sor.u32 %s39, %s40
      %p42 = scmp.eq.s32.totalorder %s41, 0
      %s44 = sadd.s32 %s43, 1
      %s45 = scalar_select %p42, %s43, %s44
      %p48 = pneg %p42
      %p49 = scmp.eq.s32.totalorder %s12, 8
      %p50 = por %p48, %p49
      %p51 = scmp.ne.s32.totalorder %s43, %s46
      %p52 = scmp.eq.s32.totalorder %s12, 0
      %p53 = por %p51, %p52
      %p54 = scmp.ne.s32.totalorder %s43, %s46
      %p55 = scmp.eq.s32.totalorder %s17, 8
      %p56 = por %p54, %p55
      %p57 = scmp.ne.s32.totalorder %s46, %s47
      %p58 = scmp.eq.s32.totalorder %s17, 0
      %p59 = por %p57, %p58
      %p60 = scmp.ne.s32.totalorder %s46, %s47
      %p61 = scmp.eq.s32.totalorder %s18, 8
      %p62 = por %p60, %p61
      %p64 = scmp.ne.s32.totalorder %s47, %s63
      %p65 = scmp.eq.s32.totalorder %s18, 0
      %p66 = por %p64, %p65
      %s67 = ssub.s32 %s21, %s30
      %s68 = ssub.s32 %s20, %s34
      %s69 = sor.u32 %s67, %s68
      %p70 = scmp.eq.s32.totalorder %s69, 0
      %s72 = sadd.s32 %s71, 1
      %s73 = scalar_select %p70, %s71, %s72
      %p76 = pneg %p70
      %p77 = scmp.eq.s32.totalorder %s12, 8
      %p78 = por %p76, %p77
      %p79 = scmp.ne.s32.totalorder %s71, %s74
      %p80 = scmp.eq.s32.totalorder %s12, 0
      %p81 = por %p79, %p80
      %p82 = scmp.ne.s32.totalorder %s71, %s74
      %p83 = scmp.eq.s32.totalorder %s17, 8
      %p84 = por %p82, %p83
      %p85 = scmp.ne.s32.totalorder %s74, %s75
      %p86 = scmp.eq.s32.totalorder %s17, 0
      %p87 = por %p85, %p86
      %p88 = scmp.ne.s32.totalorder %s74, %s75
      %p89 = scmp.eq.s32.totalorder %s18, 8
      %p90 = por %p88, %p89
      %p92 = scmp.ne.s32.totalorder %s75, %s91
      %p93 = scmp.eq.s32.totalorder %s18, 0
      %p94 = por %p92, %p93
      %s95 = ssub.s32 %s20, %s34
      %p96 = scmp.eq.s32.totalorder %s95, 0
      %s98 = sadd.s32 %s97, 1
      %s99 = scalar_select %p96, %s97, %s98
      %p102 = pneg %p96
      %p103 = scmp.eq.s32.totalorder %s12, 8
      %p104 = por %p102, %p103
      %p105 = scmp.ne.s32.totalorder %s97, %s100
      %p106 = scmp.eq.s32.totalorder %s12, 0
      %p107 = por %p105, %p106
      %p108 = scmp.ne.s32.totalorder %s97, %s100
      %p109 = scmp.eq.s32.totalorder %s17, 8
      %p110 = por %p108, %p109
      %p111 = scmp.ne.s32.totalorder %s100, %s101
      %p112 = scmp.eq.s32.totalorder %s17, 0
      %p113 = por %p111, %p112
      %p114 = scmp.ne.s32.totalorder %s100, %s101
      %p115 = scmp.eq.s32.totalorder %s18, 8
      %p116 = por %p114, %p115
      %p118 = scmp.ne.s32.totalorder %s101, %s117
      %p119 = scmp.eq.s32.totalorder %s18, 0
      %p120 = por %p118, %p119
      %s121 = ssub.s32 %s19, %s38
      %s122 = ssub.s32 %s20, %s34
      %s123 = sor.u32 %s121, %s122
      %p124 = scmp.eq.s32.totalorder %s123, 0
      %s126 = sadd.s32 %s125, 1
      %s127 = scalar_select %p124, %s125, %s126
      %p130 = pneg %p124
      %p131 = scmp.eq.s32.totalorder %s12, 8
      %p132 = por %p130, %p131
      %p133 = scmp.ne.s32.totalorder %s125, %s128
      %p134 = scmp.eq.s32.totalorder %s12, 0
      %p135 = por %p133, %p134
      %p136 = scmp.ne.s32.totalorder %s125, %s128
      %p137 = scmp.eq.s32.totalorder %s17, 8
      %p138 = por %p136, %p137
      %p139 = scmp.ne.s32.totalorder %s128, %s129
      %p140 = scmp.eq.s32.totalorder %s17, 0
      %p141 = por %p139, %p140
      %p142 = scmp.ne.s32.totalorder %s128, %s129
      %p143 = scmp.eq.s32.totalorder %s18, 8
      %p144 = por %p142, %p143
      %p146 = scmp.ne.s32.totalorder %s129, %s145
      %p147 = scmp.eq.s32.totalorder %s18, 0
      %p148 = por %p146, %p147
      %s149 = ssub.s32 %s19, %s38
      %s150 = ssub.s32 %s20, %s34
      %s151 = sor.u32 %s149, %s150
      %p152 = scmp.eq.s32.totalorder %s151, 0
      %s154 = sadd.s32 %s153, 1
      %s155 = scalar_select %p152, %s153, %s154
      %p158 = pneg %p152
      %p159 = scmp.eq.s32.totalorder %s12, 8
      %p160 = por %p158, %p159
      %p161 = scmp.ne.s32.totalorder %s153, %s156
      %p162 = scmp.eq.s32.totalorder %s12, 0
      %p163 = por %p161, %p162
      %p164 = scmp.ne.s32.totalorder %s153, %s156
      %p165 = scmp.eq.s32.totalorder %s17, 8
      %p166 = por %p164, %p165
      %p167 = scmp.ne.s32.totalorder %s156, %s157
      %p168 = scmp.eq.s32.totalorder %s17, 0
      %p169 = por %p167, %p168
      %p170 = scmp.ne.s32.totalorder %s156, %s157
      %p171 = scmp.eq.s32.totalorder %s18, 8
      %p172 = por %p170, %p171
      %p174 = scmp.ne.s32.totalorder %s157, %s173
      %p175 = scmp.eq.s32.totalorder %s18, 0
      %p176 = por %p174, %p175
      %s177 = ssub.s32 %s19, %s38
      %s178 = ssub.s32 %s20, %s34
      %s179 = sor.u32 %s177, %s178
      %p180 = scmp.eq.s32.totalorder %s179, 0
      %s182 = sadd.s32 %s181, 1
      %s183 = scalar_select %p180, %s181, %s182
      %p186 = pneg %p180
      %p187 = scmp.eq.s32.totalorder %s12, 8
      %p188 = por %p186, %p187
      %p189 = scmp.ne.s32.totalorder %s181, %s184
      %p190 = scmp.eq.s32.totalorder %s12, 0
      %p191 = por %p189, %p190
      %p192 = scmp.ne.s32.totalorder %s181, %s184
      %p193 = scmp.eq.s32.totalorder %s17, 8
      %p194 = por %p192, %p193
      %p195 = scmp.ne.s32.totalorder %s184, %s185
      %p196 = scmp.eq.s32.totalorder %s17, 0
      %p197 = por %p195, %p196
      %p198 = scmp.ne.s32.totalorder %s184, %s185
      %p199 = scmp.eq.s32.totalorder %s18, 8
      %p200 = por %p198, %p199
      %p202 = scmp.ne.s32.totalorder %s185, %s201
      %p203 = scmp.eq.s32.totalorder %s18, 0
      %p204 = por %p202, %p203
      %p205 = scmp.le.s32.totalorder 1, %s12
      %p206 = scmp.lt.s32.totalorder %s12, 10
      %p207 = pnand %p205, %p206
      %p208 = pneg %p207
      // Predicated region
      $region9: #{forward.25} parent=5 // pred_check
        _
      $region10: #{forward.25} parent=5 // pred_check_branch
        %210 = sbr.rel (%p207) target = $region12
      $region11: #{forward.25} parent=5 // pred_region
        %s211 = ssub.s32 %s12, 1
        // Predicated region
        $region13: #{forward.25} parent=11 // pred_check
          %p212 = pneg %p113
        $region14: #{forward.25} parent=11 // pred_check_branch
          %214 = sbr.rel (%p212) target = $region16
        $region15: #{forward.25} parent=11 // pred_region
          %s215 = smul.u32 2, %s23
          %p216 = scmp.lt.s32.totalorder %s215, 1
          %s217 = scalar_select %p216, %s215, 1
          %s218 = scalar_lea.vmem %s2, %s217
          %s219 = smul.u32 2, %s23
        $region16: #{forward.25} parent=11 // pred_fallthru
          _
      $region12: #{forward.25} parent=5 // pred_fallthru
        _
      %p220 = scmp.lt.s32.totalorder %s12, 9
      // Predicated region
      $region17: #{forward.25} parent=5 // pred_check
        %p221 = pneg %p220
      $region18: #{forward.25} parent=5 // pred_check_branch
        %223 = sbr.rel (%p221) target = $region20
      $region19: #{forward.25} parent=5 // pred_region
        // Predicated region
        $region21: #{forward.25} parent=19 // pred_check
          %p224 = pneg %p53
        $region22: #{forward.25} parent=19 // pred_check_branch
          %226 = sbr.rel (%p224) target = $region24
        $region23: #{forward.25} parent=19 // pred_region
          %s227 = sand.u32 %s43, 1
          %s228 = sand.u32 %s43, 1
          %s229 = smul.addr %s228, 16
          %s230 = scalar_lea.vmem [#allocation3], %s229
          %s231 = smul.u32 2, %s19
          %s232 = smul.u32 2, %s21
          %s233 = smul.addr %s231, 18
          %s234 = sadd.s32 %s232, %s233
          %s235 = smul.addr %s234, 4
          %s236 = scalar_lea.vmem %s0, %s235
          // Predicated region
          $region25: #{forward.25} parent=23 // pred_check
            _
          $region26: #{forward.25} parent=23 // pred_check_branch
            %238 = sbr.rel (0) target = $region28
          $region27: #{forward.25} parent=23 // pred_region
            // Predicated region
            $region29: #{forward.25} parent=27 // pred_check
              _
            $region30: #{forward.25} parent=27 // pred_check_branch
              %240 = sbr.rel (0) target = $region32
            $region31: #{forward.25} parent=27 // pred_region
              // Predicated region
              $region44: #{forward.25} parent=31 // pred_check
                _
              $region45: #{forward.25} parent=31 // pred_check_branch
                %258 = sbr.rel (0) target = $region47
              $region46: #{forward.25} parent=31 // pred_region
                loop: start=0, step=1, limit=1
                $region48: #{forward.25} parent=46 // loop_pre_header
                  _
                $region49: #{forward.25} parent=46 // loop_header
                  %s260 = sphi 0, %s264
                  %p261 = scmp.ge.s32.totalorder %s260, 1
                  %s265 = sphi %s236, %s236
                  %s266 = sphi %s230, %s230
                $region50: #{forward.25} parent=46 // loop_header_branch
                  %263 = sbr.rel (%p261) target = $region54
                $region51: #{forward.25} parent=46 // loop_body
                  %v267 = vld [vmem:[%s265] sm:$0xff]
                  %268 = vst [vmem:[%s266] sm:$0xff] %v267
                  %v269 = vld [vmem:[%s265 + $0x48] sm:$0xff]
                  %270 = vst [vmem:[%s266 + $0x8] sm:$0xff] %v269
                $region52: #{forward.25} parent=46 // loop_footer
                  %s264 = sadd.s32 1, %s260
                $region53: #{forward.25} parent=46 // loop_footer_branch
                  %259 = sbr.rel target = $region49
                $region54: #{forward.25} parent=46 // loop_exit
                  _
              $region47: #{forward.25} parent=31 // pred_fallthru
                _
              // Predicated region
              $region55: #{forward.25} parent=31 // pred_check
                _
              $region56: #{forward.25} parent=31 // pred_check_branch
                %272 = sbr.rel target = $region58
              $region57: #{forward.25} parent=31 // pred_region
                _
              $region58: #{forward.25} parent=31 // pred_fallthru
                _
            $region32: #{forward.25} parent=27 // pred_fallthru
              _
            // Predicated region
            $region33: #{forward.25} parent=27 // pred_check
              _
            $region34: #{forward.25} parent=27 // pred_check_branch
              %242 = sbr.rel target = $region36
            $region35: #{forward.25} parent=27 // pred_region
              %s244 = ssub.s32 256, 1
              loop: start=0, step=1, limit=1
              $region37: #{forward.25} parent=35 // loop_pre_header
                _
              $region38: #{forward.25} parent=35 // loop_header
                %s246 = sphi 0, %s250
                %p247 = scmp.ge.s32.totalorder %s246, 1
                %s251 = sphi %s236, %s236
                %s252 = sphi %s230, %s230
              $region39: #{forward.25} parent=35 // loop_header_branch
                %249 = sbr.rel (%p247) target = $region43
              $region40: #{forward.25} parent=35 // loop_body
                %v253 = vld [vmem:[%s251] sm:%s244]
                %254 = vst [vmem:[%s252] sm:%s244] %v253
                %v255 = vld [vmem:[%s251 + $0x48] sm:%s244]
                %256 = vst [vmem:[%s252 + $0x8] sm:%s244] %v255
              $region41: #{forward.25} parent=35 // loop_footer
                %s250 = sadd.s32 1, %s246
              $region42: #{forward.25} parent=35 // loop_footer_branch
                %245 = sbr.rel target = $region38
              $region43: #{forward.25} parent=35 // loop_exit
                _
            $region36: #{forward.25} parent=27 // pred_fallthru
              _
          $region28: #{forward.25} parent=23 // pred_fallthru
            _
          %273 = vnop
        $region24: #{forward.25} parent=19 // pred_fallthru
          _
        // Predicated region
        $region59: #{forward.25} parent=19 // pred_check
          %p274 = pneg %p81
        $region60: #{forward.25} parent=19 // pred_check_branch
          %276 = sbr.rel (%p274) target = $region62
        $region61: #{forward.25} parent=19 // pred_region
          %s277 = smul.u32 32, %s21
          %s278 = smul.u32 2, %s20
          %p279 = scmp.lt.s32.totalorder %s277, 287
          %s280 = scalar_select %p279, %s277, 287
          %p281 = scmp.lt.s32.totalorder %s278, 1
          %s282 = scalar_select %p281, %s278, 1
          %s283 = smul.addr %s280, 2
          %s284 = sadd.s32 %s282, %s283
          %s285 = smul.addr %s284, 4
          %s286 = scalar_lea.vmem %s1, %s285
          %s287 = smul.u32 32, %s21
          %s288 = smul.u32 2, %s20
        $region62: #{forward.25} parent=19 // pred_fallthru
          _
      $region20: #{forward.25} parent=5 // pred_fallthru
        _
      %p289 = scmp.le.s32.totalorder 1, %s12
      %p290 = scmp.lt.s32.totalorder %s12, 10
      %p291 = pnand %p289, %p290
      %p292 = pneg %p291
      // Predicated region
      $region63: #{forward.25} parent=5 // pred_check
        _
      $region64: #{forward.25} parent=5 // pred_check_branch
        %294 = sbr.rel (%p291) target = $region66
      $region65: #{forward.25} parent=5 // pred_region
        %s295 = ssub.s32 %s12, 1
        %s296 = sand.u32 %s46, 1
        %s297 = sand.u32 %s46, 1
        %s298 = smul.addr %s297, 16
        %s299 = scalar_lea.vmem [#allocation3], %s298
        // Predicated region
        $region67: #{forward.25} parent=65 // pred_check
          %p300 = pneg %p59
        $region68: #{forward.25} parent=65 // pred_check_branch
          %302 = sbr.rel (%p300) target = $region70
        $region69: #{forward.25} parent=65 // pred_region
          _
        $region70: #{forward.25} parent=65 // pred_fallthru
          _
        %s303 = sand.u32 %s46, 1
        %s304 = sand.u32 %s46, 1
        %s305 = smul.addr %s304, 16
        %s306 = scalar_lea.vmem [#allocation3], %s305
        %p307 = pneg %p59
        %p308 = pneg %p56
        %s309 = smul.u32 32, %s24
        %s310 = smul.u32 2, %s23
        %p311 = scmp.lt.s32.totalorder %s309, 287
        %s312 = scalar_select %p311, %s309, 287
        %p313 = scmp.lt.s32.totalorder %s310, 1
        %s314 = scalar_select %p313, %s310, 1
        %s315 = smul.addr %s312, 2
        %s316 = sadd.s32 %s314, %s315
        %s317 = smul.addr %s316, 4
        %s318 = scalar_lea.vmem %s1, %s317
        %p319 = pneg %p87
        %p320 = pneg %p84
        %s321 = smul.u32 2, %s23
        %p322 = scmp.lt.s32.totalorder %s321, 1
        %s323 = scalar_select %p322, %s321, 1
        %s324 = scalar_lea.vmem %s2, %s323
        %p325 = pneg %p113
        %p326 = pneg %p110
        %p327 = pneg %p141
        %p328 = pneg %p138
        %s329 = smul.u32 2, %s22
        %s330 = smul.u32 2, %s23
        %p331 = scmp.lt.s32.totalorder %s329, 1
        %s332 = scalar_select %p331, %s329, 1
        %p333 = scmp.lt.s32.totalorder %s330, 1
        %s334 = scalar_select %p333, %s330, 1
        %s335 = smul.addr %s332, 2
        %s336 = sadd.s32 %s334, %s335
        %s337 = smul.addr %s336, 4
        %s338 = scalar_lea.vmem %s3, %s337
        %p339 = pneg %p169
        %p340 = pneg %p166
        %s341 = smul.u32 2, %s23
        %p342 = scmp.lt.s32.totalorder %s22, 0
        %s343 = scalar_select %p342, %s22, 0
        %p344 = scmp.lt.s32.totalorder %s341, 1
        %s345 = scalar_select %p344, %s341, 1
        %s346 = smul.addr %s343, 2
        %s347 = sadd.s32 %s345, %s346
        %s348 = smul.addr %s347, 8
        %s349 = scalar_lea.vmem %s4, %s348
        %p350 = pneg %p197
        %p351 = pneg %p194
        %s352 = smul.u32 2, %s23
        %p353 = scmp.lt.s32.totalorder %s22, 0
        %s354 = scalar_select %p353, %s22, 0
        %p355 = scmp.lt.s32.totalorder %s352, 1
        %s356 = scalar_select %p355, %s352, 1
        %s357 = smul.addr %s354, 2
        %s358 = sadd.s32 %s356, %s357
        %s359 = smul.addr %s358, 8
        %s360 = scalar_lea.vmem %s5, %s359
        %s361 = smul.u32 2, %s22
        %s362 = smul.u32 2, %s24
        %s363 = smul.u32 32, %s24
        %s364 = smul.u32 2, %s23
        %p365 = scmp.lt.s32.totalorder %s363, 287
        %s366 = scalar_select %p365, %s363, 287
        %p367 = scmp.lt.s32.totalorder %s364, 1
        %s368 = scalar_select %p367, %s364, 1
        %s369 = smul.addr %s366, 2
        %s370 = sadd.s32 %s368, %s369
        %s371 = smul.addr %s370, 4
        %s372 = scalar_lea.vmem %s1, %s371
        %s373 = smul.u32 32, %s24
        %s374 = smul.u32 2, %s23
        %s375 = smul.u32 2, %s23
        %p376 = scmp.lt.s32.totalorder %s375, 1
        %s377 = scalar_select %p376, %s375, 1
        %s378 = scalar_lea.vmem %s2, %s377
        %s379 = smul.u32 2, %s23
        %s380 = smul.u32 2, %s22
        %s381 = smul.u32 2, %s23
        %p382 = scmp.lt.s32.totalorder %s380, 1
        %s383 = scalar_select %p382, %s380, 1
        %p384 = scmp.lt.s32.totalorder %s381, 1
        %s385 = scalar_select %p384, %s381, 1
        %s386 = smul.addr %s383, 2
        %s387 = sadd.s32 %s385, %s386
        %s388 = smul.addr %s387, 4
        %s389 = scalar_lea.vmem %s3, %s388
        %s390 = smul.u32 2, %s22
        %s391 = smul.u32 2, %s23
        %s392 = smul.u32 2, %s23
        %p393 = scmp.lt.s32.totalorder %s22, 0
        %s394 = scalar_select %p393, %s22, 0
        %p395 = scmp.lt.s32.totalorder %s392, 1
        %s396 = scalar_select %p395, %s392, 1
        %s397 = smul.addr %s394, 2
        %s398 = sadd.s32 %s396, %s397
        %s399 = smul.addr %s398, 8
        %s400 = scalar_lea.vmem %s4, %s399
        %s401 = smul.u32 2, %s23
        %s402 = smul.u32 2, %s23
        %p403 = scmp.lt.s32.totalorder %s22, 0
        %s404 = scalar_select %p403, %s22, 0
        %p405 = scmp.lt.s32.totalorder %s402, 1
        %s406 = scalar_select %p405, %s402, 1
        %s407 = smul.addr %s404, 2
        %s408 = sadd.s32 %s406, %s407
        %s409 = smul.addr %s408, 8
        %s410 = scalar_lea.vmem %s5, %s409
        %s411 = smul.u32 2, %s23
        %s412 = smul.u32 %s22, 16
        %v413 = vlaneseq
        %v414 = vshrl.u32 %v413, 7
        %v415 = vadd.s32 %v414, 8
        %v416 = vstv %s412
        %v417 = vadd.s32 %v416, %v414
        %v418 = vadd.s32 %v416, %v415
        %p419 = scmp.eq.s32.totalorder %s24, 0
        // Predicated region
        $region71: #{forward.25} parent=65 // pred_check
          %p420 = pneg %p419
        $region72: #{forward.25} parent=65 // pred_check_branch
          %422 = sbr.rel (%p420) target = $region74
        $region73: #{forward.25} parent=65 // pred_region
          %423 = vst [vmem:[#allocation2] sm:$0xff] 0.0
          %424 = vst [vmem:[#allocation2 + $0x8] sm:$0xff] 0.0
          %425 = vst [vmem:[#allocation2 + $0x10] sm:$0xff] 0.0
          %426 = vst [vmem:[#allocation2 + $0x18] sm:$0xff] 0.0
        $region74: #{forward.25} parent=65 // pred_fallthru
          _
        %v427 = vld [vmem:[#allocation2] sm:$0xff]
        %v428 = vld [vmem:[#allocation2 + $0x8] sm:$0xff]
        %v429 = vld [vmem:[#allocation2 + $0x10] sm:$0xff]
        %v430 = vld [vmem:[#allocation2 + $0x18] sm:$0xff]
        %v431 = vld [vmem:[%s299] sm:$0xff]
        %v432 = vld [vmem:[%s299 + $0x8] sm:$0xff]
        %v433 = vld [vmem:[%s372] sm:$0xff]
        %v434 = vld [vmem:[%s372 + $0x8] sm:$0xff]
        %v435 = vld [vmem:[%s372 + $0x10] sm:$0xff]
        %v436 = vld [vmem:[%s372 + $0x18] sm:$0xff]
        %v437 = vld [vmem:[%s372 + $0x20] sm:$0xff]
        %v438 = vld [vmem:[%s372 + $0x28] sm:$0xff]
        %v439 = vld [vmem:[%s372 + $0x30] sm:$0xff]
        %v440 = vld [vmem:[%s372 + $0x38] sm:$0xff]
        %v441 = vld [vmem:[%s372 + $0x40] sm:$0xff]
        %v442 = vld [vmem:[%s372 + $0x48] sm:$0xff]
        %v443 = vld [vmem:[%s372 + $0x50] sm:$0xff]
        %v444 = vld [vmem:[%s372 + $0x58] sm:$0xff]
        %v445 = vld [vmem:[%s372 + $0x60] sm:$0xff]
        %v446 = vld [vmem:[%s372 + $0x68] sm:$0xff]
        %v447 = vld [vmem:[%s372 + $0x70] sm:$0xff]
        %v448 = vld [vmem:[%s372 + $0x78] sm:$0xff]
        %v449 = vld [vmem:[%s372 + $0x80] sm:$0xff]
        %v450 = vld [vmem:[%s372 + $0x88] sm:$0xff]
        %v451 = vld [vmem:[%s372 + $0x90] sm:$0xff]
        %v452 = vld [vmem:[%s372 + $0x98] sm:$0xff]
        %v453 = vld [vmem:[%s372 + $0xa0] sm:$0xff]
        %v454 = vld [vmem:[%s372 + $0xa8] sm:$0xff]
        %v455 = vld [vmem:[%s372 + $0xb0] sm:$0xff]
        %v456 = vld [vmem:[%s372 + $0xb8] sm:$0xff]
        %v457 = vld [vmem:[%s372 + $0xc0] sm:$0xff]
        %v458 = vld [vmem:[%s372 + $0xc8] sm:$0xff]
        %v459 = vld [vmem:[%s372 + $0xd0] sm:$0xff]
        %v460 = vld [vmem:[%s372 + $0xd8] sm:$0xff]
        %v461 = vld [vmem:[%s372 + $0xe0] sm:$0xff]
        %v462 = vld [vmem:[%s372 + $0xe8] sm:$0xff]
        %v463 = vld [vmem:[%s372 + $0xf0] sm:$0xff]
        %v464 = vld [vmem:[%s372 + $0xf8] sm:$0xff]
        %v467 = vunpack.c.l.b16 %v431
        %v468 = vunpack.c.h.b16 %v431
        %v469 = vunpack.c.l.b16 %v432
        %v470 = vunpack.c.h.b16 %v432
        %v471 = vpack.c.b16 %v469, %v467
        %v472 = vpack.c.b16 %v470, %v468
        %v507 = vunpack.c.l.b16 %v433
        %v508 = vunpack.c.h.b16 %v433
        %v509 = vunpack.c.l.b16 %v434
        %v510 = vunpack.c.h.b16 %v434
        %v511 = vunpack.c.l.b16 %v435
        %v512 = vunpack.c.h.b16 %v435
        %v513 = vunpack.c.l.b16 %v436
        %v514 = vunpack.c.h.b16 %v436
        %v515 = vunpack.c.l.b16 %v437
        %v516 = vunpack.c.h.b16 %v437
        %v517 = vunpack.c.l.b16 %v438
        %v518 = vunpack.c.h.b16 %v438
        %v519 = vunpack.c.l.b16 %v439
        %v520 = vunpack.c.h.b16 %v439
        %v521 = vunpack.c.l.b16 %v440
        %v522 = vunpack.c.h.b16 %v440
        %v523 = vunpack.c.l.b16 %v441
        %v524 = vunpack.c.h.b16 %v441
        %v525 = vunpack.c.l.b16 %v442
        %v526 = vunpack.c.h.b16 %v442
        %v527 = vunpack.c.l.b16 %v443
        %v528 = vunpack.c.h.b16 %v443
        %v529 = vunpack.c.l.b16 %v444
        %v530 = vunpack.c.h.b16 %v444
        %v531 = vunpack.c.l.b16 %v445
        %v532 = vunpack.c.h.b16 %v445
        %v533 = vunpack.c.l.b16 %v446
        %v534 = vunpack.c.h.b16 %v446
        %v535 = vunpack.c.l.b16 %v447
        %v536 = vunpack.c.h.b16 %v447
        %v537 = vunpack.c.l.b16 %v448
        %v538 = vunpack.c.h.b16 %v448
        %v539 = vunpack.c.l.b16 %v449
        %v540 = vunpack.c.h.b16 %v449
        %v541 = vunpack.c.l.b16 %v450
        %v542 = vunpack.c.h.b16 %v450
        %v543 = vunpack.c.l.b16 %v451
        %v544 = vunpack.c.h.b16 %v451
        %v545 = vunpack.c.l.b16 %v452
        %v546 = vunpack.c.h.b16 %v452
        %v547 = vunpack.c.l.b16 %v453
        %v548 = vunpack.c.h.b16 %v453
        %v549 = vunpack.c.l.b16 %v454
        %v550 = vunpack.c.h.b16 %v454
        %v551 = vunpack.c.l.b16 %v455
        %v552 = vunpack.c.h.b16 %v455
        %v553 = vunpack.c.l.b16 %v456
        %v554 = vunpack.c.h.b16 %v456
        %v555 = vunpack.c.l.b16 %v457
        %v556 = vunpack.c.h.b16 %v457
        %v557 = vunpack.c.l.b16 %v458
        %v558 = vunpack.c.h.b16 %v458
        %v559 = vunpack.c.l.b16 %v459
        %v560 = vunpack.c.h.b16 %v459
        %v561 = vunpack.c.l.b16 %v460
        %v562 = vunpack.c.h.b16 %v460
        %v563 = vunpack.c.l.b16 %v461
        %v564 = vunpack.c.h.b16 %v461
        %v565 = vunpack.c.l.b16 %v462
        %v566 = vunpack.c.h.b16 %v462
        %v567 = vunpack.c.l.b16 %v463
        %v568 = vunpack.c.h.b16 %v463
        %v569 = vunpack.c.l.b16 %v464
        %v570 = vunpack.c.h.b16 %v464
        %v571 = vpack.c.b16 %v509, %v507
        %v572 = vpack.c.b16 %v510, %v508
        %v573 = vpack.c.b16 %v513, %v511
        %v574 = vpack.c.b16 %v514, %v512
        %v575 = vpack.c.b16 %v517, %v515
        %v576 = vpack.c.b16 %v518, %v516
        %v577 = vpack.c.b16 %v521, %v519
        %v578 = vpack.c.b16 %v522, %v520
        %v579 = vpack.c.b16 %v525, %v523
        %v580 = vpack.c.b16 %v526, %v524
        %v581 = vpack.c.b16 %v529, %v527
        %v582 = vpack.c.b16 %v530, %v528
        %v583 = vpack.c.b16 %v533, %v531
        %v584 = vpack.c.b16 %v534, %v532
        %v585 = vpack.c.b16 %v537, %v535
        %v586 = vpack.c.b16 %v538, %v536
        %v587 = vpack.c.b16 %v541, %v539
        %v588 = vpack.c.b16 %v542, %v540
        %v589 = vpack.c.b16 %v545, %v543
        %v590 = vpack.c.b16 %v546, %v544
        %v591 = vpack.c.b16 %v549, %v547
        %v592 = vpack.c.b16 %v550, %v548
        %v593 = vpack.c.b16 %v553, %v551
        %v594 = vpack.c.b16 %v554, %v552
        %v595 = vpack.c.b16 %v557, %v555
        %v596 = vpack.c.b16 %v558, %v556
        %v597 = vpack.c.b16 %v561, %v559
        %v598 = vpack.c.b16 %v562, %v560
        %v599 = vpack.c.b16 %v565, %v563
        %v600 = vpack.c.b16 %v566, %v564
        %v601 = vpack.c.b16 %v569, %v567
        %v602 = vpack.c.b16 %v570, %v568
        %635 = vmatprep.subr.bf16.mxu0 %v586
        %636 = vmatpush1.bf16.msra.mxu0 %v585
        %637 = vmatprep.subr.bf16.mxu0 %v584
        %638 = vmatpush1.bf16.msra.mxu0 %v583
        %639 = vmatprep.subr.bf16.mxu0 %v582
        %640 = vmatpush1.bf16.msra.mxu0 %v581
        %641 = vmatprep.subr.bf16.mxu0 %v580
        %642 = vmatpush1.bf16.msra.mxu0 %v579
        %643 = vmatprep.subr.bf16.mxu0 %v578
        %644 = vmatpush1.bf16.msra.mxu0 %v577
        %645 = vmatprep.subr.bf16.mxu0 %v576
        %646 = vmatpush1.bf16.msra.mxu0 %v575
        %647 = vmatprep.subr.bf16.mxu0 %v574
        %648 = vmatpush1.bf16.msra.mxu0 %v573
        %649 = vmatprep.subr.bf16.mxu0 %v572
        %650 = vmatpush1.bf16.msra.mxu0 %v571
        %651 = vmatprep.subr.bf16.mxu0 %v602
        %652 = vmatpush2.bf16.msra.mxu0 %v601
        %653 = vmatprep.subr.bf16.mxu0 %v600
        %654 = vmatpush2.bf16.msra.mxu0 %v599
        %655 = vmatprep.subr.bf16.mxu0 %v598
        %656 = vmatpush2.bf16.msra.mxu0 %v597
        %657 = vmatprep.subr.bf16.mxu0 %v596
        %658 = vmatpush2.bf16.msra.mxu0 %v595
        %659 = vmatprep.subr.bf16.mxu0 %v594
        %660 = vmatpush2.bf16.msra.mxu0 %v593
        %661 = vmatprep.subr.bf16.mxu0 %v592
        %662 = vmatpush2.bf16.msra.mxu0 %v591
        %663 = vmatprep.subr.bf16.mxu0 %v590
        %664 = vmatpush2.bf16.msra.mxu0 %v589
        %665 = vmatprep.subr.bf16.mxu0 %v588
        %666 = vmatpush2.bf16.msra.mxu0 %v587
        %667 = vmatprep.mubr.bf16.mxu0 %v472
        %668 = vmatmul.mubr.bf16.gmra.mxu0 %v471
        %v669 = vpop.f32.mrf.mxu0
        %v670 = vadd.f32 0.0, %v669
        %v671 = vpop.f32.mrf.mxu0
        %v672 = vadd.f32 0.0, %v671
        %v673 = vpop.f32.mrf.mxu0
        %v674 = vadd.f32 0.0, %v673
        %v675 = vpop.f32.mrf.mxu0
        %v676 = vadd.f32 0.0, %v675
        %677 = vdwg.mxu0
        %v678 = vadd.f32 %v427, %v670
        %v679 = vadd.f32 %v428, %v672
        %v680 = vadd.f32 %v429, %v674
        %v681 = vadd.f32 %v430, %v676
        %682 = vst [vmem:[#allocation2] sm:$0xff] %v678
        %683 = vst [vmem:[#allocation2 + $0x8] sm:$0xff] %v679
        %684 = vst [vmem:[#allocation2 + $0x10] sm:$0xff] %v680
        %685 = vst [vmem:[#allocation2 + $0x18] sm:$0xff] %v681
        %p686 = scmp.eq.s32.totalorder %s24, 8
        // Predicated region
        $region75: #{forward.25} parent=65 // pred_check
          %p687 = pneg %p686
        $region76: #{forward.25} parent=65 // pred_check_branch
          %689 = sbr.rel (%p687) target = $region78
        $region77: #{forward.25} parent=65 // pred_region
          %v690 = vld [vmem:[#allocation2] sm:$0xff]
          %v691 = vld [vmem:[#allocation2 + $0x8] sm:$0xff]
          %v692 = vld [vmem:[#allocation2 + $0x10] sm:$0xff]
          %v693 = vld [vmem:[#allocation2 + $0x18] sm:$0xff]
          %v694 = vld [vmem:[%s378] sm:$0x3]
          %v696 = vlaneseq
          %v697 = vshrl.u32 %v696, 7
          %v698 = vsub.s32 0, %v697
          %v699 = vrot.slane %v694, %v698
          %v700 = vlaneseq
          %v701 = vshrl.u32 %v700, 7
          %v702 = vsub.s32 1, %v701
          %v703 = vrot.slane %v694, %v702
          %v706 = vadd.f32 %v690, %v699
          %v707 = vadd.f32 %v691, %v703
          %v708 = vadd.f32 %v692, %v699
          %v709 = vadd.f32 %v693, %v703
          %v710 = vpack.c.bf16 %v708, %v706
          %v711 = vpack.c.bf16 %v709, %v707
          %v714 = vunpack.c.l.b16 %v710
          %v715 = vunpack.c.l.b16 %v711
          %v716 = vunpack.c.h.b16 %v710
          %v717 = vunpack.c.h.b16 %v711
          %v718 = vpack.c.b16 %v715, %v714
          %v719 = vpack.c.b16 %v717, %v716
          %722 = vst [vmem:[%s389] sm:$0xff] %v718
          %723 = vst [vmem:[%s389 + $0x8] sm:$0xff] %v719
          %vm724 = vcmp.lt.s32.totalorder %v417, 8
          %vm725 = vcmp.lt.s32.totalorder %v418, 8
          %v726 = vsel %vm724, 1, 0
          %v727 = vsel %vm725, 1, 0
          %vm728 = vcmp.eq.s32.totalorder %v726, 1
          %vm729 = vcmp.eq.s32.totalorder %v727, 1
          %v730 = vsel %vm728, %v706, 0.0
          %v731 = vsel %vm728, %v707, 0.0
          %v732 = vsel %vm729, %v708, 0.0
          %v733 = vsel %vm729, %v709, 0.0
          %v734 = vadd.f32 %v730, %v732
          %v735 = vrot.slane %v734, 4
          %v736 = vadd.f32 %v734, %v735
          %v737 = vrot.slane %v736, 2
          %v738 = vadd.f32 %v736, %v737
          %v739 = vrot.slane %v738, 1
          %v740 = vadd.f32 %v738, %v739
          %v741 = vadd.f32 %v731, %v733
          %v742 = vrot.slane %v741, 4
          %v743 = vadd.f32 %v741, %v742
          %v744 = vrot.slane %v743, 2
          %v745 = vadd.f32 %v743, %v744
          %v746 = vrot.slane %v745, 1
          %v747 = vadd.f32 %v745, %v746
          %v748 = vmul.f32 %v730, %v730
          %v749 = vmul.f32 %v731, %v731
          %v750 = vmul.f32 %v732, %v732
          %v751 = vmul.f32 %v733, %v733
          %v752 = vadd.f32 %v748, %v750
          %v753 = vrot.slane %v752, 4
          %v754 = vadd.f32 %v752, %v753
          %v755 = vrot.slane %v754, 2
          %v756 = vadd.f32 %v754, %v755
          %v757 = vrot.slane %v756, 1
          %v758 = vadd.f32 %v756, %v757
          %v759 = vadd.f32 %v749, %v751
          %v760 = vrot.slane %v759, 4
          %v761 = vadd.f32 %v759, %v760
          %v762 = vrot.slane %v761, 2
          %v763 = vadd.f32 %v761, %v762
          %v764 = vrot.slane %v763, 1
          %v765 = vadd.f32 %v763, %v764
          %766 = vst [vmem:[%s400] sm:$0xff] %v740
          %767 = vst [vmem:[%s400 + $0x8] sm:$0xff] %v747
          %768 = vst [vmem:[%s410] sm:$0xff] %v758
          %769 = vst [vmem:[%s410 + $0x8] sm:$0xff] %v765
        $region78: #{forward.25} parent=65 // pred_fallthru
          _
        %s770 = smul.u32 2, %s22
        %s771 = smul.u32 2, %s23
        %p772 = scmp.lt.s32.totalorder %s770, 1
        %s773 = scalar_select %p772, %s770, 1
        %p774 = scmp.lt.s32.totalorder %s771, 1
        %s775 = scalar_select %p774, %s771, 1
        %s776 = smul.addr %s773, 2
        %s777 = sadd.s32 %s775, %s776
        %s778 = smul.addr %s777, 4
        %s779 = scalar_lea.vmem %s3, %s778
        %s780 = smul.u32 2, %s23
        %p781 = scmp.lt.s32.totalorder %s22, 0
        %s782 = scalar_select %p781, %s22, 0
        %p783 = scmp.lt.s32.totalorder %s780, 1
        %s784 = scalar_select %p783, %s780, 1
        %s785 = smul.addr %s782, 2
        %s786 = sadd.s32 %s784, %s785
        %s787 = smul.addr %s786, 8
        %s788 = scalar_lea.vmem %s4, %s787
        %s789 = smul.u32 2, %s23
        %p790 = scmp.lt.s32.totalorder %s22, 0
        %s791 = scalar_select %p790, %s22, 0
        %p792 = scmp.lt.s32.totalorder %s789, 1
        %s793 = scalar_select %p792, %s789, 1
        %s794 = smul.addr %s791, 2
        %s795 = sadd.s32 %s793, %s794
        %s796 = smul.addr %s795, 8
        %s797 = scalar_lea.vmem %s5, %s796
        // Predicated region
        $region79: #{forward.25} parent=65 // pred_check
          %p798 = pneg %p138
        $region80: #{forward.25} parent=65 // pred_check_branch
          %800 = sbr.rel (%p798) target = $region82
        $region81: #{forward.25} parent=65 // pred_region
          %s801 = smul.u32 2, %s22
          %s802 = smul.u32 2, %s23
        $region82: #{forward.25} parent=65 // pred_fallthru
          _
        // Predicated region
        $region83: #{forward.25} parent=65 // pred_check
          %p803 = pneg %p166
        $region84: #{forward.25} parent=65 // pred_check_branch
          %805 = sbr.rel (%p803) target = $region86
        $region85: #{forward.25} parent=65 // pred_region
          %s806 = smul.u32 2, %s23
        $region86: #{forward.25} parent=65 // pred_fallthru
          _
        // Predicated region
        $region87: #{forward.25} parent=65 // pred_check
          %p807 = pneg %p194
        $region88: #{forward.25} parent=65 // pred_check_branch
          %809 = sbr.rel (%p807) target = $region90
        $region89: #{forward.25} parent=65 // pred_region
          %s810 = smul.u32 2, %s23
        $region90: #{forward.25} parent=65 // pred_fallthru
          _
        // Predicated region
        $region91: #{forward.25} parent=65 // pred_check
          %p811 = pneg %p138
        $region92: #{forward.25} parent=65 // pred_check_branch
          %813 = sbr.rel (%p811) target = $region94
        $region93: #{forward.25} parent=65 // pred_region
          %s814 = smul.u32 2, %s22
          %s815 = smul.u32 2, %s23
          %p816 = scmp.lt.s32.totalorder %s814, 1
          %s817 = scalar_select %p816, %s814, 1
          %p818 = scmp.lt.s32.totalorder %s815, 1
          %s819 = scalar_select %p818, %s815, 1
          %s820 = smul.addr %s817, 2
          %s821 = sadd.s32 %s819, %s820
          %s822 = smul.addr %s821, 4
          %s823 = scalar_lea.vmem %s3, %s822
        $region94: #{forward.25} parent=65 // pred_fallthru
          _
        // Predicated region
        $region95: #{forward.25} parent=65 // pred_check
          %p824 = pneg %p166
        $region96: #{forward.25} parent=65 // pred_check_branch
          %826 = sbr.rel (%p824) target = $region98
        $region97: #{forward.25} parent=65 // pred_region
          %s827 = smul.u32 2, %s23
          %p828 = scmp.lt.s32.totalorder %s22, 0
          %s829 = scalar_select %p828, %s22, 0
          %p830 = scmp.lt.s32.totalorder %s827, 1
          %s831 = scalar_select %p830, %s827, 1
          %s832 = smul.addr %s829, 2
          %s833 = sadd.s32 %s831, %s832
          %s834 = smul.addr %s833, 8
          %s835 = scalar_lea.vmem %s4, %s834
        $region98: #{forward.25} parent=65 // pred_fallthru
          _
        // Predicated region
        $region99: #{forward.25} parent=65 // pred_check
          %p836 = pneg %p194
        $region100: #{forward.25} parent=65 // pred_check_branch
          %838 = sbr.rel (%p836) target = $region102
        $region101: #{forward.25} parent=65 // pred_region
          %s839 = smul.u32 2, %s23
          %p840 = scmp.lt.s32.totalorder %s22, 0
          %s841 = scalar_select %p840, %s22, 0
          %p842 = scmp.lt.s32.totalorder %s839, 1
          %s843 = scalar_select %p842, %s839, 1
          %s844 = smul.addr %s841, 2
          %s845 = sadd.s32 %s843, %s844
          %s846 = smul.addr %s845, 8
          %s847 = scalar_lea.vmem %s5, %s846
        $region102: #{forward.25} parent=65 // pred_fallthru
          _
      $region66: #{forward.25} parent=5 // pred_fallthru
        _
      %p848 = scmp.le.s32.totalorder 2, %s12
      // Predicated region
      $region103: #{forward.25} parent=5 // pred_check
        %p849 = pneg %p848
      $region104: #{forward.25} parent=5 // pred_check_branch
        %851 = sbr.rel (%p849) target = $region106
      $region105: #{forward.25} parent=5 // pred_region
        %s852 = ssub.s32 %s12, 2
      $region106: #{forward.25} parent=5 // pred_fallthru
        _
    $region6: #{forward.25} parent=1 // loop_footer
      %s16 = sadd.s32 1, %s12
    $region7: #{forward.25} parent=1 // loop_footer_branch
      %11 = sbr.rel target = $region3
    $region8: #{forward.25} parent=1 // loop_exit
      _

// kernel: forward.28
$region0: #{forward.28}
  #allocation0 [shape = 'u32[]', space=smem, size = 0x4, offset = 0x4, fixed_abs, tag = 'smem constant byte address 0x4 - core index']
  #allocation1 [shape = 'u32[144,128]{1,0:T(1,128)}', space=vmem, size = 0x12000, scoped, tag = 'internal scratch']
  %s0 = inlined_call_operand.vmem [shape: bf16[16,512], index: 0, kind: input, shape index: {}]
  %s1 = inlined_call_operand.vmem [shape: f32[1,512], index: 1, kind: input, shape index: {}]
  %s2 = inlined_call_operand.vmem [shape: f32[1,512], index: 2, kind: input, shape index: {}]
  %s3 = inlined_call_operand.vmem [shape: bf16[16,512], index: 3, kind: output, shape index: {}]
  %s4 = sld [smem:[#allocation0]]
  $region22: #{forward.28} parent=0
    _
  %s6 = ssub.s32 1, %s4
  %s7 = scalar_select 0, %s6, %s4
  // Predicated region
  $region2: #{forward.28} parent=0 // pred_check
    _
  $region3: #{forward.28} parent=0 // pred_check_branch
    %9 = sbr.rel (0) target = $region5
  $region4: #{forward.28} parent=0 // pred_region
    _
  $region5: #{forward.28} parent=0 // pred_fallthru
    _
  // Predicated region
  $region6: #{forward.28} parent=0 // pred_check
    _
  $region7: #{forward.28} parent=0 // pred_check_branch
    %11 = sbr.rel (0) target = $region9
  $region8: #{forward.28} parent=0 // pred_region
    _
  $region9: #{forward.28} parent=0 // pred_fallthru
    _
  // Predicated region
  $region10: #{forward.28} parent=0 // pred_check
    _
  $region11: #{forward.28} parent=0 // pred_check_branch
    %13 = sbr.rel (0) target = $region13
  $region12: #{forward.28} parent=0 // pred_region
    _
  $region13: #{forward.28} parent=0 // pred_fallthru
    _
  %v14 = vld [vmem:[%s0] sm:$0xff]
  %v15 = vld [vmem:[%s0 + $0x8] sm:$0xff]
  %v16 = vld [vmem:[%s0 + $0x10] sm:$0xff]
  %v17 = vld [vmem:[%s0 + $0x18] sm:$0xff]
  %v18 = vunpack.c.l.bf16 %v14
  %v19 = vunpack.c.h.bf16 %v14
  %v20 = vunpack.c.l.bf16 %v15
  %v21 = vunpack.c.h.bf16 %v15
  %v22 = vunpack.c.l.bf16 %v16
  %v23 = vunpack.c.h.bf16 %v16
  %v24 = vunpack.c.l.bf16 %v17
  %v25 = vunpack.c.h.bf16 %v17
  %v26 = vld [vmem:[%s1] sm:$0xf]
  %v28 = vlaneseq
  %v29 = vshrl.u32 %v28, 7
  %v30 = vsub.s32 0, %v29
  %v31 = vrot.slane %v26, %v30
  %v32 = vlaneseq
  %v33 = vshrl.u32 %v32, 7
  %v34 = vsub.s32 1, %v33
  %v35 = vrot.slane %v26, %v34
  %v36 = vlaneseq
  %v37 = vshrl.u32 %v36, 7
  %v38 = vsub.s32 2, %v37
  %v39 = vrot.slane %v26, %v38
  %v40 = vlaneseq
  %v41 = vshrl.u32 %v40, 7
  %v42 = vsub.s32 3, %v41
  %v43 = vrot.slane %v26, %v42
  %v48 = vmul.f32 %v18, %v31
  %v49 = vmul.f32 %v19, %v35
  %v50 = vmul.f32 %v20, %v39
  %v51 = vmul.f32 %v21, %v43
  %v52 = vmul.f32 %v22, %v31
  %v53 = vmul.f32 %v23, %v35
  %v54 = vmul.f32 %v24, %v39
  %v55 = vmul.f32 %v25, %v43
  %v56 = vld [vmem:[%s2] sm:$0xf]
  %v58 = vlaneseq
  %v59 = vshrl.u32 %v58, 7
  %v60 = vsub.s32 0, %v59
  %v61 = vrot.slane %v56, %v60
  %v62 = vlaneseq
  %v63 = vshrl.u32 %v62, 7
  %v64 = vsub.s32 1, %v63
  %v65 = vrot.slane %v56, %v64
  %v66 = vlaneseq
  %v67 = vshrl.u32 %v66, 7
  %v68 = vsub.s32 2, %v67
  %v69 = vrot.slane %v56, %v68
  %v70 = vlaneseq
  %v71 = vshrl.u32 %v70, 7
  %v72 = vsub.s32 3, %v71
  %v73 = vrot.slane %v56, %v72
  %v78 = vadd.f32 %v48, %v61
  %v79 = vadd.f32 %v49, %v65
  %v80 = vadd.f32 %v50, %v69
  %v81 = vadd.f32 %v51, %v73
  %v82 = vadd.f32 %v52, %v61
  %v83 = vadd.f32 %v53, %v65
  %v84 = vadd.f32 %v54, %v69
  %v85 = vadd.f32 %v55, %v73
  %v86 = vxor.u32 %v78, 2147483648
  %v87 = vxor.u32 %v79, 2147483648
  %v88 = vxor.u32 %v80, 2147483648
  %v89 = vxor.u32 %v81, 2147483648
  %v90 = vxor.u32 %v82, 2147483648
  %v91 = vxor.u32 %v83, 2147483648
  %v92 = vxor.u32 %v84, 2147483648
  %v93 = vxor.u32 %v85, 2147483648
  %v94 = vmul.f32 %v86, 1.442695
  %v95 = vpow.pop %v94
  %v96 = vmul.f32 %v87, 1.442695
  %v97 = vpow.pop %v96
  %v98 = vmul.f32 %v88, 1.442695
  %v99 = vpow.pop %v98
  %v100 = vmul.f32 %v89, 1.442695
  %v101 = vpow.pop %v100
  %v102 = vmul.f32 %v90, 1.442695
  %v103 = vpow.pop %v102
  %v104 = vmul.f32 %v91, 1.442695
  %v105 = vpow.pop %v104
  %v106 = vmul.f32 %v92, 1.442695
  %v107 = vpow.pop %v106
  %v108 = vmul.f32 %v93, 1.442695
  %v109 = vpow.pop %v108
  %v110 = vadd.f32 %v95, 1.0
  %v111 = vadd.f32 %v97, 1.0
  %v112 = vadd.f32 %v99, 1.0
  %v113 = vadd.f32 %v101, 1.0
  %v114 = vadd.f32 %v103, 1.0
  %v115 = vadd.f32 %v105, 1.0
  %v116 = vadd.f32 %v107, 1.0
  %v117 = vadd.f32 %v109, 1.0
  %v118 = vrcp.pop %v110
  %v119 = vmul.f32 1.0, %v118
  %v120 = vrcp.pop %v111
  %v121 = vmul.f32 1.0, %v120
  %v122 = vrcp.pop %v112
  %v123 = vmul.f32 1.0, %v122
  %v124 = vrcp.pop %v113
  %v125 = vmul.f32 1.0, %v124
  %v126 = vrcp.pop %v114
  %v127 = vmul.f32 1.0, %v126
  %v128 = vrcp.pop %v115
  %v129 = vmul.f32 1.0, %v128
  %v130 = vrcp.pop %v116
  %v131 = vmul.f32 1.0, %v130
  %v132 = vrcp.pop %v117
  %v133 = vmul.f32 1.0, %v132
  %v134 = vmul.f32 %v78, %v119
  %v135 = vmul.f32 %v79, %v121
  %v136 = vmul.f32 %v80, %v123
  %v137 = vmul.f32 %v81, %v125
  %v138 = vmul.f32 %v82, %v127
  %v139 = vmul.f32 %v83, %v129
  %v140 = vmul.f32 %v84, %v131
  %v141 = vmul.f32 %v85, %v133
  %v142 = vpack.c.bf16 %v138, %v134
  %v143 = vpack.c.bf16 %v139, %v135
  %v144 = vpack.c.bf16 %v140, %v136
  %v145 = vpack.c.bf16 %v141, %v137
  %v150 = vunpack.c.l.b16 %v142
  %v151 = vunpack.c.l.b16 %v143
  %v152 = vunpack.c.l.b16 %v144
  %v153 = vunpack.c.l.b16 %v145
  %v154 = vunpack.c.h.b16 %v142
  %v155 = vunpack.c.h.b16 %v143
  %v156 = vunpack.c.h.b16 %v144
  %v157 = vunpack.c.h.b16 %v145
  %v158 = vpack.c.b16 %v151, %v150
  %v159 = vpack.c.b16 %v153, %v152
  %v160 = vpack.c.b16 %v155, %v154
  %v161 = vpack.c.b16 %v157, %v156
  %166 = vst [vmem:[%s3] sm:$0xff] %v158
  %167 = vst [vmem:[%s3 + $0x8] sm:$0xff] %v159
  %168 = vst [vmem:[%s3 + $0x10] sm:$0xff] %v160
  %169 = vst [vmem:[%s3 + $0x18] sm:$0xff] %v161
  // Predicated region
  $region14: #{forward.28} parent=0 // pred_check
    _
  $region15: #{forward.28} parent=0 // pred_check_branch
    %171 = sbr.rel (0) target = $region17
  $region16: #{forward.28} parent=0 // pred_region
    _
  $region17: #{forward.28} parent=0 // pred_fallthru
    _
  // Predicated region
  $region18: #{forward.28} parent=0 // pred_check
    _
  $region19: #{forward.28} parent=0 // pred_check_branch
    %173 = sbr.rel (0) target = $region21
  $region20: #{forward.28} parent=0 // pred_region
    _
  $region21: #{forward.28} parent=0 // pred_fallthru
    _

// kernel: forward.27
$region0: #{forward.27}
  #allocation0 [shape = 'u32[]', space=smem, size = 0x4, offset = 0x4, fixed_abs, tag = 'smem constant byte address 0x4 - core index']
  #allocation1 [shape = 'u32[144,128]{1,0:T(1,128)}', space=vmem, size = 0x12000, scoped, tag = 'internal scratch']
  #allocation2 [shape = 'f32[16,512]{1,0:T(8,128)}', space=vmem, size = 0x8000, scoped, tag = 'scratch operand']
  %s0 = inlined_call_operand.vmem [shape: bf16[16,2304], index: 0, kind: input, shape index: {}]
  %s1 = inlined_call_operand.vmem [shape: bf16[2304,512], index: 1, kind: input, shape index: {}]
  %s2 = inlined_call_operand.vmem [shape: f32[1,512], index: 2, kind: input, shape index: {}]
  %s3 = inlined_call_operand.vmem [shape: bf16[16,512], index: 3, kind: output, shape index: {0}]
  %s4 = inlined_call_operand.vmem [shape: f32[8,512], index: 4, kind: output, shape index: {1}]
  %s5 = inlined_call_operand.vmem [shape: f32[8,512], index: 5, kind: output, shape index: {2}]
  %6 = xla_tuple %s3, %s4, %s5
  %s7 = sld [smem:[#allocation0]]
  $region107: #{forward.27} parent=0
    _
  %s9 = ssub.s32 1, %s7
  %s10 = scalar_select 0, %s9, %s7
  $region1: #{forward.27} parent=0
    #allocation3 [shape = 'u8[16384]{0}', space=vmem, size = 0x4000, scoped, tag = 'input window, operand 0']
    loop: start=0, step=1, limit=11
    $region2: #{forward.27} parent=1 // loop_pre_header
      _
    $region3: #{forward.27} parent=1 // loop_header
      %s12 = sphi 0, %s16
      %p13 = scmp.ge.s32.totalorder %s12, 11
      %s19 = sphi 0, %s38
      %s20 = sphi 0, %s34
      %s21 = sphi 0, %s30
      %s22 = sphi 0, %s19
      %s23 = sphi 0, %s20
      %s24 = sphi 0, %s21
      %s25 = sphi 0, %s22
      %s26 = sphi 0, %s23
      %s27 = sphi 0, %s24
      %s43 = sphi 0, %s45
      %s46 = sphi 0, %s43
      %s47 = sphi 0, %s46
      %s63 = sphi 0, %s47
      %s71 = sphi 0, %s73
      %s74 = sphi 0, %s71
      %s75 = sphi 0, %s74
      %s91 = sphi 0, %s75
      %s97 = sphi 0, %s99
      %s100 = sphi 0, %s97
      %s101 = sphi 0, %s100
      %s117 = sphi 0, %s101
      %s125 = sphi 0, %s127
      %s128 = sphi 0, %s125
      %s129 = sphi 0, %s128
      %s145 = sphi 0, %s129
      %s153 = sphi 0, %s155
      %s156 = sphi 0, %s153
      %s157 = sphi 0, %s156
      %s173 = sphi 0, %s157
      %s181 = sphi 0, %s183
      %s184 = sphi 0, %s181
      %s185 = sphi 0, %s184
      %s201 = sphi 0, %s185
    $region4: #{forward.27} parent=1 // loop_header_branch
      %15 = sbr.rel (%p13) target = $region8
    $region5: #{forward.27} parent=1 // loop_body
      %s17 = ssub.s32 %s12, 1
      %s18 = ssub.s32 %s12, 2
      %s28 = sadd.s32 1, %s21
      %p29 = scmp.ge.s32.totalorder %s28, 9
      %s30 = scalar_select %p29, 0, %s28
      %s31 = sadd.s32 1, %s20
      %s32 = scalar_select %p29, %s31, %s20
      %p33 = scmp.ge.s32.totalorder %s32, 1
      %s34 = scalar_select %p33, 0, %s32
      %s35 = sadd.s32 1, %s19
      %s36 = scalar_select %p33, %s35, %s19
      %p37 = scmp.ge.s32.totalorder %s36, 1
      %s38 = scalar_select %p37, 0, %s36
      %s39 = ssub.s32 %s19, %s38
      %s40 = ssub.s32 %s21, %s30
      %s41 = sor.u32 %s39, %s40
      %p42 = scmp.eq.s32.totalorder %s41, 0
      %s44 = sadd.s32 %s43, 1
      %s45 = scalar_select %p42, %s43, %s44
      %p48 = pneg %p42
      %p49 = scmp.eq.s32.totalorder %s12, 8
      %p50 = por %p48, %p49
      %p51 = scmp.ne.s32.totalorder %s43, %s46
      %p52 = scmp.eq.s32.totalorder %s12, 0
      %p53 = por %p51, %p52
      %p54 = scmp.ne.s32.totalorder %s43, %s46
      %p55 = scmp.eq.s32.totalorder %s17, 8
      %p56 = por %p54, %p55
      %p57 = scmp.ne.s32.totalorder %s46, %s47
      %p58 = scmp.eq.s32.totalorder %s17, 0
      %p59 = por %p57, %p58
      %p60 = scmp.ne.s32.totalorder %s46, %s47
      %p61 = scmp.eq.s32.totalorder %s18, 8
      %p62 = por %p60, %p61
      %p64 = scmp.ne.s32.totalorder %s47, %s63
      %p65 = scmp.eq.s32.totalorder %s18, 0
      %p66 = por %p64, %p65
      %s67 = ssub.s32 %s21, %s30
      %s68 = ssub.s32 %s20, %s34
      %s69 = sor.u32 %s67, %s68
      %p70 = scmp.eq.s32.totalorder %s69, 0
      %s72 = sadd.s32 %s71, 1
      %s73 = scalar_select %p70, %s71, %s72
      %p76 = pneg %p70
      %p77 = scmp.eq.s32.totalorder %s12, 8
      %p78 = por %p76, %p77
      %p79 = scmp.ne.s32.totalorder %s71, %s74
      %p80 = scmp.eq.s32.totalorder %s12, 0
      %p81 = por %p79, %p80
      %p82 = scmp.ne.s32.totalorder %s71, %s74
      %p83 = scmp.eq.s32.totalorder %s17, 8
      %p84 = por %p82, %p83
      %p85 = scmp.ne.s32.totalorder %s74, %s75
      %p86 = scmp.eq.s32.totalorder %s17, 0
      %p87 = por %p85, %p86
      %p88 = scmp.ne.s32.totalorder %s74, %s75
      %p89 = scmp.eq.s32.totalorder %s18, 8
      %p90 = por %p88, %p89
      %p92 = scmp.ne.s32.totalorder %s75, %s91
      %p93 = scmp.eq.s32.totalorder %s18, 0
      %p94 = por %p92, %p93
      %s95 = ssub.s32 %s20, %s34
      %p96 = scmp.eq.s32.totalorder %s95, 0
      %s98 = sadd.s32 %s97, 1
      %s99 = scalar_select %p96, %s97, %s98
      %p102 = pneg %p96
      %p103 = scmp.eq.s32.totalorder %s12, 8
      %p104 = por %p102, %p103
      %p105 = scmp.ne.s32.totalorder %s97, %s100
      %p106 = scmp.eq.s32.totalorder %s12, 0
      %p107 = por %p105, %p106
      %p108 = scmp.ne.s32.totalorder %s97, %s100
      %p109 = scmp.eq.s32.totalorder %s17, 8
      %p110 = por %p108, %p109
      %p111 = scmp.ne.s32.totalorder %s100, %s101
      %p112 = scmp.eq.s32.totalorder %s17, 0
      %p113 = por %p111, %p112
      %p114 = scmp.ne.s32.totalorder %s100, %s101
      %p115 = scmp.eq.s32.totalorder %s18, 8
      %p116 = por %p114, %p115
      %p118 = scmp.ne.s32.totalorder %s101, %s117
      %p119 = scmp.eq.s32.totalorder %s18, 0
      %p120 = por %p118, %p119
      %s121 = ssub.s32 %s19, %s38
      %s122 = ssub.s32 %s20, %s34
      %s123 = sor.u32 %s121, %s122
      %p124 = scmp.eq.s32.totalorder %s123, 0
      %s126 = sadd.s32 %s125, 1
      %s127 = scalar_select %p124, %s125, %s126
      %p130 = pneg %p124
      %p131 = scmp.eq.s32.totalorder %s12, 8
      %p132 = por %p130, %p131
      %p133 = scmp.ne.s32.totalorder %s125, %s128
      %p134 = scmp.eq.s32.totalorder %s12, 0
      %p135 = por %p133, %p134
      %p136 = scmp.ne.s32.totalorder %s125, %s128
      %p137 = scmp.eq.s32.totalorder %s17, 8
      %p138 = por %p136, %p137
      %p139 = scmp.ne.s32.totalorder %s128, %s129
      %p140 = scmp.eq.s32.totalorder %s17, 0
      %p141 = por %p139, %p140
      %p142 = scmp.ne.s32.totalorder %s128, %s129
      %p143 = scmp.eq.s32.totalorder %s18, 8
      %p144 = por %p142, %p143
      %p146 = scmp.ne.s32.totalorder %s129, %s145
      %p147 = scmp.eq.s32.totalorder %s18, 0
      %p148 = por %p146, %p147
      %s149 = ssub.s32 %s19, %s38
      %s150 = ssub.s32 %s20, %s34
      %s151 = sor.u32 %s149, %s150
      %p152 = scmp.eq.s32.totalorder %s151, 0
      %s154 = sadd.s32 %s153, 1
      %s155 = scalar_select %p152, %s153, %s154
      %p158 = pneg %p152
      %p159 = scmp.eq.s32.totalorder %s12, 8
      %p160 = por %p158, %p159
      %p161 = scmp.ne.s32.totalorder %s153, %s156
      %p162 = scmp.eq.s32.totalorder %s12, 0
      %p163 = por %p161, %p162
      %p164 = scmp.ne.s32.totalorder %s153, %s156
      %p165 = scmp.eq.s32.totalorder %s17, 8
      %p166 = por %p164, %p165
      %p167 = scmp.ne.s32.totalorder %s156, %s157
      %p168 = scmp.eq.s32.totalorder %s17, 0
      %p169 = por %p167, %p168
      %p170 = scmp.ne.s32.totalorder %s156, %s157
      %p171 = scmp.eq.s32.totalorder %s18, 8
      %p172 = por %p170, %p171
      %p174 = scmp.ne.s32.totalorder %s157, %s173
      %p175 = scmp.eq.s32.totalorder %s18, 0
      %p176 = por %p174, %p175
      %s177 = ssub.s32 %s19, %s38
      %s178 = ssub.s32 %s20, %s34
      %s179 = sor.u32 %s177, %s178
      %p180 = scmp.eq.s32.totalorder %s179, 0
      %s182 = sadd.s32 %s181, 1
      %s183 = scalar_select %p180, %s181, %s182
      %p186 = pneg %p180
      %p187 = scmp.eq.s32.totalorder %s12, 8
      %p188 = por %p186, %p187
      %p189 = scmp.ne.s32.totalorder %s181, %s184
      %p190 = scmp.eq.s32.totalorder %s12, 0
      %p191 = por %p189, %p190
      %p192 = scmp.ne.s32.totalorder %s181, %s184
      %p193 = scmp.eq.s32.totalorder %s17, 8
      %p194 = por %p192, %p193
      %p195 = scmp.ne.s32.totalorder %s184, %s185
      %p196 = scmp.eq.s32.totalorder %s17, 0
      %p197 = por %p195, %p196
      %p198 = scmp.ne.s32.totalorder %s184, %s185
      %p199 = scmp.eq.s32.totalorder %s18, 8
      %p200 = por %p198, %p199
      %p202 = scmp.ne.s32.totalorder %s185, %s201
      %p203 = scmp.eq.s32.totalorder %s18, 0
      %p204 = por %p202, %p203
      %p205 = scmp.le.s32.totalorder 1, %s12
      %p206 = scmp.lt.s32.totalorder %s12, 10
      %p207 = pnand %p205, %p206
      %p208 = pneg %p207
      // Predicated region
      $region9: #{forward.27} parent=5 // pred_check
        _
      $region10: #{forward.27} parent=5 // pred_check_branch
        %210 = sbr.rel (%p207) target = $region12
      $region11: #{forward.27} parent=5 // pred_region
        %s211 = ssub.s32 %s12, 1
        // Predicated region
        $region13: #{forward.27} parent=11 // pred_check
          %p212 = pneg %p113
        $region14: #{forward.27} parent=11 // pred_check_branch
          %214 = sbr.rel (%p212) target = $region16
        $region15: #{forward.27} parent=11 // pred_region
          %s215 = smul.u32 4, %s23
          %p216 = scmp.lt.s32.totalorder %s215, 3
          %s217 = scalar_select %p216, %s215, 3
          %s218 = scalar_lea.vmem %s2, %s217
          %s219 = smul.u32 4, %s23
        $region16: #{forward.27} parent=11 // pred_fallthru
          _
      $region12: #{forward.27} parent=5 // pred_fallthru
        _
      %p220 = scmp.lt.s32.totalorder %s12, 9
      // Predicated region
      $region17: #{forward.27} parent=5 // pred_check
        %p221 = pneg %p220
      $region18: #{forward.27} parent=5 // pred_check_branch
        %223 = sbr.rel (%p221) target = $region20
      $region19: #{forward.27} parent=5 // pred_region
        // Predicated region
        $region21: #{forward.27} parent=19 // pred_check
          %p224 = pneg %p53
        $region22: #{forward.27} parent=19 // pred_check_branch
          %226 = sbr.rel (%p224) target = $region24
        $region23: #{forward.27} parent=19 // pred_region
          %s227 = sand.u32 %s43, 1
          %s228 = sand.u32 %s43, 1
          %s229 = smul.addr %s228, 16
          %s230 = scalar_lea.vmem [#allocation3], %s229
          %s231 = smul.u32 2, %s19
          %s232 = smul.u32 2, %s21
          %s233 = smul.addr %s231, 18
          %s234 = sadd.s32 %s232, %s233
          %s235 = smul.addr %s234, 4
          %s236 = scalar_lea.vmem %s0, %s235
          // Predicated region
          $region25: #{forward.27} parent=23 // pred_check
            _
          $region26: #{forward.27} parent=23 // pred_check_branch
            %238 = sbr.rel (0) target = $region28
          $region27: #{forward.27} parent=23 // pred_region
            // Predicated region
            $region29: #{forward.27} parent=27 // pred_check
              _
            $region30: #{forward.27} parent=27 // pred_check_branch
              %240 = sbr.rel (0) target = $region32
            $region31: #{forward.27} parent=27 // pred_region
              // Predicated region
              $region44: #{forward.27} parent=31 // pred_check
                _
              $region45: #{forward.27} parent=31 // pred_check_branch
                %258 = sbr.rel (0) target = $region47
              $region46: #{forward.27} parent=31 // pred_region
                loop: start=0, step=1, limit=1
                $region48: #{forward.27} parent=46 // loop_pre_header
                  _
                $region49: #{forward.27} parent=46 // loop_header
                  %s260 = sphi 0, %s264
                  %p261 = scmp.ge.s32.totalorder %s260, 1
                  %s265 = sphi %s236, %s236
                  %s266 = sphi %s230, %s230
                $region50: #{forward.27} parent=46 // loop_header_branch
                  %263 = sbr.rel (%p261) target = $region54
                $region51: #{forward.27} parent=46 // loop_body
                  %v267 = vld [vmem:[%s265] sm:$0xff]
                  %268 = vst [vmem:[%s266] sm:$0xff] %v267
                  %v269 = vld [vmem:[%s265 + $0x48] sm:$0xff]
                  %270 = vst [vmem:[%s266 + $0x8] sm:$0xff] %v269
                $region52: #{forward.27} parent=46 // loop_footer
                  %s264 = sadd.s32 1, %s260
                $region53: #{forward.27} parent=46 // loop_footer_branch
                  %259 = sbr.rel target = $region49
                $region54: #{forward.27} parent=46 // loop_exit
                  _
              $region47: #{forward.27} parent=31 // pred_fallthru
                _
              // Predicated region
              $region55: #{forward.27} parent=31 // pred_check
                _
              $region56: #{forward.27} parent=31 // pred_check_branch
                %272 = sbr.rel target = $region58
              $region57: #{forward.27} parent=31 // pred_region
                _
              $region58: #{forward.27} parent=31 // pred_fallthru
                _
            $region32: #{forward.27} parent=27 // pred_fallthru
              _
            // Predicated region
            $region33: #{forward.27} parent=27 // pred_check
              _
            $region34: #{forward.27} parent=27 // pred_check_branch
              %242 = sbr.rel target = $region36
            $region35: #{forward.27} parent=27 // pred_region
              %s244 = ssub.s32 256, 1
              loop: start=0, step=1, limit=1
              $region37: #{forward.27} parent=35 // loop_pre_header
                _
              $region38: #{forward.27} parent=35 // loop_header
                %s246 = sphi 0, %s250
                %p247 = scmp.ge.s32.totalorder %s246, 1
                %s251 = sphi %s236, %s236
                %s252 = sphi %s230, %s230
              $region39: #{forward.27} parent=35 // loop_header_branch
                %249 = sbr.rel (%p247) target = $region43
              $region40: #{forward.27} parent=35 // loop_body
                %v253 = vld [vmem:[%s251] sm:%s244]
                %254 = vst [vmem:[%s252] sm:%s244] %v253
                %v255 = vld [vmem:[%s251 + $0x48] sm:%s244]
                %256 = vst [vmem:[%s252 + $0x8] sm:%s244] %v255
              $region41: #{forward.27} parent=35 // loop_footer
                %s250 = sadd.s32 1, %s246
              $region42: #{forward.27} parent=35 // loop_footer_branch
                %245 = sbr.rel target = $region38
              $region43: #{forward.27} parent=35 // loop_exit
                _
            $region36: #{forward.27} parent=27 // pred_fallthru
              _
          $region28: #{forward.27} parent=23 // pred_fallthru
            _
          %273 = vnop
        $region24: #{forward.27} parent=19 // pred_fallthru
          _
        // Predicated region
        $region59: #{forward.27} parent=19 // pred_check
          %p274 = pneg %p81
        $region60: #{forward.27} parent=19 // pred_check_branch
          %276 = sbr.rel (%p274) target = $region62
        $region61: #{forward.27} parent=19 // pred_region
          %s277 = smul.u32 32, %s21
          %s278 = smul.u32 4, %s20
          %p279 = scmp.lt.s32.totalorder %s277, 287
          %s280 = scalar_select %p279, %s277, 287
          %p281 = scmp.lt.s32.totalorder %s278, 3
          %s282 = scalar_select %p281, %s278, 3
          %s283 = smul.addr %s280, 4
          %s284 = sadd.s32 %s282, %s283
          %s285 = smul.addr %s284, 4
          %s286 = scalar_lea.vmem %s1, %s285
          %s287 = smul.u32 32, %s21
          %s288 = smul.u32 4, %s20
        $region62: #{forward.27} parent=19 // pred_fallthru
          _
      $region20: #{forward.27} parent=5 // pred_fallthru
        _
      %p289 = scmp.le.s32.totalorder 1, %s12
      %p290 = scmp.lt.s32.totalorder %s12, 10
      %p291 = pnand %p289, %p290
      %p292 = pneg %p291
      // Predicated region
      $region63: #{forward.27} parent=5 // pred_check
        _
      $region64: #{forward.27} parent=5 // pred_check_branch
        %294 = sbr.rel (%p291) target = $region66
      $region65: #{forward.27} parent=5 // pred_region
        %s295 = ssub.s32 %s12, 1
        %s296 = sand.u32 %s46, 1
        %s297 = sand.u32 %s46, 1
        %s298 = smul.addr %s297, 16
        %s299 = scalar_lea.vmem [#allocation3], %s298
        // Predicated region
        $region67: #{forward.27} parent=65 // pred_check
          %p300 = pneg %p59
        $region68: #{forward.27} parent=65 // pred_check_branch
          %302 = sbr.rel (%p300) target = $region70
        $region69: #{forward.27} parent=65 // pred_region
          _
        $region70: #{forward.27} parent=65 // pred_fallthru
          _
        %s303 = sand.u32 %s46, 1
        %s304 = sand.u32 %s46, 1
        %s305 = smul.addr %s304, 16
        %s306 = scalar_lea.vmem [#allocation3], %s305
        %p307 = pneg %p59
        %p308 = pneg %p56
        %s309 = smul.u32 32, %s24
        %s310 = smul.u32 4, %s23
        %p311 = scmp.lt.s32.totalorder %s309, 287
        %s312 = scalar_select %p311, %s309, 287
        %p313 = scmp.lt.s32.totalorder %s310, 3
        %s314 = scalar_select %p313, %s310, 3
        %s315 = smul.addr %s312, 4
        %s316 = sadd.s32 %s314, %s315
        %s317 = smul.addr %s316, 4
        %s318 = scalar_lea.vmem %s1, %s317
        %p319 = pneg %p87
        %p320 = pneg %p84
        %s321 = smul.u32 4, %s23
        %p322 = scmp.lt.s32.totalorder %s321, 3
        %s323 = scalar_select %p322, %s321, 3
        %s324 = scalar_lea.vmem %s2, %s323
        %p325 = pneg %p113
        %p326 = pneg %p110
        %p327 = pneg %p141
        %p328 = pneg %p138
        %s329 = smul.u32 2, %s22
        %s330 = smul.u32 4, %s23
        %p331 = scmp.lt.s32.totalorder %s329, 1
        %s332 = scalar_select %p331, %s329, 1
        %p333 = scmp.lt.s32.totalorder %s330, 3
        %s334 = scalar_select %p333, %s330, 3
        %s335 = smul.addr %s332, 4
        %s336 = sadd.s32 %s334, %s335
        %s337 = smul.addr %s336, 4
        %s338 = scalar_lea.vmem %s3, %s337
        %p339 = pneg %p169
        %p340 = pneg %p166
        %s341 = smul.u32 4, %s23
        %p342 = scmp.lt.s32.totalorder %s22, 0
        %s343 = scalar_select %p342, %s22, 0
        %p344 = scmp.lt.s32.totalorder %s341, 3
        %s345 = scalar_select %p344, %s341, 3
        %s346 = smul.addr %s343, 4
        %s347 = sadd.s32 %s345, %s346
        %s348 = smul.addr %s347, 8
        %s349 = scalar_lea.vmem %s4, %s348
        %p350 = pneg %p197
        %p351 = pneg %p194
        %s352 = smul.u32 4, %s23
        %p353 = scmp.lt.s32.totalorder %s22, 0
        %s354 = scalar_select %p353, %s22, 0
        %p355 = scmp.lt.s32.totalorder %s352, 3
        %s356 = scalar_select %p355, %s352, 3
        %s357 = smul.addr %s354, 4
        %s358 = sadd.s32 %s356, %s357
        %s359 = smul.addr %s358, 8
        %s360 = scalar_lea.vmem %s5, %s359
        %s361 = smul.u32 2, %s22
        %s362 = smul.u32 2, %s24
        %s363 = smul.u32 32, %s24
        %s364 = smul.u32 4, %s23
        %p365 = scmp.lt.s32.totalorder %s363, 287
        %s366 = scalar_select %p365, %s363, 287
        %p367 = scmp.lt.s32.totalorder %s364, 3
        %s368 = scalar_select %p367, %s364, 3
        %s369 = smul.addr %s366, 4
        %s370 = sadd.s32 %s368, %s369
        %s371 = smul.addr %s370, 4
        %s372 = scalar_lea.vmem %s1, %s371
        %s373 = smul.u32 32, %s24
        %s374 = smul.u32 4, %s23
        %s375 = smul.u32 4, %s23
        %p376 = scmp.lt.s32.totalorder %s375, 3
        %s377 = scalar_select %p376, %s375, 3
        %s378 = scalar_lea.vmem %s2, %s377
        %s379 = smul.u32 4, %s23
        %s380 = smul.u32 2, %s22
        %s381 = smul.u32 4, %s23
        %p382 = scmp.lt.s32.totalorder %s380, 1
        %s383 = scalar_select %p382, %s380, 1
        %p384 = scmp.lt.s32.totalorder %s381, 3
        %s385 = scalar_select %p384, %s381, 3
        %s386 = smul.addr %s383, 4
        %s387 = sadd.s32 %s385, %s386
        %s388 = smul.addr %s387, 4
        %s389 = scalar_lea.vmem %s3, %s388
        %s390 = smul.u32 2, %s22
        %s391 = smul.u32 4, %s23
        %s392 = smul.u32 4, %s23
        %p393 = scmp.lt.s32.totalorder %s22, 0
        %s394 = scalar_select %p393, %s22, 0
        %p395 = scmp.lt.s32.totalorder %s392, 3
        %s396 = scalar_select %p395, %s392, 3
        %s397 = smul.addr %s394, 4
        %s398 = sadd.s32 %s396, %s397
        %s399 = smul.addr %s398, 8
        %s400 = scalar_lea.vmem %s4, %s399
        %s401 = smul.u32 4, %s23
        %s402 = smul.u32 4, %s23
        %p403 = scmp.lt.s32.totalorder %s22, 0
        %s404 = scalar_select %p403, %s22, 0
        %p405 = scmp.lt.s32.totalorder %s402, 3
        %s406 = scalar_select %p405, %s402, 3
        %s407 = smul.addr %s404, 4
        %s408 = sadd.s32 %s406, %s407
        %s409 = smul.addr %s408, 8
        %s410 = scalar_lea.vmem %s5, %s409
        %s411 = smul.u32 4, %s23
        %s412 = smul.u32 %s22, 16
        %v413 = vlaneseq
        %v414 = vshrl.u32 %v413, 7
        %v415 = vadd.s32 %v414, 8
        %v416 = vstv %s412
        %v417 = vadd.s32 %v416, %v414
        %v418 = vadd.s32 %v416, %v415
        %p419 = scmp.eq.s32.totalorder %s24, 0
        // Predicated region
        $region71: #{forward.27} parent=65 // pred_check
          %p420 = pneg %p419
        $region72: #{forward.27} parent=65 // pred_check_branch
          %422 = sbr.rel (%p420) target = $region74
        $region73: #{forward.27} parent=65 // pred_region
          %423 = vst [vmem:[#allocation2] sm:$0xff] 0.0
          %424 = vst [vmem:[#allocation2 + $0x8] sm:$0xff] 0.0
          %425 = vst [vmem:[#allocation2 + $0x10] sm:$0xff] 0.0
          %426 = vst [vmem:[#allocation2 + $0x18] sm:$0xff] 0.0
          %427 = vst [vmem:[#allocation2 + $0x20] sm:$0xff] 0.0
          %428 = vst [vmem:[#allocation2 + $0x28] sm:$0xff] 0.0
          %429 = vst [vmem:[#allocation2 + $0x30] sm:$0xff] 0.0
          %430 = vst [vmem:[#allocation2 + $0x38] sm:$0xff] 0.0
        $region74: #{forward.27} parent=65 // pred_fallthru
          _
        %v431 = vld [vmem:[#allocation2] sm:$0xff]
        %v432 = vld [vmem:[#allocation2 + $0x8] sm:$0xff]
        %v433 = vld [vmem:[#allocation2 + $0x10] sm:$0xff]
        %v434 = vld [vmem:[#allocation2 + $0x18] sm:$0xff]
        %v435 = vld [vmem:[#allocation2 + $0x20] sm:$0xff]
        %v436 = vld [vmem:[#allocation2 + $0x28] sm:$0xff]
        %v437 = vld [vmem:[#allocation2 + $0x30] sm:$0xff]
        %v438 = vld [vmem:[#allocation2 + $0x38] sm:$0xff]
        %v439 = vld [vmem:[%s299] sm:$0xff]
        %v440 = vld [vmem:[%s299 + $0x8] sm:$0xff]
        %v441 = vld [vmem:[%s372] sm:$0xff]
        %v442 = vld [vmem:[%s372 + $0x8] sm:$0xff]
        %v443 = vld [vmem:[%s372 + $0x10] sm:$0xff]
        %v444 = vld [vmem:[%s372 + $0x18] sm:$0xff]
        %v445 = vld [vmem:[%s372 + $0x20] sm:$0xff]
        %v446 = vld [vmem:[%s372 + $0x28] sm:$0xff]
        %v447 = vld [vmem:[%s372 + $0x30] sm:$0xff]
        %v448 = vld [vmem:[%s372 + $0x38] sm:$0xff]
        %v449 = vld [vmem:[%s372 + $0x40] sm:$0xff]
        %v450 = vld [vmem:[%s372 + $0x48] sm:$0xff]
        %v451 = vld [vmem:[%s372 + $0x50] sm:$0xff]
        %v452 = vld [vmem:[%s372 + $0x58] sm:$0xff]
        %v453 = vld [vmem:[%s372 + $0x60] sm:$0xff]
        %v454 = vld [vmem:[%s372 + $0x68] sm:$0xff]
        %v455 = vld [vmem:[%s372 + $0x70] sm:$0xff]
        %v456 = vld [vmem:[%s372 + $0x78] sm:$0xff]
        %v457 = vld [vmem:[%s372 + $0x80] sm:$0xff]
        %v458 = vld [vmem:[%s372 + $0x88] sm:$0xff]
        %v459 = vld [vmem:[%s372 + $0x90] sm:$0xff]
        %v460 = vld [vmem:[%s372 + $0x98] sm:$0xff]
        %v461 = vld [vmem:[%s372 + $0xa0] sm:$0xff]
        %v462 = vld [vmem:[%s372 + $0xa8] sm:$0xff]
        %v463 = vld [vmem:[%s372 + $0xb0] sm:$0xff]
        %v464 = vld [vmem:[%s372 + $0xb8] sm:$0xff]
        %v465 = vld [vmem:[%s372 + $0xc0] sm:$0xff]
        %v466 = vld [vmem:[%s372 + $0xc8] sm:$0xff]
        %v467 = vld [vmem:[%s372 + $0xd0] sm:$0xff]
        %v468 = vld [vmem:[%s372 + $0xd8] sm:$0xff]
        %v469 = vld [vmem:[%s372 + $0xe0] sm:$0xff]
        %v470 = vld [vmem:[%s372 + $0xe8] sm:$0xff]
        %v471 = vld [vmem:[%s372 + $0xf0] sm:$0xff]
        %v472 = vld [vmem:[%s372 + $0xf8] sm:$0xff]
        %v473 = vld [vmem:[%s372 + $0x100] sm:$0xff]
        %v474 = vld [vmem:[%s372 + $0x108] sm:$0xff]
        %v475 = vld [vmem:[%s372 + $0x110] sm:$0xff]
        %v476 = vld [vmem:[%s372 + $0x118] sm:$0xff]
        %v477 = vld [vmem:[%s372 + $0x120] sm:$0xff]
        %v478 = vld [vmem:[%s372 + $0x128] sm:$0xff]
        %v479 = vld [vmem:[%s372 + $0x130] sm:$0xff]
        %v480 = vld [vmem:[%s372 + $0x138] sm:$0xff]
        %v481 = vld [vmem:[%s372 + $0x140] sm:$0xff]
        %v482 = vld [vmem:[%s372 + $0x148] sm:$0xff]
        %v483 = vld [vmem:[%s372 + $0x150] sm:$0xff]
        %v484 = vld [vmem:[%s372 + $0x158] sm:$0xff]
        %v485 = vld [vmem:[%s372 + $0x160] sm:$0xff]
        %v486 = vld [vmem:[%s372 + $0x168] sm:$0xff]
        %v487 = vld [vmem:[%s372 + $0x170] sm:$0xff]
        %v488 = vld [vmem:[%s372 + $0x178] sm:$0xff]
        %v489 = vld [vmem:[%s372 + $0x180] sm:$0xff]
        %v490 = vld [vmem:[%s372 + $0x188] sm:$0xff]
        %v491 = vld [vmem:[%s372 + $0x190] sm:$0xff]
        %v492 = vld [vmem:[%s372 + $0x198] sm:$0xff]
        %v493 = vld [vmem:[%s372 + $0x1a0] sm:$0xff]
        %v494 = vld [vmem:[%s372 + $0x1a8] sm:$0xff]
        %v495 = vld [vmem:[%s372 + $0x1b0] sm:$0xff]
        %v496 = vld [vmem:[%s372 + $0x1b8] sm:$0xff]
        %v497 = vld [vmem:[%s372 + $0x1c0] sm:$0xff]
        %v498 = vld [vmem:[%s372 + $0x1c8] sm:$0xff]
        %v499 = vld [vmem:[%s372 + $0x1d0] sm:$0xff]
        %v500 = vld [vmem:[%s372 + $0x1d8] sm:$0xff]
        %v501 = vld [vmem:[%s372 + $0x1e0] sm:$0xff]
        %v502 = vld [vmem:[%s372 + $0x1e8] sm:$0xff]
        %v503 = vld [vmem:[%s372 + $0x1f0] sm:$0xff]
        %v504 = vld [vmem:[%s372 + $0x1f8] sm:$0xff]
        %v507 = vunpack.c.l.b16 %v439
        %v508 = vunpack.c.h.b16 %v439
        %v509 = vunpack.c.l.b16 %v440
        %v510 = vunpack.c.h.b16 %v440
        %v511 = vpack.c.b16 %v509, %v507
        %v512 = vpack.c.b16 %v510, %v508
        %v579 = vunpack.c.l.b16 %v441
        %v580 = vunpack.c.h.b16 %v441
        %v581 = vunpack.c.l.b16 %v442
        %v582 = vunpack.c.h.b16 %v442
        %v583 = vunpack.c.l.b16 %v443
        %v584 = vunpack.c.h.b16 %v443
        %v585 = vunpack.c.l.b16 %v444
        %v586 = vunpack.c.h.b16 %v444
        %v587 = vunpack.c.l.b16 %v445
        %v588 = vunpack.c.h.b16 %v445
        %v589 = vunpack.c.l.b16 %v446
        %v590 = vunpack.c.h.b16 %v446
        %v591 = vunpack.c.l.b16 %v447
        %v592 = vunpack.c.h.b16 %v447
        %v593 = vunpack.c.l.b16 %v448
        %v594 = vunpack.c.h.b16 %v448
        %v595 = vunpack.c.l.b16 %v449
        %v596 = vunpack.c.h.b16 %v449
        %v597 = vunpack.c.l.b16 %v450
        %v598 = vunpack.c.h.b16 %v450
        %v599 = vunpack.c.l.b16 %v451
        %v600 = vunpack.c.h.b16 %v451
        %v601 = vunpack.c.l.b16 %v452
        %v602 = vunpack.c.h.b16 %v452
        %v603 = vunpack.c.l.b16 %v453
        %v604 = vunpack.c.h.b16 %v453
        %v605 = vunpack.c.l.b16 %v454
        %v606 = vunpack.c.h.b16 %v454
        %v607 = vunpack.c.l.b16 %v455
        %v608 = vunpack.c.h.b16 %v455
        %v609 = vunpack.c.l.b16 %v456
        %v610 = vunpack.c.h.b16 %v456
        %v611 = vunpack.c.l.b16 %v457
        %v612 = vunpack.c.h.b16 %v457
        %v613 = vunpack.c.l.b16 %v458
        %v614 = vunpack.c.h.b16 %v458
        %v615 = vunpack.c.l.b16 %v459
        %v616 = vunpack.c.h.b16 %v459
        %v617 = vunpack.c.l.b16 %v460
        %v618 = vunpack.c.h.b16 %v460
        %v619 = vunpack.c.l.b16 %v461
        %v620 = vunpack.c.h.b16 %v461
        %v621 = vunpack.c.l.b16 %v462
        %v622 = vunpack.c.h.b16 %v462
        %v623 = vunpack.c.l.b16 %v463
        %v624 = vunpack.c.h.b16 %v463
        %v625 = vunpack.c.l.b16 %v464
        %v626 = vunpack.c.h.b16 %v464
        %v627 = vunpack.c.l.b16 %v465
        %v628 = vunpack.c.h.b16 %v465
        %v629 = vunpack.c.l.b16 %v466
        %v630 = vunpack.c.h.b16 %v466
        %v631 = vunpack.c.l.b16 %v467
        %v632 = vunpack.c.h.b16 %v467
        %v633 = vunpack.c.l.b16 %v468
        %v634 = vunpack.c.h.b16 %v468
        %v635 = vunpack.c.l.b16 %v469
        %v636 = vunpack.c.h.b16 %v469
        %v637 = vunpack.c.l.b16 %v470
        %v638 = vunpack.c.h.b16 %v470
        %v639 = vunpack.c.l.b16 %v471
        %v640 = vunpack.c.h.b16 %v471
        %v641 = vunpack.c.l.b16 %v472
        %v642 = vunpack.c.h.b16 %v472
        %v643 = vunpack.c.l.b16 %v473
        %v644 = vunpack.c.h.b16 %v473
        %v645 = vunpack.c.l.b16 %v474
        %v646 = vunpack.c.h.b16 %v474
        %v647 = vunpack.c.l.b16 %v475
        %v648 = vunpack.c.h.b16 %v475
        %v649 = vunpack.c.l.b16 %v476
        %v650 = vunpack.c.h.b16 %v476
        %v651 = vunpack.c.l.b16 %v477
        %v652 = vunpack.c.h.b16 %v477
        %v653 = vunpack.c.l.b16 %v478
        %v654 = vunpack.c.h.b16 %v478
        %v655 = vunpack.c.l.b16 %v479
        %v656 = vunpack.c.h.b16 %v479
        %v657 = vunpack.c.l.b16 %v480
        %v658 = vunpack.c.h.b16 %v480
        %v659 = vunpack.c.l.b16 %v481
        %v660 = vunpack.c.h.b16 %v481
        %v661 = vunpack.c.l.b16 %v482
        %v662 = vunpack.c.h.b16 %v482
        %v663 = vunpack.c.l.b16 %v483
        %v664 = vunpack.c.h.b16 %v483
        %v665 = vunpack.c.l.b16 %v484
        %v666 = vunpack.c.h.b16 %v484
        %v667 = vunpack.c.l.b16 %v485
        %v668 = vunpack.c.h.b16 %v485
        %v669 = vunpack.c.l.b16 %v486
        %v670 = vunpack.c.h.b16 %v486
        %v671 = vunpack.c.l.b16 %v487
        %v672 = vunpack.c.h.b16 %v487
        %v673 = vunpack.c.l.b16 %v488
        %v674 = vunpack.c.h.b16 %v488
        %v675 = vunpack.c.l.b16 %v489
        %v676 = vunpack.c.h.b16 %v489
        %v677 = vunpack.c.l.b16 %v490
        %v678 = vunpack.c.h.b16 %v490
        %v679 = vunpack.c.l.b16 %v491
        %v680 = vunpack.c.h.b16 %v491
        %v681 = vunpack.c.l.b16 %v492
        %v682 = vunpack.c.h.b16 %v492
        %v683 = vunpack.c.l.b16 %v493
        %v684 = vunpack.c.h.b16 %v493
        %v685 = vunpack.c.l.b16 %v494
        %v686 = vunpack.c.h.b16 %v494
        %v687 = vunpack.c.l.b16 %v495
        %v688 = vunpack.c.h.b16 %v495
        %v689 = vunpack.c.l.b16 %v496
        %v690 = vunpack.c.h.b16 %v496
        %v691 = vunpack.c.l.b16 %v497
        %v692 = vunpack.c.h.b16 %v497
        %v693 = vunpack.c.l.b16 %v498
        %v694 = vunpack.c.h.b16 %v498
        %v695 = vunpack.c.l.b16 %v499
        %v696 = vunpack.c.h.b16 %v499
        %v697 = vunpack.c.l.b16 %v500
        %v698 = vunpack.c.h.b16 %v500
        %v699 = vunpack.c.l.b16 %v501
        %v700 = vunpack.c.h.b16 %v501
        %v701 = vunpack.c.l.b16 %v502
        %v702 = vunpack.c.h.b16 %v502
        %v703 = vunpack.c.l.b16 %v503
        %v704 = vunpack.c.h.b16 %v503
        %v705 = vunpack.c.l.b16 %v504
        %v706 = vunpack.c.h.b16 %v504
        %v707 = vpack.c.b16 %v583, %v579
        %v708 = vpack.c.b16 %v584, %v580
        %v709 = vpack.c.b16 %v585, %v581
        %v710 = vpack.c.b16 %v586, %v582
        %v711 = vpack.c.b16 %v591, %v587
        %v712 = vpack.c.b16 %v592, %v588
        %v713 = vpack.c.b16 %v593, %v589
        %v714 = vpack.c.b16 %v594, %v590
        %v715 = vpack.c.b16 %v599, %v595
        %v716 = vpack.c.b16 %v600, %v596
        %v717 = vpack.c.b16 %v601, %v597
        %v718 = vpack.c.b16 %v602, %v598
        %v719 = vpack.c.b16 %v607, %v603
        %v720 = vpack.c.b16 %v608, %v604
        %v721 = vpack.c.b16 %v609, %v605
        %v722 = vpack.c.b16 %v610, %v606
        %v723 = vpack.c.b16 %v615, %v611
        %v724 = vpack.c.b16 %v616, %v612
        %v725 = vpack.c.b16 %v617, %v613
        %v726 = vpack.c.b16 %v618, %v614
        %v727 = vpack.c.b16 %v623, %v619
        %v728 = vpack.c.b16 %v624, %v620
        %v729 = vpack.c.b16 %v625, %v621
        %v730 = vpack.c.b16 %v626, %v622
        %v731 = vpack.c.b16 %v631, %v627
        %v732 = vpack.c.b16 %v632, %v628
        %v733 = vpack.c.b16 %v633, %v629
        %v734 = vpack.c.b16 %v634, %v630
        %v735 = vpack.c.b16 %v639, %v635
        %v736 = vpack.c.b16 %v640, %v636
        %v737 = vpack.c.b16 %v641, %v637
        %v738 = vpack.c.b16 %v642, %v638
        %v739 = vpack.c.b16 %v647, %v643
        %v740 = vpack.c.b16 %v648, %v644
        %v741 = vpack.c.b16 %v649, %v645
        %v742 = vpack.c.b16 %v650, %v646
        %v743 = vpack.c.b16 %v655, %v651
        %v744 = vpack.c.b16 %v656, %v652
        %v745 = vpack.c.b16 %v657, %v653
        %v746 = vpack.c.b16 %v658, %v654
        %v747 = vpack.c.b16 %v663, %v659
        %v748 = vpack.c.b16 %v664, %v660
        %v749 = vpack.c.b16 %v665, %v661
        %v750 = vpack.c.b16 %v666, %v662
        %v751 = vpack.c.b16 %v671, %v667
        %v752 = vpack.c.b16 %v672, %v668
        %v753 = vpack.c.b16 %v673, %v669
        %v754 = vpack.c.b16 %v674, %v670
        %v755 = vpack.c.b16 %v679, %v675
        %v756 = vpack.c.b16 %v680, %v676
        %v757 = vpack.c.b16 %v681, %v677
        %v758 = vpack.c.b16 %v682, %v678
        %v759 = vpack.c.b16 %v687, %v683
        %v760 = vpack.c.b16 %v688, %v684
        %v761 = vpack.c.b16 %v689, %v685
        %v762 = vpack.c.b16 %v690, %v686
        %v763 = vpack.c.b16 %v695, %v691
        %v764 = vpack.c.b16 %v696, %v692
        %v765 = vpack.c.b16 %v697, %v693
        %v766 = vpack.c.b16 %v698, %v694
        %v767 = vpack.c.b16 %v703, %v699
        %v768 = vpack.c.b16 %v704, %v700
        %v769 = vpack.c.b16 %v705, %v701
        %v770 = vpack.c.b16 %v706, %v702
        %835 = vmatprep.subr.bf16.mxu0 %v736
        %836 = vmatpush1.bf16.msra.mxu0 %v735
        %837 = vmatprep.subr.bf16.mxu0 %v732
        %838 = vmatpush1.bf16.msra.mxu0 %v731
        %839 = vmatprep.subr.bf16.mxu0 %v728
        %840 = vmatpush1.bf16.msra.mxu0 %v727
        %841 = vmatprep.subr.bf16.mxu0 %v724
        %842 = vmatpush1.bf16.msra.mxu0 %v723
        %843 = vmatprep.subr.bf16.mxu0 %v720
        %844 = vmatpush1.bf16.msra.mxu0 %v719
        %845 = vmatprep.subr.bf16.mxu0 %v716
        %846 = vmatpush1.bf16.msra.mxu0 %v715
        %847 = vmatprep.subr.bf16.mxu0 %v712
        %848 = vmatpush1.bf16.msra.mxu0 %v711
        %849 = vmatprep.subr.bf16.mxu0 %v708
        %850 = vmatpush1.bf16.msra.mxu0 %v707
        %851 = vmatprep.subr.bf16.mxu0 %v768
        %852 = vmatpush2.bf16.msra.mxu0 %v767
        %853 = vmatprep.subr.bf16.mxu0 %v764
        %854 = vmatpush2.bf16.msra.mxu0 %v763
        %855 = vmatprep.subr.bf16.mxu0 %v760
        %856 = vmatpush2.bf16.msra.mxu0 %v759
        %857 = vmatprep.subr.bf16.mxu0 %v756
        %858 = vmatpush2.bf16.msra.mxu0 %v755
        %859 = vmatprep.subr.bf16.mxu0 %v752
        %860 = vmatpush2.bf16.msra.mxu0 %v751
        %861 = vmatprep.subr.bf16.mxu0 %v748
        %862 = vmatpush2.bf16.msra.mxu0 %v747
        %863 = vmatprep.subr.bf16.mxu0 %v744
        %864 = vmatpush2.bf16.msra.mxu0 %v743
        %865 = vmatprep.subr.bf16.mxu0 %v740
        %866 = vmatpush2.bf16.msra.mxu0 %v739
        %867 = vmatprep.mubr.bf16.mxu0 %v512
        %868 = vmatmul.mubr.bf16.gmra.mxu0 %v511
        %v869 = vpop.f32.mrf.mxu0
        %v870 = vadd.f32 0.0, %v869
        %v871 = vpop.f32.mrf.mxu0
        %v872 = vadd.f32 0.0, %v871
        %v873 = vpop.f32.mrf.mxu0
        %v874 = vadd.f32 0.0, %v873
        %v875 = vpop.f32.mrf.mxu0
        %v876 = vadd.f32 0.0, %v875
        %877 = vdwg.mxu0
        %878 = vmatprep.subr.bf16.mxu0 %v738
        %879 = vmatpush1.bf16.msra.mxu0 %v737
        %880 = vmatprep.subr.bf16.mxu0 %v734
        %881 = vmatpush1.bf16.msra.mxu0 %v733
        %882 = vmatprep.subr.bf16.mxu0 %v730
        %883 = vmatpush1.bf16.msra.mxu0 %v729
        %884 = vmatprep.subr.bf16.mxu0 %v726
        %885 = vmatpush1.bf16.msra.mxu0 %v725
        %886 = vmatprep.subr.bf16.mxu0 %v722
        %887 = vmatpush1.bf16.msra.mxu0 %v721
        %888 = vmatprep.subr.bf16.mxu0 %v718
        %889 = vmatpush1.bf16.msra.mxu0 %v717
        %890 = vmatprep.subr.bf16.mxu0 %v714
        %891 = vmatpush1.bf16.msra.mxu0 %v713
        %892 = vmatprep.subr.bf16.mxu0 %v710
        %893 = vmatpush1.bf16.msra.mxu0 %v709
        %894 = vmatprep.subr.bf16.mxu0 %v770
        %895 = vmatpush2.bf16.msra.mxu0 %v769
        %896 = vmatprep.subr.bf16.mxu0 %v766
        %897 = vmatpush2.bf16.msra.mxu0 %v765
        %898 = vmatprep.subr.bf16.mxu0 %v762
        %899 = vmatpush2.bf16.msra.mxu0 %v761
        %900 = vmatprep.subr.bf16.mxu0 %v758
        %901 = vmatpush2.bf16.msra.mxu0 %v757
        %902 = vmatprep.subr.bf16.mxu0 %v754
        %903 = vmatpush2.bf16.msra.mxu0 %v753
        %904 = vmatprep.subr.bf16.mxu0 %v750
        %905 = vmatpush2.bf16.msra.mxu0 %v749
        %906 = vmatprep.subr.bf16.mxu0 %v746
        %907 = vmatpush2.bf16.msra.mxu0 %v745
        %908 = vmatprep.subr.bf16.mxu0 %v742
        %909 = vmatpush2.bf16.msra.mxu0 %v741
        %910 = vmatprep.mubr.bf16.mxu0 %v512
        %911 = vmatmul.mubr.bf16.gmra.mxu0 %v511
        %v912 = vpop.f32.mrf.mxu0
        %v913 = vadd.f32 0.0, %v912
        %v914 = vpop.f32.mrf.mxu0
        %v915 = vadd.f32 0.0, %v914
        %v916 = vpop.f32.mrf.mxu0
        %v917 = vadd.f32 0.0, %v916
        %v918 = vpop.f32.mrf.mxu0
        %v919 = vadd.f32 0.0, %v918
        %920 = vdwg.mxu0
        %v921 = vadd.f32 %v431, %v870
        %v922 = vadd.f32 %v432, %v872
        %v923 = vadd.f32 %v433, %v913
        %v924 = vadd.f32 %v434, %v915
        %v925 = vadd.f32 %v435, %v874
        %v926 = vadd.f32 %v436, %v876
        %v927 = vadd.f32 %v437, %v917
        %v928 = vadd.f32 %v438, %v919
        %929 = vst [vmem:[#allocation2] sm:$0xff] %v921
        %930 = vst [vmem:[#allocation2 + $0x8] sm:$0xff] %v922
        %931 = vst [vmem:[#allocation2 + $0x10] sm:$0xff] %v923
        %932 = vst [vmem:[#allocation2 + $0x18] sm:$0xff] %v924
        %933 = vst [vmem:[#allocation2 + $0x20] sm:$0xff] %v925
        %934 = vst [vmem:[#allocation2 + $0x28] sm:$0xff] %v926
        %935 = vst [vmem:[#allocation2 + $0x30] sm:$0xff] %v927
        %936 = vst [vmem:[#allocation2 + $0x38] sm:$0xff] %v928
        %p937 = scmp.eq.s32.totalorder %s24, 8
        // Predicated region
        $region75: #{forward.27} parent=65 // pred_check
          %p938 = pneg %p937
        $region76: #{forward.27} parent=65 // pred_check_branch
          %940 = sbr.rel (%p938) target = $region78
        $region77: #{forward.27} parent=65 // pred_region
          %v941 = vld [vmem:[#allocation2] sm:$0xff]
          %v942 = vld [vmem:[#allocation2 + $0x8] sm:$0xff]
          %v943 = vld [vmem:[#allocation2 + $0x10] sm:$0xff]
          %v944 = vld [vmem:[#allocation2 + $0x18] sm:$0xff]
          %v945 = vld [vmem:[#allocation2 + $0x20] sm:$0xff]
          %v946 = vld [vmem:[#allocation2 + $0x28] sm:$0xff]
          %v947 = vld [vmem:[#allocation2 + $0x30] sm:$0xff]
          %v948 = vld [vmem:[#allocation2 + $0x38] sm:$0xff]
          %v949 = vld [vmem:[%s378] sm:$0xf]
          %v951 = vlaneseq
          %v952 = vshrl.u32 %v951, 7
          %v953 = vsub.s32 0, %v952
          %v954 = vrot.slane %v949, %v953
          %v955 = vlaneseq
          %v956 = vshrl.u32 %v955, 7
          %v957 = vsub.s32 1, %v956
          %v958 = vrot.slane %v949, %v957
          %v959 = vlaneseq
          %v960 = vshrl.u32 %v959, 7
          %v961 = vsub.s32 2, %v960
          %v962 = vrot.slane %v949, %v961
          %v963 = vlaneseq
          %v964 = vshrl.u32 %v963, 7
          %v965 = vsub.s32 3, %v964
          %v966 = vrot.slane %v949, %v965
          %v971 = vadd.f32 %v941, %v954
          %v972 = vadd.f32 %v942, %v958
          %v973 = vadd.f32 %v943, %v962
          %v974 = vadd.f32 %v944, %v966
          %v975 = vadd.f32 %v945, %v954
          %v976 = vadd.f32 %v946, %v958
          %v977 = vadd.f32 %v947, %v962
          %v978 = vadd.f32 %v948, %v966
          %v979 = vpack.c.bf16 %v975, %v971
          %v980 = vpack.c.bf16 %v976, %v972
          %v981 = vpack.c.bf16 %v977, %v973
          %v982 = vpack.c.bf16 %v978, %v974
          %v987 = vunpack.c.l.b16 %v979
          %v988 = vunpack.c.l.b16 %v980
          %v989 = vunpack.c.l.b16 %v981
          %v990 = vunpack.c.l.b16 %v982
          %v991 = vunpack.c.h.b16 %v979
          %v992 = vunpack.c.h.b16 %v980
          %v993 = vunpack.c.h.b16 %v981
          %v994 = vunpack.c.h.b16 %v982
          %v995 = vpack.c.b16 %v988, %v987
          %v996 = vpack.c.b16 %v990, %v989
          %v997 = vpack.c.b16 %v992, %v991
          %v998 = vpack.c.b16 %v994, %v993
          %1003 = vst [vmem:[%s389] sm:$0xff] %v995
          %1004 = vst [vmem:[%s389 + $0x8] sm:$0xff] %v996
          %1005 = vst [vmem:[%s389 + $0x10] sm:$0xff] %v997
          %1006 = vst [vmem:[%s389 + $0x18] sm:$0xff] %v998
          %vm1007 = vcmp.lt.s32.totalorder %v417, 8
          %vm1008 = vcmp.lt.s32.totalorder %v418, 8
          %v1009 = vsel %vm1007, 1, 0
          %v1010 = vsel %vm1008, 1, 0
          %vm1011 = vcmp.eq.s32.totalorder %v1009, 1
          %vm1012 = vcmp.eq.s32.totalorder %v1010, 1
          %v1013 = vsel %vm1011, %v971, 0.0
          %v1014 = vsel %vm1011, %v972, 0.0
          %v1015 = vsel %vm1011, %v973, 0.0
          %v1016 = vsel %vm1011, %v974, 0.0
          %v1017 = vsel %vm1012, %v975, 0.0
          %v1018 = vsel %vm1012, %v976, 0.0
          %v1019 = vsel %vm1012, %v977, 0.0
          %v1020 = vsel %vm1012, %v978, 0.0
          %v1021 = vadd.f32 %v1013, %v1017
          %v1022 = vrot.slane %v1021, 4
          %v1023 = vadd.f32 %v1021, %v1022
          %v1024 = vrot.slane %v1023, 2
          %v1025 = vadd.f32 %v1023, %v1024
          %v1026 = vrot.slane %v1025, 1
          %v1027 = vadd.f32 %v1025, %v1026
          %v1028 = vadd.f32 %v1014, %v1018
          %v1029 = vrot.slane %v1028, 4
          %v1030 = vadd.f32 %v1028, %v1029
          %v1031 = vrot.slane %v1030, 2
          %v1032 = vadd.f32 %v1030, %v1031
          %v1033 = vrot.slane %v1032, 1
          %v1034 = vadd.f32 %v1032, %v1033
          %v1035 = vadd.f32 %v1015, %v1019
          %v1036 = vrot.slane %v1035, 4
          %v1037 = vadd.f32 %v1035, %v1036
          %v1038 = vrot.slane %v1037, 2
          %v1039 = vadd.f32 %v1037, %v1038
          %v1040 = vrot.slane %v1039, 1
          %v1041 = vadd.f32 %v1039, %v1040
          %v1042 = vadd.f32 %v1016, %v1020
          %v1043 = vrot.slane %v1042, 4
          %v1044 = vadd.f32 %v1042, %v1043
          %v1045 = vrot.slane %v1044, 2
          %v1046 = vadd.f32 %v1044, %v1045
          %v1047 = vrot.slane %v1046, 1
          %v1048 = vadd.f32 %v1046, %v1047
          %v1049 = vmul.f32 %v1013, %v1013
          %v1050 = vmul.f32 %v1014, %v1014
          %v1051 = vmul.f32 %v1015, %v1015
          %v1052 = vmul.f32 %v1016, %v1016
          %v1053 = vmul.f32 %v1017, %v1017
          %v1054 = vmul.f32 %v1018, %v1018
          %v1055 = vmul.f32 %v1019, %v1019
          %v1056 = vmul.f32 %v1020, %v1020
          %v1057 = vadd.f32 %v1049, %v1053
          %v1058 = vrot.slane %v1057, 4
          %v1059 = vadd.f32 %v1057, %v1058
          %v1060 = vrot.slane %v1059, 2
          %v1061 = vadd.f32 %v1059, %v1060
          %v1062 = vrot.slane %v1061, 1
          %v1063 = vadd.f32 %v1061, %v1062
          %v1064 = vadd.f32 %v1050, %v1054
          %v1065 = vrot.slane %v1064, 4
          %v1066 = vadd.f32 %v1064, %v1065
          %v1067 = vrot.slane %v1066, 2
          %v1068 = vadd.f32 %v1066, %v1067
          %v1069 = vrot.slane %v1068, 1
          %v1070 = vadd.f32 %v1068, %v1069
          %v1071 = vadd.f32 %v1051, %v1055
          %v1072 = vrot.slane %v1071, 4
          %v1073 = vadd.f32 %v1071, %v1072
          %v1074 = vrot.slane %v1073, 2
          %v1075 = vadd.f32 %v1073, %v1074
          %v1076 = vrot.slane %v1075, 1
          %v1077 = vadd.f32 %v1075, %v1076
          %v1078 = vadd.f32 %v1052, %v1056
          %v1079 = vrot.slane %v1078, 4
          %v1080 = vadd.f32 %v1078, %v1079
          %v1081 = vrot.slane %v1080, 2
          %v1082 = vadd.f32 %v1080, %v1081
          %v1083 = vrot.slane %v1082, 1
          %v1084 = vadd.f32 %v1082, %v1083
          %1085 = vst [vmem:[%s400] sm:$0xff] %v1027
          %1086 = vst [vmem:[%s400 + $0x8] sm:$0xff] %v1034
          %1087 = vst [vmem:[%s400 + $0x10] sm:$0xff] %v1041
          %1088 = vst [vmem:[%s400 + $0x18] sm:$0xff] %v1048
          %1089 = vst [vmem:[%s410] sm:$0xff] %v1063
          %1090 = vst [vmem:[%s410 + $0x8] sm:$0xff] %v1070
          %1091 = vst [vmem:[%s410 + $0x10] sm:$0xff] %v1077
          %1092 = vst [vmem:[%s410 + $0x18] sm:$0xff] %v1084
        $region78: #{forward.27} parent=65 // pred_fallthru
          _
        %s1093 = smul.u32 2, %s22
        %s1094 = smul.u32 4, %s23
        %p1095 = scmp.lt.s32.totalorder %s1093, 1
        %s1096 = scalar_select %p1095, %s1093, 1
        %p1097 = scmp.lt.s32.totalorder %s1094, 3
        %s1098 = scalar_select %p1097, %s1094, 3
        %s1099 = smul.addr %s1096, 4
        %s1100 = sadd.s32 %s1098, %s1099
        %s1101 = smul.addr %s1100, 4
        %s1102 = scalar_lea.vmem %s3, %s1101
        %s1103 = smul.u32 4, %s23
        %p1104 = scmp.lt.s32.totalorder %s22, 0
        %s1105 = scalar_select %p1104, %s22, 0
        %p1106 = scmp.lt.s32.totalorder %s1103, 3
        %s1107 = scalar_select %p1106, %s1103, 3
        %s1108 = smul.addr %s1105, 4
        %s1109 = sadd.s32 %s1107, %s1108
        %s1110 = smul.addr %s1109, 8
        %s1111 = scalar_lea.vmem %s4, %s1110
        %s1112 = smul.u32 4, %s23
        %p1113 = scmp.lt.s32.totalorder %s22, 0
        %s1114 = scalar_select %p1113, %s22, 0
        %p1115 = scmp.lt.s32.totalorder %s1112, 3
        %s1116 = scalar_select %p1115, %s1112, 3
        %s1117 = smul.addr %s1114, 4
        %s1118 = sadd.s32 %s1116, %s1117
        %s1119 = smul.addr %s1118, 8
        %s1120 = scalar_lea.vmem %s5, %s1119
        // Predicated region
        $region79: #{forward.27} parent=65 // pred_check
          %p1121 = pneg %p138
        $region80: #{forward.27} parent=65 // pred_check_branch
          %1123 = sbr.rel (%p1121) target = $region82
        $region81: #{forward.27} parent=65 // pred_region
          %s1124 = smul.u32 2, %s22
          %s1125 = smul.u32 4, %s23
        $region82: #{forward.27} parent=65 // pred_fallthru
          _
        // Predicated region
        $region83: #{forward.27} parent=65 // pred_check
          %p1126 = pneg %p166
        $region84: #{forward.27} parent=65 // pred_check_branch
          %1128 = sbr.rel (%p1126) target = $region86
        $region85: #{forward.27} parent=65 // pred_region
          %s1129 = smul.u32 4, %s23
        $region86: #{forward.27} parent=65 // pred_fallthru
          _
        // Predicated region
        $region87: #{forward.27} parent=65 // pred_check
          %p1130 = pneg %p194
        $region88: #{forward.27} parent=65 // pred_check_branch
          %1132 = sbr.rel (%p1130) target = $region90
        $region89: #{forward.27} parent=65 // pred_region
          %s1133 = smul.u32 4, %s23
        $region90: #{forward.27} parent=65 // pred_fallthru
          _
        // Predicated region
        $region91: #{forward.27} parent=65 // pred_check
          %p1134 = pneg %p138
        $region92: #{forward.27} parent=65 // pred_check_branch
          %1136 = sbr.rel (%p1134) target = $region94
        $region93: #{forward.27} parent=65 // pred_region
          %s1137 = smul.u32 2, %s22
          %s1138 = smul.u32 4, %s23
          %p1139 = scmp.lt.s32.totalorder %s1137, 1
          %s1140 = scalar_select %p1139, %s1137, 1
          %p1141 = scmp.lt.s32.totalorder %s1138, 3
          %s1142 = scalar_select %p1141, %s1138, 3
          %s1143 = smul.addr %s1140, 4
          %s1144 = sadd.s32 %s1142, %s1143
          %s1145 = smul.addr %s1144, 4
          %s1146 = scalar_lea.vmem %s3, %s1145
        $region94: #{forward.27} parent=65 // pred_fallthru
          _
        // Predicated region
        $region95: #{forward.27} parent=65 // pred_check
          %p1147 = pneg %p166
        $region96: #{forward.27} parent=65 // pred_check_branch
          %1149 = sbr.rel (%p1147) target = $region98
        $region97: #{forward.27} parent=65 // pred_region
          %s1150 = smul.u32 4, %s23
          %p1151 = scmp.lt.s32.totalorder %s22, 0
          %s1152 = scalar_select %p1151, %s22, 0
          %p1153 = scmp.lt.s32.totalorder %s1150, 3
          %s1154 = scalar_select %p1153, %s1150, 3
          %s1155 = smul.addr %s1152, 4
          %s1156 = sadd.s32 %s1154, %s1155
          %s1157 = smul.addr %s1156, 8
          %s1158 = scalar_lea.vmem %s4, %s1157
        $region98: #{forward.27} parent=65 // pred_fallthru
          _
        // Predicated region
        $region99: #{forward.27} parent=65 // pred_check
          %p1159 = pneg %p194
        $region100: #{forward.27} parent=65 // pred_check_branch
          %1161 = sbr.rel (%p1159) target = $region102
        $region101: #{forward.27} parent=65 // pred_region
          %s1162 = smul.u32 4, %s23
          %p1163 = scmp.lt.s32.totalorder %s22, 0
          %s1164 = scalar_select %p1163, %s22, 0
          %p1165 = scmp.lt.s32.totalorder %s1162, 3
          %s1166 = scalar_select %p1165, %s1162, 3
          %s1167 = smul.addr %s1164, 4
          %s1168 = sadd.s32 %s1166, %s1167
          %s1169 = smul.addr %s1168, 8
          %s1170 = scalar_lea.vmem %s5, %s1169
        $region102: #{forward.27} parent=65 // pred_fallthru
          _
      $region66: #{forward.27} parent=5 // pred_fallthru
        _
      %p1171 = scmp.le.s32.totalorder 2, %s12
      // Predicated region
      $region103: #{forward.27} parent=5 // pred_check
        %p1172 = pneg %p1171
      $region104: #{forward.27} parent=5 // pred_check_branch
        %1174 = sbr.rel (%p1172) target = $region106
      $region105: #{forward.27} parent=5 // pred_region
        %s1175 = ssub.s32 %s12, 2
      $region106: #{forward.27} parent=5 // pred_fallthru
        _
    $region6: #{forward.27} parent=1 // loop_footer
      %s16 = sadd.s32 1, %s12
    $region7: #{forward.27} parent=1 // loop_footer_branch
      %11 = sbr.rel target = $region3
    $region8: #{forward.27} parent=1 // loop_exit
      _

// kernel: forward.31
$region0: #{forward.31}
  #allocation0 [shape = 'u32[]', space=smem, size = 0x4, offset = 0x4, fixed_abs, tag = 'smem constant byte address 0x4 - core index']
  #allocation1 [shape = 'u32[144,128]{1,0:T(1,128)}', space=vmem, size = 0x12000, scoped, tag = 'internal scratch']
  #allocation2 [shape = 'f32[16,128]{1,0:T(8,128)}', space=vmem, size = 0x2000, scoped, tag = 'scratch operand']
  %s0 = inlined_call_operand.vmem [shape: bf16[32,512], index: 0, kind: input, shape index: {}]
  %s1 = inlined_call_operand.vmem [shape: bf16[512,128], index: 1, kind: input, shape index: {}]
  %s2 = inlined_call_operand.vmem [shape: f32[1,128], index: 2, kind: input, shape index: {}]
  %s3 = inlined_call_operand.vmem [shape: f32[16,128], index: 3, kind: output, shape index: {}]
  %s4 = sld [smem:[#allocation0]]
  $region53: #{forward.31} parent=0
    _
  %s6 = ssub.s32 1, %s4
  %s7 = scalar_select 0, %s6, %s4
  loop: start=0, step=1, limit=4
  $region2: #{forward.31} parent=0 // loop_pre_header
    _
  $region3: #{forward.31} parent=0 // loop_header
    %s9 = sphi 0, %s13
    %p10 = scmp.ge.s32.totalorder %s9, 4
    %s16 = sphi 0, %s35
    %s17 = sphi 0, %s31
    %s18 = sphi 0, %s27
    %s19 = sphi 0, %s16
    %s20 = sphi 0, %s17
    %s21 = sphi 0, %s18
    %s22 = sphi 0, %s19
    %s23 = sphi 0, %s20
    %s24 = sphi 0, %s21
    %s40 = sphi 0, %s42
    %s43 = sphi 0, %s40
    %s44 = sphi 0, %s43
    %s60 = sphi 0, %s44
    %s68 = sphi 0, %s70
    %s71 = sphi 0, %s68
    %s72 = sphi 0, %s71
    %s88 = sphi 0, %s72
    %s94 = sphi 0, %s96
    %s97 = sphi 0, %s94
    %s98 = sphi 0, %s97
    %s114 = sphi 0, %s98
    %s122 = sphi 0, %s124
    %s125 = sphi 0, %s122
    %s126 = sphi 0, %s125
    %s142 = sphi 0, %s126
  $region4: #{forward.31} parent=0 // loop_header_branch
    %12 = sbr.rel (%p10) target = $region8
  $region5: #{forward.31} parent=0 // loop_body
    %s14 = ssub.s32 %s9, 1
    %s15 = ssub.s32 %s9, 2
    %s25 = sadd.s32 1, %s18
    %p26 = scmp.ge.s32.totalorder %s25, 1
    %s27 = scalar_select %p26, 0, %s25
    %s28 = sadd.s32 1, %s17
    %s29 = scalar_select %p26, %s28, %s17
    %p30 = scmp.ge.s32.totalorder %s29, 1
    %s31 = scalar_select %p30, 0, %s29
    %s32 = sadd.s32 1, %s16
    %s33 = scalar_select %p30, %s32, %s16
    %p34 = scmp.ge.s32.totalorder %s33, 2
    %s35 = scalar_select %p34, 0, %s33
    %s36 = ssub.s32 %s16, %s35
    %s37 = ssub.s32 %s18, %s27
    %s38 = sor.u32 %s36, %s37
    %p39 = scmp.eq.s32.totalorder %s38, 0
    %s41 = sadd.s32 %s40, 1
    %s42 = scalar_select %p39, %s40, %s41
    %p45 = pneg %p39
    %p46 = scmp.eq.s32.totalorder %s9, 1
    %p47 = por %p45, %p46
    %p48 = scmp.ne.s32.totalorder %s40, %s43
    %p49 = scmp.eq.s32.totalorder %s9, 0
    %p50 = por %p48, %p49
    %p51 = scmp.ne.s32.totalorder %s40, %s43
    %p52 = scmp.eq.s32.totalorder %s14, 1
    %p53 = por %p51, %p52
    %p54 = scmp.ne.s32.totalorder %s43, %s44
    %p55 = scmp.eq.s32.totalorder %s14, 0
    %p56 = por %p54, %p55
    %p57 = scmp.ne.s32.totalorder %s43, %s44
    %p58 = scmp.eq.s32.totalorder %s15, 1
    %p59 = por %p57, %p58
    %p61 = scmp.ne.s32.totalorder %s44, %s60
    %p62 = scmp.eq.s32.totalorder %s15, 0
    %p63 = por %p61, %p62
    %s64 = ssub.s32 %s18, %s27
    %s65 = ssub.s32 %s17, %s31
    %s66 = sor.u32 %s64, %s65
    %p67 = scmp.eq.s32.totalorder %s66, 0
    %s69 = sadd.s32 %s68, 1
    %s70 = scalar_select %p67, %s68, %s69
    %p73 = pneg %p67
    %p74 = scmp.eq.s32.totalorder %s9, 1
    %p75 = por %p73, %p74
    %p76 = scmp.ne.s32.totalorder %s68, %s71
    %p77 = scmp.eq.s32.totalorder %s9, 0
    %p78 = por %p76, %p77
    %p79 = scmp.ne.s32.totalorder %s68, %s71
    %p80 = scmp.eq.s32.totalorder %s14, 1
    %p81 = por %p79, %p80
    %p82 = scmp.ne.s32.totalorder %s71, %s72
    %p83 = scmp.eq.s32.totalorder %s14, 0
    %p84 = por %p82, %p83
    %p85 = scmp.ne.s32.totalorder %s71, %s72
    %p86 = scmp.eq.s32.totalorder %s15, 1
    %p87 = por %p85, %p86
    %p89 = scmp.ne.s32.totalorder %s72, %s88
    %p90 = scmp.eq.s32.totalorder %s15, 0
    %p91 = por %p89, %p90
    %s92 = ssub.s32 %s17, %s31
    %p93 = scmp.eq.s32.totalorder %s92, 0
    %s95 = sadd.s32 %s94, 1
    %s96 = scalar_select %p93, %s94, %s95
    %p99 = pneg %p93
    %p100 = scmp.eq.s32.totalorder %s9, 1
    %p101 = por %p99, %p100
    %p102 = scmp.ne.s32.totalorder %s94, %s97
    %p103 = scmp.eq.s32.totalorder %s9, 0
    %p104 = por %p102, %p103
    %p105 = scmp.ne.s32.totalorder %s94, %s97
    %p106 = scmp.eq.s32.totalorder %s14, 1
    %p107 = por %p105, %p106
    %p108 = scmp.ne.s32.totalorder %s97, %s98
    %p109 = scmp.eq.s32.totalorder %s14, 0
    %p110 = por %p108, %p109
    %p111 = scmp.ne.s32.totalorder %s97, %s98
    %p112 = scmp.eq.s32.totalorder %s15, 1
    %p113 = por %p111, %p112
    %p115 = scmp.ne.s32.totalorder %s98, %s114
    %p116 = scmp.eq.s32.totalorder %s15, 0
    %p117 = por %p115, %p116
    %s118 = ssub.s32 %s16, %s35
    %s119 = ssub.s32 %s17, %s31
    %s120 = sor.u32 %s118, %s119
    %p121 = scmp.eq.s32.totalorder %s120, 0
    %s123 = sadd.s32 %s122, 1
    %s124 = scalar_select %p121, %s122, %s123
    %p127 = pneg %p121
    %p128 = scmp.eq.s32.totalorder %s9, 1
    %p129 = por %p127, %p128
    %p130 = scmp.ne.s32.totalorder %s122, %s125
    %p131 = scmp.eq.s32.totalorder %s9, 0
    %p132 = por %p130, %p131
    %p133 = scmp.ne.s32.totalorder %s122, %s125
    %p134 = scmp.eq.s32.totalorder %s14, 1
    %p135 = por %p133, %p134
    %p136 = scmp.ne.s32.totalorder %s125, %s126
    %p137 = scmp.eq.s32.totalorder %s14, 0
    %p138 = por %p136, %p137
    %p139 = scmp.ne.s32.totalorder %s125, %s126
    %p140 = scmp.eq.s32.totalorder %s15, 1
    %p141 = por %p139, %p140
    %p143 = scmp.ne.s32.totalorder %s126, %s142
    %p144 = scmp.eq.s32.totalorder %s15, 0
    %p145 = por %p143, %p144
    %p146 = scmp.le.s32.totalorder 1, %s9
    %p147 = scmp.lt.s32.totalorder %s9, 3
    %p148 = pnand %p146, %p147
    %p149 = pneg %p148
    // Predicated region
    $region9: #{forward.31} parent=5 // pred_check
      _
    $region10: #{forward.31} parent=5 // pred_check_branch
      %151 = sbr.rel (%p148) target = $region12
    $region11: #{forward.31} parent=5 // pred_region
      %s152 = ssub.s32 %s9, 1
      // Predicated region
      $region13: #{forward.31} parent=11 // pred_check
        %p153 = pneg %p84
      $region14: #{forward.31} parent=11 // pred_check_branch
        %155 = sbr.rel (%p153) target = $region16
      $region15: #{forward.31} parent=11 // pred_region
        %s156 = smul.u32 64, %s21
        %p157 = scmp.lt.s32.totalorder %s156, 63
        %s158 = scalar_select %p157, %s156, 63
        %p159 = scmp.lt.s32.totalorder %s20, 0
        %s160 = scalar_select %p159, %s20, 0
        %s161 = sadd.s32 %s160, %s158
        %s162 = smul.addr %s161, 4
        %s163 = scalar_lea.vmem %s1, %s162
        %s164 = smul.u32 64, %s21
      $region16: #{forward.31} parent=11 // pred_fallthru
        _
      // Predicated region
      $region17: #{forward.31} parent=11 // pred_check
        %p165 = pneg %p110
      $region18: #{forward.31} parent=11 // pred_check_branch
        %167 = sbr.rel (%p165) target = $region20
      $region19: #{forward.31} parent=11 // pred_region
        %p168 = scmp.lt.s32.totalorder %s20, 0
        %s169 = scalar_select %p168, %s20, 0
        %s170 = scalar_lea.vmem %s2, %s169
      $region20: #{forward.31} parent=11 // pred_fallthru
        _
    $region12: #{forward.31} parent=5 // pred_fallthru
      _
    %p171 = scmp.lt.s32.totalorder %s9, 2
    // Predicated region
    $region21: #{forward.31} parent=5 // pred_check
      %p172 = pneg %p171
    $region22: #{forward.31} parent=5 // pred_check_branch
      %174 = sbr.rel (%p172) target = $region24
    $region23: #{forward.31} parent=5 // pred_region
      // Predicated region
      $region25: #{forward.31} parent=23 // pred_check
        %p175 = pneg %p50
      $region26: #{forward.31} parent=23 // pred_check_branch
        %177 = sbr.rel (%p175) target = $region28
      $region27: #{forward.31} parent=23 // pred_region
        %s178 = smul.u32 2, %s16
        %s179 = smul.u32 4, %s18
        %p180 = scmp.lt.s32.totalorder %s178, 3
        %s181 = scalar_select %p180, %s178, 3
        %p182 = scmp.lt.s32.totalorder %s179, 3
        %s183 = scalar_select %p182, %s179, 3
        %s184 = smul.addr %s181, 4
        %s185 = sadd.s32 %s183, %s184
        %s186 = smul.addr %s185, 4
        %s187 = scalar_lea.vmem %s0, %s186
        %s188 = smul.u32 2, %s16
        %s189 = smul.u32 4, %s18
      $region28: #{forward.31} parent=23 // pred_fallthru
        _
    $region24: #{forward.31} parent=5 // pred_fallthru
      _
    %p190 = scmp.le.s32.totalorder 1, %s9
    %p191 = scmp.lt.s32.totalorder %s9, 3
    %p192 = pnand %p190, %p191
    %p193 = pneg %p192
    // Predicated region
    $region29: #{forward.31} parent=5 // pred_check
      _
    $region30: #{forward.31} parent=5 // pred_check_branch
      %195 = sbr.rel (%p192) target = $region32
    $region31: #{forward.31} parent=5 // pred_region
      %s196 = ssub.s32 %s9, 1
      %s197 = smul.u32 2, %s19
      %s198 = smul.u32 4, %s21
      %p199 = scmp.lt.s32.totalorder %s197, 3
      %s200 = scalar_select %p199, %s197, 3
      %p201 = scmp.lt.s32.totalorder %s198, 3
      %s202 = scalar_select %p201, %s198, 3
      %s203 = smul.addr %s200, 4
      %s204 = sadd.s32 %s202, %s203
      %s205 = smul.addr %s204, 4
      %s206 = scalar_lea.vmem %s0, %s205
      %p207 = pneg %p56
      %p208 = pneg %p53
      %s209 = smul.u32 64, %s21
      %p210 = scmp.lt.s32.totalorder %s209, 63
      %s211 = scalar_select %p210, %s209, 63
      %p212 = scmp.lt.s32.totalorder %s20, 0
      %s213 = scalar_select %p212, %s20, 0
      %s214 = sadd.s32 %s213, %s211
      %s215 = smul.addr %s214, 4
      %s216 = scalar_lea.vmem %s1, %s215
      %p217 = pneg %p84
      %p218 = pneg %p81
      %p219 = scmp.lt.s32.totalorder %s20, 0
      %s220 = scalar_select %p219, %s20, 0
      %s221 = scalar_lea.vmem %s2, %s220
      %p222 = pneg %p110
      %p223 = pneg %p107
      %p224 = pneg %p138
      %p225 = pneg %p135
      %p226 = scmp.lt.s32.totalorder %s19, 1
      %s227 = scalar_select %p226, %s19, 1
      %p228 = scmp.lt.s32.totalorder %s20, 0
      %s229 = scalar_select %p228, %s20, 0
      %s230 = sadd.s32 %s229, %s227
      %s231 = smul.addr %s230, 8
      %s232 = scalar_lea.vmem %s3, %s231
      %s233 = smul.u32 2, %s19
      %s234 = smul.u32 4, %s21
      %p235 = scmp.lt.s32.totalorder %s233, 3
      %s236 = scalar_select %p235, %s233, 3
      %p237 = scmp.lt.s32.totalorder %s234, 3
      %s238 = scalar_select %p237, %s234, 3
      %s239 = smul.addr %s236, 4
      %s240 = sadd.s32 %s238, %s239
      %s241 = smul.addr %s240, 4
      %s242 = scalar_lea.vmem %s0, %s241
      %s243 = smul.u32 2, %s19
      %s244 = smul.u32 4, %s21
      %s245 = smul.u32 64, %s21
      %p246 = scmp.lt.s32.totalorder %s245, 63
      %s247 = scalar_select %p246, %s245, 63
      %p248 = scmp.lt.s32.totalorder %s20, 0
      %s249 = scalar_select %p248, %s20, 0
      %s250 = sadd.s32 %s249, %s247
      %s251 = smul.addr %s250, 4
      %s252 = scalar_lea.vmem %s1, %s251
      %s253 = smul.u32 64, %s21
      %p254 = scmp.lt.s32.totalorder %s20, 0
      %s255 = scalar_select %p254, %s20, 0
      %s256 = scalar_lea.vmem %s2, %s255
      %p257 = scmp.lt.s32.totalorder %s19, 1
      %s258 = scalar_select %p257, %s19, 1
      %p259 = scmp.lt.s32.totalorder %s20, 0
      %s260 = scalar_select %p259, %s20, 0
      %s261 = sadd.s32 %s260, %s258
      %s262 = smul.addr %s261, 8
      %s263 = scalar_lea.vmem %s3, %s262
      %v265 = vlaneseq
      %v266 = vshrl.u32 %v265, 7
      %v267 = vadd.s32 %v266, 8
      %p268 = scmp.eq.s32.totalorder %s21, 0
      // Predicated region
      $region33: #{forward.31} parent=31 // pred_check
        %p269 = pneg %p268
      $region34: #{forward.31} parent=31 // pred_check_branch
        %271 = sbr.rel (%p269) target = $region36
      $region35: #{forward.31} parent=31 // pred_region
        %272 = vst [vmem:[#allocation2] sm:$0xff] 0.0
        %273 = vst [vmem:[#allocation2 + $0x8] sm:$0xff] 0.0
      $region36: #{forward.31} parent=31 // pred_fallthru
        _
      %v274 = vld [vmem:[#allocation2] sm:$0xff]
      %v275 = vld [vmem:[#allocation2 + $0x8] sm:$0xff]
      %v276 = vld [vmem:[%s242] sm:$0xff]
      %v277 = vld [vmem:[%s242 + $0x8] sm:$0xff]
      %v278 = vld [vmem:[%s242 + $0x10] sm:$0xff]
      %v279 = vld [vmem:[%s242 + $0x18] sm:$0xff]
      %v280 = vld [vmem:[%s252] sm:$0xf]
      %v281 = vld [vmem:[%s252 + $0x4] sm:$0xf]
      %v282 = vld [vmem:[%s252 + $0x8] sm:$0xf]
      %v283 = vld [vmem:[%s252 + $0xc] sm:$0xf]
      %v284 = vld [vmem:[%s252 + $0x10] sm:$0xf]
      %v285 = vld [vmem:[%s252 + $0x14] sm:$0xf]
      %v286 = vld [vmem:[%s252 + $0x18] sm:$0xf]
      %v287 = vld [vmem:[%s252 + $0x1c] sm:$0xf]
      %v288 = vld [vmem:[%s252 + $0x20] sm:$0xf]
      %v289 = vld [vmem:[%s252 + $0x24] sm:$0xf]
      %v290 = vld [vmem:[%s252 + $0x28] sm:$0xf]
      %v291 = vld [vmem:[%s252 + $0x2c] sm:$0xf]
      %v292 = vld [vmem:[%s252 + $0x30] sm:$0xf]
      %v293 = vld [vmem:[%s252 + $0x34] sm:$0xf]
      %v294 = vld [vmem:[%s252 + $0x38] sm:$0xf]
      %v295 = vld [vmem:[%s252 + $0x3c] sm:$0xf]
      %v296 = vld [vmem:[%s252 + $0x40] sm:$0xf]
      %v297 = vld [vmem:[%s252 + $0x44] sm:$0xf]
      %v298 = vld [vmem:[%s252 + $0x48] sm:$0xf]
      %v299 = vld [vmem:[%s252 + $0x4c] sm:$0xf]
      %v300 = vld [vmem:[%s252 + $0x50] sm:$0xf]
      %v301 = vld [vmem:[%s252 + $0x54] sm:$0xf]
      %v302 = vld [vmem:[%s252 + $0x58] sm:$0xf]
      %v303 = vld [vmem:[%s252 + $0x5c] sm:$0xf]
      %v304 = vld [vmem:[%s252 + $0x60] sm:$0xf]
      %v305 = vld [vmem:[%s252 + $0x64] sm:$0xf]
      %v306 = vld [vmem:[%s252 + $0x68] sm:$0xf]
      %v307 = vld [vmem:[%s252 + $0x6c] sm:$0xf]
      %v308 = vld [vmem:[%s252 + $0x70] sm:$0xf]
      %v309 = vld [vmem:[%s252 + $0x74] sm:$0xf]
      %v310 = vld [vmem:[%s252 + $0x78] sm:$0xf]
      %v311 = vld [vmem:[%s252 + $0x7c] sm:$0xf]
      %v312 = vld [vmem:[%s252 + $0x80] sm:$0xf]
      %v313 = vld [vmem:[%s252 + $0x84] sm:$0xf]
      %v314 = vld [vmem:[%s252 + $0x88] sm:$0xf]
      %v315 = vld [vmem:[%s252 + $0x8c] sm:$0xf]
      %v316 = vld [vmem:[%s252 + $0x90] sm:$0xf]
      %v317 = vld [vmem:[%s252 + $0x94] sm:$0xf]
      %v318 = vld [vmem:[%s252 + $0x98] sm:$0xf]
      %v319 = vld [vmem:[%s252 + $0x9c] sm:$0xf]
      %v320 = vld [vmem:[%s252 + $0xa0] sm:$0xf]
      %v321 = vld [vmem:[%s252 + $0xa4] sm:$0xf]
      %v322 = vld [vmem:[%s252 + $0xa8] sm:$0xf]
      %v323 = vld [vmem:[%s252 + $0xac] sm:$0xf]
      %v324 = vld [vmem:[%s252 + $0xb0] sm:$0xf]
      %v325 = vld [vmem:[%s252 + $0xb4] sm:$0xf]
      %v326 = vld [vmem:[%s252 + $0xb8] sm:$0xf]
      %v327 = vld [vmem:[%s252 + $0xbc] sm:$0xf]
      %v328 = vld [vmem:[%s252 + $0xc0] sm:$0xf]
      %v329 = vld [vmem:[%s252 + $0xc4] sm:$0xf]
      %v330 = vld [vmem:[%s252 + $0xc8] sm:$0xf]
      %v331 = vld [vmem:[%s252 + $0xcc] sm:$0xf]
      %v332 = vld [vmem:[%s252 + $0xd0] sm:$0xf]
      %v333 = vld [vmem:[%s252 + $0xd4] sm:$0xf]
      %v334 = vld [vmem:[%s252 + $0xd8] sm:$0xf]
      %v335 = vld [vmem:[%s252 + $0xdc] sm:$0xf]
      %v336 = vld [vmem:[%s252 + $0xe0] sm:$0xf]
      %v337 = vld [vmem:[%s252 + $0xe4] sm:$0xf]
      %v338 = vld [vmem:[%s252 + $0xe8] sm:$0xf]
      %v339 = vld [vmem:[%s252 + $0xec] sm:$0xf]
      %v340 = vld [vmem:[%s252 + $0xf0] sm:$0xf]
      %v341 = vld [vmem:[%s252 + $0xf4] sm:$0xf]
      %v342 = vld [vmem:[%s252 + $0xf8] sm:$0xf]
      %v343 = vld [vmem:[%s252 + $0xfc] sm:$0xf]
      %v348 = vunpack.c.l.b16 %v276
      %v349 = vunpack.c.h.b16 %v276
      %v350 = vunpack.c.l.b16 %v277
      %v351 = vunpack.c.h.b16 %v277
      %v352 = vunpack.c.l.b16 %v278
      %v353 = vunpack.c.h.b16 %v278
      %v354 = vunpack.c.l.b16 %v279
      %v355 = vunpack.c.h.b16 %v279
      %v356 = vpack.c.b16 %v352, %v348
      %v357 = vpack.c.b16 %v353, %v349
      %v358 = vpack.c.b16 %v354, %v350
      %v359 = vpack.c.b16 %v355, %v351
      %v428 = vunpack.c.l.b16 %v280
      %v429 = vunpack.c.l.b16 %v281
      %v430 = vunpack.c.l.b16 %v282
      %v431 = vunpack.c.l.b16 %v283
      %v432 = vunpack.c.l.b16 %v284
      %v433 = vunpack.c.l.b16 %v285
      %v434 = vunpack.c.l.b16 %v286
      %v435 = vunpack.c.l.b16 %v287
      %v436 = vunpack.c.l.b16 %v288
      %v437 = vunpack.c.l.b16 %v289
      %v438 = vunpack.c.l.b16 %v290
      %v439 = vunpack.c.l.b16 %v291
      %v440 = vunpack.c.l.b16 %v292
      %v441 = vunpack.c.l.b16 %v293
      %v442 = vunpack.c.l.b16 %v294
      %v443 = vunpack.c.l.b16 %v295
      %v444 = vunpack.c.l.b16 %v296
      %v445 = vunpack.c.l.b16 %v297
      %v446 = vunpack.c.l.b16 %v298
      %v447 = vunpack.c.l.b16 %v299
      %v448 = vunpack.c.l.b16 %v300
      %v449 = vunpack.c.l.b16 %v301
      %v450 = vunpack.c.l.b16 %v302
      %v451 = vunpack.c.l.b16 %v303
      %v452 = vunpack.c.l.b16 %v304
      %v453 = vunpack.c.l.b16 %v305
      %v454 = vunpack.c.l.b16 %v306
      %v455 = vunpack.c.l.b16 %v307
      %v456 = vunpack.c.l.b16 %v308
      %v457 = vunpack.c.l.b16 %v309
      %v458 = vunpack.c.l.b16 %v310
      %v459 = vunpack.c.l.b16 %v311
      %v460 = vunpack.c.l.b16 %v312
      %v461 = vunpack.c.l.b16 %v313
      %v462 = vunpack.c.l.b16 %v314
      %v463 = vunpack.c.l.b16 %v315
      %v464 = vunpack.c.l.b16 %v316
      %v465 = vunpack.c.l.b16 %v317
      %v466 = vunpack.c.l.b16 %v318
      %v467 = vunpack.c.l.b16 %v319
      %v468 = vunpack.c.l.b16 %v320
      %v469 = vunpack.c.l.b16 %v321
      %v470 = vunpack.c.l.b16 %v322
      %v471 = vunpack.c.l.b16 %v323
      %v472 = vunpack.c.l.b16 %v324
      %v473 = vunpack.c.l.b16 %v325
      %v474 = vunpack.c.l.b16 %v326
      %v475 = vunpack.c.l.b16 %v327
      %v476 = vunpack.c.l.b16 %v328
      %v477 = vunpack.c.l.b16 %v329
      %v478 = vunpack.c.l.b16 %v330
      %v479 = vunpack.c.l.b16 %v331
      %v480 = vunpack.c.l.b16 %v332
      %v481 = vunpack.c.l.b16 %v333
      %v482 = vunpack.c.l.b16 %v334
      %v483 = vunpack.c.l.b16 %v335
      %v484 = vunpack.c.l.b16 %v336
      %v485 = vunpack.c.l.b16 %v337
      %v486 = vunpack.c.l.b16 %v338
      %v487 = vunpack.c.l.b16 %v339
      %v488 = vunpack.c.l.b16 %v340
      %v489 = vunpack.c.l.b16 %v341
      %v490 = vunpack.c.l.b16 %v342
      %v491 = vunpack.c.l.b16 %v343
      %v492 = vpack.c.b16 %v429, %v428
      %v493 = vpack.c.b16 %v431, %v430
      %v494 = vpack.c.b16 %v433, %v432
      %v495 = vpack.c.b16 %v435, %v434
      %v496 = vpack.c.b16 %v437, %v436
      %v497 = vpack.c.b16 %v439, %v438
      %v498 = vpack.c.b16 %v441, %v440
      %v499 = vpack.c.b16 %v443, %v442
      %v500 = vpack.c.b16 %v445, %v444
      %v501 = vpack.c.b16 %v447, %v446
      %v502 = vpack.c.b16 %v449, %v448
      %v503 = vpack.c.b16 %v451, %v450
      %v504 = vpack.c.b16 %v453, %v452
      %v505 = vpack.c.b16 %v455, %v454
      %v506 = vpack.c.b16 %v457, %v456
      %v507 = vpack.c.b16 %v459, %v458
      %v508 = vpack.c.b16 %v461, %v460
      %v509 = vpack.c.b16 %v463, %v462
      %v510 = vpack.c.b16 %v465, %v464
      %v511 = vpack.c.b16 %v467, %v466
      %v512 = vpack.c.b16 %v469, %v468
      %v513 = vpack.c.b16 %v471, %v470
      %v514 = vpack.c.b16 %v473, %v472
      %v515 = vpack.c.b16 %v475, %v474
      %v516 = vpack.c.b16 %v477, %v476
      %v517 = vpack.c.b16 %v479, %v478
      %v518 = vpack.c.b16 %v481, %v480
      %v519 = vpack.c.b16 %v483, %v482
      %v520 = vpack.c.b16 %v485, %v484
      %v521 = vpack.c.b16 %v487, %v486
      %v522 = vpack.c.b16 %v489, %v488
      %v523 = vpack.c.b16 %v491, %v490
      %556 = vmatprep.subr.bf16.mxu0 0
      %557 = vmatpush1.bf16.msra.mxu0 %v499
      %558 = vmatprep.subr.bf16.mxu0 0
      %559 = vmatpush1.bf16.msra.mxu0 %v498
      %560 = vmatprep.subr.bf16.mxu0 0
      %561 = vmatpush1.bf16.msra.mxu0 %v497
      %562 = vmatprep.subr.bf16.mxu0 0
      %563 = vmatpush1.bf16.msra.mxu0 %v496
      %564 = vmatprep.subr.bf16.mxu0 0
      %565 = vmatpush1.bf16.msra.mxu0 %v495
      %566 = vmatprep.subr.bf16.mxu0 0
      %567 = vmatpush1.bf16.msra.mxu0 %v494
      %568 = vmatprep.subr.bf16.mxu0 0
      %569 = vmatpush1.bf16.msra.mxu0 %v493
      %570 = vmatprep.subr.bf16.mxu0 0
      %571 = vmatpush1.bf16.msra.mxu0 %v492
      %572 = vmatprep.subr.bf16.mxu0 0
      %573 = vmatpush2.bf16.msra.mxu0 %v507
      %574 = vmatprep.subr.bf16.mxu0 0
      %575 = vmatpush2.bf16.msra.mxu0 %v506
      %576 = vmatprep.subr.bf16.mxu0 0
      %577 = vmatpush2.bf16.msra.mxu0 %v505
      %578 = vmatprep.subr.bf16.mxu0 0
      %579 = vmatpush2.bf16.msra.mxu0 %v504
      %580 = vmatprep.subr.bf16.mxu0 0
      %581 = vmatpush2.bf16.msra.mxu0 %v503
      %582 = vmatprep.subr.bf16.mxu0 0
      %583 = vmatpush2.bf16.msra.mxu0 %v502
      %584 = vmatprep.subr.bf16.mxu0 0
      %585 = vmatpush2.bf16.msra.mxu0 %v501
      %586 = vmatprep.subr.bf16.mxu0 0
      %587 = vmatpush2.bf16.msra.mxu0 %v500
      %588 = vmatprep.mubr.bf16.mxu0 %v357
      %589 = vmatmul.mubr.bf16.gmra.mxu0 %v356
      %v590 = vpop.f32.mrf.mxu0
      %v591 = vadd.f32 0.0, %v590
      %v592 = vpop.f32.mrf.mxu0
      %v593 = vpop.f32.mrf.mxu0
      %v594 = vadd.f32 0.0, %v593
      %v595 = vpop.f32.mrf.mxu0
      %596 = vdwg.mxu0
      %597 = vmatprep.subr.bf16.mxu0 0
      %598 = vmatpush1.bf16.msra.mxu0 %v515
      %599 = vmatprep.subr.bf16.mxu0 0
      %600 = vmatpush1.bf16.msra.mxu0 %v514
      %601 = vmatprep.subr.bf16.mxu0 0
      %602 = vmatpush1.bf16.msra.mxu0 %v513
      %603 = vmatprep.subr.bf16.mxu0 0
      %604 = vmatpush1.bf16.msra.mxu0 %v512
      %605 = vmatprep.subr.bf16.mxu0 0
      %606 = vmatpush1.bf16.msra.mxu0 %v511
      %607 = vmatprep.subr.bf16.mxu0 0
      %608 = vmatpush1.bf16.msra.mxu0 %v510
      %609 = vmatprep.subr.bf16.mxu0 0
      %610 = vmatpush1.bf16.msra.mxu0 %v509
      %611 = vmatprep.subr.bf16.mxu0 0
      %612 = vmatpush1.bf16.msra.mxu0 %v508
      %613 = vmatprep.subr.bf16.mxu0 0
      %614 = vmatpush2.bf16.msra.mxu0 %v523
      %615 = vmatprep.subr.bf16.mxu0 0
      %616 = vmatpush2.bf16.msra.mxu0 %v522
      %617 = vmatprep.subr.bf16.mxu0 0
      %618 = vmatpush2.bf16.msra.mxu0 %v521
      %619 = vmatprep.subr.bf16.mxu0 0
      %620 = vmatpush2.bf16.msra.mxu0 %v520
      %621 = vmatprep.subr.bf16.mxu0 0
      %622 = vmatpush2.bf16.msra.mxu0 %v519
      %623 = vmatprep.subr.bf16.mxu0 0
      %624 = vmatpush2.bf16.msra.mxu0 %v518
      %625 = vmatprep.subr.bf16.mxu0 0
      %626 = vmatpush2.bf16.msra.mxu0 %v517
      %627 = vmatprep.subr.bf16.mxu0 0
      %628 = vmatpush2.bf16.msra.mxu0 %v516
      %629 = vmatprep.mubr.bf16.mxu0 %v359
      %630 = vmatmul.mubr.bf16.gmra.mxu0 %v358
      %v631 = vpop.f32.mrf.mxu0
      %v632 = vadd.f32 %v591, %v631
      %v633 = vpop.f32.mrf.mxu0
      %v634 = vpop.f32.mrf.mxu0
      %v635 = vadd.f32 %v594, %v634
      %v636 = vpop.f32.mrf.mxu0
      %637 = vdwg.mxu0
      %v638 = vadd.f32 %v274, %v632
      %v639 = vadd.f32 %v275, %v635
      %640 = vst [vmem:[#allocation2] sm:$0xff] %v638
      %641 = vst [vmem:[#allocation2 + $0x8] sm:$0xff] %v639
      // Predicated region
      $region37: #{forward.31} parent=31 // pred_check
        %p642 = pneg %p268
      $region38: #{forward.31} parent=31 // pred_check_branch
        %644 = sbr.rel (%p642) target = $region40
      $region39: #{forward.31} parent=31 // pred_region
        %v645 = vld [vmem:[#allocation2] sm:$0xff]
        %v646 = vld [vmem:[#allocation2 + $0x8] sm:$0xff]
        %v647 = vld [vmem:[%s256] sm:$0x1]
        %v649 = vlaneseq
        %v650 = vshrl.u32 %v649, 7
        %v651 = vsub.s32 0, %v650
        %v652 = vrot.slane %v647, %v651
        %v654 = vadd.f32 %v645, %v652
        %v655 = vadd.f32 %v646, %v652
        %vm656 = vcmp.lt.s32.totalorder %v266, 9
        %vm657 = vcmp.lt.s32.totalorder %v267, 9
        %v658 = vsel %vm656, 1, 0
        %v659 = vsel %vm657, 1, 0
        %vm660 = vcmp.eq.s32.totalorder %v658, 1
        %vm661 = vcmp.eq.s32.totalorder %v659, 1
        %v662 = vsel %vm660, %v654, 0.0
        %v663 = vsel %vm661, %v655, 0.0
        %v664 = vadd.f32 %v662, %v663
        %v665 = vrot.slane %v664, 4
        %v666 = vadd.f32 %v664, %v665
        %v667 = vrot.slane %v666, 2
        %v668 = vadd.f32 %v666, %v667
        %v669 = vrot.slane %v668, 1
        %v670 = vadd.f32 %v668, %v669
        %v671 = vmul.f32 %v670, 0.11111111
        %v672 = vxor.u32 %v671, 2147483648
        %v673 = vmul.f32 %v672, 1.442695
        %v674 = vpow.pop %v673
        %v675 = vadd.f32 %v674, 1.0
        %v676 = vrcp.pop %v675
        %v677 = vmul.f32 1.0, %v676
        %678 = vst [vmem:[%s263] sm:$0xff] %v677
      $region40: #{forward.31} parent=31 // pred_fallthru
        _
      %p679 = scmp.lt.s32.totalorder %s19, 1
      %s680 = scalar_select %p679, %s19, 1
      %p681 = scmp.lt.s32.totalorder %s20, 0
      %s682 = scalar_select %p681, %s20, 0
      %s683 = sadd.s32 %s682, %s680
      %s684 = smul.addr %s683, 8
      %s685 = scalar_lea.vmem %s3, %s684
      // Predicated region
      $region41: #{forward.31} parent=31 // pred_check
        %p686 = pneg %p135
      $region42: #{forward.31} parent=31 // pred_check_branch
        %688 = sbr.rel (%p686) target = $region44
      $region43: #{forward.31} parent=31 // pred_region
        _
      $region44: #{forward.31} parent=31 // pred_fallthru
        _
    $region32: #{forward.31} parent=5 // pred_fallthru
      _
    %p689 = scmp.le.s32.totalorder 2, %s9
    // Predicated region
    $region45: #{forward.31} parent=5 // pred_check
      %p690 = pneg %p689
    $region46: #{forward.31} parent=5 // pred_check_branch
      %692 = sbr.rel (%p690) target = $region48
    $region47: #{forward.31} parent=5 // pred_region
      %s693 = ssub.s32 %s9, 2
      // Predicated region
      $region49: #{forward.31} parent=47 // pred_check
        %p694 = pneg %p141
      $region50: #{forward.31} parent=47 // pred_check_branch
        %696 = sbr.rel (%p694) target = $region52
      $region51: #{forward.31} parent=47 // pred_region
        %p697 = scmp.lt.s32.totalorder %s22, 1
        %s698 = scalar_select %p697, %s22, 1
        %p699 = scmp.lt.s32.totalorder %s23, 0
        %s700 = scalar_select %p699, %s23, 0
        %s701 = sadd.s32 %s700, %s698
        %s702 = smul.addr %s701, 8
        %s703 = scalar_lea.vmem %s3, %s702
      $region52: #{forward.31} parent=47 // pred_fallthru
        _
    $region48: #{forward.31} parent=5 // pred_fallthru
      _
  $region6: #{forward.31} parent=0 // loop_footer
    %s13 = sadd.s32 1, %s9
  $region7: #{forward.31} parent=0 // loop_footer_branch
    %8 = sbr.rel target = $region3
  $region8: #{forward.31} parent=0 // loop_exit
    _

// kernel: forward.29
$region0: #{forward.29}
  #allocation0 [shape = 'u32[]', space=smem, size = 0x4, offset = 0x4, fixed_abs, tag = 'smem constant byte address 0x4 - core index']
  #allocation1 [shape = 'u32[144,128]{1,0:T(1,128)}', space=vmem, size = 0x12000, scoped, tag = 'internal scratch']
  #allocation2 [shape = 'f32[16,512]{1,0:T(8,128)}', space=vmem, size = 0x8000, scoped, tag = 'scratch operand']
  %s0 = inlined_call_operand.vmem [shape: bf16[16,4608], index: 0, kind: input, shape index: {}]
  %s1 = inlined_call_operand.vmem [shape: bf16[4608,512], index: 1, kind: input, shape index: {}]
  %s2 = inlined_call_operand.vmem [shape: f32[1,512], index: 2, kind: input, shape index: {}]
  %s3 = inlined_call_operand.vmem [shape: bf16[16,512], index: 3, kind: output, shape index: {0}]
  %s4 = inlined_call_operand.vmem [shape: f32[8,512], index: 4, kind: output, shape index: {1}]
  %s5 = inlined_call_operand.vmem [shape: f32[8,512], index: 5, kind: output, shape index: {2}]
  %6 = xla_tuple %s3, %s4, %s5
  %s7 = sld [smem:[#allocation0]]
  $region92: #{forward.29} parent=0
    _
  %s9 = ssub.s32 1, %s7
  %s10 = scalar_select 0, %s9, %s7
  $region1: #{forward.29} parent=0
    #allocation3 [shape = 'u8[32768]{0}', space=vmem, size = 0x8000, scoped, tag = 'input window, operand 0']
    loop: start=0, step=1, limit=11
    $region2: #{forward.29} parent=1 // loop_pre_header
      _
    $region3: #{forward.29} parent=1 // loop_header
      %s12 = sphi 0, %s16
      %p13 = scmp.ge.s32.totalorder %s12, 11
      %s19 = sphi 0, %s38
      %s20 = sphi 0, %s34
      %s21 = sphi 0, %s30
      %s22 = sphi 0, %s19
      %s23 = sphi 0, %s20
      %s24 = sphi 0, %s21
      %s25 = sphi 0, %s22
      %s26 = sphi 0, %s23
      %s27 = sphi 0, %s24
      %s43 = sphi 0, %s45
      %s46 = sphi 0, %s43
      %s47 = sphi 0, %s46
      %s63 = sphi 0, %s47
      %s71 = sphi 0, %s73
      %s74 = sphi 0, %s71
      %s75 = sphi 0, %s74
      %s91 = sphi 0, %s75
      %s97 = sphi 0, %s99
      %s100 = sphi 0, %s97
      %s101 = sphi 0, %s100
      %s117 = sphi 0, %s101
      %s125 = sphi 0, %s127
      %s128 = sphi 0, %s125
      %s129 = sphi 0, %s128
      %s145 = sphi 0, %s129
      %s153 = sphi 0, %s155
      %s156 = sphi 0, %s153
      %s157 = sphi 0, %s156
      %s173 = sphi 0, %s157
      %s181 = sphi 0, %s183
      %s184 = sphi 0, %s181
      %s185 = sphi 0, %s184
      %s201 = sphi 0, %s185
    $region4: #{forward.29} parent=1 // loop_header_branch
      %15 = sbr.rel (%p13) target = $region8
    $region5: #{forward.29} parent=1 // loop_body
      %s17 = ssub.s32 %s12, 1
      %s18 = ssub.s32 %s12, 2
      %s28 = sadd.s32 1, %s21
      %p29 = scmp.ge.s32.totalorder %s28, 9
      %s30 = scalar_select %p29, 0, %s28
      %s31 = sadd.s32 1, %s20
      %s32 = scalar_select %p29, %s31, %s20
      %p33 = scmp.ge.s32.totalorder %s32, 1
      %s34 = scalar_select %p33, 0, %s32
      %s35 = sadd.s32 1, %s19
      %s36 = scalar_select %p33, %s35, %s19
      %p37 = scmp.ge.s32.totalorder %s36, 1
      %s38 = scalar_select %p37, 0, %s36
      %s39 = ssub.s32 %s19, %s38
      %s40 = ssub.s32 %s21, %s30
      %s41 = sor.u32 %s39, %s40
      %p42 = scmp.eq.s32.totalorder %s41, 0
      %s44 = sadd.s32 %s43, 1
      %s45 = scalar_select %p42, %s43, %s44
      %p48 = pneg %p42
      %p49 = scmp.eq.s32.totalorder %s12, 8
      %p50 = por %p48, %p49
      %p51 = scmp.ne.s32.totalorder %s43, %s46
      %p52 = scmp.eq.s32.totalorder %s12, 0
      %p53 = por %p51, %p52
      %p54 = scmp.ne.s32.totalorder %s43, %s46
      %p55 = scmp.eq.s32.totalorder %s17, 8
      %p56 = por %p54, %p55
      %p57 = scmp.ne.s32.totalorder %s46, %s47
      %p58 = scmp.eq.s32.totalorder %s17, 0
      %p59 = por %p57, %p58
      %p60 = scmp.ne.s32.totalorder %s46, %s47
      %p61 = scmp.eq.s32.totalorder %s18, 8
      %p62 = por %p60, %p61
      %p64 = scmp.ne.s32.totalorder %s47, %s63
      %p65 = scmp.eq.s32.totalorder %s18, 0
      %p66 = por %p64, %p65
      %s67 = ssub.s32 %s21, %s30
      %s68 = ssub.s32 %s20, %s34
      %s69 = sor.u32 %s67, %s68
      %p70 = scmp.eq.s32.totalorder %s69, 0
      %s72 = sadd.s32 %s71, 1
      %s73 = scalar_select %p70, %s71, %s72
      %p76 = pneg %p70
      %p77 = scmp.eq.s32.totalorder %s12, 8
      %p78 = por %p76, %p77
      %p79 = scmp.ne.s32.totalorder %s71, %s74
      %p80 = scmp.eq.s32.totalorder %s12, 0
      %p81 = por %p79, %p80
      %p82 = scmp.ne.s32.totalorder %s71, %s74
      %p83 = scmp.eq.s32.totalorder %s17, 8
      %p84 = por %p82, %p83
      %p85 = scmp.ne.s32.totalorder %s74, %s75
      %p86 = scmp.eq.s32.totalorder %s17, 0
      %p87 = por %p85, %p86
      %p88 = scmp.ne.s32.totalorder %s74, %s75
      %p89 = scmp.eq.s32.totalorder %s18, 8
      %p90 = por %p88, %p89
      %p92 = scmp.ne.s32.totalorder %s75, %s91
      %p93 = scmp.eq.s32.totalorder %s18, 0
      %p94 = por %p92, %p93
      %s95 = ssub.s32 %s20, %s34
      %p96 = scmp.eq.s32.totalorder %s95, 0
      %s98 = sadd.s32 %s97, 1
      %s99 = scalar_select %p96, %s97, %s98
      %p102 = pneg %p96
      %p103 = scmp.eq.s32.totalorder %s12, 8
      %p104 = por %p102, %p103
      %p105 = scmp.ne.s32.totalorder %s97, %s100
      %p106 = scmp.eq.s32.totalorder %s12, 0
      %p107 = por %p105, %p106
      %p108 = scmp.ne.s32.totalorder %s97, %s100
      %p109 = scmp.eq.s32.totalorder %s17, 8
      %p110 = por %p108, %p109
      %p111 = scmp.ne.s32.totalorder %s100, %s101
      %p112 = scmp.eq.s32.totalorder %s17, 0
      %p113 = por %p111, %p112
      %p114 = scmp.ne.s32.totalorder %s100, %s101
      %p115 = scmp.eq.s32.totalorder %s18, 8
      %p116 = por %p114, %p115
      %p118 = scmp.ne.s32.totalorder %s101, %s117
      %p119 = scmp.eq.s32.totalorder %s18, 0
      %p120 = por %p118, %p119
      %s121 = ssub.s32 %s19, %s38
      %s122 = ssub.s32 %s20, %s34
      %s123 = sor.u32 %s121, %s122
      %p124 = scmp.eq.s32.totalorder %s123, 0
      %s126 = sadd.s32 %s125, 1
      %s127 = scalar_select %p124, %s125, %s126
      %p130 = pneg %p124
      %p131 = scmp.eq.s32.totalorder %s12, 8
      %p132 = por %p130, %p131
      %p133 = scmp.ne.s32.totalorder %s125, %s128
      %p134 = scmp.eq.s32.totalorder %s12, 0
      %p135 = por %p133, %p134
      %p136 = scmp.ne.s32.totalorder %s125, %s128
      %p137 = scmp.eq.s32.totalorder %s17, 8
      %p138 = por %p136, %p137
      %p139 = scmp.ne.s32.totalorder %s128, %s129
      %p140 = scmp.eq.s32.totalorder %s17, 0
      %p141 = por %p139, %p140
      %p142 = scmp.ne.s32.totalorder %s128, %s129
      %p143 = scmp.eq.s32.totalorder %s18, 8
      %p144 = por %p142, %p143
      %p146 = scmp.ne.s32.totalorder %s129, %s145
      %p147 = scmp.eq.s32.totalorder %s18, 0
      %p148 = por %p146, %p147
      %s149 = ssub.s32 %s19, %s38
      %s150 = ssub.s32 %s20, %s34
      %s151 = sor.u32 %s149, %s150
      %p152 = scmp.eq.s32.totalorder %s151, 0
      %s154 = sadd.s32 %s153, 1
      %s155 = scalar_select %p152, %s153, %s154
      %p158 = pneg %p152
      %p159 = scmp.eq.s32.totalorder %s12, 8
      %p160 = por %p158, %p159
      %p161 = scmp.ne.s32.totalorder %s153, %s156
      %p162 = scmp.eq.s32.totalorder %s12, 0
      %p163 = por %p161, %p162
      %p164 = scmp.ne.s32.totalorder %s153, %s156
      %p165 = scmp.eq.s32.totalorder %s17, 8
      %p166 = por %p164, %p165
      %p167 = scmp.ne.s32.totalorder %s156, %s157
      %p168 = scmp.eq.s32.totalorder %s17, 0
      %p169 = por %p167, %p168
      %p170 = scmp.ne.s32.totalorder %s156, %s157
      %p171 = scmp.eq.s32.totalorder %s18, 8
      %p172 = por %p170, %p171
      %p174 = scmp.ne.s32.totalorder %s157, %s173
      %p175 = scmp.eq.s32.totalorder %s18, 0
      %p176 = por %p174, %p175
      %s177 = ssub.s32 %s19, %s38
      %s178 = ssub.s32 %s20, %s34
      %s179 = sor.u32 %s177, %s178
      %p180 = scmp.eq.s32.totalorder %s179, 0
      %s182 = sadd.s32 %s181, 1
      %s183 = scalar_select %p180, %s181, %s182
      %p186 = pneg %p180
      %p187 = scmp.eq.s32.totalorder %s12, 8
      %p188 = por %p186, %p187
      %p189 = scmp.ne.s32.totalorder %s181, %s184
      %p190 = scmp.eq.s32.totalorder %s12, 0
      %p191 = por %p189, %p190
      %p192 = scmp.ne.s32.totalorder %s181, %s184
      %p193 = scmp.eq.s32.totalorder %s17, 8
      %p194 = por %p192, %p193
      %p195 = scmp.ne.s32.totalorder %s184, %s185
      %p196 = scmp.eq.s32.totalorder %s17, 0
      %p197 = por %p195, %p196
      %p198 = scmp.ne.s32.totalorder %s184, %s185
      %p199 = scmp.eq.s32.totalorder %s18, 8
      %p200 = por %p198, %p199
      %p202 = scmp.ne.s32.totalorder %s185, %s201
      %p203 = scmp.eq.s32.totalorder %s18, 0
      %p204 = por %p202, %p203
      %p205 = scmp.le.s32.totalorder 1, %s12
      %p206 = scmp.lt.s32.totalorder %s12, 10
      %p207 = pnand %p205, %p206
      %p208 = pneg %p207
      // Predicated region
      $region9: #{forward.29} parent=5 // pred_check
        _
      $region10: #{forward.29} parent=5 // pred_check_branch
        %210 = sbr.rel (%p207) target = $region12
      $region11: #{forward.29} parent=5 // pred_region
        %s211 = ssub.s32 %s12, 1
        // Predicated region
        $region13: #{forward.29} parent=11 // pred_check
          %p212 = pneg %p113
        $region14: #{forward.29} parent=11 // pred_check_branch
          %214 = sbr.rel (%p212) target = $region16
        $region15: #{forward.29} parent=11 // pred_region
          %s215 = smul.u32 4, %s23
          %p216 = scmp.lt.s32.totalorder %s215, 3
          %s217 = scalar_select %p216, %s215, 3
          %s218 = scalar_lea.vmem %s2, %s217
          %s219 = smul.u32 4, %s23
        $region16: #{forward.29} parent=11 // pred_fallthru
          _
      $region12: #{forward.29} parent=5 // pred_fallthru
        _
      %p220 = scmp.lt.s32.totalorder %s12, 9
      // Predicated region
      $region17: #{forward.29} parent=5 // pred_check
        %p221 = pneg %p220
      $region18: #{forward.29} parent=5 // pred_check_branch
        %223 = sbr.rel (%p221) target = $region20
      $region19: #{forward.29} parent=5 // pred_region
        // Predicated region
        $region21: #{forward.29} parent=19 // pred_check
          %p224 = pneg %p53
        $region22: #{forward.29} parent=19 // pred_check_branch
          %226 = sbr.rel (%p224) target = $region24
        $region23: #{forward.29} parent=19 // pred_region
          %s227 = sand.u32 %s43, 1
          %s228 = sand.u32 %s43, 1
          %s229 = smul.addr %s228, 32
          %s230 = scalar_lea.vmem [#allocation3], %s229
          %s231 = smul.u32 2, %s19
          %s232 = smul.u32 4, %s21
          %s233 = smul.addr %s231, 36
          %s234 = sadd.s32 %s232, %s233
          %s235 = smul.addr %s234, 4
          %s236 = scalar_lea.vmem %s0, %s235
          // Predicated region
          $region25: #{forward.29} parent=23 // pred_check
            _
          $region26: #{forward.29} parent=23 // pred_check_branch
            %238 = sbr.rel (0) target = $region28
          $region27: #{forward.29} parent=23 // pred_region
            // Predicated region
            $region29: #{forward.29} parent=27 // pred_check
              _
            $region30: #{forward.29} parent=27 // pred_check_branch
              %240 = sbr.rel (0) target = $region32
            $region31: #{forward.29} parent=27 // pred_region
              loop: start=0, step=1, limit=1
              $region33: #{forward.29} parent=31 // loop_pre_header
                _
              $region34: #{forward.29} parent=31 // loop_header
                %s242 = sphi 0, %s246
                %p243 = scmp.ge.s32.totalorder %s242, 1
                %s247 = sphi %s236, %s236
                %s248 = sphi %s230, %s230
              $region35: #{forward.29} parent=31 // loop_header_branch
                %245 = sbr.rel (%p243) target = $region39
              $region36: #{forward.29} parent=31 // loop_body
                %v249 = vld [vmem:[%s247] sm:$0xff]
                %250 = vst [vmem:[%s248] sm:$0xff] %v249
                %v251 = vld [vmem:[%s247 + $0x8] sm:$0xff]
                %252 = vst [vmem:[%s248 + $0x8] sm:$0xff] %v251
                %v253 = vld [vmem:[%s247 + $0x90] sm:$0xff]
                %254 = vst [vmem:[%s248 + $0x10] sm:$0xff] %v253
                %v255 = vld [vmem:[%s247 + $0x98] sm:$0xff]
                %256 = vst [vmem:[%s248 + $0x18] sm:$0xff] %v255
              $region37: #{forward.29} parent=31 // loop_footer
                %s246 = sadd.s32 1, %s242
              $region38: #{forward.29} parent=31 // loop_footer_branch
                %241 = sbr.rel target = $region34
              $region39: #{forward.29} parent=31 // loop_exit
                _
            $region32: #{forward.29} parent=27 // pred_fallthru
              _
            // Predicated region
            $region40: #{forward.29} parent=27 // pred_check
              _
            $region41: #{forward.29} parent=27 // pred_check_branch
              %258 = sbr.rel target = $region43
            $region42: #{forward.29} parent=27 // pred_region
              _
            $region43: #{forward.29} parent=27 // pred_fallthru
              _
          $region28: #{forward.29} parent=23 // pred_fallthru
            _
          %259 = vnop
        $region24: #{forward.29} parent=19 // pred_fallthru
          _
        // Predicated region
        $region44: #{forward.29} parent=19 // pred_check
          %p260 = pneg %p81
        $region45: #{forward.29} parent=19 // pred_check_branch
          %262 = sbr.rel (%p260) target = $region47
        $region46: #{forward.29} parent=19 // pred_region
          %s263 = smul.u32 64, %s21
          %s264 = smul.u32 4, %s20
          %p265 = scmp.lt.s32.totalorder %s263, 575
          %s266 = scalar_select %p265, %s263, 575
          %p267 = scmp.lt.s32.totalorder %s264, 3
          %s268 = scalar_select %p267, %s264, 3
          %s269 = smul.addr %s266, 4
          %s270 = sadd.s32 %s268, %s269
          %s271 = smul.addr %s270, 4
          %s272 = scalar_lea.vmem %s1, %s271
          %s273 = smul.u32 64, %s21
          %s274 = smul.u32 4, %s20
        $region47: #{forward.29} parent=19 // pred_fallthru
          _
      $region20: #{forward.29} parent=5 // pred_fallthru
        _
      %p275 = scmp.le.s32.totalorder 1, %s12
      %p276 = scmp.lt.s32.totalorder %s12, 10
      %p277 = pnand %p275, %p276
      %p278 = pneg %p277
      // Predicated region
      $region48: #{forward.29} parent=5 // pred_check
        _
      $region49: #{forward.29} parent=5 // pred_check_branch
        %280 = sbr.rel (%p277) target = $region51
      $region50: #{forward.29} parent=5 // pred_region
        %s281 = ssub.s32 %s12, 1
        %s282 = sand.u32 %s46, 1
        %s283 = sand.u32 %s46, 1
        %s284 = smul.addr %s283, 32
        %s285 = scalar_lea.vmem [#allocation3], %s284
        // Predicated region
        $region52: #{forward.29} parent=50 // pred_check
          %p286 = pneg %p59
        $region53: #{forward.29} parent=50 // pred_check_branch
          %288 = sbr.rel (%p286) target = $region55
        $region54: #{forward.29} parent=50 // pred_region
          _
        $region55: #{forward.29} parent=50 // pred_fallthru
          _
        %s289 = sand.u32 %s46, 1
        %s290 = sand.u32 %s46, 1
        %s291 = smul.addr %s290, 32
        %s292 = scalar_lea.vmem [#allocation3], %s291
        %p293 = pneg %p59
        %p294 = pneg %p56
        %s295 = smul.u32 64, %s24
        %s296 = smul.u32 4, %s23
        %p297 = scmp.lt.s32.totalorder %s295, 575
        %s298 = scalar_select %p297, %s295, 575
        %p299 = scmp.lt.s32.totalorder %s296, 3
        %s300 = scalar_select %p299, %s296, 3
        %s301 = smul.addr %s298, 4
        %s302 = sadd.s32 %s300, %s301
        %s303 = smul.addr %s302, 4
        %s304 = scalar_lea.vmem %s1, %s303
        %p305 = pneg %p87
        %p306 = pneg %p84
        %s307 = smul.u32 4, %s23
        %p308 = scmp.lt.s32.totalorder %s307, 3
        %s309 = scalar_select %p308, %s307, 3
        %s310 = scalar_lea.vmem %s2, %s309
        %p311 = pneg %p113
        %p312 = pneg %p110
        %p313 = pneg %p141
        %p314 = pneg %p138
        %s315 = smul.u32 2, %s22
        %s316 = smul.u32 4, %s23
        %p317 = scmp.lt.s32.totalorder %s315, 1
        %s318 = scalar_select %p317, %s315, 1
        %p319 = scmp.lt.s32.totalorder %s316, 3
        %s320 = scalar_select %p319, %s316, 3
        %s321 = smul.addr %s318, 4
        %s322 = sadd.s32 %s320, %s321
        %s323 = smul.addr %s322, 4
        %s324 = scalar_lea.vmem %s3, %s323
        %p325 = pneg %p169
        %p326 = pneg %p166
        %s327 = smul.u32 4, %s23
        %p328 = scmp.lt.s32.totalorder %s22, 0
        %s329 = scalar_select %p328, %s22, 0
        %p330 = scmp.lt.s32.totalorder %s327, 3
        %s331 = scalar_select %p330, %s327, 3
        %s332 = smul.addr %s329, 4
        %s333 = sadd.s32 %s331, %s332
        %s334 = smul.addr %s333, 8
        %s335 = scalar_lea.vmem %s4, %s334
        %p336 = pneg %p197
        %p337 = pneg %p194
        %s338 = smul.u32 4, %s23
        %p339 = scmp.lt.s32.totalorder %s22, 0
        %s340 = scalar_select %p339, %s22, 0
        %p341 = scmp.lt.s32.totalorder %s338, 3
        %s342 = scalar_select %p341, %s338, 3
        %s343 = smul.addr %s340, 4
        %s344 = sadd.s32 %s342, %s343
        %s345 = smul.addr %s344, 8
        %s346 = scalar_lea.vmem %s5, %s345
        %s347 = smul.u32 2, %s22
        %s348 = smul.u32 4, %s24
        %s349 = smul.u32 64, %s24
        %s350 = smul.u32 4, %s23
        %p351 = scmp.lt.s32.totalorder %s349, 575
        %s352 = scalar_select %p351, %s349, 575
        %p353 = scmp.lt.s32.totalorder %s350, 3
        %s354 = scalar_select %p353, %s350, 3
        %s355 = smul.addr %s352, 4
        %s356 = sadd.s32 %s354, %s355
        %s357 = smul.addr %s356, 4
        %s358 = scalar_lea.vmem %s1, %s357
        %s359 = smul.u32 64, %s24
        %s360 = smul.u32 4, %s23
        %s361 = smul.u32 4, %s23
        %p362 = scmp.lt.s32.totalorder %s361, 3
        %s363 = scalar_select %p362, %s361, 3
        %s364 = scalar_lea.vmem %s2, %s363
        %s365 = smul.u32 4, %s23
        %s366 = smul.u32 2, %s22
        %s367 = smul.u32 4, %s23
        %p368 = scmp.lt.s32.totalorder %s366, 1
        %s369 = scalar_select %p368, %s366, 1
        %p370 = scmp.lt.s32.totalorder %s367, 3
        %s371 = scalar_select %p370, %s367, 3
        %s372 = smul.addr %s369, 4
        %s373 = sadd.s32 %s371, %s372
        %s374 = smul.addr %s373, 4
        %s375 = scalar_lea.vmem %s3, %s374
        %s376 = smul.u32 2, %s22
        %s377 = smul.u32 4, %s23
        %s378 = smul.u32 4, %s23
        %p379 = scmp.lt.s32.totalorder %s22, 0
        %s380 = scalar_select %p379, %s22, 0
        %p381 = scmp.lt.s32.totalorder %s378, 3
        %s382 = scalar_select %p381, %s378, 3
        %s383 = smul.addr %s380, 4
        %s384 = sadd.s32 %s382, %s383
        %s385 = smul.addr %s384, 8
        %s386 = scalar_lea.vmem %s4, %s385
        %s387 = smul.u32 4, %s23
        %s388 = smul.u32 4, %s23
        %p389 = scmp.lt.s32.totalorder %s22, 0
        %s390 = scalar_select %p389, %s22, 0
        %p391 = scmp.lt.s32.totalorder %s388, 3
        %s392 = scalar_select %p391, %s388, 3
        %s393 = smul.addr %s390, 4
        %s394 = sadd.s32 %s392, %s393
        %s395 = smul.addr %s394, 8
        %s396 = scalar_lea.vmem %s5, %s395
        %s397 = smul.u32 4, %s23
        %s398 = smul.u32 %s22, 16
        %v399 = vlaneseq
        %v400 = vshrl.u32 %v399, 7
        %v401 = vadd.s32 %v400, 8
        %v402 = vstv %s398
        %v403 = vadd.s32 %v402, %v400
        %v404 = vadd.s32 %v402, %v401
        %p405 = scmp.eq.s32.totalorder %s24, 0
        // Predicated region
        $region56: #{forward.29} parent=50 // pred_check
          %p406 = pneg %p405
        $region57: #{forward.29} parent=50 // pred_check_branch
          %408 = sbr.rel (%p406) target = $region59
        $region58: #{forward.29} parent=50 // pred_region
          %409 = vst [vmem:[#allocation2] sm:$0xff] 0.0
          %410 = vst [vmem:[#allocation2 + $0x8] sm:$0xff] 0.0
          %411 = vst [vmem:[#allocation2 + $0x10] sm:$0xff] 0.0
          %412 = vst [vmem:[#allocation2 + $0x18] sm:$0xff] 0.0
          %413 = vst [vmem:[#allocation2 + $0x20] sm:$0xff] 0.0
          %414 = vst [vmem:[#allocation2 + $0x28] sm:$0xff] 0.0
          %415 = vst [vmem:[#allocation2 + $0x30] sm:$0xff] 0.0
          %416 = vst [vmem:[#allocation2 + $0x38] sm:$0xff] 0.0
        $region59: #{forward.29} parent=50 // pred_fallthru
          _
        %v417 = vld [vmem:[#allocation2] sm:$0xff]
        %v418 = vld [vmem:[#allocation2 + $0x8] sm:$0xff]
        %v419 = vld [vmem:[#allocation2 + $0x10] sm:$0xff]
        %v420 = vld [vmem:[#allocation2 + $0x18] sm:$0xff]
        %v421 = vld [vmem:[#allocation2 + $0x20] sm:$0xff]
        %v422 = vld [vmem:[#allocation2 + $0x28] sm:$0xff]
        %v423 = vld [vmem:[#allocation2 + $0x30] sm:$0xff]
        %v424 = vld [vmem:[#allocation2 + $0x38] sm:$0xff]
        %v425 = vld [vmem:[%s285] sm:$0xff]
        %v426 = vld [vmem:[%s285 + $0x8] sm:$0xff]
        %v427 = vld [vmem:[%s285 + $0x10] sm:$0xff]
        %v428 = vld [vmem:[%s285 + $0x18] sm:$0xff]
        %v429 = vld [vmem:[%s358] sm:$0xff]
        %v430 = vld [vmem:[%s358 + $0x8] sm:$0xff]
        %v431 = vld [vmem:[%s358 + $0x10] sm:$0xff]
        %v432 = vld [vmem:[%s358 + $0x18] sm:$0xff]
        %v433 = vld [vmem:[%s358 + $0x20] sm:$0xff]
        %v434 = vld [vmem:[%s358 + $0x28] sm:$0xff]
        %v435 = vld [vmem:[%s358 + $0x30] sm:$0xff]
        %v436 = vld [vmem:[%s358 + $0x38] sm:$0xff]
        %v437 = vld [vmem:[%s358 + $0x40] sm:$0xff]
        %v438 = vld [vmem:[%s358 + $0x48] sm:$0xff]
        %v439 = vld [vmem:[%s358 + $0x50] sm:$0xff]
        %v440 = vld [vmem:[%s358 + $0x58] sm:$0xff]
        %v441 = vld [vmem:[%s358 + $0x60] sm:$0xff]
        %v442 = vld [vmem:[%s358 + $0x68] sm:$0xff]
        %v443 = vld [vmem:[%s358 + $0x70] sm:$0xff]
        %v444 = vld [vmem:[%s358 + $0x78] sm:$0xff]
        %v445 = vld [vmem:[%s358 + $0x80] sm:$0xff]
        %v446 = vld [vmem:[%s358 + $0x88] sm:$0xff]
        %v447 = vld [vmem:[%s358 + $0x90] sm:$0xff]
        %v448 = vld [vmem:[%s358 + $0x98] sm:$0xff]
        %v449 = vld [vmem:[%s358 + $0xa0] sm:$0xff]
        %v450 = vld [vmem:[%s358 + $0xa8] sm:$0xff]
        %v451 = vld [vmem:[%s358 + $0xb0] sm:$0xff]
        %v452 = vld [vmem:[%s358 + $0xb8] sm:$0xff]
        %v453 = vld [vmem:[%s358 + $0xc0] sm:$0xff]
        %v454 = vld [vmem:[%s358 + $0xc8] sm:$0xff]
        %v455 = vld [vmem:[%s358 + $0xd0] sm:$0xff]
        %v456 = vld [vmem:[%s358 + $0xd8] sm:$0xff]
        %v457 = vld [vmem:[%s358 + $0xe0] sm:$0xff]
        %v458 = vld [vmem:[%s358 + $0xe8] sm:$0xff]
        %v459 = vld [vmem:[%s358 + $0xf0] sm:$0xff]
        %v460 = vld [vmem:[%s358 + $0xf8] sm:$0xff]
        %v461 = vld [vmem:[%s358 + $0x100] sm:$0xff]
        %v462 = vld [vmem:[%s358 + $0x108] sm:$0xff]
        %v463 = vld [vmem:[%s358 + $0x110] sm:$0xff]
        %v464 = vld [vmem:[%s358 + $0x118] sm:$0xff]
        %v465 = vld [vmem:[%s358 + $0x120] sm:$0xff]
        %v466 = vld [vmem:[%s358 + $0x128] sm:$0xff]
        %v467 = vld [vmem:[%s358 + $0x130] sm:$0xff]
        %v468 = vld [vmem:[%s358 + $0x138] sm:$0xff]
        %v469 = vld [vmem:[%s358 + $0x140] sm:$0xff]
        %v470 = vld [vmem:[%s358 + $0x148] sm:$0xff]
        %v471 = vld [vmem:[%s358 + $0x150] sm:$0xff]
        %v472 = vld [vmem:[%s358 + $0x158] sm:$0xff]
        %v473 = vld [vmem:[%s358 + $0x160] sm:$0xff]
        %v474 = vld [vmem:[%s358 + $0x168] sm:$0xff]
        %v475 = vld [vmem:[%s358 + $0x170] sm:$0xff]
        %v476 = vld [vmem:[%s358 + $0x178] sm:$0xff]
        %v477 = vld [vmem:[%s358 + $0x180] sm:$0xff]
        %v478 = vld [vmem:[%s358 + $0x188] sm:$0xff]
        %v479 = vld [vmem:[%s358 + $0x190] sm:$0xff]
        %v480 = vld [vmem:[%s358 + $0x198] sm:$0xff]
        %v481 = vld [vmem:[%s358 + $0x1a0] sm:$0xff]
        %v482 = vld [vmem:[%s358 + $0x1a8] sm:$0xff]
        %v483 = vld [vmem:[%s358 + $0x1b0] sm:$0xff]
        %v484 = vld [vmem:[%s358 + $0x1b8] sm:$0xff]
        %v485 = vld [vmem:[%s358 + $0x1c0] sm:$0xff]
        %v486 = vld [vmem:[%s358 + $0x1c8] sm:$0xff]
        %v487 = vld [vmem:[%s358 + $0x1d0] sm:$0xff]
        %v488 = vld [vmem:[%s358 + $0x1d8] sm:$0xff]
        %v489 = vld [vmem:[%s358 + $0x1e0] sm:$0xff]
        %v490 = vld [vmem:[%s358 + $0x1e8] sm:$0xff]
        %v491 = vld [vmem:[%s358 + $0x1f0] sm:$0xff]
        %v492 = vld [vmem:[%s358 + $0x1f8] sm:$0xff]
        %v493 = vld [vmem:[%s358 + $0x200] sm:$0xff]
        %v494 = vld [vmem:[%s358 + $0x208] sm:$0xff]
        %v495 = vld [vmem:[%s358 + $0x210] sm:$0xff]
        %v496 = vld [vmem:[%s358 + $0x218] sm:$0xff]
        %v497 = vld [vmem:[%s358 + $0x220] sm:$0xff]
        %v498 = vld [vmem:[%s358 + $0x228] sm:$0xff]
        %v499 = vld [vmem:[%s358 + $0x230] sm:$0xff]
        %v500 = vld [vmem:[%s358 + $0x238] sm:$0xff]
        %v501 = vld [vmem:[%s358 + $0x240] sm:$0xff]
        %v502 = vld [vmem:[%s358 + $0x248] sm:$0xff]
        %v503 = vld [vmem:[%s358 + $0x250] sm:$0xff]
        %v504 = vld [vmem:[%s358 + $0x258] sm:$0xff]
        %v505 = vld [vmem:[%s358 + $0x260] sm:$0xff]
        %v506 = vld [vmem:[%s358 + $0x268] sm:$0xff]
        %v507 = vld [vmem:[%s358 + $0x270] sm:$0xff]
        %v508 = vld [vmem:[%s358 + $0x278] sm:$0xff]
        %v509 = vld [vmem:[%s358 + $0x280] sm:$0xff]
        %v510 = vld [vmem:[%s358 + $0x288] sm:$0xff]
        %v511 = vld [vmem:[%s358 + $0x290] sm:$0xff]
        %v512 = vld [vmem:[%s358 + $0x298] sm:$0xff]
        %v513 = vld [vmem:[%s358 + $0x2a0] sm:$0xff]
        %v514 = vld [vmem:[%s358 + $0x2a8] sm:$0xff]
        %v515 = vld [vmem:[%s358 + $0x2b0] sm:$0xff]
        %v516 = vld [vmem:[%s358 + $0x2b8] sm:$0xff]
        %v517 = vld [vmem:[%s358 + $0x2c0] sm:$0xff]
        %v518 = vld [vmem:[%s358 + $0x2c8] sm:$0xff]
        %v519 = vld [vmem:[%s358 + $0x2d0] sm:$0xff]
        %v520 = vld [vmem:[%s358 + $0x2d8] sm:$0xff]
        %v521 = vld [vmem:[%s358 + $0x2e0] sm:$0xff]
        %v522 = vld [vmem:[%s358 + $0x2e8] sm:$0xff]
        %v523 = vld [vmem:[%s358 + $0x2f0] sm:$0xff]
        %v524 = vld [vmem:[%s358 + $0x2f8] sm:$0xff]
        %v525 = vld [vmem:[%s358 + $0x300] sm:$0xff]
        %v526 = vld [vmem:[%s358 + $0x308] sm:$0xff]
        %v527 = vld [vmem:[%s358 + $0x310] sm:$0xff]
        %v528 = vld [vmem:[%s358 + $0x318] sm:$0xff]
        %v529 = vld [vmem:[%s358 + $0x320] sm:$0xff]
        %v530 = vld [vmem:[%s358 + $0x328] sm:$0xff]
        %v531 = vld [vmem:[%s358 + $0x330] sm:$0xff]
        %v532 = vld [vmem:[%s358 + $0x338] sm:$0xff]
        %v533 = vld [vmem:[%s358 + $0x340] sm:$0xff]
        %v534 = vld [vmem:[%s358 + $0x348] sm:$0xff]
        %v535 = vld [vmem:[%s358 + $0x350] sm:$0xff]
        %v536 = vld [vmem:[%s358 + $0x358] sm:$0xff]
        %v537 = vld [vmem:[%s358 + $0x360] sm:$0xff]
        %v538 = vld [vmem:[%s358 + $0x368] sm:$0xff]
        %v539 = vld [vmem:[%s358 + $0x370] sm:$0xff]
        %v540 = vld [vmem:[%s358 + $0x378] sm:$0xff]
        %v541 = vld [vmem:[%s358 + $0x380] sm:$0xff]
        %v542 = vld [vmem:[%s358 + $0x388] sm:$0xff]
        %v543 = vld [vmem:[%s358 + $0x390] sm:$0xff]
        %v544 = vld [vmem:[%s358 + $0x398] sm:$0xff]
        %v545 = vld [vmem:[%s358 + $0x3a0] sm:$0xff]
        %v546 = vld [vmem:[%s358 + $0x3a8] sm:$0xff]
        %v547 = vld [vmem:[%s358 + $0x3b0] sm:$0xff]
        %v548 = vld [vmem:[%s358 + $0x3b8] sm:$0xff]
        %v549 = vld [vmem:[%s358 + $0x3c0] sm:$0xff]
        %v550 = vld [vmem:[%s358 + $0x3c8] sm:$0xff]
        %v551 = vld [vmem:[%s358 + $0x3d0] sm:$0xff]
        %v552 = vld [vmem:[%s358 + $0x3d8] sm:$0xff]
        %v553 = vld [vmem:[%s358 + $0x3e0] sm:$0xff]
        %v554 = vld [vmem:[%s358 + $0x3e8] sm:$0xff]
        %v555 = vld [vmem:[%s358 + $0x3f0] sm:$0xff]
        %v556 = vld [vmem:[%s358 + $0x3f8] sm:$0xff]
        %v561 = vunpack.c.l.b16 %v425
        %v562 = vunpack.c.h.b16 %v425
        %v563 = vunpack.c.l.b16 %v426
        %v564 = vunpack.c.h.b16 %v426
        %v565 = vunpack.c.l.b16 %v427
        %v566 = vunpack.c.h.b16 %v427
        %v567 = vunpack.c.l.b16 %v428
        %v568 = vunpack.c.h.b16 %v428
        %v569 = vpack.c.b16 %v565, %v561
        %v570 = vpack.c.b16 %v566, %v562
        %v571 = vpack.c.b16 %v567, %v563
        %v572 = vpack.c.b16 %v568, %v564
        %v705 = vunpack.c.l.b16 %v429
        %v706 = vunpack.c.h.b16 %v429
        %v707 = vunpack.c.l.b16 %v430
        %v708 = vunpack.c.h.b16 %v430
        %v709 = vunpack.c.l.b16 %v431
        %v710 = vunpack.c.h.b16 %v431
        %v711 = vunpack.c.l.b16 %v432
        %v712 = vunpack.c.h.b16 %v432
        %v713 = vunpack.c.l.b16 %v433
        %v714 = vunpack.c.h.b16 %v433
        %v715 = vunpack.c.l.b16 %v434
        %v716 = vunpack.c.h.b16 %v434
        %v717 = vunpack.c.l.b16 %v435
        %v718 = vunpack.c.h.b16 %v435
        %v719 = vunpack.c.l.b16 %v436
        %v720 = vunpack.c.h.b16 %v436
        %v721 = vunpack.c.l.b16 %v437
        %v722 = vunpack.c.h.b16 %v437
        %v723 = vunpack.c.l.b16 %v438
        %v724 = vunpack.c.h.b16 %v438
        %v725 = vunpack.c.l.b16 %v439
        %v726 = vunpack.c.h.b16 %v439
        %v727 = vunpack.c.l.b16 %v440
        %v728 = vunpack.c.h.b16 %v440
        %v729 = vunpack.c.l.b16 %v441
        %v730 = vunpack.c.h.b16 %v441
        %v731 = vunpack.c.l.b16 %v442
        %v732 = vunpack.c.h.b16 %v442
        %v733 = vunpack.c.l.b16 %v443
        %v734 = vunpack.c.h.b16 %v443
        %v735 = vunpack.c.l.b16 %v444
        %v736 = vunpack.c.h.b16 %v444
        %v737 = vunpack.c.l.b16 %v445
        %v738 = vunpack.c.h.b16 %v445
        %v739 = vunpack.c.l.b16 %v446
        %v740 = vunpack.c.h.b16 %v446
        %v741 = vunpack.c.l.b16 %v447
        %v742 = vunpack.c.h.b16 %v447
        %v743 = vunpack.c.l.b16 %v448
        %v744 = vunpack.c.h.b16 %v448
        %v745 = vunpack.c.l.b16 %v449
        %v746 = vunpack.c.h.b16 %v449
        %v747 = vunpack.c.l.b16 %v450
        %v748 = vunpack.c.h.b16 %v450
        %v749 = vunpack.c.l.b16 %v451
        %v750 = vunpack.c.h.b16 %v451
        %v751 = vunpack.c.l.b16 %v452
        %v752 = vunpack.c.h.b16 %v452
        %v753 = vunpack.c.l.b16 %v453
        %v754 = vunpack.c.h.b16 %v453
        %v755 = vunpack.c.l.b16 %v454
        %v756 = vunpack.c.h.b16 %v454
        %v757 = vunpack.c.l.b16 %v455
        %v758 = vunpack.c.h.b16 %v455
        %v759 = vunpack.c.l.b16 %v456
        %v760 = vunpack.c.h.b16 %v456
        %v761 = vunpack.c.l.b16 %v457
        %v762 = vunpack.c.h.b16 %v457
        %v763 = vunpack.c.l.b16 %v458
        %v764 = vunpack.c.h.b16 %v458
        %v765 = vunpack.c.l.b16 %v459
        %v766 = vunpack.c.h.b16 %v459
        %v767 = vunpack.c.l.b16 %v460
        %v768 = vunpack.c.h.b16 %v460
        %v769 = vunpack.c.l.b16 %v461
        %v770 = vunpack.c.h.b16 %v461
        %v771 = vunpack.c.l.b16 %v462
        %v772 = vunpack.c.h.b16 %v462
        %v773 = vunpack.c.l.b16 %v463
        %v774 = vunpack.c.h.b16 %v463
        %v775 = vunpack.c.l.b16 %v464
        %v776 = vunpack.c.h.b16 %v464
        %v777 = vunpack.c.l.b16 %v465
        %v778 = vunpack.c.h.b16 %v465
        %v779 = vunpack.c.l.b16 %v466
        %v780 = vunpack.c.h.b16 %v466
        %v781 = vunpack.c.l.b16 %v467
        %v782 = vunpack.c.h.b16 %v467
        %v783 = vunpack.c.l.b16 %v468
        %v784 = vunpack.c.h.b16 %v468
        %v785 = vunpack.c.l.b16 %v469
        %v786 = vunpack.c.h.b16 %v469
        %v787 = vunpack.c.l.b16 %v470
        %v788 = vunpack.c.h.b16 %v470
        %v789 = vunpack.c.l.b16 %v471
        %v790 = vunpack.c.h.b16 %v471
        %v791 = vunpack.c.l.b16 %v472
        %v792 = vunpack.c.h.b16 %v472
        %v793 = vunpack.c.l.b16 %v473
        %v794 = vunpack.c.h.b16 %v473
        %v795 = vunpack.c.l.b16 %v474
        %v796 = vunpack.c.h.b16 %v474
        %v797 = vunpack.c.l.b16 %v475
        %v798 = vunpack.c.h.b16 %v475
        %v799 = vunpack.c.l.b16 %v476
        %v800 = vunpack.c.h.b16 %v476
        %v801 = vunpack.c.l.b16 %v477
        %v802 = vunpack.c.h.b16 %v477
        %v803 = vunpack.c.l.b16 %v478
        %v804 = vunpack.c.h.b16 %v478
        %v805 = vunpack.c.l.b16 %v479
        %v806 = vunpack.c.h.b16 %v479
        %v807 = vunpack.c.l.b16 %v480
        %v808 = vunpack.c.h.b16 %v480
        %v809 = vunpack.c.l.b16 %v481
        %v810 = vunpack.c.h.b16 %v481
        %v811 = vunpack.c.l.b16 %v482
        %v812 = vunpack.c.h.b16 %v482
        %v813 = vunpack.c.l.b16 %v483
        %v814 = vunpack.c.h.b16 %v483
        %v815 = vunpack.c.l.b16 %v484
        %v816 = vunpack.c.h.b16 %v484
        %v817 = vunpack.c.l.b16 %v485
        %v818 = vunpack.c.h.b16 %v485
        %v819 = vunpack.c.l.b16 %v486
        %v820 = vunpack.c.h.b16 %v486
        %v821 = vunpack.c.l.b16 %v487
        %v822 = vunpack.c.h.b16 %v487
        %v823 = vunpack.c.l.b16 %v488
        %v824 = vunpack.c.h.b16 %v488
        %v825 = vunpack.c.l.b16 %v489
        %v826 = vunpack.c.h.b16 %v489
        %v827 = vunpack.c.l.b16 %v490
        %v828 = vunpack.c.h.b16 %v490
        %v829 = vunpack.c.l.b16 %v491
        %v830 = vunpack.c.h.b16 %v491
        %v831 = vunpack.c.l.b16 %v492
        %v832 = vunpack.c.h.b16 %v492
        %v833 = vunpack.c.l.b16 %v493
        %v834 = vunpack.c.h.b16 %v493
        %v835 = vunpack.c.l.b16 %v494
        %v836 = vunpack.c.h.b16 %v494
        %v837 = vunpack.c.l.b16 %v495
        %v838 = vunpack.c.h.b16 %v495
        %v839 = vunpack.c.l.b16 %v496
        %v840 = vunpack.c.h.b16 %v496
        %v841 = vunpack.c.l.b16 %v497
        %v842 = vunpack.c.h.b16 %v497
        %v843 = vunpack.c.l.b16 %v498
        %v844 = vunpack.c.h.b16 %v498
        %v845 = vunpack.c.l.b16 %v499
        %v846 = vunpack.c.h.b16 %v499
        %v847 = vunpack.c.l.b16 %v500
        %v848 = vunpack.c.h.b16 %v500
        %v849 = vunpack.c.l.b16 %v501
        %v850 = vunpack.c.h.b16 %v501
        %v851 = vunpack.c.l.b16 %v502
        %v852 = vunpack.c.h.b16 %v502
        %v853 = vunpack.c.l.b16 %v503
        %v854 = vunpack.c.h.b16 %v503
        %v855 = vunpack.c.l.b16 %v504
        %v856 = vunpack.c.h.b16 %v504
        %v857 = vunpack.c.l.b16 %v505
        %v858 = vunpack.c.h.b16 %v505
        %v859 = vunpack.c.l.b16 %v506
        %v860 = vunpack.c.h.b16 %v506
        %v861 = vunpack.c.l.b16 %v507
        %v862 = vunpack.c.h.b16 %v507
        %v863 = vunpack.c.l.b16 %v508
        %v864 = vunpack.c.h.b16 %v508
        %v865 = vunpack.c.l.b16 %v509
        %v866 = vunpack.c.h.b16 %v509
        %v867 = vunpack.c.l.b16 %v510
        %v868 = vunpack.c.h.b16 %v510
        %v869 = vunpack.c.l.b16 %v511
        %v870 = vunpack.c.h.b16 %v511
        %v871 = vunpack.c.l.b16 %v512
        %v872 = vunpack.c.h.b16 %v512
        %v873 = vunpack.c.l.b16 %v513
        %v874 = vunpack.c.h.b16 %v513
        %v875 = vunpack.c.l.b16 %v514
        %v876 = vunpack.c.h.b16 %v514
        %v877 = vunpack.c.l.b16 %v515
        %v878 = vunpack.c.h.b16 %v515
        %v879 = vunpack.c.l.b16 %v516
        %v880 = vunpack.c.h.b16 %v516
        %v881 = vunpack.c.l.b16 %v517
        %v882 = vunpack.c.h.b16 %v517
        %v883 = vunpack.c.l.b16 %v518
        %v884 = vunpack.c.h.b16 %v518
        %v885 = vunpack.c.l.b16 %v519
        %v886 = vunpack.c.h.b16 %v519
        %v887 = vunpack.c.l.b16 %v520
        %v888 = vunpack.c.h.b16 %v520
        %v889 = vunpack.c.l.b16 %v521
        %v890 = vunpack.c.h.b16 %v521
        %v891 = vunpack.c.l.b16 %v522
        %v892 = vunpack.c.h.b16 %v522
        %v893 = vunpack.c.l.b16 %v523
        %v894 = vunpack.c.h.b16 %v523
        %v895 = vunpack.c.l.b16 %v524
        %v896 = vunpack.c.h.b16 %v524
        %v897 = vunpack.c.l.b16 %v525
        %v898 = vunpack.c.h.b16 %v525
        %v899 = vunpack.c.l.b16 %v526
        %v900 = vunpack.c.h.b16 %v526
        %v901 = vunpack.c.l.b16 %v527
        %v902 = vunpack.c.h.b16 %v527
        %v903 = vunpack.c.l.b16 %v528
        %v904 = vunpack.c.h.b16 %v528
        %v905 = vunpack.c.l.b16 %v529
        %v906 = vunpack.c.h.b16 %v529
        %v907 = vunpack.c.l.b16 %v530
        %v908 = vunpack.c.h.b16 %v530
        %v909 = vunpack.c.l.b16 %v531
        %v910 = vunpack.c.h.b16 %v531
        %v911 = vunpack.c.l.b16 %v532
        %v912 = vunpack.c.h.b16 %v532
        %v913 = vunpack.c.l.b16 %v533
        %v914 = vunpack.c.h.b16 %v533
        %v915 = vunpack.c.l.b16 %v534
        %v916 = vunpack.c.h.b16 %v534
        %v917 = vunpack.c.l.b16 %v535
        %v918 = vunpack.c.h.b16 %v535
        %v919 = vunpack.c.l.b16 %v536
        %v920 = vunpack.c.h.b16 %v536
        %v921 = vunpack.c.l.b16 %v537
        %v922 = vunpack.c.h.b16 %v537
        %v923 = vunpack.c.l.b16 %v538
        %v924 = vunpack.c.h.b16 %v538
        %v925 = vunpack.c.l.b16 %v539
        %v926 = vunpack.c.h.b16 %v539
        %v927 = vunpack.c.l.b16 %v540
        %v928 = vunpack.c.h.b16 %v540
        %v929 = vunpack.c.l.b16 %v541
        %v930 = vunpack.c.h.b16 %v541
        %v931 = vunpack.c.l.b16 %v542
        %v932 = vunpack.c.h.b16 %v542
        %v933 = vunpack.c.l.b16 %v543
        %v934 = vunpack.c.h.b16 %v543
        %v935 = vunpack.c.l.b16 %v544
        %v936 = vunpack.c.h.b16 %v544
        %v937 = vunpack.c.l.b16 %v545
        %v938 = vunpack.c.h.b16 %v545
        %v939 = vunpack.c.l.b16 %v546
        %v940 = vunpack.c.h.b16 %v546
        %v941 = vunpack.c.l.b16 %v547
        %v942 = vunpack.c.h.b16 %v547
        %v943 = vunpack.c.l.b16 %v548
        %v944 = vunpack.c.h.b16 %v548
        %v945 = vunpack.c.l.b16 %v549
        %v946 = vunpack.c.h.b16 %v549
        %v947 = vunpack.c.l.b16 %v550
        %v948 = vunpack.c.h.b16 %v550
        %v949 = vunpack.c.l.b16 %v551
        %v950 = vunpack.c.h.b16 %v551
        %v951 = vunpack.c.l.b16 %v552
        %v952 = vunpack.c.h.b16 %v552
        %v953 = vunpack.c.l.b16 %v553
        %v954 = vunpack.c.h.b16 %v553
        %v955 = vunpack.c.l.b16 %v554
        %v956 = vunpack.c.h.b16 %v554
        %v957 = vunpack.c.l.b16 %v555
        %v958 = vunpack.c.h.b16 %v555
        %v959 = vunpack.c.l.b16 %v556
        %v960 = vunpack.c.h.b16 %v556
        %v961 = vpack.c.b16 %v709, %v705
        %v962 = vpack.c.b16 %v710, %v706
        %v963 = vpack.c.b16 %v711, %v707
        %v964 = vpack.c.b16 %v712, %v708
        %v965 = vpack.c.b16 %v717, %v713
        %v966 = vpack.c.b16 %v718, %v714
        %v967 = vpack.c.b16 %v719, %v715
        %v968 = vpack.c.b16 %v720, %v716
        %v969 = vpack.c.b16 %v725, %v721
        %v970 = vpack.c.b16 %v726, %v722
        %v971 = vpack.c.b16 %v727, %v723
        %v972 = vpack.c.b16 %v728, %v724
        %v973 = vpack.c.b16 %v733, %v729
        %v974 = vpack.c.b16 %v734, %v730
        %v975 = vpack.c.b16 %v735, %v731
        %v976 = vpack.c.b16 %v736, %v732
        %v977 = vpack.c.b16 %v741, %v737
        %v978 = vpack.c.b16 %v742, %v738
        %v979 = vpack.c.b16 %v743, %v739
        %v980 = vpack.c.b16 %v744, %v740
        %v981 = vpack.c.b16 %v749, %v745
        %v982 = vpack.c.b16 %v750, %v746
        %v983 = vpack.c.b16 %v751, %v747
        %v984 = vpack.c.b16 %v752, %v748
        %v985 = vpack.c.b16 %v757, %v753
        %v986 = vpack.c.b16 %v758, %v754
        %v987 = vpack.c.b16 %v759, %v755
        %v988 = vpack.c.b16 %v760, %v756
        %v989 = vpack.c.b16 %v765, %v761
        %v990 = vpack.c.b16 %v766, %v762
        %v991 = vpack.c.b16 %v767, %v763
        %v992 = vpack.c.b16 %v768, %v764
        %v993 = vpack.c.b16 %v773, %v769
        %v994 = vpack.c.b16 %v774, %v770
        %v995 = vpack.c.b16 %v775, %v771
        %v996 = vpack.c.b16 %v776, %v772
        %v997 = vpack.c.b16 %v781, %v777
        %v998 = vpack.c.b16 %v782, %v778
        %v999 = vpack.c.b16 %v783, %v779
        %v1000 = vpack.c.b16 %v784, %v780
        %v1001 = vpack.c.b16 %v789, %v785
        %v1002 = vpack.c.b16 %v790, %v786
        %v1003 = vpack.c.b16 %v791, %v787
        %v1004 = vpack.c.b16 %v792, %v788
        %v1005 = vpack.c.b16 %v797, %v793
        %v1006 = vpack.c.b16 %v798, %v794
        %v1007 = vpack.c.b16 %v799, %v795
        %v1008 = vpack.c.b16 %v800, %v796
        %v1009 = vpack.c.b16 %v805, %v801
        %v1010 = vpack.c.b16 %v806, %v802
        %v1011 = vpack.c.b16 %v807, %v803
        %v1012 = vpack.c.b16 %v808, %v804
        %v1013 = vpack.c.b16 %v813, %v809
        %v1014 = vpack.c.b16 %v814, %v810
        %v1015 = vpack.c.b16 %v815, %v811
        %v1016 = vpack.c.b16 %v816, %v812
        %v1017 = vpack.c.b16 %v821, %v817
        %v1018 = vpack.c.b16 %v822, %v818
        %v1019 = vpack.c.b16 %v823, %v819
        %v1020 = vpack.c.b16 %v824, %v820
        %v1021 = vpack.c.b16 %v829, %v825
        %v1022 = vpack.c.b16 %v830, %v826
        %v1023 = vpack.c.b16 %v831, %v827
        %v1024 = vpack.c.b16 %v832, %v828
        %v1025 = vpack.c.b16 %v837, %v833
        %v1026 = vpack.c.b16 %v838, %v834
        %v1027 = vpack.c.b16 %v839, %v835
        %v1028 = vpack.c.b16 %v840, %v836
        %v1029 = vpack.c.b16 %v845, %v841
        %v1030 = vpack.c.b16 %v846, %v842
        %v1031 = vpack.c.b16 %v847, %v843
        %v1032 = vpack.c.b16 %v848, %v844
        %v1033 = vpack.c.b16 %v853, %v849
        %v1034 = vpack.c.b16 %v854, %v850
        %v1035 = vpack.c.b16 %v855, %v851
        %v1036 = vpack.c.b16 %v856, %v852
        %v1037 = vpack.c.b16 %v861, %v857
        %v1038 = vpack.c.b16 %v862, %v858
        %v1039 = vpack.c.b16 %v863, %v859
        %v1040 = vpack.c.b16 %v864, %v860
        %v1041 = vpack.c.b16 %v869, %v865
        %v1042 = vpack.c.b16 %v870, %v866
        %v1043 = vpack.c.b16 %v871, %v867
        %v1044 = vpack.c.b16 %v872, %v868
        %v1045 = vpack.c.b16 %v877, %v873
        %v1046 = vpack.c.b16 %v878, %v874
        %v1047 = vpack.c.b16 %v879, %v875
        %v1048 = vpack.c.b16 %v880, %v876
        %v1049 = vpack.c.b16 %v885, %v881
        %v1050 = vpack.c.b16 %v886, %v882
        %v1051 = vpack.c.b16 %v887, %v883
        %v1052 = vpack.c.b16 %v888, %v884
        %v1053 = vpack.c.b16 %v893, %v889
        %v1054 = vpack.c.b16 %v894, %v890
        %v1055 = vpack.c.b16 %v895, %v891
        %v1056 = vpack.c.b16 %v896, %v892
        %v1057 = vpack.c.b16 %v901, %v897
        %v1058 = vpack.c.b16 %v902, %v898
        %v1059 = vpack.c.b16 %v903, %v899
        %v1060 = vpack.c.b16 %v904, %v900
        %v1061 = vpack.c.b16 %v909, %v905
        %v1062 = vpack.c.b16 %v910, %v906
        %v1063 = vpack.c.b16 %v911, %v907
        %v1064 = vpack.c.b16 %v912, %v908
        %v1065 = vpack.c.b16 %v917, %v913
        %v1066 = vpack.c.b16 %v918, %v914
        %v1067 = vpack.c.b16 %v919, %v915
        %v1068 = vpack.c.b16 %v920, %v916
        %v1069 = vpack.c.b16 %v925, %v921
        %v1070 = vpack.c.b16 %v926, %v922
        %v1071 = vpack.c.b16 %v927, %v923
        %v1072 = vpack.c.b16 %v928, %v924
        %v1073 = vpack.c.b16 %v933, %v929
        %v1074 = vpack.c.b16 %v934, %v930
        %v1075 = vpack.c.b16 %v935, %v931
        %v1076 = vpack.c.b16 %v936, %v932
        %v1077 = vpack.c.b16 %v941, %v937
        %v1078 = vpack.c.b16 %v942, %v938
        %v1079 = vpack.c.b16 %v943, %v939
        %v1080 = vpack.c.b16 %v944, %v940
        %v1081 = vpack.c.b16 %v949, %v945
        %v1082 = vpack.c.b16 %v950, %v946
        %v1083 = vpack.c.b16 %v951, %v947
        %v1084 = vpack.c.b16 %v952, %v948
        %v1085 = vpack.c.b16 %v957, %v953
        %v1086 = vpack.c.b16 %v958, %v954
        %v1087 = vpack.c.b16 %v959, %v955
        %v1088 = vpack.c.b16 %v960, %v956
        %1217 = vmatprep.subr.bf16.mxu0 %v990
        %1218 = vmatpush1.bf16.msra.mxu0 %v989
        %1219 = vmatprep.subr.bf16.mxu0 %v986
        %1220 = vmatpush1.bf16.msra.mxu0 %v985
        %1221 = vmatprep.subr.bf16.mxu0 %v982
        %1222 = vmatpush1.bf16.msra.mxu0 %v981
        %1223 = vmatprep.subr.bf16.mxu0 %v978
        %1224 = vmatpush1.bf16.msra.mxu0 %v977
        %1225 = vmatprep.subr.bf16.mxu0 %v974
        %1226 = vmatpush1.bf16.msra.mxu0 %v973
        %1227 = vmatprep.subr.bf16.mxu0 %v970
        %1228 = vmatpush1.bf16.msra.mxu0 %v969
        %1229 = vmatprep.subr.bf16.mxu0 %v966
        %1230 = vmatpush1.bf16.msra.mxu0 %v965
        %1231 = vmatprep.subr.bf16.mxu0 %v962
        %1232 = vmatpush1.bf16.msra.mxu0 %v961
        %1233 = vmatprep.subr.bf16.mxu0 %v1022
        %1234 = vmatpush2.bf16.msra.mxu0 %v1021
        %1235 = vmatprep.subr.bf16.mxu0 %v1018
        %1236 = vmatpush2.bf16.msra.mxu0 %v1017
        %1237 = vmatprep.subr.bf16.mxu0 %v1014
        %1238 = vmatpush2.bf16.msra.mxu0 %v1013
        %1239 = vmatprep.subr.bf16.mxu0 %v1010
        %1240 = vmatpush2.bf16.msra.mxu0 %v1009
        %1241 = vmatprep.subr.bf16.mxu0 %v1006
        %1242 = vmatpush2.bf16.msra.mxu0 %v1005
        %1243 = vmatprep.subr.bf16.mxu0 %v1002
        %1244 = vmatpush2.bf16.msra.mxu0 %v1001
        %1245 = vmatprep.subr.bf16.mxu0 %v998
        %1246 = vmatpush2.bf16.msra.mxu0 %v997
        %1247 = vmatprep.subr.bf16.mxu0 %v994
        %1248 = vmatpush2.bf16.msra.mxu0 %v993
        %1249 = vmatprep.mubr.bf16.mxu0 %v570
        %1250 = vmatmul.mubr.bf16.gmra.mxu0 %v569
        %v1251 = vpop.f32.mrf.mxu0
        %v1252 = vadd.f32 0.0, %v1251
        %v1253 = vpop.f32.mrf.mxu0
        %v1254 = vadd.f32 0.0, %v1253
        %v1255 = vpop.f32.mrf.mxu0
        %v1256 = vadd.f32 0.0, %v1255
        %v1257 = vpop.f32.mrf.mxu0
        %v1258 = vadd.f32 0.0, %v1257
        %1259 = vdwg.mxu0
        %1260 = vmatprep.subr.bf16.mxu0 %v1054
        %1261 = vmatpush1.bf16.msra.mxu0 %v1053
        %1262 = vmatprep.subr.bf16.mxu0 %v1050
        %1263 = vmatpush1.bf16.msra.mxu0 %v1049
        %1264 = vmatprep.subr.bf16.mxu0 %v1046
        %1265 = vmatpush1.bf16.msra.mxu0 %v1045
        %1266 = vmatprep.subr.bf16.mxu0 %v1042
        %1267 = vmatpush1.bf16.msra.mxu0 %v1041
        %1268 = vmatprep.subr.bf16.mxu0 %v1038
        %1269 = vmatpush1.bf16.msra.mxu0 %v1037
        %1270 = vmatprep.subr.bf16.mxu0 %v1034
        %1271 = vmatpush1.bf16.msra.mxu0 %v1033
        %1272 = vmatprep.subr.bf16.mxu0 %v1030
        %1273 = vmatpush1.bf16.msra.mxu0 %v1029
        %1274 = vmatprep.subr.bf16.mxu0 %v1026
        %1275 = vmatpush1.bf16.msra.mxu0 %v1025
        %1276 = vmatprep.subr.bf16.mxu0 %v1086
        %1277 = vmatpush2.bf16.msra.mxu0 %v1085
        %1278 = vmatprep.subr.bf16.mxu0 %v1082
        %1279 = vmatpush2.bf16.msra.mxu0 %v1081
        %1280 = vmatprep.subr.bf16.mxu0 %v1078
        %1281 = vmatpush2.bf16.msra.mxu0 %v1077
        %1282 = vmatprep.subr.bf16.mxu0 %v1074
        %1283 = vmatpush2.bf16.msra.mxu0 %v1073
        %1284 = vmatprep.subr.bf16.mxu0 %v1070
        %1285 = vmatpush2.bf16.msra.mxu0 %v1069
        %1286 = vmatprep.subr.bf16.mxu0 %v1066
        %1287 = vmatpush2.bf16.msra.mxu0 %v1065
        %1288 = vmatprep.subr.bf16.mxu0 %v1062
        %1289 = vmatpush2.bf16.msra.mxu0 %v1061
        %1290 = vmatprep.subr.bf16.mxu0 %v1058
        %1291 = vmatpush2.bf16.msra.mxu0 %v1057
        %1292 = vmatprep.mubr.bf16.mxu0 %v572
        %1293 = vmatmul.mubr.bf16.gmra.mxu0 %v571
        %v1294 = vpop.f32.mrf.mxu0
        %v1295 = vadd.f32 %v1252, %v1294
        %v1296 = vpop.f32.mrf.mxu0
        %v1297 = vadd.f32 %v1254, %v1296
        %v1298 = vpop.f32.mrf.mxu0
        %v1299 = vadd.f32 %v1256, %v1298
        %v1300 = vpop.f32.mrf.mxu0
        %v1301 = vadd.f32 %v1258, %v1300
        %1302 = vdwg.mxu0
        %1303 = vmatprep.subr.bf16.mxu0 %v992
        %1304 = vmatpush1.bf16.msra.mxu0 %v991
        %1305 = vmatprep.subr.bf16.mxu0 %v988
        %1306 = vmatpush1.bf16.msra.mxu0 %v987
        %1307 = vmatprep.subr.bf16.mxu0 %v984
        %1308 = vmatpush1.bf16.msra.mxu0 %v983
        %1309 = vmatprep.subr.bf16.mxu0 %v980
        %1310 = vmatpush1.bf16.msra.mxu0 %v979
        %1311 = vmatprep.subr.bf16.mxu0 %v976
        %1312 = vmatpush1.bf16.msra.mxu0 %v975
        %1313 = vmatprep.subr.bf16.mxu0 %v972
        %1314 = vmatpush1.bf16.msra.mxu0 %v971
        %1315 = vmatprep.subr.bf16.mxu0 %v968
        %1316 = vmatpush1.bf16.msra.mxu0 %v967
        %1317 = vmatprep.subr.bf16.mxu0 %v964
        %1318 = vmatpush1.bf16.msra.mxu0 %v963
        %1319 = vmatprep.subr.bf16.mxu0 %v1024
        %1320 = vmatpush2.bf16.msra.mxu0 %v1023
        %1321 = vmatprep.subr.bf16.mxu0 %v1020
        %1322 = vmatpush2.bf16.msra.mxu0 %v1019
        %1323 = vmatprep.subr.bf16.mxu0 %v1016
        %1324 = vmatpush2.bf16.msra.mxu0 %v1015
        %1325 = vmatprep.subr.bf16.mxu0 %v1012
        %1326 = vmatpush2.bf16.msra.mxu0 %v1011
        %1327 = vmatprep.subr.bf16.mxu0 %v1008
        %1328 = vmatpush2.bf16.msra.mxu0 %v1007
        %1329 = vmatprep.subr.bf16.mxu0 %v1004
        %1330 = vmatpush2.bf16.msra.mxu0 %v1003
        %1331 = vmatprep.subr.bf16.mxu0 %v1000
        %1332 = vmatpush2.bf16.msra.mxu0 %v999
        %1333 = vmatprep.subr.bf16.mxu0 %v996
        %1334 = vmatpush2.bf16.msra.mxu0 %v995
        %1335 = vmatprep.mubr.bf16.mxu0 %v570
        %1336 = vmatmul.mubr.bf16.gmra.mxu0 %v569
        %v1337 = vpop.f32.mrf.mxu0
        %v1338 = vadd.f32 0.0, %v1337
        %v1339 = vpop.f32.mrf.mxu0
        %v1340 = vadd.f32 0.0, %v1339
        %v1341 = vpop.f32.mrf.mxu0
        %v1342 = vadd.f32 0.0, %v1341
        %v1343 = vpop.f32.mrf.mxu0
        %v1344 = vadd.f32 0.0, %v1343
        %1345 = vdwg.mxu0
        %1346 = vmatprep.subr.bf16.mxu0 %v1056
        %1347 = vmatpush1.bf16.msra.mxu0 %v1055
        %1348 = vmatprep.subr.bf16.mxu0 %v1052
        %1349 = vmatpush1.bf16.msra.mxu0 %v1051
        %1350 = vmatprep.subr.bf16.mxu0 %v1048
        %1351 = vmatpush1.bf16.msra.mxu0 %v1047
        %1352 = vmatprep.subr.bf16.mxu0 %v1044
        %1353 = vmatpush1.bf16.msra.mxu0 %v1043
        %1354 = vmatprep.subr.bf16.mxu0 %v1040
        %1355 = vmatpush1.bf16.msra.mxu0 %v1039
        %1356 = vmatprep.subr.bf16.mxu0 %v1036
        %1357 = vmatpush1.bf16.msra.mxu0 %v1035
        %1358 = vmatprep.subr.bf16.mxu0 %v1032
        %1359 = vmatpush1.bf16.msra.mxu0 %v1031
        %1360 = vmatprep.subr.bf16.mxu0 %v1028
        %1361 = vmatpush1.bf16.msra.mxu0 %v1027
        %1362 = vmatprep.subr.bf16.mxu0 %v1088
        %1363 = vmatpush2.bf16.msra.mxu0 %v1087
        %1364 = vmatprep.subr.bf16.mxu0 %v1084
        %1365 = vmatpush2.bf16.msra.mxu0 %v1083
        %1366 = vmatprep.subr.bf16.mxu0 %v1080
        %1367 = vmatpush2.bf16.msra.mxu0 %v1079
        %1368 = vmatprep.subr.bf16.mxu0 %v1076
        %1369 = vmatpush2.bf16.msra.mxu0 %v1075
        %1370 = vmatprep.subr.bf16.mxu0 %v1072
        %1371 = vmatpush2.bf16.msra.mxu0 %v1071
        %1372 = vmatprep.subr.bf16.mxu0 %v1068
        %1373 = vmatpush2.bf16.msra.mxu0 %v1067
        %1374 = vmatprep.subr.bf16.mxu0 %v1064
        %1375 = vmatpush2.bf16.msra.mxu0 %v1063
        %1376 = vmatprep.subr.bf16.mxu0 %v1060
        %1377 = vmatpush2.bf16.msra.mxu0 %v1059
        %1378 = vmatprep.mubr.bf16.mxu0 %v572
        %1379 = vmatmul.mubr.bf16.gmra.mxu0 %v571
        %v1380 = vpop.f32.mrf.mxu0
        %v1381 = vadd.f32 %v1338, %v1380
        %v1382 = vpop.f32.mrf.mxu0
        %v1383 = vadd.f32 %v1340, %v1382
        %v1384 = vpop.f32.mrf.mxu0
        %v1385 = vadd.f32 %v1342, %v1384
        %v1386 = vpop.f32.mrf.mxu0
        %v1387 = vadd.f32 %v1344, %v1386
        %1388 = vdwg.mxu0
        %v1389 = vadd.f32 %v417, %v1295
        %v1390 = vadd.f32 %v418, %v1297
        %v1391 = vadd.f32 %v419, %v1381
        %v1392 = vadd.f32 %v420, %v1383
        %v1393 = vadd.f32 %v421, %v1299
        %v1394 = vadd.f32 %v422, %v1301
        %v1395 = vadd.f32 %v423, %v1385
        %v1396 = vadd.f32 %v424, %v1387
        %1397 = vst [vmem:[#allocation2] sm:$0xff] %v1389
        %1398 = vst [vmem:[#allocation2 + $0x8] sm:$0xff] %v1390
        %1399 = vst [vmem:[#allocation2 + $0x10] sm:$0xff] %v1391
        %1400 = vst [vmem:[#allocation2 + $0x18] sm:$0xff] %v1392
        %1401 = vst [vmem:[#allocation2 + $0x20] sm:$0xff] %v1393
        %1402 = vst [vmem:[#allocation2 + $0x28] sm:$0xff] %v1394
        %1403 = vst [vmem:[#allocation2 + $0x30] sm:$0xff] %v1395
        %1404 = vst [vmem:[#allocation2 + $0x38] sm:$0xff] %v1396
        %p1405 = scmp.eq.s32.totalorder %s24, 8
        // Predicated region
        $region60: #{forward.29} parent=50 // pred_check
          %p1406 = pneg %p1405
        $region61: #{forward.29} parent=50 // pred_check_branch
          %1408 = sbr.rel (%p1406) target = $region63
        $region62: #{forward.29} parent=50 // pred_region
          %v1409 = vld [vmem:[#allocation2] sm:$0xff]
          %v1410 = vld [vmem:[#allocation2 + $0x8] sm:$0xff]
          %v1411 = vld [vmem:[#allocation2 + $0x10] sm:$0xff]
          %v1412 = vld [vmem:[#allocation2 + $0x18] sm:$0xff]
          %v1413 = vld [vmem:[#allocation2 + $0x20] sm:$0xff]
          %v1414 = vld [vmem:[#allocation2 + $0x28] sm:$0xff]
          %v1415 = vld [vmem:[#allocation2 + $0x30] sm:$0xff]
          %v1416 = vld [vmem:[#allocation2 + $0x38] sm:$0xff]
          %v1417 = vld [vmem:[%s364] sm:$0xf]
          %v1419 = vlaneseq
          %v1420 = vshrl.u32 %v1419, 7
          %v1421 = vsub.s32 0, %v1420
          %v1422 = vrot.slane %v1417, %v1421
          %v1423 = vlaneseq
          %v1424 = vshrl.u32 %v1423, 7
          %v1425 = vsub.s32 1, %v1424
          %v1426 = vrot.slane %v1417, %v1425
          %v1427 = vlaneseq
          %v1428 = vshrl.u32 %v1427, 7
          %v1429 = vsub.s32 2, %v1428
          %v1430 = vrot.slane %v1417, %v1429
          %v1431 = vlaneseq
          %v1432 = vshrl.u32 %v1431, 7
          %v1433 = vsub.s32 3, %v1432
          %v1434 = vrot.slane %v1417, %v1433
          %v1439 = vadd.f32 %v1409, %v1422
          %v1440 = vadd.f32 %v1410, %v1426
          %v1441 = vadd.f32 %v1411, %v1430
          %v1442 = vadd.f32 %v1412, %v1434
          %v1443 = vadd.f32 %v1413, %v1422
          %v1444 = vadd.f32 %v1414, %v1426
          %v1445 = vadd.f32 %v1415, %v1430
          %v1446 = vadd.f32 %v1416, %v1434
          %v1447 = vpack.c.bf16 %v1443, %v1439
          %v1448 = vpack.c.bf16 %v1444, %v1440
          %v1449 = vpack.c.bf16 %v1445, %v1441
          %v1450 = vpack.c.bf16 %v1446, %v1442
          %v1455 = vunpack.c.l.b16 %v1447
          %v1456 = vunpack.c.l.b16 %v1448
          %v1457 = vunpack.c.l.b16 %v1449
          %v1458 = vunpack.c.l.b16 %v1450
          %v1459 = vunpack.c.h.b16 %v1447
          %v1460 = vunpack.c.h.b16 %v1448
          %v1461 = vunpack.c.h.b16 %v1449
          %v1462 = vunpack.c.h.b16 %v1450
          %v1463 = vpack.c.b16 %v1456, %v1455
          %v1464 = vpack.c.b16 %v1458, %v1457
          %v1465 = vpack.c.b16 %v1460, %v1459
          %v1466 = vpack.c.b16 %v1462, %v1461
          %1471 = vst [vmem:[%s375] sm:$0xff] %v1463
          %1472 = vst [vmem:[%s375 + $0x8] sm:$0xff] %v1464
          %1473 = vst [vmem:[%s375 + $0x10] sm:$0xff] %v1465
          %1474 = vst [vmem:[%s375 + $0x18] sm:$0xff] %v1466
          %vm1475 = vcmp.lt.s32.totalorder %v403, 2
          %vm1476 = vcmp.lt.s32.totalorder %v404, 2
          %v1477 = vsel %vm1475, 1, 0
          %v1478 = vsel %vm1476, 1, 0
          %vm1479 = vcmp.eq.s32.totalorder %v1477, 1
          %vm1480 = vcmp.eq.s32.totalorder %v1478, 1
          %v1481 = vsel %vm1479, %v1439, 0.0
          %v1482 = vsel %vm1479, %v1440, 0.0
          %v1483 = vsel %vm1479, %v1441, 0.0
          %v1484 = vsel %vm1479, %v1442, 0.0
          %v1485 = vsel %vm1480, %v1443, 0.0
          %v1486 = vsel %vm1480, %v1444, 0.0
          %v1487 = vsel %vm1480, %v1445, 0.0
          %v1488 = vsel %vm1480, %v1446, 0.0
          %v1489 = vadd.f32 %v1481, %v1485
          %v1490 = vrot.slane %v1489, 4
          %v1491 = vadd.f32 %v1489, %v1490
          %v1492 = vrot.slane %v1491, 2
          %v1493 = vadd.f32 %v1491, %v1492
          %v1494 = vrot.slane %v1493, 1
          %v1495 = vadd.f32 %v1493, %v1494
          %v1496 = vadd.f32 %v1482, %v1486
          %v1497 = vrot.slane %v1496, 4
          %v1498 = vadd.f32 %v1496, %v1497
          %v1499 = vrot.slane %v1498, 2
          %v1500 = vadd.f32 %v1498, %v1499
          %v1501 = vrot.slane %v1500, 1
          %v1502 = vadd.f32 %v1500, %v1501
          %v1503 = vadd.f32 %v1483, %v1487
          %v1504 = vrot.slane %v1503, 4
          %v1505 = vadd.f32 %v1503, %v1504
          %v1506 = vrot.slane %v1505, 2
          %v1507 = vadd.f32 %v1505, %v1506
          %v1508 = vrot.slane %v1507, 1
          %v1509 = vadd.f32 %v1507, %v1508
          %v1510 = vadd.f32 %v1484, %v1488
          %v1511 = vrot.slane %v1510, 4
          %v1512 = vadd.f32 %v1510, %v1511
          %v1513 = vrot.slane %v1512, 2
          %v1514 = vadd.f32 %v1512, %v1513
          %v1515 = vrot.slane %v1514, 1
          %v1516 = vadd.f32 %v1514, %v1515
          %v1517 = vmul.f32 %v1481, %v1481
          %v1518 = vmul.f32 %v1482, %v1482
          %v1519 = vmul.f32 %v1483, %v1483
          %v1520 = vmul.f32 %v1484, %v1484
          %v1521 = vmul.f32 %v1485, %v1485
          %v1522 = vmul.f32 %v1486, %v1486
          %v1523 = vmul.f32 %v1487, %v1487
          %v1524 = vmul.f32 %v1488, %v1488
          %v1525 = vadd.f32 %v1517, %v1521
          %v1526 = vrot.slane %v1525, 4
          %v1527 = vadd.f32 %v1525, %v1526
          %v1528 = vrot.slane %v1527, 2
          %v1529 = vadd.f32 %v1527, %v1528
          %v1530 = vrot.slane %v1529, 1
          %v1531 = vadd.f32 %v1529, %v1530
          %v1532 = vadd.f32 %v1518, %v1522
          %v1533 = vrot.slane %v1532, 4
          %v1534 = vadd.f32 %v1532, %v1533
          %v1535 = vrot.slane %v1534, 2
          %v1536 = vadd.f32 %v1534, %v1535
          %v1537 = vrot.slane %v1536, 1
          %v1538 = vadd.f32 %v1536, %v1537
          %v1539 = vadd.f32 %v1519, %v1523
          %v1540 = vrot.slane %v1539, 4
          %v1541 = vadd.f32 %v1539, %v1540
          %v1542 = vrot.slane %v1541, 2
          %v1543 = vadd.f32 %v1541, %v1542
          %v1544 = vrot.slane %v1543, 1
          %v1545 = vadd.f32 %v1543, %v1544
          %v1546 = vadd.f32 %v1520, %v1524
          %v1547 = vrot.slane %v1546, 4
          %v1548 = vadd.f32 %v1546, %v1547
          %v1549 = vrot.slane %v1548, 2
          %v1550 = vadd.f32 %v1548, %v1549
          %v1551 = vrot.slane %v1550, 1
          %v1552 = vadd.f32 %v1550, %v1551
          %1553 = vst [vmem:[%s386] sm:$0xff] %v1495
          %1554 = vst [vmem:[%s386 + $0x8] sm:$0xff] %v1502
          %1555 = vst [vmem:[%s386 + $0x10] sm:$0xff] %v1509
          %1556 = vst [vmem:[%s386 + $0x18] sm:$0xff] %v1516
          %1557 = vst [vmem:[%s396] sm:$0xff] %v1531
          %1558 = vst [vmem:[%s396 + $0x8] sm:$0xff] %v1538
          %1559 = vst [vmem:[%s396 + $0x10] sm:$0xff] %v1545
          %1560 = vst [vmem:[%s396 + $0x18] sm:$0xff] %v1552
        $region63: #{forward.29} parent=50 // pred_fallthru
          _
        %s1561 = smul.u32 2, %s22
        %s1562 = smul.u32 4, %s23
        %p1563 = scmp.lt.s32.totalorder %s1561, 1
        %s1564 = scalar_select %p1563, %s1561, 1
        %p1565 = scmp.lt.s32.totalorder %s1562, 3
        %s1566 = scalar_select %p1565, %s1562, 3
        %s1567 = smul.addr %s1564, 4
        %s1568 = sadd.s32 %s1566, %s1567
        %s1569 = smul.addr %s1568, 4
        %s1570 = scalar_lea.vmem %s3, %s1569
        %s1571 = smul.u32 4, %s23
        %p1572 = scmp.lt.s32.totalorder %s22, 0
        %s1573 = scalar_select %p1572, %s22, 0
        %p1574 = scmp.lt.s32.totalorder %s1571, 3
        %s1575 = scalar_select %p1574, %s1571, 3
        %s1576 = smul.addr %s1573, 4
        %s1577 = sadd.s32 %s1575, %s1576
        %s1578 = smul.addr %s1577, 8
        %s1579 = scalar_lea.vmem %s4, %s1578
        %s1580 = smul.u32 4, %s23
        %p1581 = scmp.lt.s32.totalorder %s22, 0
        %s1582 = scalar_select %p1581, %s22, 0
        %p1583 = scmp.lt.s32.totalorder %s1580, 3
        %s1584 = scalar_select %p1583, %s1580, 3
        %s1585 = smul.addr %s1582, 4
        %s1586 = sadd.s32 %s1584, %s1585
        %s1587 = smul.addr %s1586, 8
        %s1588 = scalar_lea.vmem %s5, %s1587
        // Predicated region
        $region64: #{forward.29} parent=50 // pred_check
          %p1589 = pneg %p138
        $region65: #{forward.29} parent=50 // pred_check_branch
          %1591 = sbr.rel (%p1589) target = $region67
        $region66: #{forward.29} parent=50 // pred_region
          %s1592 = smul.u32 2, %s22
          %s1593 = smul.u32 4, %s23
        $region67: #{forward.29} parent=50 // pred_fallthru
          _
        // Predicated region
        $region68: #{forward.29} parent=50 // pred_check
          %p1594 = pneg %p166
        $region69: #{forward.29} parent=50 // pred_check_branch
          %1596 = sbr.rel (%p1594) target = $region71
        $region70: #{forward.29} parent=50 // pred_region
          %s1597 = smul.u32 4, %s23
        $region71: #{forward.29} parent=50 // pred_fallthru
          _
        // Predicated region
        $region72: #{forward.29} parent=50 // pred_check
          %p1598 = pneg %p194
        $region73: #{forward.29} parent=50 // pred_check_branch
          %1600 = sbr.rel (%p1598) target = $region75
        $region74: #{forward.29} parent=50 // pred_region
          %s1601 = smul.u32 4, %s23
        $region75: #{forward.29} parent=50 // pred_fallthru
          _
        // Predicated region
        $region76: #{forward.29} parent=50 // pred_check
          %p1602 = pneg %p138
        $region77: #{forward.29} parent=50 // pred_check_branch
          %1604 = sbr.rel (%p1602) target = $region79
        $region78: #{forward.29} parent=50 // pred_region
          %s1605 = smul.u32 2, %s22
          %s1606 = smul.u32 4, %s23
          %p1607 = scmp.lt.s32.totalorder %s1605, 1
          %s1608 = scalar_select %p1607, %s1605, 1
          %p1609 = scmp.lt.s32.totalorder %s1606, 3
          %s1610 = scalar_select %p1609, %s1606, 3
          %s1611 = smul.addr %s1608, 4
          %s1612 = sadd.s32 %s1610, %s1611
          %s1613 = smul.addr %s1612, 4
          %s1614 = scalar_lea.vmem %s3, %s1613
        $region79: #{forward.29} parent=50 // pred_fallthru
          _
        // Predicated region
        $region80: #{forward.29} parent=50 // pred_check
          %p1615 = pneg %p166
        $region81: #{forward.29} parent=50 // pred_check_branch
          %1617 = sbr.rel (%p1615) target = $region83
        $region82: #{forward.29} parent=50 // pred_region
          %s1618 = smul.u32 4, %s23
          %p1619 = scmp.lt.s32.totalorder %s22, 0
          %s1620 = scalar_select %p1619, %s22, 0
          %p1621 = scmp.lt.s32.totalorder %s1618, 3
          %s1622 = scalar_select %p1621, %s1618, 3
          %s1623 = smul.addr %s1620, 4
          %s1624 = sadd.s32 %s1622, %s1623
          %s1625 = smul.addr %s1624, 8
          %s1626 = scalar_lea.vmem %s4, %s1625
        $region83: #{forward.29} parent=50 // pred_fallthru
          _
        // Predicated region
        $region84: #{forward.29} parent=50 // pred_check
          %p1627 = pneg %p194
        $region85: #{forward.29} parent=50 // pred_check_branch
          %1629 = sbr.rel (%p1627) target = $region87
        $region86: #{forward.29} parent=50 // pred_region
          %s1630 = smul.u32 4, %s23
          %p1631 = scmp.lt.s32.totalorder %s22, 0
          %s1632 = scalar_select %p1631, %s22, 0
          %p1633 = scmp.lt.s32.totalorder %s1630, 3
          %s1634 = scalar_select %p1633, %s1630, 3
          %s1635 = smul.addr %s1632, 4
          %s1636 = sadd.s32 %s1634, %s1635
          %s1637 = smul.addr %s1636, 8
          %s1638 = scalar_lea.vmem %s5, %s1637
        $region87: #{forward.29} parent=50 // pred_fallthru
          _
      $region51: #{forward.29} parent=5 // pred_fallthru
        _
      %p1639 = scmp.le.s32.totalorder 2, %s12
      // Predicated region
      $region88: #{forward.29} parent=5 // pred_check
        %p1640 = pneg %p1639
      $region89: #{forward.29} parent=5 // pred_check_branch
        %1642 = sbr.rel (%p1640) target = $region91
      $region90: #{forward.29} parent=5 // pred_region
        %s1643 = ssub.s32 %s12, 2
      $region91: #{forward.29} parent=5 // pred_fallthru
        _
    $region6: #{forward.29} parent=1 // loop_footer
      %s16 = sadd.s32 1, %s12
    $region7: #{forward.29} parent=1 // loop_footer_branch
      %11 = sbr.rel target = $region3
    $region8: #{forward.29} parent=1 // loop_exit
      _

</llo_original>
